<compile_context>
chip_gen: v7x
topology: tpu7x:2x2x1
jax: 0.10.0
libtpu: 0.0.40
codegen_flags: <defaults>
</compile_context>

<pallas_src>
import jax
import jax.numpy as jnp
from jax import lax
from jax.experimental import pallas as pl
from jax.experimental.pallas import tpu as pltpu

EPS = 1e-5
LANE = 128
TAPS = [(ky, kx) for ky in range(3) for kx in range(3)]   # ky-major, kx-minor


def _bn_train(y, gamma, beta, inv_m):
    # Training-mode BatchNorm2d over the flattened (N*H*W, C) activation.
    # One pass for the statistics (sum + sum-of-squares), biased variance,
    # then a single fused scale/bias apply.
    s = jnp.sum(y, axis=0, keepdims=True)
    ss = jnp.sum(y * y, axis=0, keepdims=True)
    mean = s * inv_m
    var = ss * inv_m - mean * mean
    scale = gamma * lax.rsqrt(var + EPS)      # rsqrt -> EUP slot (cheap)
    bias = beta - mean * scale
    return y * scale + bias                   # 2 VALU ops / element


def resblock_kernel(xpad_ref, w1_ref, w2_ref, wsk_ref,
                    g1_ref, b1_ref, g2_ref, b2_ref, gs_ref, bs_ref,
                    out_ref, pad_scr, cols1_scr, cols2_scr):
    N, Hp, Wp, Cin = xpad_ref.shape
    H, W = Hp - 2, Wp - 2
    Cout = w1_ref.shape[1]                    # true (unpadded) channel count
    M = N * H * W
    inv_m = 1.0 / float(M)

    # ---- conv1: one im2col copy (K = 9*Cin), then a single fat-K matmul ----
    center = None
    for t, (ky, kx) in enumerate(TAPS):
        tap = xpad_ref[:, ky:ky + H, kx:kx + W, :].reshape(M, Cin)
        cols1_scr[:, t * Cin:(t + 1) * Cin] = tap
        if t == 4:                            # ky = kx = 1: the unpadded input
            center = tap                      # reused by the skip path below
    acc1 = jnp.dot(cols1_scr[...], w1_ref[...],
                   preferred_element_type=jnp.float32)          # (M, Cout)
    y1 = jnp.maximum(_bn_train(acc1, g1_ref[...], b1_ref[...], inv_m), 0.0)

    # ---- skip path: 1x1 conv + BN on the already-loaded centre tap ---------
    sk = jnp.dot(center, wsk_ref[...],
                 preferred_element_type=jnp.float32)            # (M, 128)
    sk = _bn_train(sk, gs_ref[...], bs_ref[...], inv_m)

    # ---- padded copy of y1 for conv2: zero ONLY the 1-px halo ring ---------
    pad_scr[:, 0:1, :, :] = jnp.zeros((N, 1, Wp, Cout), jnp.float32)
    pad_scr[:, H + 1:Hp, :, :] = jnp.zeros((N, 1, Wp, Cout), jnp.float32)
    pad_scr[:, :, 0:1, :] = jnp.zeros((N, Hp, 1, Cout), jnp.float32)
    pad_scr[:, :, W + 1:Wp, :] = jnp.zeros((N, Hp, 1, Cout), jnp.float32)
    pad_scr[:, 1:H + 1, 1:W + 1, :] = y1.reshape(N, H, W, Cout)

    # ---- conv2: one im2col copy (K = 9*Cout), one matmul to 128 channels ---
    for t, (ky, kx) in enumerate(TAPS):
        cols2_scr[:, t * Cout:(t + 1) * Cout] = \
            pad_scr[:, ky:ky + H, kx:kx + W, :].reshape(M, Cout)
    y2 = jnp.dot(cols2_scr[...], w2_ref[...],
                 preferred_element_type=jnp.float32)            # (M, 128)
    y2 = _bn_train(y2, g2_ref[...], b2_ref[...], inv_m)

    # ---- residual add + final ReLU: lane-dense (M, 128) unmasked store -----
    out_ref[...] = jnp.maximum(y2 + sk, 0.0)


def resblock_forward(x_nchw, params):
    """params = (w1, w2, wsk, g1, b1, g2, b2, gs, bs); conv weights in HWIO."""
    w1, w2, wsk, g1, b1, g2, b2, gs, bs = params
    N, Cin, H, W = x_nchw.shape
    Cout = w1.shape[-1]
    M = N * H * W
    Cpad = pl.cdiv(Cout, LANE) * LANE        # lane-dense padded channel count

    x = jnp.transpose(x_nchw, (0, 2, 3, 1)).astype(jnp.float32)   # NCHW->NHWC
    xpad = jnp.pad(x, ((0, 0), (1, 1), (1, 1), (0, 0)))           # spatial pad

    # Weight prep: flatten taps into the contraction (K) axis; zero-pad the
    # output-channel axis of conv2/skip to 128 lanes (free on the MXU).
    w1b = w1.astype(jnp.float32).reshape(9 * Cin, Cout)                 # (36, 8)
    w2b = jnp.pad(w2.astype(jnp.float32).reshape(9 * Cout, Cout),
                  ((0, 0), (0, Cpad - Cout)))                           # (72, 128)
    wskb = jnp.pad(wsk.astype(jnp.float32).reshape(Cin, Cout),
                   ((0, 0), (0, Cpad - Cout)))                          # (4, 128)

    def r2(v):                                # BN params as (1, C)
        return v.astype(jnp.float32).reshape(1, -1)

    def r2pad(v):                             # BN params zero-padded to (1, 128)
        return jnp.pad(r2(v), ((0, 0), (0, Cpad - Cout)))

    vmem = pl.BlockSpec(memory_space=pltpu.MemorySpace.VMEM)
    out2d = pl.pallas_call(
        resblock_kernel,
        out_shape=jax.ShapeDtypeStruct((M, Cpad), jnp.float32),
        in_specs=[vmem] * 10,
        out_specs=vmem,
        scratch_shapes=[
            pltpu.VMEM((N, H + 2, W + 2, Cout), jnp.float32),   # padded y1
            pltpu.VMEM((M, 9 * Cin), jnp.float32),              # im2col conv1
            pltpu.VMEM((M, 9 * Cout), jnp.float32),             # im2col conv2
        ],
        compiler_params=pltpu.CompilerParams(
            vmem_limit_bytes=32 * 1024 * 1024),
    )(xpad, w1b, w2b, wskb, r2(g1), r2(b1),
      r2pad(g2), r2pad(b2), r2pad(gs), r2pad(bs))

    out = out2d[:, :Cout].reshape(N, H, W, Cout)                 # drop pad lanes
    return jnp.transpose(out, (0, 3, 1, 2))                      # NHWC -> NCHW


# ------------------------- pure-JAX reference --------------------------------
def resblock_ref(x_nchw, params):
    w1, w2, wsk, g1, b1, g2, b2, gs, bs = params
    x = jnp.transpose(x_nchw, (0, 2, 3, 1))
    dn = ('NHWC', 'HWIO', 'NHWC')

    def bn(y, g, b):
        m = jnp.mean(y, axis=(0, 1, 2), keepdims=True)
        v = jnp.mean((y - m) ** 2, axis=(0, 1, 2), keepdims=True)
        return (y - m) * lax.rsqrt(v + EPS) * g + b

    y = lax.conv_general_dilated(x, w1, (1, 1), 'SAME', dimension_numbers=dn)
    y = jnp.maximum(bn(y, g1, b1), 0.0)
    y = lax.conv_general_dilated(y, w2, (1, 1), 'SAME', dimension_numbers=dn)
    y = bn(y, g2, b2)
    s = lax.conv_general_dilated(x, wsk, (1, 1), 'SAME', dimension_numbers=dn)
    s = bn(s, gs, bs)
    return jnp.transpose(jnp.maximum(y + s, 0.0), (0, 3, 1, 2))


if __name__ == "__main__":
    # Small shapes consistent with ResBlock(in_planes=4, out_planes=8).
    N, Cin, Cout, H, W = 2, 4, 8, 16, 16
    key = jax.random.PRNGKey(0)
    ks = jax.random.split(key, 10)

    x = jax.random.normal(ks[0], (N, Cin, H, W), jnp.float32)     # NCHW input
    w1 = 0.1 * jax.random.normal(ks[1], (3, 3, Cin, Cout), jnp.float32)
    w2 = 0.1 * jax.random.normal(ks[2], (3, 3, Cout, Cout), jnp.float32)
    wsk = 0.1 * jax.random.normal(ks[3], (1, 1, Cin, Cout), jnp.float32)
    g1 = 1.0 + 0.1 * jax.random.normal(ks[4], (Cout,), jnp.float32)
    b1 = 0.1 * jax.random.normal(ks[5], (Cout,), jnp.float32)
    g2 = 1.0 + 0.1 * jax.random.normal(ks[6], (Cout,), jnp.float32)
    b2 = 0.1 * jax.random.normal(ks[7], (Cout,), jnp.float32)
    gs = 1.0 + 0.1 * jax.random.normal(ks[8], (Cout,), jnp.float32)
    bs = 0.1 * jax.random.normal(ks[9], (Cout,), jnp.float32)
    params = (w1, w2, wsk, g1, b1, g2, b2, gs, bs)

    out = jax.block_until_ready(resblock_forward(x, params))
    ref = jax.block_until_ready(resblock_ref(x, params))

    assert out.shape == (N, Cout, H, W), out.shape
    err = float(jnp.max(jnp.abs(out - ref)))
    assert jnp.allclose(out, ref, rtol=5e-4, atol=5e-4), f"max abs err {err}"
    print("KERNEL_OK")
</pallas_src>

<mosaic_0001>
module attributes {stable_mosaic.version = 11 : i64} {
  func.func @resblock_kernel(%arg0: memref<2x18x18x4xf32, #tpu.memory_space<vmem>>, %arg1: memref<36x8xf32, #tpu.memory_space<vmem>>, %arg2: memref<72x128xf32, #tpu.memory_space<vmem>>, %arg3: memref<4x128xf32, #tpu.memory_space<vmem>>, %arg4: memref<1x8xf32, #tpu.memory_space<vmem>>, %arg5: memref<1x8xf32, #tpu.memory_space<vmem>>, %arg6: memref<1x128xf32, #tpu.memory_space<vmem>>, %arg7: memref<1x128xf32, #tpu.memory_space<vmem>>, %arg8: memref<1x128xf32, #tpu.memory_space<vmem>>, %arg9: memref<1x128xf32, #tpu.memory_space<vmem>>, %arg10: memref<512x128xf32, #tpu.memory_space<vmem>>, %arg11: memref<2x18x18x8xf32, #tpu.memory_space<vmem>>, %arg12: memref<512x36xf32, #tpu.memory_space<vmem>>, %arg13: memref<512x72xf32, #tpu.memory_space<vmem>>) attributes {dimension_semantics = [], scalar_prefetch = 0 : i64, scratch_operands = 3 : i64, tpu.core_type = #tpu.core_type<tc>} {
    %c0 = arith.constant 0 : index
    %c0_0 = arith.constant 0 : index
    %c0_1 = arith.constant 0 : index
    %c0_2 = arith.constant 0 : index
    %0 = vector.load %arg0[%c0, %c0_0, %c0_1, %c0_2] : memref<2x18x18x4xf32, #tpu.memory_space<vmem>>, vector<2x16x16x4xf32>
    %1 = vector.shape_cast %0 : vector<2x16x16x4xf32> to vector<512x4xf32>
    %c0_3 = arith.constant 0 : index
    %c0_4 = arith.constant 0 : index
    %2 = vector.load %arg12[%c0_3, %c0_4] : memref<512x36xf32, #tpu.memory_space<vmem>>, vector<512x4xf32>
    tpu.vector_store %arg12[%c0_3, %c0_4], %1 {strides = array<i32>} : memref<512x36xf32, #tpu.memory_space<vmem>>, vector<512x4xf32>,
    %c0_5 = arith.constant 0 : index
    %c0_6 = arith.constant 0 : index
    %c1 = arith.constant 1 : index
    %c0_7 = arith.constant 0 : index
    %3 = vector.load %arg0[%c0_5, %c0_6, %c1, %c0_7] : memref<2x18x18x4xf32, #tpu.memory_space<vmem>>, vector<2x16x16x4xf32>
    %4 = vector.shape_cast %3 : vector<2x16x16x4xf32> to vector<512x4xf32>
    %c0_8 = arith.constant 0 : index
    %c4 = arith.constant 4 : index
    %5 = vector.load %arg12[%c0_8, %c4] : memref<512x36xf32, #tpu.memory_space<vmem>>, vector<512x4xf32>
    tpu.vector_store %arg12[%c0_8, %c4], %4 {strides = array<i32>} : memref<512x36xf32, #tpu.memory_space<vmem>>, vector<512x4xf32>,
    %c0_9 = arith.constant 0 : index
    %c0_10 = arith.constant 0 : index
    %c2 = arith.constant 2 : index
    %c0_11 = arith.constant 0 : index
    %6 = vector.load %arg0[%c0_9, %c0_10, %c2, %c0_11] : memref<2x18x18x4xf32, #tpu.memory_space<vmem>>, vector<2x16x16x4xf32>
    %7 = vector.shape_cast %6 : vector<2x16x16x4xf32> to vector<512x4xf32>
    %c0_12 = arith.constant 0 : index
    %c8 = arith.constant 8 : index
    %8 = vector.load %arg12[%c0_12, %c8] : memref<512x36xf32, #tpu.memory_space<vmem>>, vector<512x4xf32>
    tpu.vector_store %arg12[%c0_12, %c8], %7 {strides = array<i32>} : memref<512x36xf32, #tpu.memory_space<vmem>>, vector<512x4xf32>,
    %c0_13 = arith.constant 0 : index
    %c1_14 = arith.constant 1 : index
    %c0_15 = arith.constant 0 : index
    %c0_16 = arith.constant 0 : index
    %9 = vector.load %arg0[%c0_13, %c1_14, %c0_15, %c0_16] : memref<2x18x18x4xf32, #tpu.memory_space<vmem>>, vector<2x16x16x4xf32>
    %10 = vector.shape_cast %9 : vector<2x16x16x4xf32> to vector<512x4xf32>
    %c0_17 = arith.constant 0 : index
    %c12 = arith.constant 12 : index
    %11 = vector.load %arg12[%c0_17, %c12] : memref<512x36xf32, #tpu.memory_space<vmem>>, vector<512x4xf32>
    tpu.vector_store %arg12[%c0_17, %c12], %10 {strides = array<i32>} : memref<512x36xf32, #tpu.memory_space<vmem>>, vector<512x4xf32>,
    %c0_18 = arith.constant 0 : index
    %c1_19 = arith.constant 1 : index
    %c1_20 = arith.constant 1 : index
    %c0_21 = arith.constant 0 : index
    %12 = vector.load %arg0[%c0_18, %c1_19, %c1_20, %c0_21] : memref<2x18x18x4xf32, #tpu.memory_space<vmem>>, vector<2x16x16x4xf32>
    %13 = vector.shape_cast %12 : vector<2x16x16x4xf32> to vector<512x4xf32>
    %c0_22 = arith.constant 0 : index
    %c16 = arith.constant 16 : index
    %14 = vector.load %arg12[%c0_22, %c16] : memref<512x36xf32, #tpu.memory_space<vmem>>, vector<512x4xf32>
    tpu.vector_store %arg12[%c0_22, %c16], %13 {strides = array<i32>} : memref<512x36xf32, #tpu.memory_space<vmem>>, vector<512x4xf32>,
    %c0_23 = arith.constant 0 : index
    %c1_24 = arith.constant 1 : index
    %c2_25 = arith.constant 2 : index
    %c0_26 = arith.constant 0 : index
    %15 = vector.load %arg0[%c0_23, %c1_24, %c2_25, %c0_26] : memref<2x18x18x4xf32, #tpu.memory_space<vmem>>, vector<2x16x16x4xf32>
    %16 = vector.shape_cast %15 : vector<2x16x16x4xf32> to vector<512x4xf32>
    %c0_27 = arith.constant 0 : index
    %c20 = arith.constant 20 : index
    %17 = vector.load %arg12[%c0_27, %c20] : memref<512x36xf32, #tpu.memory_space<vmem>>, vector<512x4xf32>
    tpu.vector_store %arg12[%c0_27, %c20], %16 {strides = array<i32>} : memref<512x36xf32, #tpu.memory_space<vmem>>, vector<512x4xf32>,
    %c0_28 = arith.constant 0 : index
    %c2_29 = arith.constant 2 : index
    %c0_30 = arith.constant 0 : index
    %c0_31 = arith.constant 0 : index
    %18 = vector.load %arg0[%c0_28, %c2_29, %c0_30, %c0_31] : memref<2x18x18x4xf32, #tpu.memory_space<vmem>>, vector<2x16x16x4xf32>
    %19 = vector.shape_cast %18 : vector<2x16x16x4xf32> to vector<512x4xf32>
    %c0_32 = arith.constant 0 : index
    %c24 = arith.constant 24 : index
    %20 = vector.load %arg12[%c0_32, %c24] : memref<512x36xf32, #tpu.memory_space<vmem>>, vector<512x4xf32>
    tpu.vector_store %arg12[%c0_32, %c24], %19 {strides = array<i32>} : memref<512x36xf32, #tpu.memory_space<vmem>>, vector<512x4xf32>,
    %c0_33 = arith.constant 0 : index
    %c2_34 = arith.constant 2 : index
    %c1_35 = arith.constant 1 : index
    %c0_36 = arith.constant 0 : index
    %21 = vector.load %arg0[%c0_33, %c2_34, %c1_35, %c0_36] : memref<2x18x18x4xf32, #tpu.memory_space<vmem>>, vector<2x16x16x4xf32>
    %22 = vector.shape_cast %21 : vector<2x16x16x4xf32> to vector<512x4xf32>
    %c0_37 = arith.constant 0 : index
    %c28 = arith.constant 28 : index
    %23 = vector.load %arg12[%c0_37, %c28] : memref<512x36xf32, #tpu.memory_space<vmem>>, vector<512x4xf32>
    tpu.vector_store %arg12[%c0_37, %c28], %22 {strides = array<i32>} : memref<512x36xf32, #tpu.memory_space<vmem>>, vector<512x4xf32>,
    %c0_38 = arith.constant 0 : index
    %c2_39 = arith.constant 2 : index
    %c2_40 = arith.constant 2 : index
    %c0_41 = arith.constant 0 : index
    %24 = vector.load %arg0[%c0_38, %c2_39, %c2_40, %c0_41] : memref<2x18x18x4xf32, #tpu.memory_space<vmem>>, vector<2x16x16x4xf32>
    %25 = vector.shape_cast %24 : vector<2x16x16x4xf32> to vector<512x4xf32>
    %c0_42 = arith.constant 0 : index
    %c32 = arith.constant 32 : index
    %26 = vector.load %arg12[%c0_42, %c32] : memref<512x36xf32, #tpu.memory_space<vmem>>, vector<512x4xf32>
    tpu.vector_store %arg12[%c0_42, %c32], %25 {strides = array<i32>} : memref<512x36xf32, #tpu.memory_space<vmem>>, vector<512x4xf32>,
    %c0_43 = arith.constant 0 : index
    %c0_44 = arith.constant 0 : index
    %27 = vector.load %arg12[%c0_43, %c0_44] : memref<512x36xf32, #tpu.memory_space<vmem>>, vector<512x36xf32>
    %c0_45 = arith.constant 0 : index
    %c0_46 = arith.constant 0 : index
    %28 = vector.load %arg1[%c0_45, %c0_46] : memref<36x8xf32, #tpu.memory_space<vmem>>, vector<36x8xf32>
    %cst = arith.constant dense<0.000000e+00> : vector<512x8xf32>
    %29 = tpu.matmul %27, %28, %cst {dimension_numbers = #tpu.dot_dimension_numbers<[1], [0], [0], [1], [0, 0, 1, 1], [], []>} : vector<512x36xf32>, vector<36x8xf32>, vector<512x8xf32> -> vector<512x8xf32>
    %c0_47 = arith.constant 0 : index
    %c0_48 = arith.constant 0 : index
    %30 = vector.load %arg4[%c0_47, %c0_48] : memref<1x8xf32, #tpu.memory_space<vmem>>, vector<1x8xf32>
    %c0_49 = arith.constant 0 : index
    %c0_50 = arith.constant 0 : index
    %31 = vector.load %arg5[%c0_49, %c0_50] : memref<1x8xf32, #tpu.memory_space<vmem>>, vector<1x8xf32>
    %cst_51 = arith.constant dense<0.000000e+00> : vector<8xf32>
    %32 = vector.multi_reduction <add>, %29, %cst_51 [0] : vector<512x8xf32> to vector<8xf32>
    %33 = vector.shape_cast %32 : vector<8xf32> to vector<1x8xf32>
    %34 = arith.mulf %29, %29 : vector<512x8xf32>
    %cst_52 = arith.constant dense<0.000000e+00> : vector<8xf32>
    %35 = vector.multi_reduction <add>, %34, %cst_52 [0] : vector<512x8xf32> to vector<8xf32>
    %36 = vector.shape_cast %35 : vector<8xf32> to vector<1x8xf32>
    %cst_53 = arith.constant 0.001953125 : f32
    %37 = vector.broadcast %cst_53 : f32 to vector<1x8xf32>
    %38 = arith.mulf %33, %37 : vector<1x8xf32>
    %cst_54 = arith.constant 0.001953125 : f32
    %39 = vector.broadcast %cst_54 : f32 to vector<1x8xf32>
    %40 = arith.mulf %36, %39 : vector<1x8xf32>
    %41 = arith.mulf %38, %38 : vector<1x8xf32>
    %42 = arith.subf %40, %41 : vector<1x8xf32>
    %cst_55 = arith.constant 9.99999974E-6 : f32
    %43 = vector.broadcast %cst_55 : f32 to vector<1x8xf32>
    %44 = arith.addf %42, %43 : vector<1x8xf32>
    %45 = math.rsqrt %44 : vector<1x8xf32>
    %46 = arith.mulf %30, %45 : vector<1x8xf32>
    %47 = arith.mulf %38, %46 : vector<1x8xf32>
    %48 = arith.subf %31, %47 : vector<1x8xf32>
    %49 = vector.broadcast %46 : vector<1x8xf32> to vector<512x8xf32>
    %50 = arith.mulf %29, %49 : vector<512x8xf32>
    %51 = vector.broadcast %48 : vector<1x8xf32> to vector<512x8xf32>
    %52 = arith.addf %50, %51 : vector<512x8xf32>
    %cst_56 = arith.constant 0.000000e+00 : f32
    %53 = vector.broadcast %cst_56 : f32 to vector<512x8xf32>
    %54 = arith.maximumf %52, %53 : vector<512x8xf32>
    %c0_57 = arith.constant 0 : index
    %c0_58 = arith.constant 0 : index
    %55 = vector.load %arg3[%c0_57, %c0_58] : memref<4x128xf32, #tpu.memory_space<vmem>>, vector<4x128xf32>
    %cst_59 = arith.constant dense<0.000000e+00> : vector<512x128xf32>
    %56 = tpu.matmul %13, %55, %cst_59 {dimension_numbers = #tpu.dot_dimension_numbers<[1], [0], [0], [1], [0, 0, 1, 1], [], []>} : vector<512x4xf32>, vector<4x128xf32>, vector<512x128xf32> -> vector<512x128xf32>
    %c0_60 = arith.constant 0 : index
    %c0_61 = arith.constant 0 : index
    %57 = vector.load %arg8[%c0_60, %c0_61] : memref<1x128xf32, #tpu.memory_space<vmem>>, vector<1x128xf32>
    %c0_62 = arith.constant 0 : index
    %c0_63 = arith.constant 0 : index
    %58 = vector.load %arg9[%c0_62, %c0_63] : memref<1x128xf32, #tpu.memory_space<vmem>>, vector<1x128xf32>
    %cst_64 = arith.constant dense<0.000000e+00> : vector<128xf32>
    %59 = vector.multi_reduction <add>, %56, %cst_64 [0] : vector<512x128xf32> to vector<128xf32>
    %60 = vector.shape_cast %59 : vector<128xf32> to vector<1x128xf32>
    %61 = arith.mulf %56, %56 : vector<512x128xf32>
    %cst_65 = arith.constant dense<0.000000e+00> : vector<128xf32>
    %62 = vector.multi_reduction <add>, %61, %cst_65 [0] : vector<512x128xf32> to vector<128xf32>
    %63 = vector.shape_cast %62 : vector<128xf32> to vector<1x128xf32>
    %cst_66 = arith.constant 0.001953125 : f32
    %64 = vector.broadcast %cst_66 : f32 to vector<1x128xf32>
    %65 = arith.mulf %60, %64 : vector<1x128xf32>
    %cst_67 = arith.constant 0.001953125 : f32
    %66 = vector.broadcast %cst_67 : f32 to vector<1x128xf32>
    %67 = arith.mulf %63, %66 : vector<1x128xf32>
    %68 = arith.mulf %65, %65 : vector<1x128xf32>
    %69 = arith.subf %67, %68 : vector<1x128xf32>
    %cst_68 = arith.constant 9.99999974E-6 : f32
    %70 = vector.broadcast %cst_68 : f32 to vector<1x128xf32>
    %71 = arith.addf %69, %70 : vector<1x128xf32>
    %72 = math.rsqrt %71 : vector<1x128xf32>
    %73 = arith.mulf %57, %72 : vector<1x128xf32>
    %74 = arith.mulf %65, %73 : vector<1x128xf32>
    %75 = arith.subf %58, %74 : vector<1x128xf32>
    %76 = vector.broadcast %73 : vector<1x128xf32> to vector<512x128xf32>
    %77 = arith.mulf %56, %76 : vector<512x128xf32>
    %78 = vector.broadcast %75 : vector<1x128xf32> to vector<512x128xf32>
    %79 = arith.addf %77, %78 : vector<512x128xf32>
    %cst_69 = arith.constant 0.000000e+00 : f32
    %80 = vector.broadcast %cst_69 : f32 to vector<2x1x18x8xf32>
    %c0_70 = arith.constant 0 : index
    %c0_71 = arith.constant 0 : index
    %c0_72 = arith.constant 0 : index
    %c0_73 = arith.constant 0 : index
    %81 = vector.load %arg11[%c0_70, %c0_71, %c0_72, %c0_73] : memref<2x18x18x8xf32, #tpu.memory_space<vmem>>, vector<2x1x18x8xf32>
    tpu.vector_store %arg11[%c0_70, %c0_71, %c0_72, %c0_73], %80 {strides = array<i32>} : memref<2x18x18x8xf32, #tpu.memory_space<vmem>>, vector<2x1x18x8xf32>,
    %cst_74 = arith.constant 0.000000e+00 : f32
    %82 = vector.broadcast %cst_74 : f32 to vector<2x1x18x8xf32>
    %c0_75 = arith.constant 0 : index
    %c17 = arith.constant 17 : index
    %c0_76 = arith.constant 0 : index
    %c0_77 = arith.constant 0 : index
    %83 = vector.load %arg11[%c0_75, %c17, %c0_76, %c0_77] : memref<2x18x18x8xf32, #tpu.memory_space<vmem>>, vector<2x1x18x8xf32>
    tpu.vector_store %arg11[%c0_75, %c17, %c0_76, %c0_77], %82 {strides = array<i32>} : memref<2x18x18x8xf32, #tpu.memory_space<vmem>>, vector<2x1x18x8xf32>,
    %cst_78 = arith.constant 0.000000e+00 : f32
    %84 = vector.broadcast %cst_78 : f32 to vector<2x18x1x8xf32>
    %c0_79 = arith.constant 0 : index
    %c0_80 = arith.constant 0 : index
    %c0_81 = arith.constant 0 : index
    %c0_82 = arith.constant 0 : index
    %85 = vector.load %arg11[%c0_79, %c0_80, %c0_81, %c0_82] : memref<2x18x18x8xf32, #tpu.memory_space<vmem>>, vector<2x18x1x8xf32>
    tpu.vector_store %arg11[%c0_79, %c0_80, %c0_81, %c0_82], %84 {strides = array<i32>} : memref<2x18x18x8xf32, #tpu.memory_space<vmem>>, vector<2x18x1x8xf32>,
    %cst_83 = arith.constant 0.000000e+00 : f32
    %86 = vector.broadcast %cst_83 : f32 to vector<2x18x1x8xf32>
    %c0_84 = arith.constant 0 : index
    %c0_85 = arith.constant 0 : index
    %c17_86 = arith.constant 17 : index
    %c0_87 = arith.constant 0 : index
    %87 = vector.load %arg11[%c0_84, %c0_85, %c17_86, %c0_87] : memref<2x18x18x8xf32, #tpu.memory_space<vmem>>, vector<2x18x1x8xf32>
    tpu.vector_store %arg11[%c0_84, %c0_85, %c17_86, %c0_87], %86 {strides = array<i32>} : memref<2x18x18x8xf32, #tpu.memory_space<vmem>>, vector<2x18x1x8xf32>,
    %88 = vector.shape_cast %54 : vector<512x8xf32> to vector<2x16x16x8xf32>
    %c0_88 = arith.constant 0 : index
    %c1_89 = arith.constant 1 : index
    %c1_90 = arith.constant 1 : index
    %c0_91 = arith.constant 0 : index
    %89 = vector.load %arg11[%c0_88, %c1_89, %c1_90, %c0_91] : memref<2x18x18x8xf32, #tpu.memory_space<vmem>>, vector<2x16x16x8xf32>
    tpu.vector_store %arg11[%c0_88, %c1_89, %c1_90, %c0_91], %88 {strides = array<i32>} : memref<2x18x18x8xf32, #tpu.memory_space<vmem>>, vector<2x16x16x8xf32>,
    %c0_92 = arith.constant 0 : index
    %c0_93 = arith.constant 0 : index
    %c0_94 = arith.constant 0 : index
    %c0_95 = arith.constant 0 : index
    %90 = vector.load %arg11[%c0_92, %c0_93, %c0_94, %c0_95] : memref<2x18x18x8xf32, #tpu.memory_space<vmem>>, vector<2x16x16x8xf32>
    %91 = vector.shape_cast %90 : vector<2x16x16x8xf32> to vector<512x8xf32>
    %c0_96 = arith.constant 0 : index
    %c0_97 = arith.constant 0 : index
    %92 = vector.load %arg13[%c0_96, %c0_97] : memref<512x72xf32, #tpu.memory_space<vmem>>, vector<512x8xf32>
    tpu.vector_store %arg13[%c0_96, %c0_97], %91 {strides = array<i32>} : memref<512x72xf32, #tpu.memory_space<vmem>>, vector<512x8xf32>,
    %c0_98 = arith.constant 0 : index
    %c0_99 = arith.constant 0 : index
    %c1_100 = arith.constant 1 : index
    %c0_101 = arith.constant 0 : index
    %93 = vector.load %arg11[%c0_98, %c0_99, %c1_100, %c0_101] : memref<2x18x18x8xf32, #tpu.memory_space<vmem>>, vector<2x16x16x8xf32>
    %94 = vector.shape_cast %93 : vector<2x16x16x8xf32> to vector<512x8xf32>
    %c0_102 = arith.constant 0 : index
    %c8_103 = arith.constant 8 : index
    %95 = vector.load %arg13[%c0_102, %c8_103] : memref<512x72xf32, #tpu.memory_space<vmem>>, vector<512x8xf32>
    tpu.vector_store %arg13[%c0_102, %c8_103], %94 {strides = array<i32>} : memref<512x72xf32, #tpu.memory_space<vmem>>, vector<512x8xf32>,
    %c0_104 = arith.constant 0 : index
    %c0_105 = arith.constant 0 : index
    %c2_106 = arith.constant 2 : index
    %c0_107 = arith.constant 0 : index
    %96 = vector.load %arg11[%c0_104, %c0_105, %c2_106, %c0_107] : memref<2x18x18x8xf32, #tpu.memory_space<vmem>>, vector<2x16x16x8xf32>
    %97 = vector.shape_cast %96 : vector<2x16x16x8xf32> to vector<512x8xf32>
    %c0_108 = arith.constant 0 : index
    %c16_109 = arith.constant 16 : index
    %98 = vector.load %arg13[%c0_108, %c16_109] : memref<512x72xf32, #tpu.memory_space<vmem>>, vector<512x8xf32>
    tpu.vector_store %arg13[%c0_108, %c16_109], %97 {strides = array<i32>} : memref<512x72xf32, #tpu.memory_space<vmem>>, vector<512x8xf32>,
    %c0_110 = arith.constant 0 : index
    %c1_111 = arith.constant 1 : index
    %c0_112 = arith.constant 0 : index
    %c0_113 = arith.constant 0 : index
    %99 = vector.load %arg11[%c0_110, %c1_111, %c0_112, %c0_113] : memref<2x18x18x8xf32, #tpu.memory_space<vmem>>, vector<2x16x16x8xf32>
    %100 = vector.shape_cast %99 : vector<2x16x16x8xf32> to vector<512x8xf32>
    %c0_114 = arith.constant 0 : index
    %c24_115 = arith.constant 24 : index
    %101 = vector.load %arg13[%c0_114, %c24_115] : memref<512x72xf32, #tpu.memory_space<vmem>>, vector<512x8xf32>
    tpu.vector_store %arg13[%c0_114, %c24_115], %100 {strides = array<i32>} : memref<512x72xf32, #tpu.memory_space<vmem>>, vector<512x8xf32>,
    %c0_116 = arith.constant 0 : index
    %c1_117 = arith.constant 1 : index
    %c1_118 = arith.constant 1 : index
    %c0_119 = arith.constant 0 : index
    %102 = vector.load %arg11[%c0_116, %c1_117, %c1_118, %c0_119] : memref<2x18x18x8xf32, #tpu.memory_space<vmem>>, vector<2x16x16x8xf32>
    %103 = vector.shape_cast %102 : vector<2x16x16x8xf32> to vector<512x8xf32>
    %c0_120 = arith.constant 0 : index
    %c32_121 = arith.constant 32 : index
    %104 = vector.load %arg13[%c0_120, %c32_121] : memref<512x72xf32, #tpu.memory_space<vmem>>, vector<512x8xf32>
    tpu.vector_store %arg13[%c0_120, %c32_121], %103 {strides = array<i32>} : memref<512x72xf32, #tpu.memory_space<vmem>>, vector<512x8xf32>,
    %c0_122 = arith.constant 0 : index
    %c1_123 = arith.constant 1 : index
    %c2_124 = arith.constant 2 : index
    %c0_125 = arith.constant 0 : index
    %105 = vector.load %arg11[%c0_122, %c1_123, %c2_124, %c0_125] : memref<2x18x18x8xf32, #tpu.memory_space<vmem>>, vector<2x16x16x8xf32>
    %106 = vector.shape_cast %105 : vector<2x16x16x8xf32> to vector<512x8xf32>
    %c0_126 = arith.constant 0 : index
    %c40 = arith.constant 40 : index
    %107 = vector.load %arg13[%c0_126, %c40] : memref<512x72xf32, #tpu.memory_space<vmem>>, vector<512x8xf32>
    tpu.vector_store %arg13[%c0_126, %c40], %106 {strides = array<i32>} : memref<512x72xf32, #tpu.memory_space<vmem>>, vector<512x8xf32>,
    %c0_127 = arith.constant 0 : index
    %c2_128 = arith.constant 2 : index
    %c0_129 = arith.constant 0 : index
    %c0_130 = arith.constant 0 : index
    %108 = vector.load %arg11[%c0_127, %c2_128, %c0_129, %c0_130] : memref<2x18x18x8xf32, #tpu.memory_space<vmem>>, vector<2x16x16x8xf32>
    %109 = vector.shape_cast %108 : vector<2x16x16x8xf32> to vector<512x8xf32>
    %c0_131 = arith.constant 0 : index
    %c48 = arith.constant 48 : index
    %110 = vector.load %arg13[%c0_131, %c48] : memref<512x72xf32, #tpu.memory_space<vmem>>, vector<512x8xf32>
    tpu.vector_store %arg13[%c0_131, %c48], %109 {strides = array<i32>} : memref<512x72xf32, #tpu.memory_space<vmem>>, vector<512x8xf32>,
    %c0_132 = arith.constant 0 : index
    %c2_133 = arith.constant 2 : index
    %c1_134 = arith.constant 1 : index
    %c0_135 = arith.constant 0 : index
    %111 = vector.load %arg11[%c0_132, %c2_133, %c1_134, %c0_135] : memref<2x18x18x8xf32, #tpu.memory_space<vmem>>, vector<2x16x16x8xf32>
    %112 = vector.shape_cast %111 : vector<2x16x16x8xf32> to vector<512x8xf32>
    %c0_136 = arith.constant 0 : index
    %c56 = arith.constant 56 : index
    %113 = vector.load %arg13[%c0_136, %c56] : memref<512x72xf32, #tpu.memory_space<vmem>>, vector<512x8xf32>
    tpu.vector_store %arg13[%c0_136, %c56], %112 {strides = array<i32>} : memref<512x72xf32, #tpu.memory_space<vmem>>, vector<512x8xf32>,
    %c0_137 = arith.constant 0 : index
    %c2_138 = arith.constant 2 : index
    %c2_139 = arith.constant 2 : index
    %c0_140 = arith.constant 0 : index
    %114 = vector.load %arg11[%c0_137, %c2_138, %c2_139, %c0_140] : memref<2x18x18x8xf32, #tpu.memory_space<vmem>>, vector<2x16x16x8xf32>
    %115 = vector.shape_cast %114 : vector<2x16x16x8xf32> to vector<512x8xf32>
    %c0_141 = arith.constant 0 : index
    %c64 = arith.constant 64 : index
    %116 = vector.load %arg13[%c0_141, %c64] : memref<512x72xf32, #tpu.memory_space<vmem>>, vector<512x8xf32>
    tpu.vector_store %arg13[%c0_141, %c64], %115 {strides = array<i32>} : memref<512x72xf32, #tpu.memory_space<vmem>>, vector<512x8xf32>,
    %c0_142 = arith.constant 0 : index
    %c0_143 = arith.constant 0 : index
    %117 = vector.load %arg13[%c0_142, %c0_143] : memref<512x72xf32, #tpu.memory_space<vmem>>, vector<512x72xf32>
    %c0_144 = arith.constant 0 : index
    %c0_145 = arith.constant 0 : index
    %118 = vector.load %arg2[%c0_144, %c0_145] : memref<72x128xf32, #tpu.memory_space<vmem>>, vector<72x128xf32>
    %cst_146 = arith.constant dense<0.000000e+00> : vector<512x128xf32>
    %119 = tpu.matmul %117, %118, %cst_146 {dimension_numbers = #tpu.dot_dimension_numbers<[1], [0], [0], [1], [0, 0, 1, 1], [], []>} : vector<512x72xf32>, vector<72x128xf32>, vector<512x128xf32> -> vector<512x128xf32>
    %c0_147 = arith.constant 0 : index
    %c0_148 = arith.constant 0 : index
    %120 = vector.load %arg6[%c0_147, %c0_148] : memref<1x128xf32, #tpu.memory_space<vmem>>, vector<1x128xf32>
    %c0_149 = arith.constant 0 : index
    %c0_150 = arith.constant 0 : index
    %121 = vector.load %arg7[%c0_149, %c0_150] : memref<1x128xf32, #tpu.memory_space<vmem>>, vector<1x128xf32>
    %cst_151 = arith.constant dense<0.000000e+00> : vector<128xf32>
    %122 = vector.multi_reduction <add>, %119, %cst_151 [0] : vector<512x128xf32> to vector<128xf32>
    %123 = vector.shape_cast %122 : vector<128xf32> to vector<1x128xf32>
    %124 = arith.mulf %119, %119 : vector<512x128xf32>
    %cst_152 = arith.constant dense<0.000000e+00> : vector<128xf32>
    %125 = vector.multi_reduction <add>, %124, %cst_152 [0] : vector<512x128xf32> to vector<128xf32>
    %126 = vector.shape_cast %125 : vector<128xf32> to vector<1x128xf32>
    %cst_153 = arith.constant 0.001953125 : f32
    %127 = vector.broadcast %cst_153 : f32 to vector<1x128xf32>
    %128 = arith.mulf %123, %127 : vector<1x128xf32>
    %cst_154 = arith.constant 0.001953125 : f32
    %129 = vector.broadcast %cst_154 : f32 to vector<1x128xf32>
    %130 = arith.mulf %126, %129 : vector<1x128xf32>
    %131 = arith.mulf %128, %128 : vector<1x128xf32>
    %132 = arith.subf %130, %131 : vector<1x128xf32>
    %cst_155 = arith.constant 9.99999974E-6 : f32
    %133 = vector.broadcast %cst_155 : f32 to vector<1x128xf32>
    %134 = arith.addf %132, %133 : vector<1x128xf32>
    %135 = math.rsqrt %134 : vector<1x128xf32>
    %136 = arith.mulf %120, %135 : vector<1x128xf32>
    %137 = arith.mulf %128, %136 : vector<1x128xf32>
    %138 = arith.subf %121, %137 : vector<1x128xf32>
    %139 = vector.broadcast %136 : vector<1x128xf32> to vector<512x128xf32>
    %140 = arith.mulf %119, %139 : vector<512x128xf32>
    %141 = vector.broadcast %138 : vector<1x128xf32> to vector<512x128xf32>
    %142 = arith.addf %140, %141 : vector<512x128xf32>
    %143 = arith.addf %142, %79 : vector<512x128xf32>
    %cst_156 = arith.constant 0.000000e+00 : f32
    %144 = vector.broadcast %cst_156 : f32 to vector<512x128xf32>
    %145 = arith.maximumf %143, %144 : vector<512x128xf32>
    %c0_157 = arith.constant 0 : index
    %c0_158 = arith.constant 0 : index
    %146 = vector.load %arg10[%c0_157, %c0_158] : memref<512x128xf32, #tpu.memory_space<vmem>>, vector<512x128xf32>
    tpu.vector_store %arg10[%c0_157, %c0_158], %145 {strides = array<i32>} : memref<512x128xf32, #tpu.memory_space<vmem>>, vector<512x128xf32>,
    return
  }
}

</mosaic_0001>

<llo_original>
// kernel: tpu_custom_call.1
$region0: #{tpu_custom_call.1}
  #allocation0 [shape = 'u32[]', space=smem, size = 0x4, offset = 0x4, fixed_abs, tag = 'smem constant byte address 0x4 - core index']
  #allocation1 [shape = 'u32[144,128]{1,0:T(1,128)}', space=vmem, size = 0x12000, scoped, tag = 'internal scratch']
  #allocation2 [shape = 'f32[2,18,18,8]{3,2,1,0:T(8,128)}', space=vmem, size = 0x6c000, scoped, tag = 'scratch operand']
  #allocation3 [shape = 'f32[512,36]{1,0:T(8,128)}', space=vmem, size = 0x40000, scoped, tag = 'scratch operand']
  #allocation4 [shape = 'f32[512,72]{1,0:T(8,128)}', space=vmem, size = 0x40000, scoped, tag = 'scratch operand']
  %s0 = inlined_call_operand.vmem [shape: f32[2,18,18,4], index: 0, kind: input, shape index: {}]
  %s1 = inlined_call_operand.vmem [shape: f32[36,8], index: 1, kind: input, shape index: {}]
  %s2 = inlined_call_operand.vmem [shape: f32[72,128], index: 2, kind: input, shape index: {}]
  %s3 = inlined_call_operand.vmem [shape: f32[4,128], index: 3, kind: input, shape index: {}]
  %s4 = inlined_call_operand.vmem [shape: f32[1,8], index: 4, kind: input, shape index: {}]
  %s5 = inlined_call_operand.vmem [shape: f32[1,8], index: 5, kind: input, shape index: {}]
  %s6 = inlined_call_operand.vmem [shape: f32[1,128], index: 6, kind: input, shape index: {}]
  %s7 = inlined_call_operand.vmem [shape: f32[1,128], index: 7, kind: input, shape index: {}]
  %s8 = inlined_call_operand.vmem [shape: f32[1,128], index: 8, kind: input, shape index: {}]
  %s9 = inlined_call_operand.vmem [shape: f32[1,128], index: 9, kind: input, shape index: {}]
  %s10 = inlined_call_operand.hbm [shape: f32[512,128], index: 10, kind: output, shape index: {}]
  %s11 = sld [smem:[#allocation0]]
  $region50: #{tpu_custom_call.1} parent=0
    _
  %s13 = ssub.s32 1, %s11
  %s14 = scalar_select 0, %s13, %s11
  $region1: #{tpu_custom_call.1} parent=0
    #allocation5 [shape = 'u8[262144]{0}', space=vmem, size = 0x40000, scoped, tag = 'output window, operand 0, single buffered']
    #allocation6 [shape = 's32[1]{0}', space=sflag, size = 0x4, scoped, tag = 'scoped memory for tpu_custom_call.1']
    %15 = vsyncpa [#allocation6], 0
    // Predicated region
    $region2: #{tpu_custom_call.1} parent=1 // pred_check
      _
    $region3: #{tpu_custom_call.1} parent=1 // pred_check_branch
      %17 = sbr.rel (0) target = $region5
    $region4: #{tpu_custom_call.1} parent=1 // pred_region
      _
    $region5: #{tpu_custom_call.1} parent=1 // pred_fallthru
      _
    // Predicated region
    $region6: #{tpu_custom_call.1} parent=1 // pred_check
      _
    $region7: #{tpu_custom_call.1} parent=1 // pred_check_branch
      %19 = sbr.rel (0) target = $region9
    $region8: #{tpu_custom_call.1} parent=1 // pred_region
      _
    $region9: #{tpu_custom_call.1} parent=1 // pred_fallthru
      _
    // Predicated region
    $region10: #{tpu_custom_call.1} parent=1 // pred_check
      _
    $region11: #{tpu_custom_call.1} parent=1 // pred_check_branch
      %21 = sbr.rel (0) target = $region13
    $region12: #{tpu_custom_call.1} parent=1 // pred_region
      _
    $region13: #{tpu_custom_call.1} parent=1 // pred_fallthru
      _
    // Predicated region
    $region14: #{tpu_custom_call.1} parent=1 // pred_check
      _
    $region15: #{tpu_custom_call.1} parent=1 // pred_check_branch
      %23 = sbr.rel (0) target = $region17
    $region16: #{tpu_custom_call.1} parent=1 // pred_region
      _
    $region17: #{tpu_custom_call.1} parent=1 // pred_fallthru
      _
    // Predicated region
    $region18: #{tpu_custom_call.1} parent=1 // pred_check
      _
    $region19: #{tpu_custom_call.1} parent=1 // pred_check_branch
      %25 = sbr.rel (0) target = $region21
    $region20: #{tpu_custom_call.1} parent=1 // pred_region
      _
    $region21: #{tpu_custom_call.1} parent=1 // pred_fallthru
      _
    // Predicated region
    $region22: #{tpu_custom_call.1} parent=1 // pred_check
      _
    $region23: #{tpu_custom_call.1} parent=1 // pred_check_branch
      %27 = sbr.rel (0) target = $region25
    $region24: #{tpu_custom_call.1} parent=1 // pred_region
      _
    $region25: #{tpu_custom_call.1} parent=1 // pred_fallthru
      _
    // Predicated region
    $region26: #{tpu_custom_call.1} parent=1 // pred_check
      _
    $region27: #{tpu_custom_call.1} parent=1 // pred_check_branch
      %29 = sbr.rel (0) target = $region29
    $region28: #{tpu_custom_call.1} parent=1 // pred_region
      _
    $region29: #{tpu_custom_call.1} parent=1 // pred_fallthru
      _
    // Predicated region
    $region30: #{tpu_custom_call.1} parent=1 // pred_check
      _
    $region31: #{tpu_custom_call.1} parent=1 // pred_check_branch
      %31 = sbr.rel (0) target = $region33
    $region32: #{tpu_custom_call.1} parent=1 // pred_region
      _
    $region33: #{tpu_custom_call.1} parent=1 // pred_fallthru
      _
    // Predicated region
    $region34: #{tpu_custom_call.1} parent=1 // pred_check
      _
    $region35: #{tpu_custom_call.1} parent=1 // pred_check_branch
      %33 = sbr.rel (0) target = $region37
    $region36: #{tpu_custom_call.1} parent=1 // pred_region
      _
    $region37: #{tpu_custom_call.1} parent=1 // pred_fallthru
      _
    // Predicated region
    $region38: #{tpu_custom_call.1} parent=1 // pred_check
      _
    $region39: #{tpu_custom_call.1} parent=1 // pred_check_branch
      %35 = sbr.rel (0) target = $region41
    $region40: #{tpu_custom_call.1} parent=1 // pred_region
      _
    $region41: #{tpu_custom_call.1} parent=1 // pred_fallthru
      _
    %v36 = vld [vmem:[%s0] sm:$0xff]
    %v37 = vld [vmem:[%s0 + $0x8] sm:$0xff]
    %v38 = vld [vmem:[%s0 + $0x18] sm:$0xff]
    %v39 = vld [vmem:[%s0 + $0x20] sm:$0xff]
    %v40 = vld [vmem:[%s0 + $0x30] sm:$0xff]
    %v41 = vld [vmem:[%s0 + $0x38] sm:$0xff]
    %v42 = vld [vmem:[%s0 + $0x48] sm:$0xff]
    %v43 = vld [vmem:[%s0 + $0x50] sm:$0xff]
    %v44 = vld [vmem:[%s0 + $0x60] sm:$0xff]
    %v45 = vld [vmem:[%s0 + $0x68] sm:$0xff]
    %v46 = vld [vmem:[%s0 + $0x78] sm:$0xff]
    %v47 = vld [vmem:[%s0 + $0x80] sm:$0xff]
    %v48 = vld [vmem:[%s0 + $0x90] sm:$0xff]
    %v49 = vld [vmem:[%s0 + $0x98] sm:$0xff]
    %v50 = vld [vmem:[%s0 + $0xa8] sm:$0xff]
    %v51 = vld [vmem:[%s0 + $0xb0] sm:$0xff]
    %v52 = vld [vmem:[%s0 + $0xc0] sm:$0xff]
    %v53 = vld [vmem:[%s0 + $0xc8] sm:$0xff]
    %v54 = vld [vmem:[%s0 + $0xd8] sm:$0xff]
    %v55 = vld [vmem:[%s0 + $0xe0] sm:$0xff]
    %v56 = vld [vmem:[%s0 + $0xf0] sm:$0xff]
    %v57 = vld [vmem:[%s0 + $0xf8] sm:$0xff]
    %v58 = vld [vmem:[%s0 + $0x108] sm:$0xff]
    %v59 = vld [vmem:[%s0 + $0x110] sm:$0xff]
    %v60 = vld [vmem:[%s0 + $0x120] sm:$0xff]
    %v61 = vld [vmem:[%s0 + $0x128] sm:$0xff]
    %v62 = vld [vmem:[%s0 + $0x138] sm:$0xff]
    %v63 = vld [vmem:[%s0 + $0x140] sm:$0xff]
    %v64 = vld [vmem:[%s0 + $0x150] sm:$0xff]
    %v65 = vld [vmem:[%s0 + $0x158] sm:$0xff]
    %v66 = vld [vmem:[%s0 + $0x168] sm:$0xff]
    %v67 = vld [vmem:[%s0 + $0x170] sm:$0xff]
    %v68 = vld [vmem:[%s0 + $0x1b0] sm:$0xff]
    %v69 = vld [vmem:[%s0 + $0x1b8] sm:$0xff]
    %v70 = vld [vmem:[%s0 + $0x1c8] sm:$0xff]
    %v71 = vld [vmem:[%s0 + $0x1d0] sm:$0xff]
    %v72 = vld [vmem:[%s0 + $0x1e0] sm:$0xff]
    %v73 = vld [vmem:[%s0 + $0x1e8] sm:$0xff]
    %v74 = vld [vmem:[%s0 + $0x1f8] sm:$0xff]
    %v75 = vld [vmem:[%s0 + $0x200] sm:$0xff]
    %v76 = vld [vmem:[%s0 + $0x210] sm:$0xff]
    %v77 = vld [vmem:[%s0 + $0x218] sm:$0xff]
    %v78 = vld [vmem:[%s0 + $0x228] sm:$0xff]
    %v79 = vld [vmem:[%s0 + $0x230] sm:$0xff]
    %v80 = vld [vmem:[%s0 + $0x240] sm:$0xff]
    %v81 = vld [vmem:[%s0 + $0x248] sm:$0xff]
    %v82 = vld [vmem:[%s0 + $0x258] sm:$0xff]
    %v83 = vld [vmem:[%s0 + $0x260] sm:$0xff]
    %v84 = vld [vmem:[%s0 + $0x270] sm:$0xff]
    %v85 = vld [vmem:[%s0 + $0x278] sm:$0xff]
    %v86 = vld [vmem:[%s0 + $0x288] sm:$0xff]
    %v87 = vld [vmem:[%s0 + $0x290] sm:$0xff]
    %v88 = vld [vmem:[%s0 + $0x2a0] sm:$0xff]
    %v89 = vld [vmem:[%s0 + $0x2a8] sm:$0xff]
    %v90 = vld [vmem:[%s0 + $0x2b8] sm:$0xff]
    %v91 = vld [vmem:[%s0 + $0x2c0] sm:$0xff]
    %v92 = vld [vmem:[%s0 + $0x2d0] sm:$0xff]
    %v93 = vld [vmem:[%s0 + $0x2d8] sm:$0xff]
    %v94 = vld [vmem:[%s0 + $0x2e8] sm:$0xff]
    %v95 = vld [vmem:[%s0 + $0x2f0] sm:$0xff]
    %v96 = vld [vmem:[%s0 + $0x300] sm:$0xff]
    %v97 = vld [vmem:[%s0 + $0x308] sm:$0xff]
    %v98 = vld [vmem:[%s0 + $0x318] sm:$0xff]
    %v99 = vld [vmem:[%s0 + $0x320] sm:$0xff]
    %vm100 = vcmask 31744
    %101 = vst.msk [vmem:[#allocation3] sm:$0xff] %vm100, %v36
    %102 = vst.msk [vmem:[#allocation3 + $0x8] sm:$0xff] %vm100, %v37
    %103 = vst.msk [vmem:[#allocation3 + $0x10] sm:$0xff] %vm100, %v38
    %104 = vst.msk [vmem:[#allocation3 + $0x18] sm:$0xff] %vm100, %v39
    %105 = vst.msk [vmem:[#allocation3 + $0x20] sm:$0xff] %vm100, %v40
    %106 = vst.msk [vmem:[#allocation3 + $0x28] sm:$0xff] %vm100, %v41
    %107 = vst.msk [vmem:[#allocation3 + $0x30] sm:$0xff] %vm100, %v42
    %108 = vst.msk [vmem:[#allocation3 + $0x38] sm:$0xff] %vm100, %v43
    %109 = vst.msk [vmem:[#allocation3 + $0x40] sm:$0xff] %vm100, %v44
    %110 = vst.msk [vmem:[#allocation3 + $0x48] sm:$0xff] %vm100, %v45
    %111 = vst.msk [vmem:[#allocation3 + $0x50] sm:$0xff] %vm100, %v46
    %112 = vst.msk [vmem:[#allocation3 + $0x58] sm:$0xff] %vm100, %v47
    %113 = vst.msk [vmem:[#allocation3 + $0x60] sm:$0xff] %vm100, %v48
    %114 = vst.msk [vmem:[#allocation3 + $0x68] sm:$0xff] %vm100, %v49
    %115 = vst.msk [vmem:[#allocation3 + $0x70] sm:$0xff] %vm100, %v50
    %116 = vst.msk [vmem:[#allocation3 + $0x78] sm:$0xff] %vm100, %v51
    %117 = vst.msk [vmem:[#allocation3 + $0x80] sm:$0xff] %vm100, %v52
    %118 = vst.msk [vmem:[#allocation3 + $0x88] sm:$0xff] %vm100, %v53
    %119 = vst.msk [vmem:[#allocation3 + $0x90] sm:$0xff] %vm100, %v54
    %120 = vst.msk [vmem:[#allocation3 + $0x98] sm:$0xff] %vm100, %v55
    %121 = vst.msk [vmem:[#allocation3 + $0xa0] sm:$0xff] %vm100, %v56
    %122 = vst.msk [vmem:[#allocation3 + $0xa8] sm:$0xff] %vm100, %v57
    %123 = vst.msk [vmem:[#allocation3 + $0xb0] sm:$0xff] %vm100, %v58
    %124 = vst.msk [vmem:[#allocation3 + $0xb8] sm:$0xff] %vm100, %v59
    %125 = vst.msk [vmem:[#allocation3 + $0xc0] sm:$0xff] %vm100, %v60
    %126 = vst.msk [vmem:[#allocation3 + $0xc8] sm:$0xff] %vm100, %v61
    %127 = vst.msk [vmem:[#allocation3 + $0xd0] sm:$0xff] %vm100, %v62
    %128 = vst.msk [vmem:[#allocation3 + $0xd8] sm:$0xff] %vm100, %v63
    %129 = vst.msk [vmem:[#allocation3 + $0xe0] sm:$0xff] %vm100, %v64
    %130 = vst.msk [vmem:[#allocation3 + $0xe8] sm:$0xff] %vm100, %v65
    %131 = vst.msk [vmem:[#allocation3 + $0xf0] sm:$0xff] %vm100, %v66
    %132 = vst.msk [vmem:[#allocation3 + $0xf8] sm:$0xff] %vm100, %v67
    %133 = vst.msk [vmem:[#allocation3 + $0x100] sm:$0xff] %vm100, %v68
    %134 = vst.msk [vmem:[#allocation3 + $0x108] sm:$0xff] %vm100, %v69
    %135 = vst.msk [vmem:[#allocation3 + $0x110] sm:$0xff] %vm100, %v70
    %136 = vst.msk [vmem:[#allocation3 + $0x118] sm:$0xff] %vm100, %v71
    %137 = vst.msk [vmem:[#allocation3 + $0x120] sm:$0xff] %vm100, %v72
    %138 = vst.msk [vmem:[#allocation3 + $0x128] sm:$0xff] %vm100, %v73
    %139 = vst.msk [vmem:[#allocation3 + $0x130] sm:$0xff] %vm100, %v74
    %140 = vst.msk [vmem:[#allocation3 + $0x138] sm:$0xff] %vm100, %v75
    %141 = vst.msk [vmem:[#allocation3 + $0x140] sm:$0xff] %vm100, %v76
    %142 = vst.msk [vmem:[#allocation3 + $0x148] sm:$0xff] %vm100, %v77
    %143 = vst.msk [vmem:[#allocation3 + $0x150] sm:$0xff] %vm100, %v78
    %144 = vst.msk [vmem:[#allocation3 + $0x158] sm:$0xff] %vm100, %v79
    %145 = vst.msk [vmem:[#allocation3 + $0x160] sm:$0xff] %vm100, %v80
    %146 = vst.msk [vmem:[#allocation3 + $0x168] sm:$0xff] %vm100, %v81
    %147 = vst.msk [vmem:[#allocation3 + $0x170] sm:$0xff] %vm100, %v82
    %148 = vst.msk [vmem:[#allocation3 + $0x178] sm:$0xff] %vm100, %v83
    %149 = vst.msk [vmem:[#allocation3 + $0x180] sm:$0xff] %vm100, %v84
    %150 = vst.msk [vmem:[#allocation3 + $0x188] sm:$0xff] %vm100, %v85
    %151 = vst.msk [vmem:[#allocation3 + $0x190] sm:$0xff] %vm100, %v86
    %152 = vst.msk [vmem:[#allocation3 + $0x198] sm:$0xff] %vm100, %v87
    %153 = vst.msk [vmem:[#allocation3 + $0x1a0] sm:$0xff] %vm100, %v88
    %154 = vst.msk [vmem:[#allocation3 + $0x1a8] sm:$0xff] %vm100, %v89
    %155 = vst.msk [vmem:[#allocation3 + $0x1b0] sm:$0xff] %vm100, %v90
    %156 = vst.msk [vmem:[#allocation3 + $0x1b8] sm:$0xff] %vm100, %v91
    %157 = vst.msk [vmem:[#allocation3 + $0x1c0] sm:$0xff] %vm100, %v92
    %158 = vst.msk [vmem:[#allocation3 + $0x1c8] sm:$0xff] %vm100, %v93
    %159 = vst.msk [vmem:[#allocation3 + $0x1d0] sm:$0xff] %vm100, %v94
    %160 = vst.msk [vmem:[#allocation3 + $0x1d8] sm:$0xff] %vm100, %v95
    %161 = vst.msk [vmem:[#allocation3 + $0x1e0] sm:$0xff] %vm100, %v96
    %162 = vst.msk [vmem:[#allocation3 + $0x1e8] sm:$0xff] %vm100, %v97
    %163 = vst.msk [vmem:[#allocation3 + $0x1f0] sm:$0xff] %vm100, %v98
    %164 = vst.msk [vmem:[#allocation3 + $0x1f8] sm:$0xff] %vm100, %v99
    %v165 = vld [vmem:[%s0 + $0x1] sm:$0xff]
    %v166 = vld [vmem:[%s0 + $0x9] sm:$0xff]
    %v167 = vld [vmem:[%s0 + $0x19] sm:$0xff]
    %v168 = vld [vmem:[%s0 + $0x21] sm:$0xff]
    %v169 = vld [vmem:[%s0 + $0x31] sm:$0xff]
    %v170 = vld [vmem:[%s0 + $0x39] sm:$0xff]
    %v171 = vld [vmem:[%s0 + $0x49] sm:$0xff]
    %v172 = vld [vmem:[%s0 + $0x51] sm:$0xff]
    %v173 = vld [vmem:[%s0 + $0x61] sm:$0xff]
    %v174 = vld [vmem:[%s0 + $0x69] sm:$0xff]
    %v175 = vld [vmem:[%s0 + $0x79] sm:$0xff]
    %v176 = vld [vmem:[%s0 + $0x81] sm:$0xff]
    %v177 = vld [vmem:[%s0 + $0x91] sm:$0xff]
    %v178 = vld [vmem:[%s0 + $0x99] sm:$0xff]
    %v179 = vld [vmem:[%s0 + $0xa9] sm:$0xff]
    %v180 = vld [vmem:[%s0 + $0xb1] sm:$0xff]
    %v181 = vld [vmem:[%s0 + $0xc1] sm:$0xff]
    %v182 = vld [vmem:[%s0 + $0xc9] sm:$0xff]
    %v183 = vld [vmem:[%s0 + $0xd9] sm:$0xff]
    %v184 = vld [vmem:[%s0 + $0xe1] sm:$0xff]
    %v185 = vld [vmem:[%s0 + $0xf1] sm:$0xff]
    %v186 = vld [vmem:[%s0 + $0xf9] sm:$0xff]
    %v187 = vld [vmem:[%s0 + $0x109] sm:$0xff]
    %v188 = vld [vmem:[%s0 + $0x111] sm:$0xff]
    %v189 = vld [vmem:[%s0 + $0x121] sm:$0xff]
    %v190 = vld [vmem:[%s0 + $0x129] sm:$0xff]
    %v191 = vld [vmem:[%s0 + $0x139] sm:$0xff]
    %v192 = vld [vmem:[%s0 + $0x141] sm:$0xff]
    %v193 = vld [vmem:[%s0 + $0x151] sm:$0xff]
    %v194 = vld [vmem:[%s0 + $0x159] sm:$0xff]
    %v195 = vld [vmem:[%s0 + $0x169] sm:$0xff]
    %v196 = vld [vmem:[%s0 + $0x171] sm:$0xff]
    %v197 = vld [vmem:[%s0 + $0x1b1] sm:$0xff]
    %v198 = vld [vmem:[%s0 + $0x1b9] sm:$0xff]
    %v199 = vld [vmem:[%s0 + $0x1c9] sm:$0xff]
    %v200 = vld [vmem:[%s0 + $0x1d1] sm:$0xff]
    %v201 = vld [vmem:[%s0 + $0x1e1] sm:$0xff]
    %v202 = vld [vmem:[%s0 + $0x1e9] sm:$0xff]
    %v203 = vld [vmem:[%s0 + $0x1f9] sm:$0xff]
    %v204 = vld [vmem:[%s0 + $0x201] sm:$0xff]
    %v205 = vld [vmem:[%s0 + $0x211] sm:$0xff]
    %v206 = vld [vmem:[%s0 + $0x219] sm:$0xff]
    %v207 = vld [vmem:[%s0 + $0x229] sm:$0xff]
    %v208 = vld [vmem:[%s0 + $0x231] sm:$0xff]
    %v209 = vld [vmem:[%s0 + $0x241] sm:$0xff]
    %v210 = vld [vmem:[%s0 + $0x249] sm:$0xff]
    %v211 = vld [vmem:[%s0 + $0x259] sm:$0xff]
    %v212 = vld [vmem:[%s0 + $0x261] sm:$0xff]
    %v213 = vld [vmem:[%s0 + $0x271] sm:$0xff]
    %v214 = vld [vmem:[%s0 + $0x279] sm:$0xff]
    %v215 = vld [vmem:[%s0 + $0x289] sm:$0xff]
    %v216 = vld [vmem:[%s0 + $0x291] sm:$0xff]
    %v217 = vld [vmem:[%s0 + $0x2a1] sm:$0xff]
    %v218 = vld [vmem:[%s0 + $0x2a9] sm:$0xff]
    %v219 = vld [vmem:[%s0 + $0x2b9] sm:$0xff]
    %v220 = vld [vmem:[%s0 + $0x2c1] sm:$0xff]
    %v221 = vld [vmem:[%s0 + $0x2d1] sm:$0xff]
    %v222 = vld [vmem:[%s0 + $0x2d9] sm:$0xff]
    %v223 = vld [vmem:[%s0 + $0x2e9] sm:$0xff]
    %v224 = vld [vmem:[%s0 + $0x2f1] sm:$0xff]
    %v225 = vld [vmem:[%s0 + $0x301] sm:$0xff]
    %v226 = vld [vmem:[%s0 + $0x309] sm:$0xff]
    %v227 = vld [vmem:[%s0 + $0x319] sm:$0xff]
    %v228 = vld [vmem:[%s0 + $0x321] sm:$0xff]
    %293 = vrot.lane.b32.xlu0 %v165, 4
    %v294 = vpop.permute.xlu0 %293
    %295 = vrot.lane.b32.xlu0 %v166, 4
    %v296 = vpop.permute.xlu0 %295
    %297 = vrot.lane.b32.xlu0 %v167, 4
    %v298 = vpop.permute.xlu0 %297
    %299 = vrot.lane.b32.xlu0 %v168, 4
    %v300 = vpop.permute.xlu0 %299
    %301 = vrot.lane.b32.xlu0 %v169, 4
    %v302 = vpop.permute.xlu0 %301
    %303 = vrot.lane.b32.xlu0 %v170, 4
    %v304 = vpop.permute.xlu0 %303
    %305 = vrot.lane.b32.xlu0 %v171, 4
    %v306 = vpop.permute.xlu0 %305
    %307 = vrot.lane.b32.xlu0 %v172, 4
    %v308 = vpop.permute.xlu0 %307
    %309 = vrot.lane.b32.xlu0 %v173, 4
    %v310 = vpop.permute.xlu0 %309
    %311 = vrot.lane.b32.xlu0 %v174, 4
    %v312 = vpop.permute.xlu0 %311
    %313 = vrot.lane.b32.xlu0 %v175, 4
    %v314 = vpop.permute.xlu0 %313
    %315 = vrot.lane.b32.xlu0 %v176, 4
    %v316 = vpop.permute.xlu0 %315
    %317 = vrot.lane.b32.xlu0 %v177, 4
    %v318 = vpop.permute.xlu0 %317
    %319 = vrot.lane.b32.xlu0 %v178, 4
    %v320 = vpop.permute.xlu0 %319
    %321 = vrot.lane.b32.xlu0 %v179, 4
    %v322 = vpop.permute.xlu0 %321
    %323 = vrot.lane.b32.xlu0 %v180, 4
    %v324 = vpop.permute.xlu0 %323
    %325 = vrot.lane.b32.xlu0 %v181, 4
    %v326 = vpop.permute.xlu0 %325
    %327 = vrot.lane.b32.xlu0 %v182, 4
    %v328 = vpop.permute.xlu0 %327
    %329 = vrot.lane.b32.xlu0 %v183, 4
    %v330 = vpop.permute.xlu0 %329
    %331 = vrot.lane.b32.xlu0 %v184, 4
    %v332 = vpop.permute.xlu0 %331
    %333 = vrot.lane.b32.xlu0 %v185, 4
    %v334 = vpop.permute.xlu0 %333
    %335 = vrot.lane.b32.xlu0 %v186, 4
    %v336 = vpop.permute.xlu0 %335
    %337 = vrot.lane.b32.xlu0 %v187, 4
    %v338 = vpop.permute.xlu0 %337
    %339 = vrot.lane.b32.xlu0 %v188, 4
    %v340 = vpop.permute.xlu0 %339
    %341 = vrot.lane.b32.xlu0 %v189, 4
    %v342 = vpop.permute.xlu0 %341
    %343 = vrot.lane.b32.xlu0 %v190, 4
    %v344 = vpop.permute.xlu0 %343
    %345 = vrot.lane.b32.xlu0 %v191, 4
    %v346 = vpop.permute.xlu0 %345
    %347 = vrot.lane.b32.xlu0 %v192, 4
    %v348 = vpop.permute.xlu0 %347
    %349 = vrot.lane.b32.xlu0 %v193, 4
    %v350 = vpop.permute.xlu0 %349
    %351 = vrot.lane.b32.xlu0 %v194, 4
    %v352 = vpop.permute.xlu0 %351
    %353 = vrot.lane.b32.xlu0 %v195, 4
    %v354 = vpop.permute.xlu0 %353
    %355 = vrot.lane.b32.xlu0 %v196, 4
    %v356 = vpop.permute.xlu0 %355
    %357 = vrot.lane.b32.xlu0 %v197, 4
    %v358 = vpop.permute.xlu0 %357
    %359 = vrot.lane.b32.xlu0 %v198, 4
    %v360 = vpop.permute.xlu0 %359
    %361 = vrot.lane.b32.xlu0 %v199, 4
    %v362 = vpop.permute.xlu0 %361
    %363 = vrot.lane.b32.xlu0 %v200, 4
    %v364 = vpop.permute.xlu0 %363
    %365 = vrot.lane.b32.xlu0 %v201, 4
    %v366 = vpop.permute.xlu0 %365
    %367 = vrot.lane.b32.xlu0 %v202, 4
    %v368 = vpop.permute.xlu0 %367
    %369 = vrot.lane.b32.xlu0 %v203, 4
    %v370 = vpop.permute.xlu0 %369
    %371 = vrot.lane.b32.xlu0 %v204, 4
    %v372 = vpop.permute.xlu0 %371
    %373 = vrot.lane.b32.xlu0 %v205, 4
    %v374 = vpop.permute.xlu0 %373
    %375 = vrot.lane.b32.xlu0 %v206, 4
    %v376 = vpop.permute.xlu0 %375
    %377 = vrot.lane.b32.xlu0 %v207, 4
    %v378 = vpop.permute.xlu0 %377
    %379 = vrot.lane.b32.xlu0 %v208, 4
    %v380 = vpop.permute.xlu0 %379
    %381 = vrot.lane.b32.xlu0 %v209, 4
    %v382 = vpop.permute.xlu0 %381
    %383 = vrot.lane.b32.xlu0 %v210, 4
    %v384 = vpop.permute.xlu0 %383
    %385 = vrot.lane.b32.xlu0 %v211, 4
    %v386 = vpop.permute.xlu0 %385
    %387 = vrot.lane.b32.xlu0 %v212, 4
    %v388 = vpop.permute.xlu0 %387
    %389 = vrot.lane.b32.xlu0 %v213, 4
    %v390 = vpop.permute.xlu0 %389
    %391 = vrot.lane.b32.xlu0 %v214, 4
    %v392 = vpop.permute.xlu0 %391
    %393 = vrot.lane.b32.xlu0 %v215, 4
    %v394 = vpop.permute.xlu0 %393
    %395 = vrot.lane.b32.xlu0 %v216, 4
    %v396 = vpop.permute.xlu0 %395
    %397 = vrot.lane.b32.xlu0 %v217, 4
    %v398 = vpop.permute.xlu0 %397
    %399 = vrot.lane.b32.xlu0 %v218, 4
    %v400 = vpop.permute.xlu0 %399
    %401 = vrot.lane.b32.xlu0 %v219, 4
    %v402 = vpop.permute.xlu0 %401
    %403 = vrot.lane.b32.xlu0 %v220, 4
    %v404 = vpop.permute.xlu0 %403
    %405 = vrot.lane.b32.xlu0 %v221, 4
    %v406 = vpop.permute.xlu0 %405
    %407 = vrot.lane.b32.xlu0 %v222, 4
    %v408 = vpop.permute.xlu0 %407
    %409 = vrot.lane.b32.xlu0 %v223, 4
    %v410 = vpop.permute.xlu0 %409
    %411 = vrot.lane.b32.xlu0 %v224, 4
    %v412 = vpop.permute.xlu0 %411
    %413 = vrot.lane.b32.xlu0 %v225, 4
    %v414 = vpop.permute.xlu0 %413
    %415 = vrot.lane.b32.xlu0 %v226, 4
    %v416 = vpop.permute.xlu0 %415
    %417 = vrot.lane.b32.xlu0 %v227, 4
    %v418 = vpop.permute.xlu0 %417
    %419 = vrot.lane.b32.xlu0 %v228, 4
    %v420 = vpop.permute.xlu0 %419
    %vm485 = vcmask 64544
    %486 = vst.msk [vmem:[#allocation3] sm:$0xff] %vm485, %v294
    %487 = vst.msk [vmem:[#allocation3 + $0x8] sm:$0xff] %vm485, %v296
    %488 = vst.msk [vmem:[#allocation3 + $0x10] sm:$0xff] %vm485, %v298
    %489 = vst.msk [vmem:[#allocation3 + $0x18] sm:$0xff] %vm485, %v300
    %490 = vst.msk [vmem:[#allocation3 + $0x20] sm:$0xff] %vm485, %v302
    %491 = vst.msk [vmem:[#allocation3 + $0x28] sm:$0xff] %vm485, %v304
    %492 = vst.msk [vmem:[#allocation3 + $0x30] sm:$0xff] %vm485, %v306
    %493 = vst.msk [vmem:[#allocation3 + $0x38] sm:$0xff] %vm485, %v308
    %494 = vst.msk [vmem:[#allocation3 + $0x40] sm:$0xff] %vm485, %v310
    %495 = vst.msk [vmem:[#allocation3 + $0x48] sm:$0xff] %vm485, %v312
    %496 = vst.msk [vmem:[#allocation3 + $0x50] sm:$0xff] %vm485, %v314
    %497 = vst.msk [vmem:[#allocation3 + $0x58] sm:$0xff] %vm485, %v316
    %498 = vst.msk [vmem:[#allocation3 + $0x60] sm:$0xff] %vm485, %v318
    %499 = vst.msk [vmem:[#allocation3 + $0x68] sm:$0xff] %vm485, %v320
    %500 = vst.msk [vmem:[#allocation3 + $0x70] sm:$0xff] %vm485, %v322
    %501 = vst.msk [vmem:[#allocation3 + $0x78] sm:$0xff] %vm485, %v324
    %502 = vst.msk [vmem:[#allocation3 + $0x80] sm:$0xff] %vm485, %v326
    %503 = vst.msk [vmem:[#allocation3 + $0x88] sm:$0xff] %vm485, %v328
    %504 = vst.msk [vmem:[#allocation3 + $0x90] sm:$0xff] %vm485, %v330
    %505 = vst.msk [vmem:[#allocation3 + $0x98] sm:$0xff] %vm485, %v332
    %506 = vst.msk [vmem:[#allocation3 + $0xa0] sm:$0xff] %vm485, %v334
    %507 = vst.msk [vmem:[#allocation3 + $0xa8] sm:$0xff] %vm485, %v336
    %508 = vst.msk [vmem:[#allocation3 + $0xb0] sm:$0xff] %vm485, %v338
    %509 = vst.msk [vmem:[#allocation3 + $0xb8] sm:$0xff] %vm485, %v340
    %510 = vst.msk [vmem:[#allocation3 + $0xc0] sm:$0xff] %vm485, %v342
    %511 = vst.msk [vmem:[#allocation3 + $0xc8] sm:$0xff] %vm485, %v344
    %512 = vst.msk [vmem:[#allocation3 + $0xd0] sm:$0xff] %vm485, %v346
    %513 = vst.msk [vmem:[#allocation3 + $0xd8] sm:$0xff] %vm485, %v348
    %514 = vst.msk [vmem:[#allocation3 + $0xe0] sm:$0xff] %vm485, %v350
    %515 = vst.msk [vmem:[#allocation3 + $0xe8] sm:$0xff] %vm485, %v352
    %516 = vst.msk [vmem:[#allocation3 + $0xf0] sm:$0xff] %vm485, %v354
    %517 = vst.msk [vmem:[#allocation3 + $0xf8] sm:$0xff] %vm485, %v356
    %518 = vst.msk [vmem:[#allocation3 + $0x100] sm:$0xff] %vm485, %v358
    %519 = vst.msk [vmem:[#allocation3 + $0x108] sm:$0xff] %vm485, %v360
    %520 = vst.msk [vmem:[#allocation3 + $0x110] sm:$0xff] %vm485, %v362
    %521 = vst.msk [vmem:[#allocation3 + $0x118] sm:$0xff] %vm485, %v364
    %522 = vst.msk [vmem:[#allocation3 + $0x120] sm:$0xff] %vm485, %v366
    %523 = vst.msk [vmem:[#allocation3 + $0x128] sm:$0xff] %vm485, %v368
    %524 = vst.msk [vmem:[#allocation3 + $0x130] sm:$0xff] %vm485, %v370
    %525 = vst.msk [vmem:[#allocation3 + $0x138] sm:$0xff] %vm485, %v372
    %526 = vst.msk [vmem:[#allocation3 + $0x140] sm:$0xff] %vm485, %v374
    %527 = vst.msk [vmem:[#allocation3 + $0x148] sm:$0xff] %vm485, %v376
    %528 = vst.msk [vmem:[#allocation3 + $0x150] sm:$0xff] %vm485, %v378
    %529 = vst.msk [vmem:[#allocation3 + $0x158] sm:$0xff] %vm485, %v380
    %530 = vst.msk [vmem:[#allocation3 + $0x160] sm:$0xff] %vm485, %v382
    %531 = vst.msk [vmem:[#allocation3 + $0x168] sm:$0xff] %vm485, %v384
    %532 = vst.msk [vmem:[#allocation3 + $0x170] sm:$0xff] %vm485, %v386
    %533 = vst.msk [vmem:[#allocation3 + $0x178] sm:$0xff] %vm485, %v388
    %534 = vst.msk [vmem:[#allocation3 + $0x180] sm:$0xff] %vm485, %v390
    %535 = vst.msk [vmem:[#allocation3 + $0x188] sm:$0xff] %vm485, %v392
    %536 = vst.msk [vmem:[#allocation3 + $0x190] sm:$0xff] %vm485, %v394
    %537 = vst.msk [vmem:[#allocation3 + $0x198] sm:$0xff] %vm485, %v396
    %538 = vst.msk [vmem:[#allocation3 + $0x1a0] sm:$0xff] %vm485, %v398
    %539 = vst.msk [vmem:[#allocation3 + $0x1a8] sm:$0xff] %vm485, %v400
    %540 = vst.msk [vmem:[#allocation3 + $0x1b0] sm:$0xff] %vm485, %v402
    %541 = vst.msk [vmem:[#allocation3 + $0x1b8] sm:$0xff] %vm485, %v404
    %542 = vst.msk [vmem:[#allocation3 + $0x1c0] sm:$0xff] %vm485, %v406
    %543 = vst.msk [vmem:[#allocation3 + $0x1c8] sm:$0xff] %vm485, %v408
    %544 = vst.msk [vmem:[#allocation3 + $0x1d0] sm:$0xff] %vm485, %v410
    %545 = vst.msk [vmem:[#allocation3 + $0x1d8] sm:$0xff] %vm485, %v412
    %546 = vst.msk [vmem:[#allocation3 + $0x1e0] sm:$0xff] %vm485, %v414
    %547 = vst.msk [vmem:[#allocation3 + $0x1e8] sm:$0xff] %vm485, %v416
    %548 = vst.msk [vmem:[#allocation3 + $0x1f0] sm:$0xff] %vm485, %v418
    %549 = vst.msk [vmem:[#allocation3 + $0x1f8] sm:$0xff] %vm485, %v420
    %v550 = vld [vmem:[%s0 + $0x2] sm:$0xff]
    %v551 = vld [vmem:[%s0 + $0xa] sm:$0xff]
    %v552 = vld [vmem:[%s0 + $0x1a] sm:$0xff]
    %v553 = vld [vmem:[%s0 + $0x22] sm:$0xff]
    %v554 = vld [vmem:[%s0 + $0x32] sm:$0xff]
    %v555 = vld [vmem:[%s0 + $0x3a] sm:$0xff]
    %v556 = vld [vmem:[%s0 + $0x4a] sm:$0xff]
    %v557 = vld [vmem:[%s0 + $0x52] sm:$0xff]
    %v558 = vld [vmem:[%s0 + $0x62] sm:$0xff]
    %v559 = vld [vmem:[%s0 + $0x6a] sm:$0xff]
    %v560 = vld [vmem:[%s0 + $0x7a] sm:$0xff]
    %v561 = vld [vmem:[%s0 + $0x82] sm:$0xff]
    %v562 = vld [vmem:[%s0 + $0x92] sm:$0xff]
    %v563 = vld [vmem:[%s0 + $0x9a] sm:$0xff]
    %v564 = vld [vmem:[%s0 + $0xaa] sm:$0xff]
    %v565 = vld [vmem:[%s0 + $0xb2] sm:$0xff]
    %v566 = vld [vmem:[%s0 + $0xc2] sm:$0xff]
    %v567 = vld [vmem:[%s0 + $0xca] sm:$0xff]
    %v568 = vld [vmem:[%s0 + $0xda] sm:$0xff]
    %v569 = vld [vmem:[%s0 + $0xe2] sm:$0xff]
    %v570 = vld [vmem:[%s0 + $0xf2] sm:$0xff]
    %v571 = vld [vmem:[%s0 + $0xfa] sm:$0xff]
    %v572 = vld [vmem:[%s0 + $0x10a] sm:$0xff]
    %v573 = vld [vmem:[%s0 + $0x112] sm:$0xff]
    %v574 = vld [vmem:[%s0 + $0x122] sm:$0xff]
    %v575 = vld [vmem:[%s0 + $0x12a] sm:$0xff]
    %v576 = vld [vmem:[%s0 + $0x13a] sm:$0xff]
    %v577 = vld [vmem:[%s0 + $0x142] sm:$0xff]
    %v578 = vld [vmem:[%s0 + $0x152] sm:$0xff]
    %v579 = vld [vmem:[%s0 + $0x15a] sm:$0xff]
    %v580 = vld [vmem:[%s0 + $0x16a] sm:$0xff]
    %v581 = vld [vmem:[%s0 + $0x172] sm:$0xff]
    %v582 = vld [vmem:[%s0 + $0x1b2] sm:$0xff]
    %v583 = vld [vmem:[%s0 + $0x1ba] sm:$0xff]
    %v584 = vld [vmem:[%s0 + $0x1ca] sm:$0xff]
    %v585 = vld [vmem:[%s0 + $0x1d2] sm:$0xff]
    %v586 = vld [vmem:[%s0 + $0x1e2] sm:$0xff]
    %v587 = vld [vmem:[%s0 + $0x1ea] sm:$0xff]
    %v588 = vld [vmem:[%s0 + $0x1fa] sm:$0xff]
    %v589 = vld [vmem:[%s0 + $0x202] sm:$0xff]
    %v590 = vld [vmem:[%s0 + $0x212] sm:$0xff]
    %v591 = vld [vmem:[%s0 + $0x21a] sm:$0xff]
    %v592 = vld [vmem:[%s0 + $0x22a] sm:$0xff]
    %v593 = vld [vmem:[%s0 + $0x232] sm:$0xff]
    %v594 = vld [vmem:[%s0 + $0x242] sm:$0xff]
    %v595 = vld [vmem:[%s0 + $0x24a] sm:$0xff]
    %v596 = vld [vmem:[%s0 + $0x25a] sm:$0xff]
    %v597 = vld [vmem:[%s0 + $0x262] sm:$0xff]
    %v598 = vld [vmem:[%s0 + $0x272] sm:$0xff]
    %v599 = vld [vmem:[%s0 + $0x27a] sm:$0xff]
    %v600 = vld [vmem:[%s0 + $0x28a] sm:$0xff]
    %v601 = vld [vmem:[%s0 + $0x292] sm:$0xff]
    %v602 = vld [vmem:[%s0 + $0x2a2] sm:$0xff]
    %v603 = vld [vmem:[%s0 + $0x2aa] sm:$0xff]
    %v604 = vld [vmem:[%s0 + $0x2ba] sm:$0xff]
    %v605 = vld [vmem:[%s0 + $0x2c2] sm:$0xff]
    %v606 = vld [vmem:[%s0 + $0x2d2] sm:$0xff]
    %v607 = vld [vmem:[%s0 + $0x2da] sm:$0xff]
    %v608 = vld [vmem:[%s0 + $0x2ea] sm:$0xff]
    %v609 = vld [vmem:[%s0 + $0x2f2] sm:$0xff]
    %v610 = vld [vmem:[%s0 + $0x302] sm:$0xff]
    %v611 = vld [vmem:[%s0 + $0x30a] sm:$0xff]
    %v612 = vld [vmem:[%s0 + $0x31a] sm:$0xff]
    %v613 = vld [vmem:[%s0 + $0x322] sm:$0xff]
    %678 = vrot.lane.b32.xlu0 %v550, 8
    %v679 = vpop.permute.xlu0 %678
    %680 = vrot.lane.b32.xlu0 %v551, 8
    %v681 = vpop.permute.xlu0 %680
    %682 = vrot.lane.b32.xlu0 %v552, 8
    %v683 = vpop.permute.xlu0 %682
    %684 = vrot.lane.b32.xlu0 %v553, 8
    %v685 = vpop.permute.xlu0 %684
    %686 = vrot.lane.b32.xlu0 %v554, 8
    %v687 = vpop.permute.xlu0 %686
    %688 = vrot.lane.b32.xlu0 %v555, 8
    %v689 = vpop.permute.xlu0 %688
    %690 = vrot.lane.b32.xlu0 %v556, 8
    %v691 = vpop.permute.xlu0 %690
    %692 = vrot.lane.b32.xlu0 %v557, 8
    %v693 = vpop.permute.xlu0 %692
    %694 = vrot.lane.b32.xlu0 %v558, 8
    %v695 = vpop.permute.xlu0 %694
    %696 = vrot.lane.b32.xlu0 %v559, 8
    %v697 = vpop.permute.xlu0 %696
    %698 = vrot.lane.b32.xlu0 %v560, 8
    %v699 = vpop.permute.xlu0 %698
    %700 = vrot.lane.b32.xlu0 %v561, 8
    %v701 = vpop.permute.xlu0 %700
    %702 = vrot.lane.b32.xlu0 %v562, 8
    %v703 = vpop.permute.xlu0 %702
    %704 = vrot.lane.b32.xlu0 %v563, 8
    %v705 = vpop.permute.xlu0 %704
    %706 = vrot.lane.b32.xlu0 %v564, 8
    %v707 = vpop.permute.xlu0 %706
    %708 = vrot.lane.b32.xlu0 %v565, 8
    %v709 = vpop.permute.xlu0 %708
    %710 = vrot.lane.b32.xlu0 %v566, 8
    %v711 = vpop.permute.xlu0 %710
    %712 = vrot.lane.b32.xlu0 %v567, 8
    %v713 = vpop.permute.xlu0 %712
    %714 = vrot.lane.b32.xlu0 %v568, 8
    %v715 = vpop.permute.xlu0 %714
    %716 = vrot.lane.b32.xlu0 %v569, 8
    %v717 = vpop.permute.xlu0 %716
    %718 = vrot.lane.b32.xlu0 %v570, 8
    %v719 = vpop.permute.xlu0 %718
    %720 = vrot.lane.b32.xlu0 %v571, 8
    %v721 = vpop.permute.xlu0 %720
    %722 = vrot.lane.b32.xlu0 %v572, 8
    %v723 = vpop.permute.xlu0 %722
    %724 = vrot.lane.b32.xlu0 %v573, 8
    %v725 = vpop.permute.xlu0 %724
    %726 = vrot.lane.b32.xlu0 %v574, 8
    %v727 = vpop.permute.xlu0 %726
    %728 = vrot.lane.b32.xlu0 %v575, 8
    %v729 = vpop.permute.xlu0 %728
    %730 = vrot.lane.b32.xlu0 %v576, 8
    %v731 = vpop.permute.xlu0 %730
    %732 = vrot.lane.b32.xlu0 %v577, 8
    %v733 = vpop.permute.xlu0 %732
    %734 = vrot.lane.b32.xlu0 %v578, 8
    %v735 = vpop.permute.xlu0 %734
    %736 = vrot.lane.b32.xlu0 %v579, 8
    %v737 = vpop.permute.xlu0 %736
    %738 = vrot.lane.b32.xlu0 %v580, 8
    %v739 = vpop.permute.xlu0 %738
    %740 = vrot.lane.b32.xlu0 %v581, 8
    %v741 = vpop.permute.xlu0 %740
    %742 = vrot.lane.b32.xlu0 %v582, 8
    %v743 = vpop.permute.xlu0 %742
    %744 = vrot.lane.b32.xlu0 %v583, 8
    %v745 = vpop.permute.xlu0 %744
    %746 = vrot.lane.b32.xlu0 %v584, 8
    %v747 = vpop.permute.xlu0 %746
    %748 = vrot.lane.b32.xlu0 %v585, 8
    %v749 = vpop.permute.xlu0 %748
    %750 = vrot.lane.b32.xlu0 %v586, 8
    %v751 = vpop.permute.xlu0 %750
    %752 = vrot.lane.b32.xlu0 %v587, 8
    %v753 = vpop.permute.xlu0 %752
    %754 = vrot.lane.b32.xlu0 %v588, 8
    %v755 = vpop.permute.xlu0 %754
    %756 = vrot.lane.b32.xlu0 %v589, 8
    %v757 = vpop.permute.xlu0 %756
    %758 = vrot.lane.b32.xlu0 %v590, 8
    %v759 = vpop.permute.xlu0 %758
    %760 = vrot.lane.b32.xlu0 %v591, 8
    %v761 = vpop.permute.xlu0 %760
    %762 = vrot.lane.b32.xlu0 %v592, 8
    %v763 = vpop.permute.xlu0 %762
    %764 = vrot.lane.b32.xlu0 %v593, 8
    %v765 = vpop.permute.xlu0 %764
    %766 = vrot.lane.b32.xlu0 %v594, 8
    %v767 = vpop.permute.xlu0 %766
    %768 = vrot.lane.b32.xlu0 %v595, 8
    %v769 = vpop.permute.xlu0 %768
    %770 = vrot.lane.b32.xlu0 %v596, 8
    %v771 = vpop.permute.xlu0 %770
    %772 = vrot.lane.b32.xlu0 %v597, 8
    %v773 = vpop.permute.xlu0 %772
    %774 = vrot.lane.b32.xlu0 %v598, 8
    %v775 = vpop.permute.xlu0 %774
    %776 = vrot.lane.b32.xlu0 %v599, 8
    %v777 = vpop.permute.xlu0 %776
    %778 = vrot.lane.b32.xlu0 %v600, 8
    %v779 = vpop.permute.xlu0 %778
    %780 = vrot.lane.b32.xlu0 %v601, 8
    %v781 = vpop.permute.xlu0 %780
    %782 = vrot.lane.b32.xlu0 %v602, 8
    %v783 = vpop.permute.xlu0 %782
    %784 = vrot.lane.b32.xlu0 %v603, 8
    %v785 = vpop.permute.xlu0 %784
    %786 = vrot.lane.b32.xlu0 %v604, 8
    %v787 = vpop.permute.xlu0 %786
    %788 = vrot.lane.b32.xlu0 %v605, 8
    %v789 = vpop.permute.xlu0 %788
    %790 = vrot.lane.b32.xlu0 %v606, 8
    %v791 = vpop.permute.xlu0 %790
    %792 = vrot.lane.b32.xlu0 %v607, 8
    %v793 = vpop.permute.xlu0 %792
    %794 = vrot.lane.b32.xlu0 %v608, 8
    %v795 = vpop.permute.xlu0 %794
    %796 = vrot.lane.b32.xlu0 %v609, 8
    %v797 = vpop.permute.xlu0 %796
    %798 = vrot.lane.b32.xlu0 %v610, 8
    %v799 = vpop.permute.xlu0 %798
    %800 = vrot.lane.b32.xlu0 %v611, 8
    %v801 = vpop.permute.xlu0 %800
    %802 = vrot.lane.b32.xlu0 %v612, 8
    %v803 = vpop.permute.xlu0 %802
    %804 = vrot.lane.b32.xlu0 %v613, 8
    %v805 = vpop.permute.xlu0 %804
    %vm870 = vcmask 97344
    %871 = vst.msk [vmem:[#allocation3] sm:$0xff] %vm870, %v679
    %872 = vst.msk [vmem:[#allocation3 + $0x8] sm:$0xff] %vm870, %v681
    %873 = vst.msk [vmem:[#allocation3 + $0x10] sm:$0xff] %vm870, %v683
    %874 = vst.msk [vmem:[#allocation3 + $0x18] sm:$0xff] %vm870, %v685
    %875 = vst.msk [vmem:[#allocation3 + $0x20] sm:$0xff] %vm870, %v687
    %876 = vst.msk [vmem:[#allocation3 + $0x28] sm:$0xff] %vm870, %v689
    %877 = vst.msk [vmem:[#allocation3 + $0x30] sm:$0xff] %vm870, %v691
    %878 = vst.msk [vmem:[#allocation3 + $0x38] sm:$0xff] %vm870, %v693
    %879 = vst.msk [vmem:[#allocation3 + $0x40] sm:$0xff] %vm870, %v695
    %880 = vst.msk [vmem:[#allocation3 + $0x48] sm:$0xff] %vm870, %v697
    %881 = vst.msk [vmem:[#allocation3 + $0x50] sm:$0xff] %vm870, %v699
    %882 = vst.msk [vmem:[#allocation3 + $0x58] sm:$0xff] %vm870, %v701
    %883 = vst.msk [vmem:[#allocation3 + $0x60] sm:$0xff] %vm870, %v703
    %884 = vst.msk [vmem:[#allocation3 + $0x68] sm:$0xff] %vm870, %v705
    %885 = vst.msk [vmem:[#allocation3 + $0x70] sm:$0xff] %vm870, %v707
    %886 = vst.msk [vmem:[#allocation3 + $0x78] sm:$0xff] %vm870, %v709
    %887 = vst.msk [vmem:[#allocation3 + $0x80] sm:$0xff] %vm870, %v711
    %888 = vst.msk [vmem:[#allocation3 + $0x88] sm:$0xff] %vm870, %v713
    %889 = vst.msk [vmem:[#allocation3 + $0x90] sm:$0xff] %vm870, %v715
    %890 = vst.msk [vmem:[#allocation3 + $0x98] sm:$0xff] %vm870, %v717
    %891 = vst.msk [vmem:[#allocation3 + $0xa0] sm:$0xff] %vm870, %v719
    %892 = vst.msk [vmem:[#allocation3 + $0xa8] sm:$0xff] %vm870, %v721
    %893 = vst.msk [vmem:[#allocation3 + $0xb0] sm:$0xff] %vm870, %v723
    %894 = vst.msk [vmem:[#allocation3 + $0xb8] sm:$0xff] %vm870, %v725
    %895 = vst.msk [vmem:[#allocation3 + $0xc0] sm:$0xff] %vm870, %v727
    %896 = vst.msk [vmem:[#allocation3 + $0xc8] sm:$0xff] %vm870, %v729
    %897 = vst.msk [vmem:[#allocation3 + $0xd0] sm:$0xff] %vm870, %v731
    %898 = vst.msk [vmem:[#allocation3 + $0xd8] sm:$0xff] %vm870, %v733
    %899 = vst.msk [vmem:[#allocation3 + $0xe0] sm:$0xff] %vm870, %v735
    %900 = vst.msk [vmem:[#allocation3 + $0xe8] sm:$0xff] %vm870, %v737
    %901 = vst.msk [vmem:[#allocation3 + $0xf0] sm:$0xff] %vm870, %v739
    %902 = vst.msk [vmem:[#allocation3 + $0xf8] sm:$0xff] %vm870, %v741
    %903 = vst.msk [vmem:[#allocation3 + $0x100] sm:$0xff] %vm870, %v743
    %904 = vst.msk [vmem:[#allocation3 + $0x108] sm:$0xff] %vm870, %v745
    %905 = vst.msk [vmem:[#allocation3 + $0x110] sm:$0xff] %vm870, %v747
    %906 = vst.msk [vmem:[#allocation3 + $0x118] sm:$0xff] %vm870, %v749
    %907 = vst.msk [vmem:[#allocation3 + $0x120] sm:$0xff] %vm870, %v751
    %908 = vst.msk [vmem:[#allocation3 + $0x128] sm:$0xff] %vm870, %v753
    %909 = vst.msk [vmem:[#allocation3 + $0x130] sm:$0xff] %vm870, %v755
    %910 = vst.msk [vmem:[#allocation3 + $0x138] sm:$0xff] %vm870, %v757
    %911 = vst.msk [vmem:[#allocation3 + $0x140] sm:$0xff] %vm870, %v759
    %912 = vst.msk [vmem:[#allocation3 + $0x148] sm:$0xff] %vm870, %v761
    %913 = vst.msk [vmem:[#allocation3 + $0x150] sm:$0xff] %vm870, %v763
    %914 = vst.msk [vmem:[#allocation3 + $0x158] sm:$0xff] %vm870, %v765
    %915 = vst.msk [vmem:[#allocation3 + $0x160] sm:$0xff] %vm870, %v767
    %916 = vst.msk [vmem:[#allocation3 + $0x168] sm:$0xff] %vm870, %v769
    %917 = vst.msk [vmem:[#allocation3 + $0x170] sm:$0xff] %vm870, %v771
    %918 = vst.msk [vmem:[#allocation3 + $0x178] sm:$0xff] %vm870, %v773
    %919 = vst.msk [vmem:[#allocation3 + $0x180] sm:$0xff] %vm870, %v775
    %920 = vst.msk [vmem:[#allocation3 + $0x188] sm:$0xff] %vm870, %v777
    %921 = vst.msk [vmem:[#allocation3 + $0x190] sm:$0xff] %vm870, %v779
    %922 = vst.msk [vmem:[#allocation3 + $0x198] sm:$0xff] %vm870, %v781
    %923 = vst.msk [vmem:[#allocation3 + $0x1a0] sm:$0xff] %vm870, %v783
    %924 = vst.msk [vmem:[#allocation3 + $0x1a8] sm:$0xff] %vm870, %v785
    %925 = vst.msk [vmem:[#allocation3 + $0x1b0] sm:$0xff] %vm870, %v787
    %926 = vst.msk [vmem:[#allocation3 + $0x1b8] sm:$0xff] %vm870, %v789
    %927 = vst.msk [vmem:[#allocation3 + $0x1c0] sm:$0xff] %vm870, %v791
    %928 = vst.msk [vmem:[#allocation3 + $0x1c8] sm:$0xff] %vm870, %v793
    %929 = vst.msk [vmem:[#allocation3 + $0x1d0] sm:$0xff] %vm870, %v795
    %930 = vst.msk [vmem:[#allocation3 + $0x1d8] sm:$0xff] %vm870, %v797
    %931 = vst.msk [vmem:[#allocation3 + $0x1e0] sm:$0xff] %vm870, %v799
    %932 = vst.msk [vmem:[#allocation3 + $0x1e8] sm:$0xff] %vm870, %v801
    %933 = vst.msk [vmem:[#allocation3 + $0x1f0] sm:$0xff] %vm870, %v803
    %934 = vst.msk [vmem:[#allocation3 + $0x1f8] sm:$0xff] %vm870, %v805
    %s935 = scalar_lea.vmem %s0, 24
    %v936 = vld [vmem:[%s935] sm:$0xff]
    %v937 = vld [vmem:[%s935 + $0x8] sm:$0xff]
    %v938 = vld [vmem:[%s935 + $0x18] sm:$0xff]
    %v939 = vld [vmem:[%s935 + $0x20] sm:$0xff]
    %v940 = vld [vmem:[%s935 + $0x30] sm:$0xff]
    %v941 = vld [vmem:[%s935 + $0x38] sm:$0xff]
    %v942 = vld [vmem:[%s935 + $0x48] sm:$0xff]
    %v943 = vld [vmem:[%s935 + $0x50] sm:$0xff]
    %v944 = vld [vmem:[%s935 + $0x60] sm:$0xff]
    %v945 = vld [vmem:[%s935 + $0x68] sm:$0xff]
    %v946 = vld [vmem:[%s935 + $0x78] sm:$0xff]
    %v947 = vld [vmem:[%s935 + $0x80] sm:$0xff]
    %v948 = vld [vmem:[%s935 + $0x90] sm:$0xff]
    %v949 = vld [vmem:[%s935 + $0x98] sm:$0xff]
    %v950 = vld [vmem:[%s935 + $0xa8] sm:$0xff]
    %v951 = vld [vmem:[%s935 + $0xb0] sm:$0xff]
    %v952 = vld [vmem:[%s935 + $0xc0] sm:$0xff]
    %v953 = vld [vmem:[%s935 + $0xc8] sm:$0xff]
    %v954 = vld [vmem:[%s935 + $0xd8] sm:$0xff]
    %v955 = vld [vmem:[%s935 + $0xe0] sm:$0xff]
    %v956 = vld [vmem:[%s935 + $0xf0] sm:$0xff]
    %v957 = vld [vmem:[%s935 + $0xf8] sm:$0xff]
    %v958 = vld [vmem:[%s935 + $0x108] sm:$0xff]
    %v959 = vld [vmem:[%s935 + $0x110] sm:$0xff]
    %v960 = vld [vmem:[%s935 + $0x120] sm:$0xff]
    %v961 = vld [vmem:[%s935 + $0x128] sm:$0xff]
    %v962 = vld [vmem:[%s935 + $0x138] sm:$0xff]
    %v963 = vld [vmem:[%s935 + $0x140] sm:$0xff]
    %v964 = vld [vmem:[%s935 + $0x150] sm:$0xff]
    %v965 = vld [vmem:[%s935 + $0x158] sm:$0xff]
    %v966 = vld [vmem:[%s935 + $0x168] sm:$0xff]
    %v967 = vld [vmem:[%s935 + $0x170] sm:$0xff]
    %v968 = vld [vmem:[%s935 + $0x1b0] sm:$0xff]
    %v969 = vld [vmem:[%s935 + $0x1b8] sm:$0xff]
    %v970 = vld [vmem:[%s935 + $0x1c8] sm:$0xff]
    %v971 = vld [vmem:[%s935 + $0x1d0] sm:$0xff]
    %v972 = vld [vmem:[%s935 + $0x1e0] sm:$0xff]
    %v973 = vld [vmem:[%s935 + $0x1e8] sm:$0xff]
    %v974 = vld [vmem:[%s935 + $0x1f8] sm:$0xff]
    %v975 = vld [vmem:[%s935 + $0x200] sm:$0xff]
    %v976 = vld [vmem:[%s935 + $0x210] sm:$0xff]
    %v977 = vld [vmem:[%s935 + $0x218] sm:$0xff]
    %v978 = vld [vmem:[%s935 + $0x228] sm:$0xff]
    %v979 = vld [vmem:[%s935 + $0x230] sm:$0xff]
    %v980 = vld [vmem:[%s935 + $0x240] sm:$0xff]
    %v981 = vld [vmem:[%s935 + $0x248] sm:$0xff]
    %v982 = vld [vmem:[%s935 + $0x258] sm:$0xff]
    %v983 = vld [vmem:[%s935 + $0x260] sm:$0xff]
    %v984 = vld [vmem:[%s935 + $0x270] sm:$0xff]
    %v985 = vld [vmem:[%s935 + $0x278] sm:$0xff]
    %v986 = vld [vmem:[%s935 + $0x288] sm:$0xff]
    %v987 = vld [vmem:[%s935 + $0x290] sm:$0xff]
    %v988 = vld [vmem:[%s935 + $0x2a0] sm:$0xff]
    %v989 = vld [vmem:[%s935 + $0x2a8] sm:$0xff]
    %v990 = vld [vmem:[%s935 + $0x2b8] sm:$0xff]
    %v991 = vld [vmem:[%s935 + $0x2c0] sm:$0xff]
    %v992 = vld [vmem:[%s935 + $0x2d0] sm:$0xff]
    %v993 = vld [vmem:[%s935 + $0x2d8] sm:$0xff]
    %v994 = vld [vmem:[%s935 + $0x2e8] sm:$0xff]
    %v995 = vld [vmem:[%s935 + $0x2f0] sm:$0xff]
    %v996 = vld [vmem:[%s935 + $0x300] sm:$0xff]
    %v997 = vld [vmem:[%s935 + $0x308] sm:$0xff]
    %v998 = vld [vmem:[%s935 + $0x318] sm:$0xff]
    %v999 = vld [vmem:[%s935 + $0x320] sm:$0xff]
    %1064 = vrot.lane.b32.xlu0 %v936, 12
    %v1065 = vpop.permute.xlu0 %1064
    %1066 = vrot.lane.b32.xlu0 %v937, 12
    %v1067 = vpop.permute.xlu0 %1066
    %1068 = vrot.lane.b32.xlu0 %v938, 12
    %v1069 = vpop.permute.xlu0 %1068
    %1070 = vrot.lane.b32.xlu0 %v939, 12
    %v1071 = vpop.permute.xlu0 %1070
    %1072 = vrot.lane.b32.xlu0 %v940, 12
    %v1073 = vpop.permute.xlu0 %1072
    %1074 = vrot.lane.b32.xlu0 %v941, 12
    %v1075 = vpop.permute.xlu0 %1074
    %1076 = vrot.lane.b32.xlu0 %v942, 12
    %v1077 = vpop.permute.xlu0 %1076
    %1078 = vrot.lane.b32.xlu0 %v943, 12
    %v1079 = vpop.permute.xlu0 %1078
    %1080 = vrot.lane.b32.xlu0 %v944, 12
    %v1081 = vpop.permute.xlu0 %1080
    %1082 = vrot.lane.b32.xlu0 %v945, 12
    %v1083 = vpop.permute.xlu0 %1082
    %1084 = vrot.lane.b32.xlu0 %v946, 12
    %v1085 = vpop.permute.xlu0 %1084
    %1086 = vrot.lane.b32.xlu0 %v947, 12
    %v1087 = vpop.permute.xlu0 %1086
    %1088 = vrot.lane.b32.xlu0 %v948, 12
    %v1089 = vpop.permute.xlu0 %1088
    %1090 = vrot.lane.b32.xlu0 %v949, 12
    %v1091 = vpop.permute.xlu0 %1090
    %1092 = vrot.lane.b32.xlu0 %v950, 12
    %v1093 = vpop.permute.xlu0 %1092
    %1094 = vrot.lane.b32.xlu0 %v951, 12
    %v1095 = vpop.permute.xlu0 %1094
    %1096 = vrot.lane.b32.xlu0 %v952, 12
    %v1097 = vpop.permute.xlu0 %1096
    %1098 = vrot.lane.b32.xlu0 %v953, 12
    %v1099 = vpop.permute.xlu0 %1098
    %1100 = vrot.lane.b32.xlu0 %v954, 12
    %v1101 = vpop.permute.xlu0 %1100
    %1102 = vrot.lane.b32.xlu0 %v955, 12
    %v1103 = vpop.permute.xlu0 %1102
    %1104 = vrot.lane.b32.xlu0 %v956, 12
    %v1105 = vpop.permute.xlu0 %1104
    %1106 = vrot.lane.b32.xlu0 %v957, 12
    %v1107 = vpop.permute.xlu0 %1106
    %1108 = vrot.lane.b32.xlu0 %v958, 12
    %v1109 = vpop.permute.xlu0 %1108
    %1110 = vrot.lane.b32.xlu0 %v959, 12
    %v1111 = vpop.permute.xlu0 %1110
    %1112 = vrot.lane.b32.xlu0 %v960, 12
    %v1113 = vpop.permute.xlu0 %1112
    %1114 = vrot.lane.b32.xlu0 %v961, 12
    %v1115 = vpop.permute.xlu0 %1114
    %1116 = vrot.lane.b32.xlu0 %v962, 12
    %v1117 = vpop.permute.xlu0 %1116
    %1118 = vrot.lane.b32.xlu0 %v963, 12
    %v1119 = vpop.permute.xlu0 %1118
    %1120 = vrot.lane.b32.xlu0 %v964, 12
    %v1121 = vpop.permute.xlu0 %1120
    %1122 = vrot.lane.b32.xlu0 %v965, 12
    %v1123 = vpop.permute.xlu0 %1122
    %1124 = vrot.lane.b32.xlu0 %v966, 12
    %v1125 = vpop.permute.xlu0 %1124
    %1126 = vrot.lane.b32.xlu0 %v967, 12
    %v1127 = vpop.permute.xlu0 %1126
    %1128 = vrot.lane.b32.xlu0 %v968, 12
    %v1129 = vpop.permute.xlu0 %1128
    %1130 = vrot.lane.b32.xlu0 %v969, 12
    %v1131 = vpop.permute.xlu0 %1130
    %1132 = vrot.lane.b32.xlu0 %v970, 12
    %v1133 = vpop.permute.xlu0 %1132
    %1134 = vrot.lane.b32.xlu0 %v971, 12
    %v1135 = vpop.permute.xlu0 %1134
    %1136 = vrot.lane.b32.xlu0 %v972, 12
    %v1137 = vpop.permute.xlu0 %1136
    %1138 = vrot.lane.b32.xlu0 %v973, 12
    %v1139 = vpop.permute.xlu0 %1138
    %1140 = vrot.lane.b32.xlu0 %v974, 12
    %v1141 = vpop.permute.xlu0 %1140
    %1142 = vrot.lane.b32.xlu0 %v975, 12
    %v1143 = vpop.permute.xlu0 %1142
    %1144 = vrot.lane.b32.xlu0 %v976, 12
    %v1145 = vpop.permute.xlu0 %1144
    %1146 = vrot.lane.b32.xlu0 %v977, 12
    %v1147 = vpop.permute.xlu0 %1146
    %1148 = vrot.lane.b32.xlu0 %v978, 12
    %v1149 = vpop.permute.xlu0 %1148
    %1150 = vrot.lane.b32.xlu0 %v979, 12
    %v1151 = vpop.permute.xlu0 %1150
    %1152 = vrot.lane.b32.xlu0 %v980, 12
    %v1153 = vpop.permute.xlu0 %1152
    %1154 = vrot.lane.b32.xlu0 %v981, 12
    %v1155 = vpop.permute.xlu0 %1154
    %1156 = vrot.lane.b32.xlu0 %v982, 12
    %v1157 = vpop.permute.xlu0 %1156
    %1158 = vrot.lane.b32.xlu0 %v983, 12
    %v1159 = vpop.permute.xlu0 %1158
    %1160 = vrot.lane.b32.xlu0 %v984, 12
    %v1161 = vpop.permute.xlu0 %1160
    %1162 = vrot.lane.b32.xlu0 %v985, 12
    %v1163 = vpop.permute.xlu0 %1162
    %1164 = vrot.lane.b32.xlu0 %v986, 12
    %v1165 = vpop.permute.xlu0 %1164
    %1166 = vrot.lane.b32.xlu0 %v987, 12
    %v1167 = vpop.permute.xlu0 %1166
    %1168 = vrot.lane.b32.xlu0 %v988, 12
    %v1169 = vpop.permute.xlu0 %1168
    %1170 = vrot.lane.b32.xlu0 %v989, 12
    %v1171 = vpop.permute.xlu0 %1170
    %1172 = vrot.lane.b32.xlu0 %v990, 12
    %v1173 = vpop.permute.xlu0 %1172
    %1174 = vrot.lane.b32.xlu0 %v991, 12
    %v1175 = vpop.permute.xlu0 %1174
    %1176 = vrot.lane.b32.xlu0 %v992, 12
    %v1177 = vpop.permute.xlu0 %1176
    %1178 = vrot.lane.b32.xlu0 %v993, 12
    %v1179 = vpop.permute.xlu0 %1178
    %1180 = vrot.lane.b32.xlu0 %v994, 12
    %v1181 = vpop.permute.xlu0 %1180
    %1182 = vrot.lane.b32.xlu0 %v995, 12
    %v1183 = vpop.permute.xlu0 %1182
    %1184 = vrot.lane.b32.xlu0 %v996, 12
    %v1185 = vpop.permute.xlu0 %1184
    %1186 = vrot.lane.b32.xlu0 %v997, 12
    %v1187 = vpop.permute.xlu0 %1186
    %1188 = vrot.lane.b32.xlu0 %v998, 12
    %v1189 = vpop.permute.xlu0 %1188
    %1190 = vrot.lane.b32.xlu0 %v999, 12
    %v1191 = vpop.permute.xlu0 %1190
    %vm1256 = vcmask 130144
    %1257 = vst.msk [vmem:[#allocation3] sm:$0xff] %vm1256, %v1065
    %1258 = vst.msk [vmem:[#allocation3 + $0x8] sm:$0xff] %vm1256, %v1067
    %1259 = vst.msk [vmem:[#allocation3 + $0x10] sm:$0xff] %vm1256, %v1069
    %1260 = vst.msk [vmem:[#allocation3 + $0x18] sm:$0xff] %vm1256, %v1071
    %1261 = vst.msk [vmem:[#allocation3 + $0x20] sm:$0xff] %vm1256, %v1073
    %1262 = vst.msk [vmem:[#allocation3 + $0x28] sm:$0xff] %vm1256, %v1075
    %1263 = vst.msk [vmem:[#allocation3 + $0x30] sm:$0xff] %vm1256, %v1077
    %1264 = vst.msk [vmem:[#allocation3 + $0x38] sm:$0xff] %vm1256, %v1079
    %1265 = vst.msk [vmem:[#allocation3 + $0x40] sm:$0xff] %vm1256, %v1081
    %1266 = vst.msk [vmem:[#allocation3 + $0x48] sm:$0xff] %vm1256, %v1083
    %1267 = vst.msk [vmem:[#allocation3 + $0x50] sm:$0xff] %vm1256, %v1085
    %1268 = vst.msk [vmem:[#allocation3 + $0x58] sm:$0xff] %vm1256, %v1087
    %1269 = vst.msk [vmem:[#allocation3 + $0x60] sm:$0xff] %vm1256, %v1089
    %1270 = vst.msk [vmem:[#allocation3 + $0x68] sm:$0xff] %vm1256, %v1091
    %1271 = vst.msk [vmem:[#allocation3 + $0x70] sm:$0xff] %vm1256, %v1093
    %1272 = vst.msk [vmem:[#allocation3 + $0x78] sm:$0xff] %vm1256, %v1095
    %1273 = vst.msk [vmem:[#allocation3 + $0x80] sm:$0xff] %vm1256, %v1097
    %1274 = vst.msk [vmem:[#allocation3 + $0x88] sm:$0xff] %vm1256, %v1099
    %1275 = vst.msk [vmem:[#allocation3 + $0x90] sm:$0xff] %vm1256, %v1101
    %1276 = vst.msk [vmem:[#allocation3 + $0x98] sm:$0xff] %vm1256, %v1103
    %1277 = vst.msk [vmem:[#allocation3 + $0xa0] sm:$0xff] %vm1256, %v1105
    %1278 = vst.msk [vmem:[#allocation3 + $0xa8] sm:$0xff] %vm1256, %v1107
    %1279 = vst.msk [vmem:[#allocation3 + $0xb0] sm:$0xff] %vm1256, %v1109
    %1280 = vst.msk [vmem:[#allocation3 + $0xb8] sm:$0xff] %vm1256, %v1111
    %1281 = vst.msk [vmem:[#allocation3 + $0xc0] sm:$0xff] %vm1256, %v1113
    %1282 = vst.msk [vmem:[#allocation3 + $0xc8] sm:$0xff] %vm1256, %v1115
    %1283 = vst.msk [vmem:[#allocation3 + $0xd0] sm:$0xff] %vm1256, %v1117
    %1284 = vst.msk [vmem:[#allocation3 + $0xd8] sm:$0xff] %vm1256, %v1119
    %1285 = vst.msk [vmem:[#allocation3 + $0xe0] sm:$0xff] %vm1256, %v1121
    %1286 = vst.msk [vmem:[#allocation3 + $0xe8] sm:$0xff] %vm1256, %v1123
    %1287 = vst.msk [vmem:[#allocation3 + $0xf0] sm:$0xff] %vm1256, %v1125
    %1288 = vst.msk [vmem:[#allocation3 + $0xf8] sm:$0xff] %vm1256, %v1127
    %1289 = vst.msk [vmem:[#allocation3 + $0x100] sm:$0xff] %vm1256, %v1129
    %1290 = vst.msk [vmem:[#allocation3 + $0x108] sm:$0xff] %vm1256, %v1131
    %1291 = vst.msk [vmem:[#allocation3 + $0x110] sm:$0xff] %vm1256, %v1133
    %1292 = vst.msk [vmem:[#allocation3 + $0x118] sm:$0xff] %vm1256, %v1135
    %1293 = vst.msk [vmem:[#allocation3 + $0x120] sm:$0xff] %vm1256, %v1137
    %1294 = vst.msk [vmem:[#allocation3 + $0x128] sm:$0xff] %vm1256, %v1139
    %1295 = vst.msk [vmem:[#allocation3 + $0x130] sm:$0xff] %vm1256, %v1141
    %1296 = vst.msk [vmem:[#allocation3 + $0x138] sm:$0xff] %vm1256, %v1143
    %1297 = vst.msk [vmem:[#allocation3 + $0x140] sm:$0xff] %vm1256, %v1145
    %1298 = vst.msk [vmem:[#allocation3 + $0x148] sm:$0xff] %vm1256, %v1147
    %1299 = vst.msk [vmem:[#allocation3 + $0x150] sm:$0xff] %vm1256, %v1149
    %1300 = vst.msk [vmem:[#allocation3 + $0x158] sm:$0xff] %vm1256, %v1151
    %1301 = vst.msk [vmem:[#allocation3 + $0x160] sm:$0xff] %vm1256, %v1153
    %1302 = vst.msk [vmem:[#allocation3 + $0x168] sm:$0xff] %vm1256, %v1155
    %1303 = vst.msk [vmem:[#allocation3 + $0x170] sm:$0xff] %vm1256, %v1157
    %1304 = vst.msk [vmem:[#allocation3 + $0x178] sm:$0xff] %vm1256, %v1159
    %1305 = vst.msk [vmem:[#allocation3 + $0x180] sm:$0xff] %vm1256, %v1161
    %1306 = vst.msk [vmem:[#allocation3 + $0x188] sm:$0xff] %vm1256, %v1163
    %1307 = vst.msk [vmem:[#allocation3 + $0x190] sm:$0xff] %vm1256, %v1165
    %1308 = vst.msk [vmem:[#allocation3 + $0x198] sm:$0xff] %vm1256, %v1167
    %1309 = vst.msk [vmem:[#allocation3 + $0x1a0] sm:$0xff] %vm1256, %v1169
    %1310 = vst.msk [vmem:[#allocation3 + $0x1a8] sm:$0xff] %vm1256, %v1171
    %1311 = vst.msk [vmem:[#allocation3 + $0x1b0] sm:$0xff] %vm1256, %v1173
    %1312 = vst.msk [vmem:[#allocation3 + $0x1b8] sm:$0xff] %vm1256, %v1175
    %1313 = vst.msk [vmem:[#allocation3 + $0x1c0] sm:$0xff] %vm1256, %v1177
    %1314 = vst.msk [vmem:[#allocation3 + $0x1c8] sm:$0xff] %vm1256, %v1179
    %1315 = vst.msk [vmem:[#allocation3 + $0x1d0] sm:$0xff] %vm1256, %v1181
    %1316 = vst.msk [vmem:[#allocation3 + $0x1d8] sm:$0xff] %vm1256, %v1183
    %1317 = vst.msk [vmem:[#allocation3 + $0x1e0] sm:$0xff] %vm1256, %v1185
    %1318 = vst.msk [vmem:[#allocation3 + $0x1e8] sm:$0xff] %vm1256, %v1187
    %1319 = vst.msk [vmem:[#allocation3 + $0x1f0] sm:$0xff] %vm1256, %v1189
    %1320 = vst.msk [vmem:[#allocation3 + $0x1f8] sm:$0xff] %vm1256, %v1191
    %v1321 = vld [vmem:[%s935 + $0x1] sm:$0xff]
    %v1322 = vld [vmem:[%s935 + $0x9] sm:$0xff]
    %v1323 = vld [vmem:[%s935 + $0x19] sm:$0xff]
    %v1324 = vld [vmem:[%s935 + $0x21] sm:$0xff]
    %v1325 = vld [vmem:[%s935 + $0x31] sm:$0xff]
    %v1326 = vld [vmem:[%s935 + $0x39] sm:$0xff]
    %v1327 = vld [vmem:[%s935 + $0x49] sm:$0xff]
    %v1328 = vld [vmem:[%s935 + $0x51] sm:$0xff]
    %v1329 = vld [vmem:[%s935 + $0x61] sm:$0xff]
    %v1330 = vld [vmem:[%s935 + $0x69] sm:$0xff]
    %v1331 = vld [vmem:[%s935 + $0x79] sm:$0xff]
    %v1332 = vld [vmem:[%s935 + $0x81] sm:$0xff]
    %v1333 = vld [vmem:[%s935 + $0x91] sm:$0xff]
    %v1334 = vld [vmem:[%s935 + $0x99] sm:$0xff]
    %v1335 = vld [vmem:[%s935 + $0xa9] sm:$0xff]
    %v1336 = vld [vmem:[%s935 + $0xb1] sm:$0xff]
    %v1337 = vld [vmem:[%s935 + $0xc1] sm:$0xff]
    %v1338 = vld [vmem:[%s935 + $0xc9] sm:$0xff]
    %v1339 = vld [vmem:[%s935 + $0xd9] sm:$0xff]
    %v1340 = vld [vmem:[%s935 + $0xe1] sm:$0xff]
    %v1341 = vld [vmem:[%s935 + $0xf1] sm:$0xff]
    %v1342 = vld [vmem:[%s935 + $0xf9] sm:$0xff]
    %v1343 = vld [vmem:[%s935 + $0x109] sm:$0xff]
    %v1344 = vld [vmem:[%s935 + $0x111] sm:$0xff]
    %v1345 = vld [vmem:[%s935 + $0x121] sm:$0xff]
    %v1346 = vld [vmem:[%s935 + $0x129] sm:$0xff]
    %v1347 = vld [vmem:[%s935 + $0x139] sm:$0xff]
    %v1348 = vld [vmem:[%s935 + $0x141] sm:$0xff]
    %v1349 = vld [vmem:[%s935 + $0x151] sm:$0xff]
    %v1350 = vld [vmem:[%s935 + $0x159] sm:$0xff]
    %v1351 = vld [vmem:[%s935 + $0x169] sm:$0xff]
    %v1352 = vld [vmem:[%s935 + $0x171] sm:$0xff]
    %v1353 = vld [vmem:[%s935 + $0x1b1] sm:$0xff]
    %v1354 = vld [vmem:[%s935 + $0x1b9] sm:$0xff]
    %v1355 = vld [vmem:[%s935 + $0x1c9] sm:$0xff]
    %v1356 = vld [vmem:[%s935 + $0x1d1] sm:$0xff]
    %v1357 = vld [vmem:[%s935 + $0x1e1] sm:$0xff]
    %v1358 = vld [vmem:[%s935 + $0x1e9] sm:$0xff]
    %v1359 = vld [vmem:[%s935 + $0x1f9] sm:$0xff]
    %v1360 = vld [vmem:[%s935 + $0x201] sm:$0xff]
    %v1361 = vld [vmem:[%s935 + $0x211] sm:$0xff]
    %v1362 = vld [vmem:[%s935 + $0x219] sm:$0xff]
    %v1363 = vld [vmem:[%s935 + $0x229] sm:$0xff]
    %v1364 = vld [vmem:[%s935 + $0x231] sm:$0xff]
    %v1365 = vld [vmem:[%s935 + $0x241] sm:$0xff]
    %v1366 = vld [vmem:[%s935 + $0x249] sm:$0xff]
    %v1367 = vld [vmem:[%s935 + $0x259] sm:$0xff]
    %v1368 = vld [vmem:[%s935 + $0x261] sm:$0xff]
    %v1369 = vld [vmem:[%s935 + $0x271] sm:$0xff]
    %v1370 = vld [vmem:[%s935 + $0x279] sm:$0xff]
    %v1371 = vld [vmem:[%s935 + $0x289] sm:$0xff]
    %v1372 = vld [vmem:[%s935 + $0x291] sm:$0xff]
    %v1373 = vld [vmem:[%s935 + $0x2a1] sm:$0xff]
    %v1374 = vld [vmem:[%s935 + $0x2a9] sm:$0xff]
    %v1375 = vld [vmem:[%s935 + $0x2b9] sm:$0xff]
    %v1376 = vld [vmem:[%s935 + $0x2c1] sm:$0xff]
    %v1377 = vld [vmem:[%s935 + $0x2d1] sm:$0xff]
    %v1378 = vld [vmem:[%s935 + $0x2d9] sm:$0xff]
    %v1379 = vld [vmem:[%s935 + $0x2e9] sm:$0xff]
    %v1380 = vld [vmem:[%s935 + $0x2f1] sm:$0xff]
    %v1381 = vld [vmem:[%s935 + $0x301] sm:$0xff]
    %v1382 = vld [vmem:[%s935 + $0x309] sm:$0xff]
    %v1383 = vld [vmem:[%s935 + $0x319] sm:$0xff]
    %v1384 = vld [vmem:[%s935 + $0x321] sm:$0xff]
    %1449 = vrot.lane.b32.xlu0 %v1321, 16
    %v1450 = vpop.permute.xlu0 %1449
    %1451 = vrot.lane.b32.xlu0 %v1322, 16
    %v1452 = vpop.permute.xlu0 %1451
    %1453 = vrot.lane.b32.xlu0 %v1323, 16
    %v1454 = vpop.permute.xlu0 %1453
    %1455 = vrot.lane.b32.xlu0 %v1324, 16
    %v1456 = vpop.permute.xlu0 %1455
    %1457 = vrot.lane.b32.xlu0 %v1325, 16
    %v1458 = vpop.permute.xlu0 %1457
    %1459 = vrot.lane.b32.xlu0 %v1326, 16
    %v1460 = vpop.permute.xlu0 %1459
    %1461 = vrot.lane.b32.xlu0 %v1327, 16
    %v1462 = vpop.permute.xlu0 %1461
    %1463 = vrot.lane.b32.xlu0 %v1328, 16
    %v1464 = vpop.permute.xlu0 %1463
    %1465 = vrot.lane.b32.xlu0 %v1329, 16
    %v1466 = vpop.permute.xlu0 %1465
    %1467 = vrot.lane.b32.xlu0 %v1330, 16
    %v1468 = vpop.permute.xlu0 %1467
    %1469 = vrot.lane.b32.xlu0 %v1331, 16
    %v1470 = vpop.permute.xlu0 %1469
    %1471 = vrot.lane.b32.xlu0 %v1332, 16
    %v1472 = vpop.permute.xlu0 %1471
    %1473 = vrot.lane.b32.xlu0 %v1333, 16
    %v1474 = vpop.permute.xlu0 %1473
    %1475 = vrot.lane.b32.xlu0 %v1334, 16
    %v1476 = vpop.permute.xlu0 %1475
    %1477 = vrot.lane.b32.xlu0 %v1335, 16
    %v1478 = vpop.permute.xlu0 %1477
    %1479 = vrot.lane.b32.xlu0 %v1336, 16
    %v1480 = vpop.permute.xlu0 %1479
    %1481 = vrot.lane.b32.xlu0 %v1337, 16
    %v1482 = vpop.permute.xlu0 %1481
    %1483 = vrot.lane.b32.xlu0 %v1338, 16
    %v1484 = vpop.permute.xlu0 %1483
    %1485 = vrot.lane.b32.xlu0 %v1339, 16
    %v1486 = vpop.permute.xlu0 %1485
    %1487 = vrot.lane.b32.xlu0 %v1340, 16
    %v1488 = vpop.permute.xlu0 %1487
    %1489 = vrot.lane.b32.xlu0 %v1341, 16
    %v1490 = vpop.permute.xlu0 %1489
    %1491 = vrot.lane.b32.xlu0 %v1342, 16
    %v1492 = vpop.permute.xlu0 %1491
    %1493 = vrot.lane.b32.xlu0 %v1343, 16
    %v1494 = vpop.permute.xlu0 %1493
    %1495 = vrot.lane.b32.xlu0 %v1344, 16
    %v1496 = vpop.permute.xlu0 %1495
    %1497 = vrot.lane.b32.xlu0 %v1345, 16
    %v1498 = vpop.permute.xlu0 %1497
    %1499 = vrot.lane.b32.xlu0 %v1346, 16
    %v1500 = vpop.permute.xlu0 %1499
    %1501 = vrot.lane.b32.xlu0 %v1347, 16
    %v1502 = vpop.permute.xlu0 %1501
    %1503 = vrot.lane.b32.xlu0 %v1348, 16
    %v1504 = vpop.permute.xlu0 %1503
    %1505 = vrot.lane.b32.xlu0 %v1349, 16
    %v1506 = vpop.permute.xlu0 %1505
    %1507 = vrot.lane.b32.xlu0 %v1350, 16
    %v1508 = vpop.permute.xlu0 %1507
    %1509 = vrot.lane.b32.xlu0 %v1351, 16
    %v1510 = vpop.permute.xlu0 %1509
    %1511 = vrot.lane.b32.xlu0 %v1352, 16
    %v1512 = vpop.permute.xlu0 %1511
    %1513 = vrot.lane.b32.xlu0 %v1353, 16
    %v1514 = vpop.permute.xlu0 %1513
    %1515 = vrot.lane.b32.xlu0 %v1354, 16
    %v1516 = vpop.permute.xlu0 %1515
    %1517 = vrot.lane.b32.xlu0 %v1355, 16
    %v1518 = vpop.permute.xlu0 %1517
    %1519 = vrot.lane.b32.xlu0 %v1356, 16
    %v1520 = vpop.permute.xlu0 %1519
    %1521 = vrot.lane.b32.xlu0 %v1357, 16
    %v1522 = vpop.permute.xlu0 %1521
    %1523 = vrot.lane.b32.xlu0 %v1358, 16
    %v1524 = vpop.permute.xlu0 %1523
    %1525 = vrot.lane.b32.xlu0 %v1359, 16
    %v1526 = vpop.permute.xlu0 %1525
    %1527 = vrot.lane.b32.xlu0 %v1360, 16
    %v1528 = vpop.permute.xlu0 %1527
    %1529 = vrot.lane.b32.xlu0 %v1361, 16
    %v1530 = vpop.permute.xlu0 %1529
    %1531 = vrot.lane.b32.xlu0 %v1362, 16
    %v1532 = vpop.permute.xlu0 %1531
    %1533 = vrot.lane.b32.xlu0 %v1363, 16
    %v1534 = vpop.permute.xlu0 %1533
    %1535 = vrot.lane.b32.xlu0 %v1364, 16
    %v1536 = vpop.permute.xlu0 %1535
    %1537 = vrot.lane.b32.xlu0 %v1365, 16
    %v1538 = vpop.permute.xlu0 %1537
    %1539 = vrot.lane.b32.xlu0 %v1366, 16
    %v1540 = vpop.permute.xlu0 %1539
    %1541 = vrot.lane.b32.xlu0 %v1367, 16
    %v1542 = vpop.permute.xlu0 %1541
    %1543 = vrot.lane.b32.xlu0 %v1368, 16
    %v1544 = vpop.permute.xlu0 %1543
    %1545 = vrot.lane.b32.xlu0 %v1369, 16
    %v1546 = vpop.permute.xlu0 %1545
    %1547 = vrot.lane.b32.xlu0 %v1370, 16
    %v1548 = vpop.permute.xlu0 %1547
    %1549 = vrot.lane.b32.xlu0 %v1371, 16
    %v1550 = vpop.permute.xlu0 %1549
    %1551 = vrot.lane.b32.xlu0 %v1372, 16
    %v1552 = vpop.permute.xlu0 %1551
    %1553 = vrot.lane.b32.xlu0 %v1373, 16
    %v1554 = vpop.permute.xlu0 %1553
    %1555 = vrot.lane.b32.xlu0 %v1374, 16
    %v1556 = vpop.permute.xlu0 %1555
    %1557 = vrot.lane.b32.xlu0 %v1375, 16
    %v1558 = vpop.permute.xlu0 %1557
    %1559 = vrot.lane.b32.xlu0 %v1376, 16
    %v1560 = vpop.permute.xlu0 %1559
    %1561 = vrot.lane.b32.xlu0 %v1377, 16
    %v1562 = vpop.permute.xlu0 %1561
    %1563 = vrot.lane.b32.xlu0 %v1378, 16
    %v1564 = vpop.permute.xlu0 %1563
    %1565 = vrot.lane.b32.xlu0 %v1379, 16
    %v1566 = vpop.permute.xlu0 %1565
    %1567 = vrot.lane.b32.xlu0 %v1380, 16
    %v1568 = vpop.permute.xlu0 %1567
    %1569 = vrot.lane.b32.xlu0 %v1381, 16
    %v1570 = vpop.permute.xlu0 %1569
    %1571 = vrot.lane.b32.xlu0 %v1382, 16
    %v1572 = vpop.permute.xlu0 %1571
    %1573 = vrot.lane.b32.xlu0 %v1383, 16
    %v1574 = vpop.permute.xlu0 %1573
    %1575 = vrot.lane.b32.xlu0 %v1384, 16
    %v1576 = vpop.permute.xlu0 %1575
    %vm1641 = vcmask 162944
    %1642 = vst.msk [vmem:[#allocation3] sm:$0xff] %vm1641, %v1450
    %1643 = vst.msk [vmem:[#allocation3 + $0x8] sm:$0xff] %vm1641, %v1452
    %1644 = vst.msk [vmem:[#allocation3 + $0x10] sm:$0xff] %vm1641, %v1454
    %1645 = vst.msk [vmem:[#allocation3 + $0x18] sm:$0xff] %vm1641, %v1456
    %1646 = vst.msk [vmem:[#allocation3 + $0x20] sm:$0xff] %vm1641, %v1458
    %1647 = vst.msk [vmem:[#allocation3 + $0x28] sm:$0xff] %vm1641, %v1460
    %1648 = vst.msk [vmem:[#allocation3 + $0x30] sm:$0xff] %vm1641, %v1462
    %1649 = vst.msk [vmem:[#allocation3 + $0x38] sm:$0xff] %vm1641, %v1464
    %1650 = vst.msk [vmem:[#allocation3 + $0x40] sm:$0xff] %vm1641, %v1466
    %1651 = vst.msk [vmem:[#allocation3 + $0x48] sm:$0xff] %vm1641, %v1468
    %1652 = vst.msk [vmem:[#allocation3 + $0x50] sm:$0xff] %vm1641, %v1470
    %1653 = vst.msk [vmem:[#allocation3 + $0x58] sm:$0xff] %vm1641, %v1472
    %1654 = vst.msk [vmem:[#allocation3 + $0x60] sm:$0xff] %vm1641, %v1474
    %1655 = vst.msk [vmem:[#allocation3 + $0x68] sm:$0xff] %vm1641, %v1476
    %1656 = vst.msk [vmem:[#allocation3 + $0x70] sm:$0xff] %vm1641, %v1478
    %1657 = vst.msk [vmem:[#allocation3 + $0x78] sm:$0xff] %vm1641, %v1480
    %1658 = vst.msk [vmem:[#allocation3 + $0x80] sm:$0xff] %vm1641, %v1482
    %1659 = vst.msk [vmem:[#allocation3 + $0x88] sm:$0xff] %vm1641, %v1484
    %1660 = vst.msk [vmem:[#allocation3 + $0x90] sm:$0xff] %vm1641, %v1486
    %1661 = vst.msk [vmem:[#allocation3 + $0x98] sm:$0xff] %vm1641, %v1488
    %1662 = vst.msk [vmem:[#allocation3 + $0xa0] sm:$0xff] %vm1641, %v1490
    %1663 = vst.msk [vmem:[#allocation3 + $0xa8] sm:$0xff] %vm1641, %v1492
    %1664 = vst.msk [vmem:[#allocation3 + $0xb0] sm:$0xff] %vm1641, %v1494
    %1665 = vst.msk [vmem:[#allocation3 + $0xb8] sm:$0xff] %vm1641, %v1496
    %1666 = vst.msk [vmem:[#allocation3 + $0xc0] sm:$0xff] %vm1641, %v1498
    %1667 = vst.msk [vmem:[#allocation3 + $0xc8] sm:$0xff] %vm1641, %v1500
    %1668 = vst.msk [vmem:[#allocation3 + $0xd0] sm:$0xff] %vm1641, %v1502
    %1669 = vst.msk [vmem:[#allocation3 + $0xd8] sm:$0xff] %vm1641, %v1504
    %1670 = vst.msk [vmem:[#allocation3 + $0xe0] sm:$0xff] %vm1641, %v1506
    %1671 = vst.msk [vmem:[#allocation3 + $0xe8] sm:$0xff] %vm1641, %v1508
    %1672 = vst.msk [vmem:[#allocation3 + $0xf0] sm:$0xff] %vm1641, %v1510
    %1673 = vst.msk [vmem:[#allocation3 + $0xf8] sm:$0xff] %vm1641, %v1512
    %1674 = vst.msk [vmem:[#allocation3 + $0x100] sm:$0xff] %vm1641, %v1514
    %1675 = vst.msk [vmem:[#allocation3 + $0x108] sm:$0xff] %vm1641, %v1516
    %1676 = vst.msk [vmem:[#allocation3 + $0x110] sm:$0xff] %vm1641, %v1518
    %1677 = vst.msk [vmem:[#allocation3 + $0x118] sm:$0xff] %vm1641, %v1520
    %1678 = vst.msk [vmem:[#allocation3 + $0x120] sm:$0xff] %vm1641, %v1522
    %1679 = vst.msk [vmem:[#allocation3 + $0x128] sm:$0xff] %vm1641, %v1524
    %1680 = vst.msk [vmem:[#allocation3 + $0x130] sm:$0xff] %vm1641, %v1526
    %1681 = vst.msk [vmem:[#allocation3 + $0x138] sm:$0xff] %vm1641, %v1528
    %1682 = vst.msk [vmem:[#allocation3 + $0x140] sm:$0xff] %vm1641, %v1530
    %1683 = vst.msk [vmem:[#allocation3 + $0x148] sm:$0xff] %vm1641, %v1532
    %1684 = vst.msk [vmem:[#allocation3 + $0x150] sm:$0xff] %vm1641, %v1534
    %1685 = vst.msk [vmem:[#allocation3 + $0x158] sm:$0xff] %vm1641, %v1536
    %1686 = vst.msk [vmem:[#allocation3 + $0x160] sm:$0xff] %vm1641, %v1538
    %1687 = vst.msk [vmem:[#allocation3 + $0x168] sm:$0xff] %vm1641, %v1540
    %1688 = vst.msk [vmem:[#allocation3 + $0x170] sm:$0xff] %vm1641, %v1542
    %1689 = vst.msk [vmem:[#allocation3 + $0x178] sm:$0xff] %vm1641, %v1544
    %1690 = vst.msk [vmem:[#allocation3 + $0x180] sm:$0xff] %vm1641, %v1546
    %1691 = vst.msk [vmem:[#allocation3 + $0x188] sm:$0xff] %vm1641, %v1548
    %1692 = vst.msk [vmem:[#allocation3 + $0x190] sm:$0xff] %vm1641, %v1550
    %1693 = vst.msk [vmem:[#allocation3 + $0x198] sm:$0xff] %vm1641, %v1552
    %1694 = vst.msk [vmem:[#allocation3 + $0x1a0] sm:$0xff] %vm1641, %v1554
    %1695 = vst.msk [vmem:[#allocation3 + $0x1a8] sm:$0xff] %vm1641, %v1556
    %1696 = vst.msk [vmem:[#allocation3 + $0x1b0] sm:$0xff] %vm1641, %v1558
    %1697 = vst.msk [vmem:[#allocation3 + $0x1b8] sm:$0xff] %vm1641, %v1560
    %1698 = vst.msk [vmem:[#allocation3 + $0x1c0] sm:$0xff] %vm1641, %v1562
    %1699 = vst.msk [vmem:[#allocation3 + $0x1c8] sm:$0xff] %vm1641, %v1564
    %1700 = vst.msk [vmem:[#allocation3 + $0x1d0] sm:$0xff] %vm1641, %v1566
    %1701 = vst.msk [vmem:[#allocation3 + $0x1d8] sm:$0xff] %vm1641, %v1568
    %1702 = vst.msk [vmem:[#allocation3 + $0x1e0] sm:$0xff] %vm1641, %v1570
    %1703 = vst.msk [vmem:[#allocation3 + $0x1e8] sm:$0xff] %vm1641, %v1572
    %1704 = vst.msk [vmem:[#allocation3 + $0x1f0] sm:$0xff] %vm1641, %v1574
    %1705 = vst.msk [vmem:[#allocation3 + $0x1f8] sm:$0xff] %vm1641, %v1576
    %v1706 = vld [vmem:[%s935 + $0x2] sm:$0xff]
    %v1707 = vld [vmem:[%s935 + $0xa] sm:$0xff]
    %v1708 = vld [vmem:[%s935 + $0x1a] sm:$0xff]
    %v1709 = vld [vmem:[%s935 + $0x22] sm:$0xff]
    %v1710 = vld [vmem:[%s935 + $0x32] sm:$0xff]
    %v1711 = vld [vmem:[%s935 + $0x3a] sm:$0xff]
    %v1712 = vld [vmem:[%s935 + $0x4a] sm:$0xff]
    %v1713 = vld [vmem:[%s935 + $0x52] sm:$0xff]
    %v1714 = vld [vmem:[%s935 + $0x62] sm:$0xff]
    %v1715 = vld [vmem:[%s935 + $0x6a] sm:$0xff]
    %v1716 = vld [vmem:[%s935 + $0x7a] sm:$0xff]
    %v1717 = vld [vmem:[%s935 + $0x82] sm:$0xff]
    %v1718 = vld [vmem:[%s935 + $0x92] sm:$0xff]
    %v1719 = vld [vmem:[%s935 + $0x9a] sm:$0xff]
    %v1720 = vld [vmem:[%s935 + $0xaa] sm:$0xff]
    %v1721 = vld [vmem:[%s935 + $0xb2] sm:$0xff]
    %v1722 = vld [vmem:[%s935 + $0xc2] sm:$0xff]
    %v1723 = vld [vmem:[%s935 + $0xca] sm:$0xff]
    %v1724 = vld [vmem:[%s935 + $0xda] sm:$0xff]
    %v1725 = vld [vmem:[%s935 + $0xe2] sm:$0xff]
    %v1726 = vld [vmem:[%s935 + $0xf2] sm:$0xff]
    %v1727 = vld [vmem:[%s935 + $0xfa] sm:$0xff]
    %v1728 = vld [vmem:[%s935 + $0x10a] sm:$0xff]
    %v1729 = vld [vmem:[%s935 + $0x112] sm:$0xff]
    %v1730 = vld [vmem:[%s935 + $0x122] sm:$0xff]
    %v1731 = vld [vmem:[%s935 + $0x12a] sm:$0xff]
    %v1732 = vld [vmem:[%s935 + $0x13a] sm:$0xff]
    %v1733 = vld [vmem:[%s935 + $0x142] sm:$0xff]
    %v1734 = vld [vmem:[%s935 + $0x152] sm:$0xff]
    %v1735 = vld [vmem:[%s935 + $0x15a] sm:$0xff]
    %v1736 = vld [vmem:[%s935 + $0x16a] sm:$0xff]
    %v1737 = vld [vmem:[%s935 + $0x172] sm:$0xff]
    %v1738 = vld [vmem:[%s935 + $0x1b2] sm:$0xff]
    %v1739 = vld [vmem:[%s935 + $0x1ba] sm:$0xff]
    %v1740 = vld [vmem:[%s935 + $0x1ca] sm:$0xff]
    %v1741 = vld [vmem:[%s935 + $0x1d2] sm:$0xff]
    %v1742 = vld [vmem:[%s935 + $0x1e2] sm:$0xff]
    %v1743 = vld [vmem:[%s935 + $0x1ea] sm:$0xff]
    %v1744 = vld [vmem:[%s935 + $0x1fa] sm:$0xff]
    %v1745 = vld [vmem:[%s935 + $0x202] sm:$0xff]
    %v1746 = vld [vmem:[%s935 + $0x212] sm:$0xff]
    %v1747 = vld [vmem:[%s935 + $0x21a] sm:$0xff]
    %v1748 = vld [vmem:[%s935 + $0x22a] sm:$0xff]
    %v1749 = vld [vmem:[%s935 + $0x232] sm:$0xff]
    %v1750 = vld [vmem:[%s935 + $0x242] sm:$0xff]
    %v1751 = vld [vmem:[%s935 + $0x24a] sm:$0xff]
    %v1752 = vld [vmem:[%s935 + $0x25a] sm:$0xff]
    %v1753 = vld [vmem:[%s935 + $0x262] sm:$0xff]
    %v1754 = vld [vmem:[%s935 + $0x272] sm:$0xff]
    %v1755 = vld [vmem:[%s935 + $0x27a] sm:$0xff]
    %v1756 = vld [vmem:[%s935 + $0x28a] sm:$0xff]
    %v1757 = vld [vmem:[%s935 + $0x292] sm:$0xff]
    %v1758 = vld [vmem:[%s935 + $0x2a2] sm:$0xff]
    %v1759 = vld [vmem:[%s935 + $0x2aa] sm:$0xff]
    %v1760 = vld [vmem:[%s935 + $0x2ba] sm:$0xff]
    %v1761 = vld [vmem:[%s935 + $0x2c2] sm:$0xff]
    %v1762 = vld [vmem:[%s935 + $0x2d2] sm:$0xff]
    %v1763 = vld [vmem:[%s935 + $0x2da] sm:$0xff]
    %v1764 = vld [vmem:[%s935 + $0x2ea] sm:$0xff]
    %v1765 = vld [vmem:[%s935 + $0x2f2] sm:$0xff]
    %v1766 = vld [vmem:[%s935 + $0x302] sm:$0xff]
    %v1767 = vld [vmem:[%s935 + $0x30a] sm:$0xff]
    %v1768 = vld [vmem:[%s935 + $0x31a] sm:$0xff]
    %v1769 = vld [vmem:[%s935 + $0x322] sm:$0xff]
    %1834 = vrot.lane.b32.xlu0 %v1706, 20
    %v1835 = vpop.permute.xlu0 %1834
    %1836 = vrot.lane.b32.xlu0 %v1707, 20
    %v1837 = vpop.permute.xlu0 %1836
    %1838 = vrot.lane.b32.xlu0 %v1708, 20
    %v1839 = vpop.permute.xlu0 %1838
    %1840 = vrot.lane.b32.xlu0 %v1709, 20
    %v1841 = vpop.permute.xlu0 %1840
    %1842 = vrot.lane.b32.xlu0 %v1710, 20
    %v1843 = vpop.permute.xlu0 %1842
    %1844 = vrot.lane.b32.xlu0 %v1711, 20
    %v1845 = vpop.permute.xlu0 %1844
    %1846 = vrot.lane.b32.xlu0 %v1712, 20
    %v1847 = vpop.permute.xlu0 %1846
    %1848 = vrot.lane.b32.xlu0 %v1713, 20
    %v1849 = vpop.permute.xlu0 %1848
    %1850 = vrot.lane.b32.xlu0 %v1714, 20
    %v1851 = vpop.permute.xlu0 %1850
    %1852 = vrot.lane.b32.xlu0 %v1715, 20
    %v1853 = vpop.permute.xlu0 %1852
    %1854 = vrot.lane.b32.xlu0 %v1716, 20
    %v1855 = vpop.permute.xlu0 %1854
    %1856 = vrot.lane.b32.xlu0 %v1717, 20
    %v1857 = vpop.permute.xlu0 %1856
    %1858 = vrot.lane.b32.xlu0 %v1718, 20
    %v1859 = vpop.permute.xlu0 %1858
    %1860 = vrot.lane.b32.xlu0 %v1719, 20
    %v1861 = vpop.permute.xlu0 %1860
    %1862 = vrot.lane.b32.xlu0 %v1720, 20
    %v1863 = vpop.permute.xlu0 %1862
    %1864 = vrot.lane.b32.xlu0 %v1721, 20
    %v1865 = vpop.permute.xlu0 %1864
    %1866 = vrot.lane.b32.xlu0 %v1722, 20
    %v1867 = vpop.permute.xlu0 %1866
    %1868 = vrot.lane.b32.xlu0 %v1723, 20
    %v1869 = vpop.permute.xlu0 %1868
    %1870 = vrot.lane.b32.xlu0 %v1724, 20
    %v1871 = vpop.permute.xlu0 %1870
    %1872 = vrot.lane.b32.xlu0 %v1725, 20
    %v1873 = vpop.permute.xlu0 %1872
    %1874 = vrot.lane.b32.xlu0 %v1726, 20
    %v1875 = vpop.permute.xlu0 %1874
    %1876 = vrot.lane.b32.xlu0 %v1727, 20
    %v1877 = vpop.permute.xlu0 %1876
    %1878 = vrot.lane.b32.xlu0 %v1728, 20
    %v1879 = vpop.permute.xlu0 %1878
    %1880 = vrot.lane.b32.xlu0 %v1729, 20
    %v1881 = vpop.permute.xlu0 %1880
    %1882 = vrot.lane.b32.xlu0 %v1730, 20
    %v1883 = vpop.permute.xlu0 %1882
    %1884 = vrot.lane.b32.xlu0 %v1731, 20
    %v1885 = vpop.permute.xlu0 %1884
    %1886 = vrot.lane.b32.xlu0 %v1732, 20
    %v1887 = vpop.permute.xlu0 %1886
    %1888 = vrot.lane.b32.xlu0 %v1733, 20
    %v1889 = vpop.permute.xlu0 %1888
    %1890 = vrot.lane.b32.xlu0 %v1734, 20
    %v1891 = vpop.permute.xlu0 %1890
    %1892 = vrot.lane.b32.xlu0 %v1735, 20
    %v1893 = vpop.permute.xlu0 %1892
    %1894 = vrot.lane.b32.xlu0 %v1736, 20
    %v1895 = vpop.permute.xlu0 %1894
    %1896 = vrot.lane.b32.xlu0 %v1737, 20
    %v1897 = vpop.permute.xlu0 %1896
    %1898 = vrot.lane.b32.xlu0 %v1738, 20
    %v1899 = vpop.permute.xlu0 %1898
    %1900 = vrot.lane.b32.xlu0 %v1739, 20
    %v1901 = vpop.permute.xlu0 %1900
    %1902 = vrot.lane.b32.xlu0 %v1740, 20
    %v1903 = vpop.permute.xlu0 %1902
    %1904 = vrot.lane.b32.xlu0 %v1741, 20
    %v1905 = vpop.permute.xlu0 %1904
    %1906 = vrot.lane.b32.xlu0 %v1742, 20
    %v1907 = vpop.permute.xlu0 %1906
    %1908 = vrot.lane.b32.xlu0 %v1743, 20
    %v1909 = vpop.permute.xlu0 %1908
    %1910 = vrot.lane.b32.xlu0 %v1744, 20
    %v1911 = vpop.permute.xlu0 %1910
    %1912 = vrot.lane.b32.xlu0 %v1745, 20
    %v1913 = vpop.permute.xlu0 %1912
    %1914 = vrot.lane.b32.xlu0 %v1746, 20
    %v1915 = vpop.permute.xlu0 %1914
    %1916 = vrot.lane.b32.xlu0 %v1747, 20
    %v1917 = vpop.permute.xlu0 %1916
    %1918 = vrot.lane.b32.xlu0 %v1748, 20
    %v1919 = vpop.permute.xlu0 %1918
    %1920 = vrot.lane.b32.xlu0 %v1749, 20
    %v1921 = vpop.permute.xlu0 %1920
    %1922 = vrot.lane.b32.xlu0 %v1750, 20
    %v1923 = vpop.permute.xlu0 %1922
    %1924 = vrot.lane.b32.xlu0 %v1751, 20
    %v1925 = vpop.permute.xlu0 %1924
    %1926 = vrot.lane.b32.xlu0 %v1752, 20
    %v1927 = vpop.permute.xlu0 %1926
    %1928 = vrot.lane.b32.xlu0 %v1753, 20
    %v1929 = vpop.permute.xlu0 %1928
    %1930 = vrot.lane.b32.xlu0 %v1754, 20
    %v1931 = vpop.permute.xlu0 %1930
    %1932 = vrot.lane.b32.xlu0 %v1755, 20
    %v1933 = vpop.permute.xlu0 %1932
    %1934 = vrot.lane.b32.xlu0 %v1756, 20
    %v1935 = vpop.permute.xlu0 %1934
    %1936 = vrot.lane.b32.xlu0 %v1757, 20
    %v1937 = vpop.permute.xlu0 %1936
    %1938 = vrot.lane.b32.xlu0 %v1758, 20
    %v1939 = vpop.permute.xlu0 %1938
    %1940 = vrot.lane.b32.xlu0 %v1759, 20
    %v1941 = vpop.permute.xlu0 %1940
    %1942 = vrot.lane.b32.xlu0 %v1760, 20
    %v1943 = vpop.permute.xlu0 %1942
    %1944 = vrot.lane.b32.xlu0 %v1761, 20
    %v1945 = vpop.permute.xlu0 %1944
    %1946 = vrot.lane.b32.xlu0 %v1762, 20
    %v1947 = vpop.permute.xlu0 %1946
    %1948 = vrot.lane.b32.xlu0 %v1763, 20
    %v1949 = vpop.permute.xlu0 %1948
    %1950 = vrot.lane.b32.xlu0 %v1764, 20
    %v1951 = vpop.permute.xlu0 %1950
    %1952 = vrot.lane.b32.xlu0 %v1765, 20
    %v1953 = vpop.permute.xlu0 %1952
    %1954 = vrot.lane.b32.xlu0 %v1766, 20
    %v1955 = vpop.permute.xlu0 %1954
    %1956 = vrot.lane.b32.xlu0 %v1767, 20
    %v1957 = vpop.permute.xlu0 %1956
    %1958 = vrot.lane.b32.xlu0 %v1768, 20
    %v1959 = vpop.permute.xlu0 %1958
    %1960 = vrot.lane.b32.xlu0 %v1769, 20
    %v1961 = vpop.permute.xlu0 %1960
    %vm2026 = vcmask 195744
    %2027 = vst.msk [vmem:[#allocation3] sm:$0xff] %vm2026, %v1835
    %2028 = vst.msk [vmem:[#allocation3 + $0x8] sm:$0xff] %vm2026, %v1837
    %2029 = vst.msk [vmem:[#allocation3 + $0x10] sm:$0xff] %vm2026, %v1839
    %2030 = vst.msk [vmem:[#allocation3 + $0x18] sm:$0xff] %vm2026, %v1841
    %2031 = vst.msk [vmem:[#allocation3 + $0x20] sm:$0xff] %vm2026, %v1843
    %2032 = vst.msk [vmem:[#allocation3 + $0x28] sm:$0xff] %vm2026, %v1845
    %2033 = vst.msk [vmem:[#allocation3 + $0x30] sm:$0xff] %vm2026, %v1847
    %2034 = vst.msk [vmem:[#allocation3 + $0x38] sm:$0xff] %vm2026, %v1849
    %2035 = vst.msk [vmem:[#allocation3 + $0x40] sm:$0xff] %vm2026, %v1851
    %2036 = vst.msk [vmem:[#allocation3 + $0x48] sm:$0xff] %vm2026, %v1853
    %2037 = vst.msk [vmem:[#allocation3 + $0x50] sm:$0xff] %vm2026, %v1855
    %2038 = vst.msk [vmem:[#allocation3 + $0x58] sm:$0xff] %vm2026, %v1857
    %2039 = vst.msk [vmem:[#allocation3 + $0x60] sm:$0xff] %vm2026, %v1859
    %2040 = vst.msk [vmem:[#allocation3 + $0x68] sm:$0xff] %vm2026, %v1861
    %2041 = vst.msk [vmem:[#allocation3 + $0x70] sm:$0xff] %vm2026, %v1863
    %2042 = vst.msk [vmem:[#allocation3 + $0x78] sm:$0xff] %vm2026, %v1865
    %2043 = vst.msk [vmem:[#allocation3 + $0x80] sm:$0xff] %vm2026, %v1867
    %2044 = vst.msk [vmem:[#allocation3 + $0x88] sm:$0xff] %vm2026, %v1869
    %2045 = vst.msk [vmem:[#allocation3 + $0x90] sm:$0xff] %vm2026, %v1871
    %2046 = vst.msk [vmem:[#allocation3 + $0x98] sm:$0xff] %vm2026, %v1873
    %2047 = vst.msk [vmem:[#allocation3 + $0xa0] sm:$0xff] %vm2026, %v1875
    %2048 = vst.msk [vmem:[#allocation3 + $0xa8] sm:$0xff] %vm2026, %v1877
    %2049 = vst.msk [vmem:[#allocation3 + $0xb0] sm:$0xff] %vm2026, %v1879
    %2050 = vst.msk [vmem:[#allocation3 + $0xb8] sm:$0xff] %vm2026, %v1881
    %2051 = vst.msk [vmem:[#allocation3 + $0xc0] sm:$0xff] %vm2026, %v1883
    %2052 = vst.msk [vmem:[#allocation3 + $0xc8] sm:$0xff] %vm2026, %v1885
    %2053 = vst.msk [vmem:[#allocation3 + $0xd0] sm:$0xff] %vm2026, %v1887
    %2054 = vst.msk [vmem:[#allocation3 + $0xd8] sm:$0xff] %vm2026, %v1889
    %2055 = vst.msk [vmem:[#allocation3 + $0xe0] sm:$0xff] %vm2026, %v1891
    %2056 = vst.msk [vmem:[#allocation3 + $0xe8] sm:$0xff] %vm2026, %v1893
    %2057 = vst.msk [vmem:[#allocation3 + $0xf0] sm:$0xff] %vm2026, %v1895
    %2058 = vst.msk [vmem:[#allocation3 + $0xf8] sm:$0xff] %vm2026, %v1897
    %2059 = vst.msk [vmem:[#allocation3 + $0x100] sm:$0xff] %vm2026, %v1899
    %2060 = vst.msk [vmem:[#allocation3 + $0x108] sm:$0xff] %vm2026, %v1901
    %2061 = vst.msk [vmem:[#allocation3 + $0x110] sm:$0xff] %vm2026, %v1903
    %2062 = vst.msk [vmem:[#allocation3 + $0x118] sm:$0xff] %vm2026, %v1905
    %2063 = vst.msk [vmem:[#allocation3 + $0x120] sm:$0xff] %vm2026, %v1907
    %2064 = vst.msk [vmem:[#allocation3 + $0x128] sm:$0xff] %vm2026, %v1909
    %2065 = vst.msk [vmem:[#allocation3 + $0x130] sm:$0xff] %vm2026, %v1911
    %2066 = vst.msk [vmem:[#allocation3 + $0x138] sm:$0xff] %vm2026, %v1913
    %2067 = vst.msk [vmem:[#allocation3 + $0x140] sm:$0xff] %vm2026, %v1915
    %2068 = vst.msk [vmem:[#allocation3 + $0x148] sm:$0xff] %vm2026, %v1917
    %2069 = vst.msk [vmem:[#allocation3 + $0x150] sm:$0xff] %vm2026, %v1919
    %2070 = vst.msk [vmem:[#allocation3 + $0x158] sm:$0xff] %vm2026, %v1921
    %2071 = vst.msk [vmem:[#allocation3 + $0x160] sm:$0xff] %vm2026, %v1923
    %2072 = vst.msk [vmem:[#allocation3 + $0x168] sm:$0xff] %vm2026, %v1925
    %2073 = vst.msk [vmem:[#allocation3 + $0x170] sm:$0xff] %vm2026, %v1927
    %2074 = vst.msk [vmem:[#allocation3 + $0x178] sm:$0xff] %vm2026, %v1929
    %2075 = vst.msk [vmem:[#allocation3 + $0x180] sm:$0xff] %vm2026, %v1931
    %2076 = vst.msk [vmem:[#allocation3 + $0x188] sm:$0xff] %vm2026, %v1933
    %2077 = vst.msk [vmem:[#allocation3 + $0x190] sm:$0xff] %vm2026, %v1935
    %2078 = vst.msk [vmem:[#allocation3 + $0x198] sm:$0xff] %vm2026, %v1937
    %2079 = vst.msk [vmem:[#allocation3 + $0x1a0] sm:$0xff] %vm2026, %v1939
    %2080 = vst.msk [vmem:[#allocation3 + $0x1a8] sm:$0xff] %vm2026, %v1941
    %2081 = vst.msk [vmem:[#allocation3 + $0x1b0] sm:$0xff] %vm2026, %v1943
    %2082 = vst.msk [vmem:[#allocation3 + $0x1b8] sm:$0xff] %vm2026, %v1945
    %2083 = vst.msk [vmem:[#allocation3 + $0x1c0] sm:$0xff] %vm2026, %v1947
    %2084 = vst.msk [vmem:[#allocation3 + $0x1c8] sm:$0xff] %vm2026, %v1949
    %2085 = vst.msk [vmem:[#allocation3 + $0x1d0] sm:$0xff] %vm2026, %v1951
    %2086 = vst.msk [vmem:[#allocation3 + $0x1d8] sm:$0xff] %vm2026, %v1953
    %2087 = vst.msk [vmem:[#allocation3 + $0x1e0] sm:$0xff] %vm2026, %v1955
    %2088 = vst.msk [vmem:[#allocation3 + $0x1e8] sm:$0xff] %vm2026, %v1957
    %2089 = vst.msk [vmem:[#allocation3 + $0x1f0] sm:$0xff] %vm2026, %v1959
    %2090 = vst.msk [vmem:[#allocation3 + $0x1f8] sm:$0xff] %vm2026, %v1961
    %s2091 = scalar_lea.vmem %s0, 48
    %v2092 = vld [vmem:[%s2091] sm:$0xff]
    %v2093 = vld [vmem:[%s2091 + $0x8] sm:$0xff]
    %v2094 = vld [vmem:[%s2091 + $0x18] sm:$0xff]
    %v2095 = vld [vmem:[%s2091 + $0x20] sm:$0xff]
    %v2096 = vld [vmem:[%s2091 + $0x30] sm:$0xff]
    %v2097 = vld [vmem:[%s2091 + $0x38] sm:$0xff]
    %v2098 = vld [vmem:[%s2091 + $0x48] sm:$0xff]
    %v2099 = vld [vmem:[%s2091 + $0x50] sm:$0xff]
    %v2100 = vld [vmem:[%s2091 + $0x60] sm:$0xff]
    %v2101 = vld [vmem:[%s2091 + $0x68] sm:$0xff]
    %v2102 = vld [vmem:[%s2091 + $0x78] sm:$0xff]
    %v2103 = vld [vmem:[%s2091 + $0x80] sm:$0xff]
    %v2104 = vld [vmem:[%s2091 + $0x90] sm:$0xff]
    %v2105 = vld [vmem:[%s2091 + $0x98] sm:$0xff]
    %v2106 = vld [vmem:[%s2091 + $0xa8] sm:$0xff]
    %v2107 = vld [vmem:[%s2091 + $0xb0] sm:$0xff]
    %v2108 = vld [vmem:[%s2091 + $0xc0] sm:$0xff]
    %v2109 = vld [vmem:[%s2091 + $0xc8] sm:$0xff]
    %v2110 = vld [vmem:[%s2091 + $0xd8] sm:$0xff]
    %v2111 = vld [vmem:[%s2091 + $0xe0] sm:$0xff]
    %v2112 = vld [vmem:[%s2091 + $0xf0] sm:$0xff]
    %v2113 = vld [vmem:[%s2091 + $0xf8] sm:$0xff]
    %v2114 = vld [vmem:[%s2091 + $0x108] sm:$0xff]
    %v2115 = vld [vmem:[%s2091 + $0x110] sm:$0xff]
    %v2116 = vld [vmem:[%s2091 + $0x120] sm:$0xff]
    %v2117 = vld [vmem:[%s2091 + $0x128] sm:$0xff]
    %v2118 = vld [vmem:[%s2091 + $0x138] sm:$0xff]
    %v2119 = vld [vmem:[%s2091 + $0x140] sm:$0xff]
    %v2120 = vld [vmem:[%s2091 + $0x150] sm:$0xff]
    %v2121 = vld [vmem:[%s2091 + $0x158] sm:$0xff]
    %v2122 = vld [vmem:[%s2091 + $0x168] sm:$0xff]
    %v2123 = vld [vmem:[%s2091 + $0x170] sm:$0xff]
    %v2124 = vld [vmem:[%s2091 + $0x1b0] sm:$0xff]
    %v2125 = vld [vmem:[%s2091 + $0x1b8] sm:$0xff]
    %v2126 = vld [vmem:[%s2091 + $0x1c8] sm:$0xff]
    %v2127 = vld [vmem:[%s2091 + $0x1d0] sm:$0xff]
    %v2128 = vld [vmem:[%s2091 + $0x1e0] sm:$0xff]
    %v2129 = vld [vmem:[%s2091 + $0x1e8] sm:$0xff]
    %v2130 = vld [vmem:[%s2091 + $0x1f8] sm:$0xff]
    %v2131 = vld [vmem:[%s2091 + $0x200] sm:$0xff]
    %v2132 = vld [vmem:[%s2091 + $0x210] sm:$0xff]
    %v2133 = vld [vmem:[%s2091 + $0x218] sm:$0xff]
    %v2134 = vld [vmem:[%s2091 + $0x228] sm:$0xff]
    %v2135 = vld [vmem:[%s2091 + $0x230] sm:$0xff]
    %v2136 = vld [vmem:[%s2091 + $0x240] sm:$0xff]
    %v2137 = vld [vmem:[%s2091 + $0x248] sm:$0xff]
    %v2138 = vld [vmem:[%s2091 + $0x258] sm:$0xff]
    %v2139 = vld [vmem:[%s2091 + $0x260] sm:$0xff]
    %v2140 = vld [vmem:[%s2091 + $0x270] sm:$0xff]
    %v2141 = vld [vmem:[%s2091 + $0x278] sm:$0xff]
    %v2142 = vld [vmem:[%s2091 + $0x288] sm:$0xff]
    %v2143 = vld [vmem:[%s2091 + $0x290] sm:$0xff]
    %v2144 = vld [vmem:[%s2091 + $0x2a0] sm:$0xff]
    %v2145 = vld [vmem:[%s2091 + $0x2a8] sm:$0xff]
    %v2146 = vld [vmem:[%s2091 + $0x2b8] sm:$0xff]
    %v2147 = vld [vmem:[%s2091 + $0x2c0] sm:$0xff]
    %v2148 = vld [vmem:[%s2091 + $0x2d0] sm:$0xff]
    %v2149 = vld [vmem:[%s2091 + $0x2d8] sm:$0xff]
    %v2150 = vld [vmem:[%s2091 + $0x2e8] sm:$0xff]
    %v2151 = vld [vmem:[%s2091 + $0x2f0] sm:$0xff]
    %v2152 = vld [vmem:[%s2091 + $0x300] sm:$0xff]
    %v2153 = vld [vmem:[%s2091 + $0x308] sm:$0xff]
    %v2154 = vld [vmem:[%s2091 + $0x318] sm:$0xff]
    %v2155 = vld [vmem:[%s2091 + $0x320] sm:$0xff]
    %2220 = vrot.lane.b32.xlu0 %v2092, 24
    %v2221 = vpop.permute.xlu0 %2220
    %2222 = vrot.lane.b32.xlu0 %v2093, 24
    %v2223 = vpop.permute.xlu0 %2222
    %2224 = vrot.lane.b32.xlu0 %v2094, 24
    %v2225 = vpop.permute.xlu0 %2224
    %2226 = vrot.lane.b32.xlu0 %v2095, 24
    %v2227 = vpop.permute.xlu0 %2226
    %2228 = vrot.lane.b32.xlu0 %v2096, 24
    %v2229 = vpop.permute.xlu0 %2228
    %2230 = vrot.lane.b32.xlu0 %v2097, 24
    %v2231 = vpop.permute.xlu0 %2230
    %2232 = vrot.lane.b32.xlu0 %v2098, 24
    %v2233 = vpop.permute.xlu0 %2232
    %2234 = vrot.lane.b32.xlu0 %v2099, 24
    %v2235 = vpop.permute.xlu0 %2234
    %2236 = vrot.lane.b32.xlu0 %v2100, 24
    %v2237 = vpop.permute.xlu0 %2236
    %2238 = vrot.lane.b32.xlu0 %v2101, 24
    %v2239 = vpop.permute.xlu0 %2238
    %2240 = vrot.lane.b32.xlu0 %v2102, 24
    %v2241 = vpop.permute.xlu0 %2240
    %2242 = vrot.lane.b32.xlu0 %v2103, 24
    %v2243 = vpop.permute.xlu0 %2242
    %2244 = vrot.lane.b32.xlu0 %v2104, 24
    %v2245 = vpop.permute.xlu0 %2244
    %2246 = vrot.lane.b32.xlu0 %v2105, 24
    %v2247 = vpop.permute.xlu0 %2246
    %2248 = vrot.lane.b32.xlu0 %v2106, 24
    %v2249 = vpop.permute.xlu0 %2248
    %2250 = vrot.lane.b32.xlu0 %v2107, 24
    %v2251 = vpop.permute.xlu0 %2250
    %2252 = vrot.lane.b32.xlu0 %v2108, 24
    %v2253 = vpop.permute.xlu0 %2252
    %2254 = vrot.lane.b32.xlu0 %v2109, 24
    %v2255 = vpop.permute.xlu0 %2254
    %2256 = vrot.lane.b32.xlu0 %v2110, 24
    %v2257 = vpop.permute.xlu0 %2256
    %2258 = vrot.lane.b32.xlu0 %v2111, 24
    %v2259 = vpop.permute.xlu0 %2258
    %2260 = vrot.lane.b32.xlu0 %v2112, 24
    %v2261 = vpop.permute.xlu0 %2260
    %2262 = vrot.lane.b32.xlu0 %v2113, 24
    %v2263 = vpop.permute.xlu0 %2262
    %2264 = vrot.lane.b32.xlu0 %v2114, 24
    %v2265 = vpop.permute.xlu0 %2264
    %2266 = vrot.lane.b32.xlu0 %v2115, 24
    %v2267 = vpop.permute.xlu0 %2266
    %2268 = vrot.lane.b32.xlu0 %v2116, 24
    %v2269 = vpop.permute.xlu0 %2268
    %2270 = vrot.lane.b32.xlu0 %v2117, 24
    %v2271 = vpop.permute.xlu0 %2270
    %2272 = vrot.lane.b32.xlu0 %v2118, 24
    %v2273 = vpop.permute.xlu0 %2272
    %2274 = vrot.lane.b32.xlu0 %v2119, 24
    %v2275 = vpop.permute.xlu0 %2274
    %2276 = vrot.lane.b32.xlu0 %v2120, 24
    %v2277 = vpop.permute.xlu0 %2276
    %2278 = vrot.lane.b32.xlu0 %v2121, 24
    %v2279 = vpop.permute.xlu0 %2278
    %2280 = vrot.lane.b32.xlu0 %v2122, 24
    %v2281 = vpop.permute.xlu0 %2280
    %2282 = vrot.lane.b32.xlu0 %v2123, 24
    %v2283 = vpop.permute.xlu0 %2282
    %2284 = vrot.lane.b32.xlu0 %v2124, 24
    %v2285 = vpop.permute.xlu0 %2284
    %2286 = vrot.lane.b32.xlu0 %v2125, 24
    %v2287 = vpop.permute.xlu0 %2286
    %2288 = vrot.lane.b32.xlu0 %v2126, 24
    %v2289 = vpop.permute.xlu0 %2288
    %2290 = vrot.lane.b32.xlu0 %v2127, 24
    %v2291 = vpop.permute.xlu0 %2290
    %2292 = vrot.lane.b32.xlu0 %v2128, 24
    %v2293 = vpop.permute.xlu0 %2292
    %2294 = vrot.lane.b32.xlu0 %v2129, 24
    %v2295 = vpop.permute.xlu0 %2294
    %2296 = vrot.lane.b32.xlu0 %v2130, 24
    %v2297 = vpop.permute.xlu0 %2296
    %2298 = vrot.lane.b32.xlu0 %v2131, 24
    %v2299 = vpop.permute.xlu0 %2298
    %2300 = vrot.lane.b32.xlu0 %v2132, 24
    %v2301 = vpop.permute.xlu0 %2300
    %2302 = vrot.lane.b32.xlu0 %v2133, 24
    %v2303 = vpop.permute.xlu0 %2302
    %2304 = vrot.lane.b32.xlu0 %v2134, 24
    %v2305 = vpop.permute.xlu0 %2304
    %2306 = vrot.lane.b32.xlu0 %v2135, 24
    %v2307 = vpop.permute.xlu0 %2306
    %2308 = vrot.lane.b32.xlu0 %v2136, 24
    %v2309 = vpop.permute.xlu0 %2308
    %2310 = vrot.lane.b32.xlu0 %v2137, 24
    %v2311 = vpop.permute.xlu0 %2310
    %2312 = vrot.lane.b32.xlu0 %v2138, 24
    %v2313 = vpop.permute.xlu0 %2312
    %2314 = vrot.lane.b32.xlu0 %v2139, 24
    %v2315 = vpop.permute.xlu0 %2314
    %2316 = vrot.lane.b32.xlu0 %v2140, 24
    %v2317 = vpop.permute.xlu0 %2316
    %2318 = vrot.lane.b32.xlu0 %v2141, 24
    %v2319 = vpop.permute.xlu0 %2318
    %2320 = vrot.lane.b32.xlu0 %v2142, 24
    %v2321 = vpop.permute.xlu0 %2320
    %2322 = vrot.lane.b32.xlu0 %v2143, 24
    %v2323 = vpop.permute.xlu0 %2322
    %2324 = vrot.lane.b32.xlu0 %v2144, 24
    %v2325 = vpop.permute.xlu0 %2324
    %2326 = vrot.lane.b32.xlu0 %v2145, 24
    %v2327 = vpop.permute.xlu0 %2326
    %2328 = vrot.lane.b32.xlu0 %v2146, 24
    %v2329 = vpop.permute.xlu0 %2328
    %2330 = vrot.lane.b32.xlu0 %v2147, 24
    %v2331 = vpop.permute.xlu0 %2330
    %2332 = vrot.lane.b32.xlu0 %v2148, 24
    %v2333 = vpop.permute.xlu0 %2332
    %2334 = vrot.lane.b32.xlu0 %v2149, 24
    %v2335 = vpop.permute.xlu0 %2334
    %2336 = vrot.lane.b32.xlu0 %v2150, 24
    %v2337 = vpop.permute.xlu0 %2336
    %2338 = vrot.lane.b32.xlu0 %v2151, 24
    %v2339 = vpop.permute.xlu0 %2338
    %2340 = vrot.lane.b32.xlu0 %v2152, 24
    %v2341 = vpop.permute.xlu0 %2340
    %2342 = vrot.lane.b32.xlu0 %v2153, 24
    %v2343 = vpop.permute.xlu0 %2342
    %2344 = vrot.lane.b32.xlu0 %v2154, 24
    %v2345 = vpop.permute.xlu0 %2344
    %2346 = vrot.lane.b32.xlu0 %v2155, 24
    %v2347 = vpop.permute.xlu0 %2346
    %vm2412 = vcmask 228544
    %2413 = vst.msk [vmem:[#allocation3] sm:$0xff] %vm2412, %v2221
    %2414 = vst.msk [vmem:[#allocation3 + $0x8] sm:$0xff] %vm2412, %v2223
    %2415 = vst.msk [vmem:[#allocation3 + $0x10] sm:$0xff] %vm2412, %v2225
    %2416 = vst.msk [vmem:[#allocation3 + $0x18] sm:$0xff] %vm2412, %v2227
    %2417 = vst.msk [vmem:[#allocation3 + $0x20] sm:$0xff] %vm2412, %v2229
    %2418 = vst.msk [vmem:[#allocation3 + $0x28] sm:$0xff] %vm2412, %v2231
    %2419 = vst.msk [vmem:[#allocation3 + $0x30] sm:$0xff] %vm2412, %v2233
    %2420 = vst.msk [vmem:[#allocation3 + $0x38] sm:$0xff] %vm2412, %v2235
    %2421 = vst.msk [vmem:[#allocation3 + $0x40] sm:$0xff] %vm2412, %v2237
    %2422 = vst.msk [vmem:[#allocation3 + $0x48] sm:$0xff] %vm2412, %v2239
    %2423 = vst.msk [vmem:[#allocation3 + $0x50] sm:$0xff] %vm2412, %v2241
    %2424 = vst.msk [vmem:[#allocation3 + $0x58] sm:$0xff] %vm2412, %v2243
    %2425 = vst.msk [vmem:[#allocation3 + $0x60] sm:$0xff] %vm2412, %v2245
    %2426 = vst.msk [vmem:[#allocation3 + $0x68] sm:$0xff] %vm2412, %v2247
    %2427 = vst.msk [vmem:[#allocation3 + $0x70] sm:$0xff] %vm2412, %v2249
    %2428 = vst.msk [vmem:[#allocation3 + $0x78] sm:$0xff] %vm2412, %v2251
    %2429 = vst.msk [vmem:[#allocation3 + $0x80] sm:$0xff] %vm2412, %v2253
    %2430 = vst.msk [vmem:[#allocation3 + $0x88] sm:$0xff] %vm2412, %v2255
    %2431 = vst.msk [vmem:[#allocation3 + $0x90] sm:$0xff] %vm2412, %v2257
    %2432 = vst.msk [vmem:[#allocation3 + $0x98] sm:$0xff] %vm2412, %v2259
    %2433 = vst.msk [vmem:[#allocation3 + $0xa0] sm:$0xff] %vm2412, %v2261
    %2434 = vst.msk [vmem:[#allocation3 + $0xa8] sm:$0xff] %vm2412, %v2263
    %2435 = vst.msk [vmem:[#allocation3 + $0xb0] sm:$0xff] %vm2412, %v2265
    %2436 = vst.msk [vmem:[#allocation3 + $0xb8] sm:$0xff] %vm2412, %v2267
    %2437 = vst.msk [vmem:[#allocation3 + $0xc0] sm:$0xff] %vm2412, %v2269
    %2438 = vst.msk [vmem:[#allocation3 + $0xc8] sm:$0xff] %vm2412, %v2271
    %2439 = vst.msk [vmem:[#allocation3 + $0xd0] sm:$0xff] %vm2412, %v2273
    %2440 = vst.msk [vmem:[#allocation3 + $0xd8] sm:$0xff] %vm2412, %v2275
    %2441 = vst.msk [vmem:[#allocation3 + $0xe0] sm:$0xff] %vm2412, %v2277
    %2442 = vst.msk [vmem:[#allocation3 + $0xe8] sm:$0xff] %vm2412, %v2279
    %2443 = vst.msk [vmem:[#allocation3 + $0xf0] sm:$0xff] %vm2412, %v2281
    %2444 = vst.msk [vmem:[#allocation3 + $0xf8] sm:$0xff] %vm2412, %v2283
    %2445 = vst.msk [vmem:[#allocation3 + $0x100] sm:$0xff] %vm2412, %v2285
    %2446 = vst.msk [vmem:[#allocation3 + $0x108] sm:$0xff] %vm2412, %v2287
    %2447 = vst.msk [vmem:[#allocation3 + $0x110] sm:$0xff] %vm2412, %v2289
    %2448 = vst.msk [vmem:[#allocation3 + $0x118] sm:$0xff] %vm2412, %v2291
    %2449 = vst.msk [vmem:[#allocation3 + $0x120] sm:$0xff] %vm2412, %v2293
    %2450 = vst.msk [vmem:[#allocation3 + $0x128] sm:$0xff] %vm2412, %v2295
    %2451 = vst.msk [vmem:[#allocation3 + $0x130] sm:$0xff] %vm2412, %v2297
    %2452 = vst.msk [vmem:[#allocation3 + $0x138] sm:$0xff] %vm2412, %v2299
    %2453 = vst.msk [vmem:[#allocation3 + $0x140] sm:$0xff] %vm2412, %v2301
    %2454 = vst.msk [vmem:[#allocation3 + $0x148] sm:$0xff] %vm2412, %v2303
    %2455 = vst.msk [vmem:[#allocation3 + $0x150] sm:$0xff] %vm2412, %v2305
    %2456 = vst.msk [vmem:[#allocation3 + $0x158] sm:$0xff] %vm2412, %v2307
    %2457 = vst.msk [vmem:[#allocation3 + $0x160] sm:$0xff] %vm2412, %v2309
    %2458 = vst.msk [vmem:[#allocation3 + $0x168] sm:$0xff] %vm2412, %v2311
    %2459 = vst.msk [vmem:[#allocation3 + $0x170] sm:$0xff] %vm2412, %v2313
    %2460 = vst.msk [vmem:[#allocation3 + $0x178] sm:$0xff] %vm2412, %v2315
    %2461 = vst.msk [vmem:[#allocation3 + $0x180] sm:$0xff] %vm2412, %v2317
    %2462 = vst.msk [vmem:[#allocation3 + $0x188] sm:$0xff] %vm2412, %v2319
    %2463 = vst.msk [vmem:[#allocation3 + $0x190] sm:$0xff] %vm2412, %v2321
    %2464 = vst.msk [vmem:[#allocation3 + $0x198] sm:$0xff] %vm2412, %v2323
    %2465 = vst.msk [vmem:[#allocation3 + $0x1a0] sm:$0xff] %vm2412, %v2325
    %2466 = vst.msk [vmem:[#allocation3 + $0x1a8] sm:$0xff] %vm2412, %v2327
    %2467 = vst.msk [vmem:[#allocation3 + $0x1b0] sm:$0xff] %vm2412, %v2329
    %2468 = vst.msk [vmem:[#allocation3 + $0x1b8] sm:$0xff] %vm2412, %v2331
    %2469 = vst.msk [vmem:[#allocation3 + $0x1c0] sm:$0xff] %vm2412, %v2333
    %2470 = vst.msk [vmem:[#allocation3 + $0x1c8] sm:$0xff] %vm2412, %v2335
    %2471 = vst.msk [vmem:[#allocation3 + $0x1d0] sm:$0xff] %vm2412, %v2337
    %2472 = vst.msk [vmem:[#allocation3 + $0x1d8] sm:$0xff] %vm2412, %v2339
    %2473 = vst.msk [vmem:[#allocation3 + $0x1e0] sm:$0xff] %vm2412, %v2341
    %2474 = vst.msk [vmem:[#allocation3 + $0x1e8] sm:$0xff] %vm2412, %v2343
    %2475 = vst.msk [vmem:[#allocation3 + $0x1f0] sm:$0xff] %vm2412, %v2345
    %2476 = vst.msk [vmem:[#allocation3 + $0x1f8] sm:$0xff] %vm2412, %v2347
    %v2477 = vld [vmem:[%s2091 + $0x1] sm:$0xff]
    %v2478 = vld [vmem:[%s2091 + $0x9] sm:$0xff]
    %v2479 = vld [vmem:[%s2091 + $0x19] sm:$0xff]
    %v2480 = vld [vmem:[%s2091 + $0x21] sm:$0xff]
    %v2481 = vld [vmem:[%s2091 + $0x31] sm:$0xff]
    %v2482 = vld [vmem:[%s2091 + $0x39] sm:$0xff]
    %v2483 = vld [vmem:[%s2091 + $0x49] sm:$0xff]
    %v2484 = vld [vmem:[%s2091 + $0x51] sm:$0xff]
    %v2485 = vld [vmem:[%s2091 + $0x61] sm:$0xff]
    %v2486 = vld [vmem:[%s2091 + $0x69] sm:$0xff]
    %v2487 = vld [vmem:[%s2091 + $0x79] sm:$0xff]
    %v2488 = vld [vmem:[%s2091 + $0x81] sm:$0xff]
    %v2489 = vld [vmem:[%s2091 + $0x91] sm:$0xff]
    %v2490 = vld [vmem:[%s2091 + $0x99] sm:$0xff]
    %v2491 = vld [vmem:[%s2091 + $0xa9] sm:$0xff]
    %v2492 = vld [vmem:[%s2091 + $0xb1] sm:$0xff]
    %v2493 = vld [vmem:[%s2091 + $0xc1] sm:$0xff]
    %v2494 = vld [vmem:[%s2091 + $0xc9] sm:$0xff]
    %v2495 = vld [vmem:[%s2091 + $0xd9] sm:$0xff]
    %v2496 = vld [vmem:[%s2091 + $0xe1] sm:$0xff]
    %v2497 = vld [vmem:[%s2091 + $0xf1] sm:$0xff]
    %v2498 = vld [vmem:[%s2091 + $0xf9] sm:$0xff]
    %v2499 = vld [vmem:[%s2091 + $0x109] sm:$0xff]
    %v2500 = vld [vmem:[%s2091 + $0x111] sm:$0xff]
    %v2501 = vld [vmem:[%s2091 + $0x121] sm:$0xff]
    %v2502 = vld [vmem:[%s2091 + $0x129] sm:$0xff]
    %v2503 = vld [vmem:[%s2091 + $0x139] sm:$0xff]
    %v2504 = vld [vmem:[%s2091 + $0x141] sm:$0xff]
    %v2505 = vld [vmem:[%s2091 + $0x151] sm:$0xff]
    %v2506 = vld [vmem:[%s2091 + $0x159] sm:$0xff]
    %v2507 = vld [vmem:[%s2091 + $0x169] sm:$0xff]
    %v2508 = vld [vmem:[%s2091 + $0x171] sm:$0xff]
    %v2509 = vld [vmem:[%s2091 + $0x1b1] sm:$0xff]
    %v2510 = vld [vmem:[%s2091 + $0x1b9] sm:$0xff]
    %v2511 = vld [vmem:[%s2091 + $0x1c9] sm:$0xff]
    %v2512 = vld [vmem:[%s2091 + $0x1d1] sm:$0xff]
    %v2513 = vld [vmem:[%s2091 + $0x1e1] sm:$0xff]
    %v2514 = vld [vmem:[%s2091 + $0x1e9] sm:$0xff]
    %v2515 = vld [vmem:[%s2091 + $0x1f9] sm:$0xff]
    %v2516 = vld [vmem:[%s2091 + $0x201] sm:$0xff]
    %v2517 = vld [vmem:[%s2091 + $0x211] sm:$0xff]
    %v2518 = vld [vmem:[%s2091 + $0x219] sm:$0xff]
    %v2519 = vld [vmem:[%s2091 + $0x229] sm:$0xff]
    %v2520 = vld [vmem:[%s2091 + $0x231] sm:$0xff]
    %v2521 = vld [vmem:[%s2091 + $0x241] sm:$0xff]
    %v2522 = vld [vmem:[%s2091 + $0x249] sm:$0xff]
    %v2523 = vld [vmem:[%s2091 + $0x259] sm:$0xff]
    %v2524 = vld [vmem:[%s2091 + $0x261] sm:$0xff]
    %v2525 = vld [vmem:[%s2091 + $0x271] sm:$0xff]
    %v2526 = vld [vmem:[%s2091 + $0x279] sm:$0xff]
    %v2527 = vld [vmem:[%s2091 + $0x289] sm:$0xff]
    %v2528 = vld [vmem:[%s2091 + $0x291] sm:$0xff]
    %v2529 = vld [vmem:[%s2091 + $0x2a1] sm:$0xff]
    %v2530 = vld [vmem:[%s2091 + $0x2a9] sm:$0xff]
    %v2531 = vld [vmem:[%s2091 + $0x2b9] sm:$0xff]
    %v2532 = vld [vmem:[%s2091 + $0x2c1] sm:$0xff]
    %v2533 = vld [vmem:[%s2091 + $0x2d1] sm:$0xff]
    %v2534 = vld [vmem:[%s2091 + $0x2d9] sm:$0xff]
    %v2535 = vld [vmem:[%s2091 + $0x2e9] sm:$0xff]
    %v2536 = vld [vmem:[%s2091 + $0x2f1] sm:$0xff]
    %v2537 = vld [vmem:[%s2091 + $0x301] sm:$0xff]
    %v2538 = vld [vmem:[%s2091 + $0x309] sm:$0xff]
    %v2539 = vld [vmem:[%s2091 + $0x319] sm:$0xff]
    %v2540 = vld [vmem:[%s2091 + $0x321] sm:$0xff]
    %2605 = vrot.lane.b32.xlu0 %v2477, 28
    %v2606 = vpop.permute.xlu0 %2605
    %2607 = vrot.lane.b32.xlu0 %v2478, 28
    %v2608 = vpop.permute.xlu0 %2607
    %2609 = vrot.lane.b32.xlu0 %v2479, 28
    %v2610 = vpop.permute.xlu0 %2609
    %2611 = vrot.lane.b32.xlu0 %v2480, 28
    %v2612 = vpop.permute.xlu0 %2611
    %2613 = vrot.lane.b32.xlu0 %v2481, 28
    %v2614 = vpop.permute.xlu0 %2613
    %2615 = vrot.lane.b32.xlu0 %v2482, 28
    %v2616 = vpop.permute.xlu0 %2615
    %2617 = vrot.lane.b32.xlu0 %v2483, 28
    %v2618 = vpop.permute.xlu0 %2617
    %2619 = vrot.lane.b32.xlu0 %v2484, 28
    %v2620 = vpop.permute.xlu0 %2619
    %2621 = vrot.lane.b32.xlu0 %v2485, 28
    %v2622 = vpop.permute.xlu0 %2621
    %2623 = vrot.lane.b32.xlu0 %v2486, 28
    %v2624 = vpop.permute.xlu0 %2623
    %2625 = vrot.lane.b32.xlu0 %v2487, 28
    %v2626 = vpop.permute.xlu0 %2625
    %2627 = vrot.lane.b32.xlu0 %v2488, 28
    %v2628 = vpop.permute.xlu0 %2627
    %2629 = vrot.lane.b32.xlu0 %v2489, 28
    %v2630 = vpop.permute.xlu0 %2629
    %2631 = vrot.lane.b32.xlu0 %v2490, 28
    %v2632 = vpop.permute.xlu0 %2631
    %2633 = vrot.lane.b32.xlu0 %v2491, 28
    %v2634 = vpop.permute.xlu0 %2633
    %2635 = vrot.lane.b32.xlu0 %v2492, 28
    %v2636 = vpop.permute.xlu0 %2635
    %2637 = vrot.lane.b32.xlu0 %v2493, 28
    %v2638 = vpop.permute.xlu0 %2637
    %2639 = vrot.lane.b32.xlu0 %v2494, 28
    %v2640 = vpop.permute.xlu0 %2639
    %2641 = vrot.lane.b32.xlu0 %v2495, 28
    %v2642 = vpop.permute.xlu0 %2641
    %2643 = vrot.lane.b32.xlu0 %v2496, 28
    %v2644 = vpop.permute.xlu0 %2643
    %2645 = vrot.lane.b32.xlu0 %v2497, 28
    %v2646 = vpop.permute.xlu0 %2645
    %2647 = vrot.lane.b32.xlu0 %v2498, 28
    %v2648 = vpop.permute.xlu0 %2647
    %2649 = vrot.lane.b32.xlu0 %v2499, 28
    %v2650 = vpop.permute.xlu0 %2649
    %2651 = vrot.lane.b32.xlu0 %v2500, 28
    %v2652 = vpop.permute.xlu0 %2651
    %2653 = vrot.lane.b32.xlu0 %v2501, 28
    %v2654 = vpop.permute.xlu0 %2653
    %2655 = vrot.lane.b32.xlu0 %v2502, 28
    %v2656 = vpop.permute.xlu0 %2655
    %2657 = vrot.lane.b32.xlu0 %v2503, 28
    %v2658 = vpop.permute.xlu0 %2657
    %2659 = vrot.lane.b32.xlu0 %v2504, 28
    %v2660 = vpop.permute.xlu0 %2659
    %2661 = vrot.lane.b32.xlu0 %v2505, 28
    %v2662 = vpop.permute.xlu0 %2661
    %2663 = vrot.lane.b32.xlu0 %v2506, 28
    %v2664 = vpop.permute.xlu0 %2663
    %2665 = vrot.lane.b32.xlu0 %v2507, 28
    %v2666 = vpop.permute.xlu0 %2665
    %2667 = vrot.lane.b32.xlu0 %v2508, 28
    %v2668 = vpop.permute.xlu0 %2667
    %2669 = vrot.lane.b32.xlu0 %v2509, 28
    %v2670 = vpop.permute.xlu0 %2669
    %2671 = vrot.lane.b32.xlu0 %v2510, 28
    %v2672 = vpop.permute.xlu0 %2671
    %2673 = vrot.lane.b32.xlu0 %v2511, 28
    %v2674 = vpop.permute.xlu0 %2673
    %2675 = vrot.lane.b32.xlu0 %v2512, 28
    %v2676 = vpop.permute.xlu0 %2675
    %2677 = vrot.lane.b32.xlu0 %v2513, 28
    %v2678 = vpop.permute.xlu0 %2677
    %2679 = vrot.lane.b32.xlu0 %v2514, 28
    %v2680 = vpop.permute.xlu0 %2679
    %2681 = vrot.lane.b32.xlu0 %v2515, 28
    %v2682 = vpop.permute.xlu0 %2681
    %2683 = vrot.lane.b32.xlu0 %v2516, 28
    %v2684 = vpop.permute.xlu0 %2683
    %2685 = vrot.lane.b32.xlu0 %v2517, 28
    %v2686 = vpop.permute.xlu0 %2685
    %2687 = vrot.lane.b32.xlu0 %v2518, 28
    %v2688 = vpop.permute.xlu0 %2687
    %2689 = vrot.lane.b32.xlu0 %v2519, 28
    %v2690 = vpop.permute.xlu0 %2689
    %2691 = vrot.lane.b32.xlu0 %v2520, 28
    %v2692 = vpop.permute.xlu0 %2691
    %2693 = vrot.lane.b32.xlu0 %v2521, 28
    %v2694 = vpop.permute.xlu0 %2693
    %2695 = vrot.lane.b32.xlu0 %v2522, 28
    %v2696 = vpop.permute.xlu0 %2695
    %2697 = vrot.lane.b32.xlu0 %v2523, 28
    %v2698 = vpop.permute.xlu0 %2697
    %2699 = vrot.lane.b32.xlu0 %v2524, 28
    %v2700 = vpop.permute.xlu0 %2699
    %2701 = vrot.lane.b32.xlu0 %v2525, 28
    %v2702 = vpop.permute.xlu0 %2701
    %2703 = vrot.lane.b32.xlu0 %v2526, 28
    %v2704 = vpop.permute.xlu0 %2703
    %2705 = vrot.lane.b32.xlu0 %v2527, 28
    %v2706 = vpop.permute.xlu0 %2705
    %2707 = vrot.lane.b32.xlu0 %v2528, 28
    %v2708 = vpop.permute.xlu0 %2707
    %2709 = vrot.lane.b32.xlu0 %v2529, 28
    %v2710 = vpop.permute.xlu0 %2709
    %2711 = vrot.lane.b32.xlu0 %v2530, 28
    %v2712 = vpop.permute.xlu0 %2711
    %2713 = vrot.lane.b32.xlu0 %v2531, 28
    %v2714 = vpop.permute.xlu0 %2713
    %2715 = vrot.lane.b32.xlu0 %v2532, 28
    %v2716 = vpop.permute.xlu0 %2715
    %2717 = vrot.lane.b32.xlu0 %v2533, 28
    %v2718 = vpop.permute.xlu0 %2717
    %2719 = vrot.lane.b32.xlu0 %v2534, 28
    %v2720 = vpop.permute.xlu0 %2719
    %2721 = vrot.lane.b32.xlu0 %v2535, 28
    %v2722 = vpop.permute.xlu0 %2721
    %2723 = vrot.lane.b32.xlu0 %v2536, 28
    %v2724 = vpop.permute.xlu0 %2723
    %2725 = vrot.lane.b32.xlu0 %v2537, 28
    %v2726 = vpop.permute.xlu0 %2725
    %2727 = vrot.lane.b32.xlu0 %v2538, 28
    %v2728 = vpop.permute.xlu0 %2727
    %2729 = vrot.lane.b32.xlu0 %v2539, 28
    %v2730 = vpop.permute.xlu0 %2729
    %2731 = vrot.lane.b32.xlu0 %v2540, 28
    %v2732 = vpop.permute.xlu0 %2731
    %vm2797 = vcmask 261344
    %2798 = vst.msk [vmem:[#allocation3] sm:$0xff] %vm2797, %v2606
    %2799 = vst.msk [vmem:[#allocation3 + $0x8] sm:$0xff] %vm2797, %v2608
    %2800 = vst.msk [vmem:[#allocation3 + $0x10] sm:$0xff] %vm2797, %v2610
    %2801 = vst.msk [vmem:[#allocation3 + $0x18] sm:$0xff] %vm2797, %v2612
    %2802 = vst.msk [vmem:[#allocation3 + $0x20] sm:$0xff] %vm2797, %v2614
    %2803 = vst.msk [vmem:[#allocation3 + $0x28] sm:$0xff] %vm2797, %v2616
    %2804 = vst.msk [vmem:[#allocation3 + $0x30] sm:$0xff] %vm2797, %v2618
    %2805 = vst.msk [vmem:[#allocation3 + $0x38] sm:$0xff] %vm2797, %v2620
    %2806 = vst.msk [vmem:[#allocation3 + $0x40] sm:$0xff] %vm2797, %v2622
    %2807 = vst.msk [vmem:[#allocation3 + $0x48] sm:$0xff] %vm2797, %v2624
    %2808 = vst.msk [vmem:[#allocation3 + $0x50] sm:$0xff] %vm2797, %v2626
    %2809 = vst.msk [vmem:[#allocation3 + $0x58] sm:$0xff] %vm2797, %v2628
    %2810 = vst.msk [vmem:[#allocation3 + $0x60] sm:$0xff] %vm2797, %v2630
    %2811 = vst.msk [vmem:[#allocation3 + $0x68] sm:$0xff] %vm2797, %v2632
    %2812 = vst.msk [vmem:[#allocation3 + $0x70] sm:$0xff] %vm2797, %v2634
    %2813 = vst.msk [vmem:[#allocation3 + $0x78] sm:$0xff] %vm2797, %v2636
    %2814 = vst.msk [vmem:[#allocation3 + $0x80] sm:$0xff] %vm2797, %v2638
    %2815 = vst.msk [vmem:[#allocation3 + $0x88] sm:$0xff] %vm2797, %v2640
    %2816 = vst.msk [vmem:[#allocation3 + $0x90] sm:$0xff] %vm2797, %v2642
    %2817 = vst.msk [vmem:[#allocation3 + $0x98] sm:$0xff] %vm2797, %v2644
    %2818 = vst.msk [vmem:[#allocation3 + $0xa0] sm:$0xff] %vm2797, %v2646
    %2819 = vst.msk [vmem:[#allocation3 + $0xa8] sm:$0xff] %vm2797, %v2648
    %2820 = vst.msk [vmem:[#allocation3 + $0xb0] sm:$0xff] %vm2797, %v2650
    %2821 = vst.msk [vmem:[#allocation3 + $0xb8] sm:$0xff] %vm2797, %v2652
    %2822 = vst.msk [vmem:[#allocation3 + $0xc0] sm:$0xff] %vm2797, %v2654
    %2823 = vst.msk [vmem:[#allocation3 + $0xc8] sm:$0xff] %vm2797, %v2656
    %2824 = vst.msk [vmem:[#allocation3 + $0xd0] sm:$0xff] %vm2797, %v2658
    %2825 = vst.msk [vmem:[#allocation3 + $0xd8] sm:$0xff] %vm2797, %v2660
    %2826 = vst.msk [vmem:[#allocation3 + $0xe0] sm:$0xff] %vm2797, %v2662
    %2827 = vst.msk [vmem:[#allocation3 + $0xe8] sm:$0xff] %vm2797, %v2664
    %2828 = vst.msk [vmem:[#allocation3 + $0xf0] sm:$0xff] %vm2797, %v2666
    %2829 = vst.msk [vmem:[#allocation3 + $0xf8] sm:$0xff] %vm2797, %v2668
    %2830 = vst.msk [vmem:[#allocation3 + $0x100] sm:$0xff] %vm2797, %v2670
    %2831 = vst.msk [vmem:[#allocation3 + $0x108] sm:$0xff] %vm2797, %v2672
    %2832 = vst.msk [vmem:[#allocation3 + $0x110] sm:$0xff] %vm2797, %v2674
    %2833 = vst.msk [vmem:[#allocation3 + $0x118] sm:$0xff] %vm2797, %v2676
    %2834 = vst.msk [vmem:[#allocation3 + $0x120] sm:$0xff] %vm2797, %v2678
    %2835 = vst.msk [vmem:[#allocation3 + $0x128] sm:$0xff] %vm2797, %v2680
    %2836 = vst.msk [vmem:[#allocation3 + $0x130] sm:$0xff] %vm2797, %v2682
    %2837 = vst.msk [vmem:[#allocation3 + $0x138] sm:$0xff] %vm2797, %v2684
    %2838 = vst.msk [vmem:[#allocation3 + $0x140] sm:$0xff] %vm2797, %v2686
    %2839 = vst.msk [vmem:[#allocation3 + $0x148] sm:$0xff] %vm2797, %v2688
    %2840 = vst.msk [vmem:[#allocation3 + $0x150] sm:$0xff] %vm2797, %v2690
    %2841 = vst.msk [vmem:[#allocation3 + $0x158] sm:$0xff] %vm2797, %v2692
    %2842 = vst.msk [vmem:[#allocation3 + $0x160] sm:$0xff] %vm2797, %v2694
    %2843 = vst.msk [vmem:[#allocation3 + $0x168] sm:$0xff] %vm2797, %v2696
    %2844 = vst.msk [vmem:[#allocation3 + $0x170] sm:$0xff] %vm2797, %v2698
    %2845 = vst.msk [vmem:[#allocation3 + $0x178] sm:$0xff] %vm2797, %v2700
    %2846 = vst.msk [vmem:[#allocation3 + $0x180] sm:$0xff] %vm2797, %v2702
    %2847 = vst.msk [vmem:[#allocation3 + $0x188] sm:$0xff] %vm2797, %v2704
    %2848 = vst.msk [vmem:[#allocation3 + $0x190] sm:$0xff] %vm2797, %v2706
    %2849 = vst.msk [vmem:[#allocation3 + $0x198] sm:$0xff] %vm2797, %v2708
    %2850 = vst.msk [vmem:[#allocation3 + $0x1a0] sm:$0xff] %vm2797, %v2710
    %2851 = vst.msk [vmem:[#allocation3 + $0x1a8] sm:$0xff] %vm2797, %v2712
    %2852 = vst.msk [vmem:[#allocation3 + $0x1b0] sm:$0xff] %vm2797, %v2714
    %2853 = vst.msk [vmem:[#allocation3 + $0x1b8] sm:$0xff] %vm2797, %v2716
    %2854 = vst.msk [vmem:[#allocation3 + $0x1c0] sm:$0xff] %vm2797, %v2718
    %2855 = vst.msk [vmem:[#allocation3 + $0x1c8] sm:$0xff] %vm2797, %v2720
    %2856 = vst.msk [vmem:[#allocation3 + $0x1d0] sm:$0xff] %vm2797, %v2722
    %2857 = vst.msk [vmem:[#allocation3 + $0x1d8] sm:$0xff] %vm2797, %v2724
    %2858 = vst.msk [vmem:[#allocation3 + $0x1e0] sm:$0xff] %vm2797, %v2726
    %2859 = vst.msk [vmem:[#allocation3 + $0x1e8] sm:$0xff] %vm2797, %v2728
    %2860 = vst.msk [vmem:[#allocation3 + $0x1f0] sm:$0xff] %vm2797, %v2730
    %2861 = vst.msk [vmem:[#allocation3 + $0x1f8] sm:$0xff] %vm2797, %v2732
    %v2862 = vld [vmem:[%s2091 + $0x2] sm:$0xff]
    %v2863 = vld [vmem:[%s2091 + $0xa] sm:$0xff]
    %v2864 = vld [vmem:[%s2091 + $0x1a] sm:$0xff]
    %v2865 = vld [vmem:[%s2091 + $0x22] sm:$0xff]
    %v2866 = vld [vmem:[%s2091 + $0x32] sm:$0xff]
    %v2867 = vld [vmem:[%s2091 + $0x3a] sm:$0xff]
    %v2868 = vld [vmem:[%s2091 + $0x4a] sm:$0xff]
    %v2869 = vld [vmem:[%s2091 + $0x52] sm:$0xff]
    %v2870 = vld [vmem:[%s2091 + $0x62] sm:$0xff]
    %v2871 = vld [vmem:[%s2091 + $0x6a] sm:$0xff]
    %v2872 = vld [vmem:[%s2091 + $0x7a] sm:$0xff]
    %v2873 = vld [vmem:[%s2091 + $0x82] sm:$0xff]
    %v2874 = vld [vmem:[%s2091 + $0x92] sm:$0xff]
    %v2875 = vld [vmem:[%s2091 + $0x9a] sm:$0xff]
    %v2876 = vld [vmem:[%s2091 + $0xaa] sm:$0xff]
    %v2877 = vld [vmem:[%s2091 + $0xb2] sm:$0xff]
    %v2878 = vld [vmem:[%s2091 + $0xc2] sm:$0xff]
    %v2879 = vld [vmem:[%s2091 + $0xca] sm:$0xff]
    %v2880 = vld [vmem:[%s2091 + $0xda] sm:$0xff]
    %v2881 = vld [vmem:[%s2091 + $0xe2] sm:$0xff]
    %v2882 = vld [vmem:[%s2091 + $0xf2] sm:$0xff]
    %v2883 = vld [vmem:[%s2091 + $0xfa] sm:$0xff]
    %v2884 = vld [vmem:[%s2091 + $0x10a] sm:$0xff]
    %v2885 = vld [vmem:[%s2091 + $0x112] sm:$0xff]
    %v2886 = vld [vmem:[%s2091 + $0x122] sm:$0xff]
    %v2887 = vld [vmem:[%s2091 + $0x12a] sm:$0xff]
    %v2888 = vld [vmem:[%s2091 + $0x13a] sm:$0xff]
    %v2889 = vld [vmem:[%s2091 + $0x142] sm:$0xff]
    %v2890 = vld [vmem:[%s2091 + $0x152] sm:$0xff]
    %v2891 = vld [vmem:[%s2091 + $0x15a] sm:$0xff]
    %v2892 = vld [vmem:[%s2091 + $0x16a] sm:$0xff]
    %v2893 = vld [vmem:[%s2091 + $0x172] sm:$0xff]
    %v2894 = vld [vmem:[%s2091 + $0x1b2] sm:$0xff]
    %v2895 = vld [vmem:[%s2091 + $0x1ba] sm:$0xff]
    %v2896 = vld [vmem:[%s2091 + $0x1ca] sm:$0xff]
    %v2897 = vld [vmem:[%s2091 + $0x1d2] sm:$0xff]
    %v2898 = vld [vmem:[%s2091 + $0x1e2] sm:$0xff]
    %v2899 = vld [vmem:[%s2091 + $0x1ea] sm:$0xff]
    %v2900 = vld [vmem:[%s2091 + $0x1fa] sm:$0xff]
    %v2901 = vld [vmem:[%s2091 + $0x202] sm:$0xff]
    %v2902 = vld [vmem:[%s2091 + $0x212] sm:$0xff]
    %v2903 = vld [vmem:[%s2091 + $0x21a] sm:$0xff]
    %v2904 = vld [vmem:[%s2091 + $0x22a] sm:$0xff]
    %v2905 = vld [vmem:[%s2091 + $0x232] sm:$0xff]
    %v2906 = vld [vmem:[%s2091 + $0x242] sm:$0xff]
    %v2907 = vld [vmem:[%s2091 + $0x24a] sm:$0xff]
    %v2908 = vld [vmem:[%s2091 + $0x25a] sm:$0xff]
    %v2909 = vld [vmem:[%s2091 + $0x262] sm:$0xff]
    %v2910 = vld [vmem:[%s2091 + $0x272] sm:$0xff]
    %v2911 = vld [vmem:[%s2091 + $0x27a] sm:$0xff]
    %v2912 = vld [vmem:[%s2091 + $0x28a] sm:$0xff]
    %v2913 = vld [vmem:[%s2091 + $0x292] sm:$0xff]
    %v2914 = vld [vmem:[%s2091 + $0x2a2] sm:$0xff]
    %v2915 = vld [vmem:[%s2091 + $0x2aa] sm:$0xff]
    %v2916 = vld [vmem:[%s2091 + $0x2ba] sm:$0xff]
    %v2917 = vld [vmem:[%s2091 + $0x2c2] sm:$0xff]
    %v2918 = vld [vmem:[%s2091 + $0x2d2] sm:$0xff]
    %v2919 = vld [vmem:[%s2091 + $0x2da] sm:$0xff]
    %v2920 = vld [vmem:[%s2091 + $0x2ea] sm:$0xff]
    %v2921 = vld [vmem:[%s2091 + $0x2f2] sm:$0xff]
    %v2922 = vld [vmem:[%s2091 + $0x302] sm:$0xff]
    %v2923 = vld [vmem:[%s2091 + $0x30a] sm:$0xff]
    %v2924 = vld [vmem:[%s2091 + $0x31a] sm:$0xff]
    %v2925 = vld [vmem:[%s2091 + $0x322] sm:$0xff]
    %2990 = vrot.lane.b32.xlu0 %v2862, 32
    %v2991 = vpop.permute.xlu0 %2990
    %2992 = vrot.lane.b32.xlu0 %v2863, 32
    %v2993 = vpop.permute.xlu0 %2992
    %2994 = vrot.lane.b32.xlu0 %v2864, 32
    %v2995 = vpop.permute.xlu0 %2994
    %2996 = vrot.lane.b32.xlu0 %v2865, 32
    %v2997 = vpop.permute.xlu0 %2996
    %2998 = vrot.lane.b32.xlu0 %v2866, 32
    %v2999 = vpop.permute.xlu0 %2998
    %3000 = vrot.lane.b32.xlu0 %v2867, 32
    %v3001 = vpop.permute.xlu0 %3000
    %3002 = vrot.lane.b32.xlu0 %v2868, 32
    %v3003 = vpop.permute.xlu0 %3002
    %3004 = vrot.lane.b32.xlu0 %v2869, 32
    %v3005 = vpop.permute.xlu0 %3004
    %3006 = vrot.lane.b32.xlu0 %v2870, 32
    %v3007 = vpop.permute.xlu0 %3006
    %3008 = vrot.lane.b32.xlu0 %v2871, 32
    %v3009 = vpop.permute.xlu0 %3008
    %3010 = vrot.lane.b32.xlu0 %v2872, 32
    %v3011 = vpop.permute.xlu0 %3010
    %3012 = vrot.lane.b32.xlu0 %v2873, 32
    %v3013 = vpop.permute.xlu0 %3012
    %3014 = vrot.lane.b32.xlu0 %v2874, 32
    %v3015 = vpop.permute.xlu0 %3014
    %3016 = vrot.lane.b32.xlu0 %v2875, 32
    %v3017 = vpop.permute.xlu0 %3016
    %3018 = vrot.lane.b32.xlu0 %v2876, 32
    %v3019 = vpop.permute.xlu0 %3018
    %3020 = vrot.lane.b32.xlu0 %v2877, 32
    %v3021 = vpop.permute.xlu0 %3020
    %3022 = vrot.lane.b32.xlu0 %v2878, 32
    %v3023 = vpop.permute.xlu0 %3022
    %3024 = vrot.lane.b32.xlu0 %v2879, 32
    %v3025 = vpop.permute.xlu0 %3024
    %3026 = vrot.lane.b32.xlu0 %v2880, 32
    %v3027 = vpop.permute.xlu0 %3026
    %3028 = vrot.lane.b32.xlu0 %v2881, 32
    %v3029 = vpop.permute.xlu0 %3028
    %3030 = vrot.lane.b32.xlu0 %v2882, 32
    %v3031 = vpop.permute.xlu0 %3030
    %3032 = vrot.lane.b32.xlu0 %v2883, 32
    %v3033 = vpop.permute.xlu0 %3032
    %3034 = vrot.lane.b32.xlu0 %v2884, 32
    %v3035 = vpop.permute.xlu0 %3034
    %3036 = vrot.lane.b32.xlu0 %v2885, 32
    %v3037 = vpop.permute.xlu0 %3036
    %3038 = vrot.lane.b32.xlu0 %v2886, 32
    %v3039 = vpop.permute.xlu0 %3038
    %3040 = vrot.lane.b32.xlu0 %v2887, 32
    %v3041 = vpop.permute.xlu0 %3040
    %3042 = vrot.lane.b32.xlu0 %v2888, 32
    %v3043 = vpop.permute.xlu0 %3042
    %3044 = vrot.lane.b32.xlu0 %v2889, 32
    %v3045 = vpop.permute.xlu0 %3044
    %3046 = vrot.lane.b32.xlu0 %v2890, 32
    %v3047 = vpop.permute.xlu0 %3046
    %3048 = vrot.lane.b32.xlu0 %v2891, 32
    %v3049 = vpop.permute.xlu0 %3048
    %3050 = vrot.lane.b32.xlu0 %v2892, 32
    %v3051 = vpop.permute.xlu0 %3050
    %3052 = vrot.lane.b32.xlu0 %v2893, 32
    %v3053 = vpop.permute.xlu0 %3052
    %3054 = vrot.lane.b32.xlu0 %v2894, 32
    %v3055 = vpop.permute.xlu0 %3054
    %3056 = vrot.lane.b32.xlu0 %v2895, 32
    %v3057 = vpop.permute.xlu0 %3056
    %3058 = vrot.lane.b32.xlu0 %v2896, 32
    %v3059 = vpop.permute.xlu0 %3058
    %3060 = vrot.lane.b32.xlu0 %v2897, 32
    %v3061 = vpop.permute.xlu0 %3060
    %3062 = vrot.lane.b32.xlu0 %v2898, 32
    %v3063 = vpop.permute.xlu0 %3062
    %3064 = vrot.lane.b32.xlu0 %v2899, 32
    %v3065 = vpop.permute.xlu0 %3064
    %3066 = vrot.lane.b32.xlu0 %v2900, 32
    %v3067 = vpop.permute.xlu0 %3066
    %3068 = vrot.lane.b32.xlu0 %v2901, 32
    %v3069 = vpop.permute.xlu0 %3068
    %3070 = vrot.lane.b32.xlu0 %v2902, 32
    %v3071 = vpop.permute.xlu0 %3070
    %3072 = vrot.lane.b32.xlu0 %v2903, 32
    %v3073 = vpop.permute.xlu0 %3072
    %3074 = vrot.lane.b32.xlu0 %v2904, 32
    %v3075 = vpop.permute.xlu0 %3074
    %3076 = vrot.lane.b32.xlu0 %v2905, 32
    %v3077 = vpop.permute.xlu0 %3076
    %3078 = vrot.lane.b32.xlu0 %v2906, 32
    %v3079 = vpop.permute.xlu0 %3078
    %3080 = vrot.lane.b32.xlu0 %v2907, 32
    %v3081 = vpop.permute.xlu0 %3080
    %3082 = vrot.lane.b32.xlu0 %v2908, 32
    %v3083 = vpop.permute.xlu0 %3082
    %3084 = vrot.lane.b32.xlu0 %v2909, 32
    %v3085 = vpop.permute.xlu0 %3084
    %3086 = vrot.lane.b32.xlu0 %v2910, 32
    %v3087 = vpop.permute.xlu0 %3086
    %3088 = vrot.lane.b32.xlu0 %v2911, 32
    %v3089 = vpop.permute.xlu0 %3088
    %3090 = vrot.lane.b32.xlu0 %v2912, 32
    %v3091 = vpop.permute.xlu0 %3090
    %3092 = vrot.lane.b32.xlu0 %v2913, 32
    %v3093 = vpop.permute.xlu0 %3092
    %3094 = vrot.lane.b32.xlu0 %v2914, 32
    %v3095 = vpop.permute.xlu0 %3094
    %3096 = vrot.lane.b32.xlu0 %v2915, 32
    %v3097 = vpop.permute.xlu0 %3096
    %3098 = vrot.lane.b32.xlu0 %v2916, 32
    %v3099 = vpop.permute.xlu0 %3098
    %3100 = vrot.lane.b32.xlu0 %v2917, 32
    %v3101 = vpop.permute.xlu0 %3100
    %3102 = vrot.lane.b32.xlu0 %v2918, 32
    %v3103 = vpop.permute.xlu0 %3102
    %3104 = vrot.lane.b32.xlu0 %v2919, 32
    %v3105 = vpop.permute.xlu0 %3104
    %3106 = vrot.lane.b32.xlu0 %v2920, 32
    %v3107 = vpop.permute.xlu0 %3106
    %3108 = vrot.lane.b32.xlu0 %v2921, 32
    %v3109 = vpop.permute.xlu0 %3108
    %3110 = vrot.lane.b32.xlu0 %v2922, 32
    %v3111 = vpop.permute.xlu0 %3110
    %3112 = vrot.lane.b32.xlu0 %v2923, 32
    %v3113 = vpop.permute.xlu0 %3112
    %3114 = vrot.lane.b32.xlu0 %v2924, 32
    %v3115 = vpop.permute.xlu0 %3114
    %3116 = vrot.lane.b32.xlu0 %v2925, 32
    %v3117 = vpop.permute.xlu0 %3116
    %vm3182 = vcmask 294144
    %3183 = vst.msk [vmem:[#allocation3] sm:$0xff] %vm3182, %v2991
    %3184 = vst.msk [vmem:[#allocation3 + $0x8] sm:$0xff] %vm3182, %v2993
    %3185 = vst.msk [vmem:[#allocation3 + $0x10] sm:$0xff] %vm3182, %v2995
    %3186 = vst.msk [vmem:[#allocation3 + $0x18] sm:$0xff] %vm3182, %v2997
    %3187 = vst.msk [vmem:[#allocation3 + $0x20] sm:$0xff] %vm3182, %v2999
    %3188 = vst.msk [vmem:[#allocation3 + $0x28] sm:$0xff] %vm3182, %v3001
    %3189 = vst.msk [vmem:[#allocation3 + $0x30] sm:$0xff] %vm3182, %v3003
    %3190 = vst.msk [vmem:[#allocation3 + $0x38] sm:$0xff] %vm3182, %v3005
    %3191 = vst.msk [vmem:[#allocation3 + $0x40] sm:$0xff] %vm3182, %v3007
    %3192 = vst.msk [vmem:[#allocation3 + $0x48] sm:$0xff] %vm3182, %v3009
    %3193 = vst.msk [vmem:[#allocation3 + $0x50] sm:$0xff] %vm3182, %v3011
    %3194 = vst.msk [vmem:[#allocation3 + $0x58] sm:$0xff] %vm3182, %v3013
    %3195 = vst.msk [vmem:[#allocation3 + $0x60] sm:$0xff] %vm3182, %v3015
    %3196 = vst.msk [vmem:[#allocation3 + $0x68] sm:$0xff] %vm3182, %v3017
    %3197 = vst.msk [vmem:[#allocation3 + $0x70] sm:$0xff] %vm3182, %v3019
    %3198 = vst.msk [vmem:[#allocation3 + $0x78] sm:$0xff] %vm3182, %v3021
    %3199 = vst.msk [vmem:[#allocation3 + $0x80] sm:$0xff] %vm3182, %v3023
    %3200 = vst.msk [vmem:[#allocation3 + $0x88] sm:$0xff] %vm3182, %v3025
    %3201 = vst.msk [vmem:[#allocation3 + $0x90] sm:$0xff] %vm3182, %v3027
    %3202 = vst.msk [vmem:[#allocation3 + $0x98] sm:$0xff] %vm3182, %v3029
    %3203 = vst.msk [vmem:[#allocation3 + $0xa0] sm:$0xff] %vm3182, %v3031
    %3204 = vst.msk [vmem:[#allocation3 + $0xa8] sm:$0xff] %vm3182, %v3033
    %3205 = vst.msk [vmem:[#allocation3 + $0xb0] sm:$0xff] %vm3182, %v3035
    %3206 = vst.msk [vmem:[#allocation3 + $0xb8] sm:$0xff] %vm3182, %v3037
    %3207 = vst.msk [vmem:[#allocation3 + $0xc0] sm:$0xff] %vm3182, %v3039
    %3208 = vst.msk [vmem:[#allocation3 + $0xc8] sm:$0xff] %vm3182, %v3041
    %3209 = vst.msk [vmem:[#allocation3 + $0xd0] sm:$0xff] %vm3182, %v3043
    %3210 = vst.msk [vmem:[#allocation3 + $0xd8] sm:$0xff] %vm3182, %v3045
    %3211 = vst.msk [vmem:[#allocation3 + $0xe0] sm:$0xff] %vm3182, %v3047
    %3212 = vst.msk [vmem:[#allocation3 + $0xe8] sm:$0xff] %vm3182, %v3049
    %3213 = vst.msk [vmem:[#allocation3 + $0xf0] sm:$0xff] %vm3182, %v3051
    %3214 = vst.msk [vmem:[#allocation3 + $0xf8] sm:$0xff] %vm3182, %v3053
    %3215 = vst.msk [vmem:[#allocation3 + $0x100] sm:$0xff] %vm3182, %v3055
    %3216 = vst.msk [vmem:[#allocation3 + $0x108] sm:$0xff] %vm3182, %v3057
    %3217 = vst.msk [vmem:[#allocation3 + $0x110] sm:$0xff] %vm3182, %v3059
    %3218 = vst.msk [vmem:[#allocation3 + $0x118] sm:$0xff] %vm3182, %v3061
    %3219 = vst.msk [vmem:[#allocation3 + $0x120] sm:$0xff] %vm3182, %v3063
    %3220 = vst.msk [vmem:[#allocation3 + $0x128] sm:$0xff] %vm3182, %v3065
    %3221 = vst.msk [vmem:[#allocation3 + $0x130] sm:$0xff] %vm3182, %v3067
    %3222 = vst.msk [vmem:[#allocation3 + $0x138] sm:$0xff] %vm3182, %v3069
    %3223 = vst.msk [vmem:[#allocation3 + $0x140] sm:$0xff] %vm3182, %v3071
    %3224 = vst.msk [vmem:[#allocation3 + $0x148] sm:$0xff] %vm3182, %v3073
    %3225 = vst.msk [vmem:[#allocation3 + $0x150] sm:$0xff] %vm3182, %v3075
    %3226 = vst.msk [vmem:[#allocation3 + $0x158] sm:$0xff] %vm3182, %v3077
    %3227 = vst.msk [vmem:[#allocation3 + $0x160] sm:$0xff] %vm3182, %v3079
    %3228 = vst.msk [vmem:[#allocation3 + $0x168] sm:$0xff] %vm3182, %v3081
    %3229 = vst.msk [vmem:[#allocation3 + $0x170] sm:$0xff] %vm3182, %v3083
    %3230 = vst.msk [vmem:[#allocation3 + $0x178] sm:$0xff] %vm3182, %v3085
    %3231 = vst.msk [vmem:[#allocation3 + $0x180] sm:$0xff] %vm3182, %v3087
    %3232 = vst.msk [vmem:[#allocation3 + $0x188] sm:$0xff] %vm3182, %v3089
    %3233 = vst.msk [vmem:[#allocation3 + $0x190] sm:$0xff] %vm3182, %v3091
    %3234 = vst.msk [vmem:[#allocation3 + $0x198] sm:$0xff] %vm3182, %v3093
    %3235 = vst.msk [vmem:[#allocation3 + $0x1a0] sm:$0xff] %vm3182, %v3095
    %3236 = vst.msk [vmem:[#allocation3 + $0x1a8] sm:$0xff] %vm3182, %v3097
    %3237 = vst.msk [vmem:[#allocation3 + $0x1b0] sm:$0xff] %vm3182, %v3099
    %3238 = vst.msk [vmem:[#allocation3 + $0x1b8] sm:$0xff] %vm3182, %v3101
    %3239 = vst.msk [vmem:[#allocation3 + $0x1c0] sm:$0xff] %vm3182, %v3103
    %3240 = vst.msk [vmem:[#allocation3 + $0x1c8] sm:$0xff] %vm3182, %v3105
    %3241 = vst.msk [vmem:[#allocation3 + $0x1d0] sm:$0xff] %vm3182, %v3107
    %3242 = vst.msk [vmem:[#allocation3 + $0x1d8] sm:$0xff] %vm3182, %v3109
    %3243 = vst.msk [vmem:[#allocation3 + $0x1e0] sm:$0xff] %vm3182, %v3111
    %3244 = vst.msk [vmem:[#allocation3 + $0x1e8] sm:$0xff] %vm3182, %v3113
    %3245 = vst.msk [vmem:[#allocation3 + $0x1f0] sm:$0xff] %vm3182, %v3115
    %3246 = vst.msk [vmem:[#allocation3 + $0x1f8] sm:$0xff] %vm3182, %v3117
    %v3247 = vld [vmem:[#allocation3] sm:$0xff]
    %v3248 = vld [vmem:[#allocation3 + $0x8] sm:$0xff]
    %v3249 = vld [vmem:[#allocation3 + $0x10] sm:$0xff]
    %v3250 = vld [vmem:[#allocation3 + $0x18] sm:$0xff]
    %v3251 = vld [vmem:[#allocation3 + $0x20] sm:$0xff]
    %v3252 = vld [vmem:[#allocation3 + $0x28] sm:$0xff]
    %v3253 = vld [vmem:[#allocation3 + $0x30] sm:$0xff]
    %v3254 = vld [vmem:[#allocation3 + $0x38] sm:$0xff]
    %v3255 = vld [vmem:[#allocation3 + $0x40] sm:$0xff]
    %v3256 = vld [vmem:[#allocation3 + $0x48] sm:$0xff]
    %v3257 = vld [vmem:[#allocation3 + $0x50] sm:$0xff]
    %v3258 = vld [vmem:[#allocation3 + $0x58] sm:$0xff]
    %v3259 = vld [vmem:[#allocation3 + $0x60] sm:$0xff]
    %v3260 = vld [vmem:[#allocation3 + $0x68] sm:$0xff]
    %v3261 = vld [vmem:[#allocation3 + $0x70] sm:$0xff]
    %v3262 = vld [vmem:[#allocation3 + $0x78] sm:$0xff]
    %v3263 = vld [vmem:[#allocation3 + $0x80] sm:$0xff]
    %v3264 = vld [vmem:[#allocation3 + $0x88] sm:$0xff]
    %v3265 = vld [vmem:[#allocation3 + $0x90] sm:$0xff]
    %v3266 = vld [vmem:[#allocation3 + $0x98] sm:$0xff]
    %v3267 = vld [vmem:[#allocation3 + $0xa0] sm:$0xff]
    %v3268 = vld [vmem:[#allocation3 + $0xa8] sm:$0xff]
    %v3269 = vld [vmem:[#allocation3 + $0xb0] sm:$0xff]
    %v3270 = vld [vmem:[#allocation3 + $0xb8] sm:$0xff]
    %v3271 = vld [vmem:[#allocation3 + $0xc0] sm:$0xff]
    %v3272 = vld [vmem:[#allocation3 + $0xc8] sm:$0xff]
    %v3273 = vld [vmem:[#allocation3 + $0xd0] sm:$0xff]
    %v3274 = vld [vmem:[#allocation3 + $0xd8] sm:$0xff]
    %v3275 = vld [vmem:[#allocation3 + $0xe0] sm:$0xff]
    %v3276 = vld [vmem:[#allocation3 + $0xe8] sm:$0xff]
    %v3277 = vld [vmem:[#allocation3 + $0xf0] sm:$0xff]
    %v3278 = vld [vmem:[#allocation3 + $0xf8] sm:$0xff]
    %v3279 = vld [vmem:[#allocation3 + $0x100] sm:$0xff]
    %v3280 = vld [vmem:[#allocation3 + $0x108] sm:$0xff]
    %v3281 = vld [vmem:[#allocation3 + $0x110] sm:$0xff]
    %v3282 = vld [vmem:[#allocation3 + $0x118] sm:$0xff]
    %v3283 = vld [vmem:[#allocation3 + $0x120] sm:$0xff]
    %v3284 = vld [vmem:[#allocation3 + $0x128] sm:$0xff]
    %v3285 = vld [vmem:[#allocation3 + $0x130] sm:$0xff]
    %v3286 = vld [vmem:[#allocation3 + $0x138] sm:$0xff]
    %v3287 = vld [vmem:[#allocation3 + $0x140] sm:$0xff]
    %v3288 = vld [vmem:[#allocation3 + $0x148] sm:$0xff]
    %v3289 = vld [vmem:[#allocation3 + $0x150] sm:$0xff]
    %v3290 = vld [vmem:[#allocation3 + $0x158] sm:$0xff]
    %v3291 = vld [vmem:[#allocation3 + $0x160] sm:$0xff]
    %v3292 = vld [vmem:[#allocation3 + $0x168] sm:$0xff]
    %v3293 = vld [vmem:[#allocation3 + $0x170] sm:$0xff]
    %v3294 = vld [vmem:[#allocation3 + $0x178] sm:$0xff]
    %v3295 = vld [vmem:[#allocation3 + $0x180] sm:$0xff]
    %v3296 = vld [vmem:[#allocation3 + $0x188] sm:$0xff]
    %v3297 = vld [vmem:[#allocation3 + $0x190] sm:$0xff]
    %v3298 = vld [vmem:[#allocation3 + $0x198] sm:$0xff]
    %v3299 = vld [vmem:[#allocation3 + $0x1a0] sm:$0xff]
    %v3300 = vld [vmem:[#allocation3 + $0x1a8] sm:$0xff]
    %v3301 = vld [vmem:[#allocation3 + $0x1b0] sm:$0xff]
    %v3302 = vld [vmem:[#allocation3 + $0x1b8] sm:$0xff]
    %v3303 = vld [vmem:[#allocation3 + $0x1c0] sm:$0xff]
    %v3304 = vld [vmem:[#allocation3 + $0x1c8] sm:$0xff]
    %v3305 = vld [vmem:[#allocation3 + $0x1d0] sm:$0xff]
    %v3306 = vld [vmem:[#allocation3 + $0x1d8] sm:$0xff]
    %v3307 = vld [vmem:[#allocation3 + $0x1e0] sm:$0xff]
    %v3308 = vld [vmem:[#allocation3 + $0x1e8] sm:$0xff]
    %v3309 = vld [vmem:[#allocation3 + $0x1f0] sm:$0xff]
    %v3310 = vld [vmem:[#allocation3 + $0x1f8] sm:$0xff]
    %v3311 = vld [vmem:[%s1] sm:$0xff]
    %v3312 = vld [vmem:[%s1 + $0x8] sm:$0xff]
    %v3313 = vld [vmem:[%s1 + $0x10] sm:$0xff]
    %v3314 = vld [vmem:[%s1 + $0x18] sm:$0xff]
    %v3315 = vld [vmem:[%s1 + $0x20] sm:$0xf]
    %vm3316 = vcmask 293888
    %v3318 = vsel %vm3316, %v3247, 0
    %v3321 = vsel %vm3316, %v3248, 0
    %v3324 = vsel %vm3316, %v3249, 0
    %v3327 = vsel %vm3316, %v3250, 0
    %v3330 = vsel %vm3316, %v3251, 0
    %v3333 = vsel %vm3316, %v3252, 0
    %v3336 = vsel %vm3316, %v3253, 0
    %v3339 = vsel %vm3316, %v3254, 0
    %v3342 = vsel %vm3316, %v3255, 0
    %v3345 = vsel %vm3316, %v3256, 0
    %v3348 = vsel %vm3316, %v3257, 0
    %v3351 = vsel %vm3316, %v3258, 0
    %v3354 = vsel %vm3316, %v3259, 0
    %v3357 = vsel %vm3316, %v3260, 0
    %v3360 = vsel %vm3316, %v3261, 0
    %v3363 = vsel %vm3316, %v3262, 0
    %v3366 = vsel %vm3316, %v3263, 0
    %v3369 = vsel %vm3316, %v3264, 0
    %v3372 = vsel %vm3316, %v3265, 0
    %v3375 = vsel %vm3316, %v3266, 0
    %v3378 = vsel %vm3316, %v3267, 0
    %v3381 = vsel %vm3316, %v3268, 0
    %v3384 = vsel %vm3316, %v3269, 0
    %v3387 = vsel %vm3316, %v3270, 0
    %v3390 = vsel %vm3316, %v3271, 0
    %v3393 = vsel %vm3316, %v3272, 0
    %v3396 = vsel %vm3316, %v3273, 0
    %v3399 = vsel %vm3316, %v3274, 0
    %v3402 = vsel %vm3316, %v3275, 0
    %v3405 = vsel %vm3316, %v3276, 0
    %v3408 = vsel %vm3316, %v3277, 0
    %v3411 = vsel %vm3316, %v3278, 0
    %v3414 = vsel %vm3316, %v3279, 0
    %v3417 = vsel %vm3316, %v3280, 0
    %v3420 = vsel %vm3316, %v3281, 0
    %v3423 = vsel %vm3316, %v3282, 0
    %v3426 = vsel %vm3316, %v3283, 0
    %v3429 = vsel %vm3316, %v3284, 0
    %v3432 = vsel %vm3316, %v3285, 0
    %v3435 = vsel %vm3316, %v3286, 0
    %v3438 = vsel %vm3316, %v3287, 0
    %v3441 = vsel %vm3316, %v3288, 0
    %v3444 = vsel %vm3316, %v3289, 0
    %v3447 = vsel %vm3316, %v3290, 0
    %v3450 = vsel %vm3316, %v3291, 0
    %v3453 = vsel %vm3316, %v3292, 0
    %v3456 = vsel %vm3316, %v3293, 0
    %v3459 = vsel %vm3316, %v3294, 0
    %v3462 = vsel %vm3316, %v3295, 0
    %v3465 = vsel %vm3316, %v3296, 0
    %v3468 = vsel %vm3316, %v3297, 0
    %v3471 = vsel %vm3316, %v3298, 0
    %v3474 = vsel %vm3316, %v3299, 0
    %v3477 = vsel %vm3316, %v3300, 0
    %v3480 = vsel %vm3316, %v3301, 0
    %v3483 = vsel %vm3316, %v3302, 0
    %v3486 = vsel %vm3316, %v3303, 0
    %v3489 = vsel %vm3316, %v3304, 0
    %v3492 = vsel %vm3316, %v3305, 0
    %v3495 = vsel %vm3316, %v3306, 0
    %v3498 = vsel %vm3316, %v3307, 0
    %v3501 = vsel %vm3316, %v3308, 0
    %v3504 = vsel %vm3316, %v3309, 0
    %v3507 = vsel %vm3316, %v3310, 0
    %vm3509 = vcmask 1043456
    %v3511 = vsel %vm3509, %v3315, 0
    %3513 = vmatprep.subr.mxu0 0.0
    %3514 = vmatpush1.msra.mxu0 %v3311
    %3515 = vmatprep.subr.mxu0 0.0
    %3516 = vmatpush1.msra.mxu0 %v3312
    %3517 = vmatprep.subr.mxu0 0.0
    %3518 = vmatpush1.msra.mxu0 %v3313
    %3519 = vmatprep.subr.mxu0 0.0
    %3520 = vmatpush1.msra.mxu0 %v3314
    %3521 = vmatprep.subr.mxu0 0.0
    %3522 = vmatpush1.msra.mxu0 %v3511
    %3523 = vmatprep.subr.mxu0 0.0
    %3524 = vmatpush1.msra.mxu0 0.0
    %3525 = vmatprep.subr.mxu0 0.0
    %3526 = vmatpush1.msra.mxu0 0.0
    %3527 = vmatprep.subr.mxu0 0.0
    %3528 = vmatpush1.msra.mxu0 0.0
    %3529 = vmatprep.subr.mxu0 0.0
    %3530 = vmatpush1.msra.mxu0 0.0
    %3531 = vmatprep.subr.mxu0 0.0
    %3532 = vmatpush1.msra.mxu0 0.0
    %3533 = vmatprep.subr.mxu0 0.0
    %3534 = vmatpush1.msra.mxu0 0.0
    %3535 = vmatprep.subr.mxu0 0.0
    %3536 = vmatpush1.msra.mxu0 0.0
    %3537 = vmatprep.subr.mxu0 0.0
    %3538 = vmatpush1.msra.mxu0 0.0
    %3539 = vmatprep.subr.mxu0 0.0
    %3540 = vmatpush1.msra.mxu0 0.0
    %3541 = vmatprep.subr.mxu0 0.0
    %3542 = vmatpush1.msra.mxu0 0.0
    %3543 = vmatprep.subr.mxu0 0.0
    %3544 = vmatpush1.msra.mxu0 0.0
    %3545 = vmatprep.subr.mxu0 0.0
    %3546 = vmatpush1.msra.mxu0 0.0
    %3547 = vmatprep.subr.mxu0 0.0
    %3548 = vmatpush1.msra.mxu0 0.0
    %3549 = vmatprep.subr.mxu0 0.0
    %3550 = vmatpush1.msra.mxu0 0.0
    %3551 = vmatprep.subr.mxu0 0.0
    %3552 = vmatpush1.msra.mxu0 0.0
    %3553 = vmatprep.subr.mxu0 0.0
    %3554 = vmatpush1.msra.mxu0 0.0
    %3555 = vmatprep.subr.mxu0 0.0
    %3556 = vmatpush1.msra.mxu0 0.0
    %3557 = vmatprep.subr.mxu0 0.0
    %3558 = vmatpush1.msra.mxu0 0.0
    %3559 = vmatprep.subr.mxu0 0.0
    %3560 = vmatpush1.msra.mxu0 0.0
    %3561 = vmatprep.subr.mxu0 0.0
    %3562 = vmatpush1.msra.mxu0 0.0
    %3563 = vmatprep.subr.mxu0 0.0
    %3564 = vmatpush1.msra.mxu0 0.0
    %3565 = vmatprep.subr.mxu0 0.0
    %3566 = vmatpush1.msra.mxu0 0.0
    %3567 = vmatprep.subr.mxu0 0.0
    %3568 = vmatpush1.msra.mxu0 0.0
    %3569 = vmatprep.subr.mxu0 0.0
    %3570 = vmatpush1.msra.mxu0 0.0
    %3571 = vmatprep.subr.mxu0 0.0
    %3572 = vmatpush1.msra.mxu0 0.0
    %3573 = vmatprep.subr.mxu0 0.0
    %3574 = vmatpush1.msra.mxu0 0.0
    %3575 = vmatprep.subr.mxu0 0.0
    %3576 = vmatpush1.msra.mxu0 0.0
    %3577 = vmatprep.mubr.f32.mxu0 0.0
    %3578 = vmatmul.mubr.f32.gmra.mrb[0].mxu0 %v3318
    %v3579 = vpop.f32.mrb[0].mxu0
    %v3580 = vadd.f32 0.0, %v3579
    %v3581 = vpop.f32.mrb[0].mxu0
    %3582 = vmatprep.mubr.f32.mxu0 0.0
    %3583 = vmatmul.mubr.f32.gmra.mrb[0].mxu0 %v3321
    %v3584 = vpop.f32.mrb[0].mxu0
    %v3585 = vadd.f32 0.0, %v3584
    %v3586 = vpop.f32.mrb[0].mxu0
    %3587 = vmatprep.mubr.f32.mxu0 0.0
    %3588 = vmatmul.mubr.f32.gmra.mrb[0].mxu0 %v3324
    %v3589 = vpop.f32.mrb[0].mxu0
    %v3590 = vadd.f32 0.0, %v3589
    %v3591 = vpop.f32.mrb[0].mxu0
    %3592 = vmatprep.mubr.f32.mxu0 0.0
    %3593 = vmatmul.mubr.f32.gmra.mrb[0].mxu0 %v3327
    %v3594 = vpop.f32.mrb[0].mxu0
    %v3595 = vadd.f32 0.0, %v3594
    %v3596 = vpop.f32.mrb[0].mxu0
    %3597 = vmatprep.mubr.f32.mxu0 0.0
    %3598 = vmatmul.mubr.f32.gmra.mrb[0].mxu0 %v3330
    %v3599 = vpop.f32.mrb[0].mxu0
    %v3600 = vadd.f32 0.0, %v3599
    %v3601 = vpop.f32.mrb[0].mxu0
    %3602 = vmatprep.mubr.f32.mxu0 0.0
    %3603 = vmatmul.mubr.f32.gmra.mrb[0].mxu0 %v3333
    %v3604 = vpop.f32.mrb[0].mxu0
    %v3605 = vadd.f32 0.0, %v3604
    %v3606 = vpop.f32.mrb[0].mxu0
    %3607 = vmatprep.mubr.f32.mxu0 0.0
    %3608 = vmatmul.mubr.f32.gmra.mrb[0].mxu0 %v3336
    %v3609 = vpop.f32.mrb[0].mxu0
    %v3610 = vadd.f32 0.0, %v3609
    %v3611 = vpop.f32.mrb[0].mxu0
    %3612 = vmatprep.mubr.f32.mxu0 0.0
    %3613 = vmatmul.mubr.f32.gmra.mrb[0].mxu0 %v3339
    %v3614 = vpop.f32.mrb[0].mxu0
    %v3615 = vadd.f32 0.0, %v3614
    %v3616 = vpop.f32.mrb[0].mxu0
    %3617 = vmatprep.mubr.f32.mxu0 0.0
    %3618 = vmatmul.mubr.f32.gmra.mrb[0].mxu0 %v3342
    %v3619 = vpop.f32.mrb[0].mxu0
    %v3620 = vadd.f32 0.0, %v3619
    %v3621 = vpop.f32.mrb[0].mxu0
    %3622 = vmatprep.mubr.f32.mxu0 0.0
    %3623 = vmatmul.mubr.f32.gmra.mrb[0].mxu0 %v3345
    %v3624 = vpop.f32.mrb[0].mxu0
    %v3625 = vadd.f32 0.0, %v3624
    %v3626 = vpop.f32.mrb[0].mxu0
    %3627 = vmatprep.mubr.f32.mxu0 0.0
    %3628 = vmatmul.mubr.f32.gmra.mrb[0].mxu0 %v3348
    %v3629 = vpop.f32.mrb[0].mxu0
    %v3630 = vadd.f32 0.0, %v3629
    %v3631 = vpop.f32.mrb[0].mxu0
    %3632 = vmatprep.mubr.f32.mxu0 0.0
    %3633 = vmatmul.mubr.f32.gmra.mrb[0].mxu0 %v3351
    %v3634 = vpop.f32.mrb[0].mxu0
    %v3635 = vadd.f32 0.0, %v3634
    %v3636 = vpop.f32.mrb[0].mxu0
    %3637 = vmatprep.mubr.f32.mxu0 0.0
    %3638 = vmatmul.mubr.f32.gmra.mrb[0].mxu0 %v3354
    %v3639 = vpop.f32.mrb[0].mxu0
    %v3640 = vadd.f32 0.0, %v3639
    %v3641 = vpop.f32.mrb[0].mxu0
    %3642 = vmatprep.mubr.f32.mxu0 0.0
    %3643 = vmatmul.mubr.f32.gmra.mrb[0].mxu0 %v3357
    %v3644 = vpop.f32.mrb[0].mxu0
    %v3645 = vadd.f32 0.0, %v3644
    %v3646 = vpop.f32.mrb[0].mxu0
    %3647 = vmatprep.mubr.f32.mxu0 0.0
    %3648 = vmatmul.mubr.f32.gmra.mrb[0].mxu0 %v3360
    %v3649 = vpop.f32.mrb[0].mxu0
    %v3650 = vadd.f32 0.0, %v3649
    %v3651 = vpop.f32.mrb[0].mxu0
    %3652 = vmatprep.mubr.f32.mxu0 0.0
    %3653 = vmatmul.mubr.f32.gmra.mrb[0].mxu0 %v3363
    %v3654 = vpop.f32.mrb[0].mxu0
    %v3655 = vadd.f32 0.0, %v3654
    %v3656 = vpop.f32.mrb[0].mxu0
    %3657 = vmatprep.mubr.f32.mxu0 0.0
    %3658 = vmatmul.mubr.f32.gmra.mrb[0].mxu0 %v3366
    %v3659 = vpop.f32.mrb[0].mxu0
    %v3660 = vadd.f32 0.0, %v3659
    %v3661 = vpop.f32.mrb[0].mxu0
    %3662 = vmatprep.mubr.f32.mxu0 0.0
    %3663 = vmatmul.mubr.f32.gmra.mrb[0].mxu0 %v3369
    %v3664 = vpop.f32.mrb[0].mxu0
    %v3665 = vadd.f32 0.0, %v3664
    %v3666 = vpop.f32.mrb[0].mxu0
    %3667 = vmatprep.mubr.f32.mxu0 0.0
    %3668 = vmatmul.mubr.f32.gmra.mrb[0].mxu0 %v3372
    %v3669 = vpop.f32.mrb[0].mxu0
    %v3670 = vadd.f32 0.0, %v3669
    %v3671 = vpop.f32.mrb[0].mxu0
    %3672 = vmatprep.mubr.f32.mxu0 0.0
    %3673 = vmatmul.mubr.f32.gmra.mrb[0].mxu0 %v3375
    %v3674 = vpop.f32.mrb[0].mxu0
    %v3675 = vadd.f32 0.0, %v3674
    %v3676 = vpop.f32.mrb[0].mxu0
    %3677 = vmatprep.mubr.f32.mxu0 0.0
    %3678 = vmatmul.mubr.f32.gmra.mrb[0].mxu0 %v3378
    %v3679 = vpop.f32.mrb[0].mxu0
    %v3680 = vadd.f32 0.0, %v3679
    %v3681 = vpop.f32.mrb[0].mxu0
    %3682 = vmatprep.mubr.f32.mxu0 0.0
    %3683 = vmatmul.mubr.f32.gmra.mrb[0].mxu0 %v3381
    %v3684 = vpop.f32.mrb[0].mxu0
    %v3685 = vadd.f32 0.0, %v3684
    %v3686 = vpop.f32.mrb[0].mxu0
    %3687 = vmatprep.mubr.f32.mxu0 0.0
    %3688 = vmatmul.mubr.f32.gmra.mrb[0].mxu0 %v3384
    %v3689 = vpop.f32.mrb[0].mxu0
    %v3690 = vadd.f32 0.0, %v3689
    %v3691 = vpop.f32.mrb[0].mxu0
    %3692 = vmatprep.mubr.f32.mxu0 0.0
    %3693 = vmatmul.mubr.f32.gmra.mrb[0].mxu0 %v3387
    %v3694 = vpop.f32.mrb[0].mxu0
    %v3695 = vadd.f32 0.0, %v3694
    %v3696 = vpop.f32.mrb[0].mxu0
    %3697 = vmatprep.mubr.f32.mxu0 0.0
    %3698 = vmatmul.mubr.f32.gmra.mrb[0].mxu0 %v3390
    %v3699 = vpop.f32.mrb[0].mxu0
    %v3700 = vadd.f32 0.0, %v3699
    %v3701 = vpop.f32.mrb[0].mxu0
    %3702 = vmatprep.mubr.f32.mxu0 0.0
    %3703 = vmatmul.mubr.f32.gmra.mrb[0].mxu0 %v3393
    %v3704 = vpop.f32.mrb[0].mxu0
    %v3705 = vadd.f32 0.0, %v3704
    %v3706 = vpop.f32.mrb[0].mxu0
    %3707 = vmatprep.mubr.f32.mxu0 0.0
    %3708 = vmatmul.mubr.f32.gmra.mrb[0].mxu0 %v3396
    %v3709 = vpop.f32.mrb[0].mxu0
    %v3710 = vadd.f32 0.0, %v3709
    %v3711 = vpop.f32.mrb[0].mxu0
    %3712 = vmatprep.mubr.f32.mxu0 0.0
    %3713 = vmatmul.mubr.f32.gmra.mrb[0].mxu0 %v3399
    %v3714 = vpop.f32.mrb[0].mxu0
    %v3715 = vadd.f32 0.0, %v3714
    %v3716 = vpop.f32.mrb[0].mxu0
    %3717 = vmatprep.mubr.f32.mxu0 0.0
    %3718 = vmatmul.mubr.f32.gmra.mrb[0].mxu0 %v3402
    %v3719 = vpop.f32.mrb[0].mxu0
    %v3720 = vadd.f32 0.0, %v3719
    %v3721 = vpop.f32.mrb[0].mxu0
    %3722 = vmatprep.mubr.f32.mxu0 0.0
    %3723 = vmatmul.mubr.f32.gmra.mrb[0].mxu0 %v3405
    %v3724 = vpop.f32.mrb[0].mxu0
    %v3725 = vadd.f32 0.0, %v3724
    %v3726 = vpop.f32.mrb[0].mxu0
    %3727 = vmatprep.mubr.f32.mxu0 0.0
    %3728 = vmatmul.mubr.f32.gmra.mrb[0].mxu0 %v3408
    %v3729 = vpop.f32.mrb[0].mxu0
    %v3730 = vadd.f32 0.0, %v3729
    %v3731 = vpop.f32.mrb[0].mxu0
    %3732 = vmatprep.mubr.f32.mxu0 0.0
    %3733 = vmatmul.mubr.f32.gmra.mrb[0].mxu0 %v3411
    %v3734 = vpop.f32.mrb[0].mxu0
    %v3735 = vadd.f32 0.0, %v3734
    %v3736 = vpop.f32.mrb[0].mxu0
    %3737 = vmatprep.mubr.f32.mxu0 0.0
    %3738 = vmatmul.mubr.f32.gmra.mrb[0].mxu0 %v3414
    %v3739 = vpop.f32.mrb[0].mxu0
    %v3740 = vadd.f32 0.0, %v3739
    %v3741 = vpop.f32.mrb[0].mxu0
    %3742 = vmatprep.mubr.f32.mxu0 0.0
    %3743 = vmatmul.mubr.f32.gmra.mrb[0].mxu0 %v3417
    %v3744 = vpop.f32.mrb[0].mxu0
    %v3745 = vadd.f32 0.0, %v3744
    %v3746 = vpop.f32.mrb[0].mxu0
    %3747 = vmatprep.mubr.f32.mxu0 0.0
    %3748 = vmatmul.mubr.f32.gmra.mrb[0].mxu0 %v3420
    %v3749 = vpop.f32.mrb[0].mxu0
    %v3750 = vadd.f32 0.0, %v3749
    %v3751 = vpop.f32.mrb[0].mxu0
    %3752 = vmatprep.mubr.f32.mxu0 0.0
    %3753 = vmatmul.mubr.f32.gmra.mrb[0].mxu0 %v3423
    %v3754 = vpop.f32.mrb[0].mxu0
    %v3755 = vadd.f32 0.0, %v3754
    %v3756 = vpop.f32.mrb[0].mxu0
    %3757 = vmatprep.mubr.f32.mxu0 0.0
    %3758 = vmatmul.mubr.f32.gmra.mrb[0].mxu0 %v3426
    %v3759 = vpop.f32.mrb[0].mxu0
    %v3760 = vadd.f32 0.0, %v3759
    %v3761 = vpop.f32.mrb[0].mxu0
    %3762 = vmatprep.mubr.f32.mxu0 0.0
    %3763 = vmatmul.mubr.f32.gmra.mrb[0].mxu0 %v3429
    %v3764 = vpop.f32.mrb[0].mxu0
    %v3765 = vadd.f32 0.0, %v3764
    %v3766 = vpop.f32.mrb[0].mxu0
    %3767 = vmatprep.mubr.f32.mxu0 0.0
    %3768 = vmatmul.mubr.f32.gmra.mrb[0].mxu0 %v3432
    %v3769 = vpop.f32.mrb[0].mxu0
    %v3770 = vadd.f32 0.0, %v3769
    %v3771 = vpop.f32.mrb[0].mxu0
    %3772 = vmatprep.mubr.f32.mxu0 0.0
    %3773 = vmatmul.mubr.f32.gmra.mrb[0].mxu0 %v3435
    %v3774 = vpop.f32.mrb[0].mxu0
    %v3775 = vadd.f32 0.0, %v3774
    %v3776 = vpop.f32.mrb[0].mxu0
    %3777 = vmatprep.mubr.f32.mxu0 0.0
    %3778 = vmatmul.mubr.f32.gmra.mrb[0].mxu0 %v3438
    %v3779 = vpop.f32.mrb[0].mxu0
    %v3780 = vadd.f32 0.0, %v3779
    %v3781 = vpop.f32.mrb[0].mxu0
    %3782 = vmatprep.mubr.f32.mxu0 0.0
    %3783 = vmatmul.mubr.f32.gmra.mrb[0].mxu0 %v3441
    %v3784 = vpop.f32.mrb[0].mxu0
    %v3785 = vadd.f32 0.0, %v3784
    %v3786 = vpop.f32.mrb[0].mxu0
    %3787 = vmatprep.mubr.f32.mxu0 0.0
    %3788 = vmatmul.mubr.f32.gmra.mrb[0].mxu0 %v3444
    %v3789 = vpop.f32.mrb[0].mxu0
    %v3790 = vadd.f32 0.0, %v3789
    %v3791 = vpop.f32.mrb[0].mxu0
    %3792 = vmatprep.mubr.f32.mxu0 0.0
    %3793 = vmatmul.mubr.f32.gmra.mrb[0].mxu0 %v3447
    %v3794 = vpop.f32.mrb[0].mxu0
    %v3795 = vadd.f32 0.0, %v3794
    %v3796 = vpop.f32.mrb[0].mxu0
    %3797 = vmatprep.mubr.f32.mxu0 0.0
    %3798 = vmatmul.mubr.f32.gmra.mrb[0].mxu0 %v3450
    %v3799 = vpop.f32.mrb[0].mxu0
    %v3800 = vadd.f32 0.0, %v3799
    %v3801 = vpop.f32.mrb[0].mxu0
    %3802 = vmatprep.mubr.f32.mxu0 0.0
    %3803 = vmatmul.mubr.f32.gmra.mrb[0].mxu0 %v3453
    %v3804 = vpop.f32.mrb[0].mxu0
    %v3805 = vadd.f32 0.0, %v3804
    %v3806 = vpop.f32.mrb[0].mxu0
    %3807 = vmatprep.mubr.f32.mxu0 0.0
    %3808 = vmatmul.mubr.f32.gmra.mrb[0].mxu0 %v3456
    %v3809 = vpop.f32.mrb[0].mxu0
    %v3810 = vadd.f32 0.0, %v3809
    %v3811 = vpop.f32.mrb[0].mxu0
    %3812 = vmatprep.mubr.f32.mxu0 0.0
    %3813 = vmatmul.mubr.f32.gmra.mrb[0].mxu0 %v3459
    %v3814 = vpop.f32.mrb[0].mxu0
    %v3815 = vadd.f32 0.0, %v3814
    %v3816 = vpop.f32.mrb[0].mxu0
    %3817 = vmatprep.mubr.f32.mxu0 0.0
    %3818 = vmatmul.mubr.f32.gmra.mrb[0].mxu0 %v3462
    %v3819 = vpop.f32.mrb[0].mxu0
    %v3820 = vadd.f32 0.0, %v3819
    %v3821 = vpop.f32.mrb[0].mxu0
    %3822 = vmatprep.mubr.f32.mxu0 0.0
    %3823 = vmatmul.mubr.f32.gmra.mrb[0].mxu0 %v3465
    %v3824 = vpop.f32.mrb[0].mxu0
    %v3825 = vadd.f32 0.0, %v3824
    %v3826 = vpop.f32.mrb[0].mxu0
    %3827 = vmatprep.mubr.f32.mxu0 0.0
    %3828 = vmatmul.mubr.f32.gmra.mrb[0].mxu0 %v3468
    %v3829 = vpop.f32.mrb[0].mxu0
    %v3830 = vadd.f32 0.0, %v3829
    %v3831 = vpop.f32.mrb[0].mxu0
    %3832 = vmatprep.mubr.f32.mxu0 0.0
    %3833 = vmatmul.mubr.f32.gmra.mrb[0].mxu0 %v3471
    %v3834 = vpop.f32.mrb[0].mxu0
    %v3835 = vadd.f32 0.0, %v3834
    %v3836 = vpop.f32.mrb[0].mxu0
    %3837 = vmatprep.mubr.f32.mxu0 0.0
    %3838 = vmatmul.mubr.f32.gmra.mrb[0].mxu0 %v3474
    %v3839 = vpop.f32.mrb[0].mxu0
    %v3840 = vadd.f32 0.0, %v3839
    %v3841 = vpop.f32.mrb[0].mxu0
    %3842 = vmatprep.mubr.f32.mxu0 0.0
    %3843 = vmatmul.mubr.f32.gmra.mrb[0].mxu0 %v3477
    %v3844 = vpop.f32.mrb[0].mxu0
    %v3845 = vadd.f32 0.0, %v3844
    %v3846 = vpop.f32.mrb[0].mxu0
    %3847 = vmatprep.mubr.f32.mxu0 0.0
    %3848 = vmatmul.mubr.f32.gmra.mrb[0].mxu0 %v3480
    %v3849 = vpop.f32.mrb[0].mxu0
    %v3850 = vadd.f32 0.0, %v3849
    %v3851 = vpop.f32.mrb[0].mxu0
    %3852 = vmatprep.mubr.f32.mxu0 0.0
    %3853 = vmatmul.mubr.f32.gmra.mrb[0].mxu0 %v3483
    %v3854 = vpop.f32.mrb[0].mxu0
    %v3855 = vadd.f32 0.0, %v3854
    %v3856 = vpop.f32.mrb[0].mxu0
    %3857 = vmatprep.mubr.f32.mxu0 0.0
    %3858 = vmatmul.mubr.f32.gmra.mrb[0].mxu0 %v3486
    %v3859 = vpop.f32.mrb[0].mxu0
    %v3860 = vadd.f32 0.0, %v3859
    %v3861 = vpop.f32.mrb[0].mxu0
    %3862 = vmatprep.mubr.f32.mxu0 0.0
    %3863 = vmatmul.mubr.f32.gmra.mrb[0].mxu0 %v3489
    %v3864 = vpop.f32.mrb[0].mxu0
    %v3865 = vadd.f32 0.0, %v3864
    %v3866 = vpop.f32.mrb[0].mxu0
    %3867 = vmatprep.mubr.f32.mxu0 0.0
    %3868 = vmatmul.mubr.f32.gmra.mrb[0].mxu0 %v3492
    %v3869 = vpop.f32.mrb[0].mxu0
    %v3870 = vadd.f32 0.0, %v3869
    %v3871 = vpop.f32.mrb[0].mxu0
    %3872 = vmatprep.mubr.f32.mxu0 0.0
    %3873 = vmatmul.mubr.f32.gmra.mrb[0].mxu0 %v3495
    %v3874 = vpop.f32.mrb[0].mxu0
    %v3875 = vadd.f32 0.0, %v3874
    %v3876 = vpop.f32.mrb[0].mxu0
    %3877 = vmatprep.mubr.f32.mxu0 0.0
    %3878 = vmatmul.mubr.f32.gmra.mrb[0].mxu0 %v3498
    %v3879 = vpop.f32.mrb[0].mxu0
    %v3880 = vadd.f32 0.0, %v3879
    %v3881 = vpop.f32.mrb[0].mxu0
    %3882 = vmatprep.mubr.f32.mxu0 0.0
    %3883 = vmatmul.mubr.f32.gmra.mrb[0].mxu0 %v3501
    %v3884 = vpop.f32.mrb[0].mxu0
    %v3885 = vadd.f32 0.0, %v3884
    %v3886 = vpop.f32.mrb[0].mxu0
    %3887 = vmatprep.mubr.f32.mxu0 0.0
    %3888 = vmatmul.mubr.f32.gmra.mrb[0].mxu0 %v3504
    %v3889 = vpop.f32.mrb[0].mxu0
    %v3890 = vadd.f32 0.0, %v3889
    %v3891 = vpop.f32.mrb[0].mxu0
    %3892 = vmatprep.mubr.f32.mxu0 0.0
    %3893 = vmatmul.mubr.f32.gmra.mrb[0].mxu0 %v3507
    %v3894 = vpop.f32.mrb[0].mxu0
    %v3895 = vadd.f32 0.0, %v3894
    %v3896 = vpop.f32.mrb[0].mxu0
    %3897 = vdwg.mxu0
    %v3898 = vld [vmem:[%s4] sm:$0x1]
    %v3899 = vld [vmem:[%s5] sm:$0x1]
    %vm3900 = vcmask 64512
    %v3901 = vsel %vm3900, %v3580, 0.0
    %v3902 = vsel %vm3900, %v3585, 0.0
    %v3903 = vadd.f32 %v3901, %v3902
    %v3904 = vsel %vm3900, %v3590, 0.0
    %v3905 = vadd.f32 %v3903, %v3904
    %v3906 = vsel %vm3900, %v3595, 0.0
    %v3907 = vadd.f32 %v3905, %v3906
    %v3908 = vsel %vm3900, %v3600, 0.0
    %v3909 = vadd.f32 %v3907, %v3908
    %v3910 = vsel %vm3900, %v3605, 0.0
    %v3911 = vadd.f32 %v3909, %v3910
    %v3912 = vsel %vm3900, %v3610, 0.0
    %v3913 = vadd.f32 %v3911, %v3912
    %v3914 = vsel %vm3900, %v3615, 0.0
    %v3915 = vadd.f32 %v3913, %v3914
    %v3916 = vsel %vm3900, %v3620, 0.0
    %v3917 = vadd.f32 %v3915, %v3916
    %v3918 = vsel %vm3900, %v3625, 0.0
    %v3919 = vadd.f32 %v3917, %v3918
    %v3920 = vsel %vm3900, %v3630, 0.0
    %v3921 = vadd.f32 %v3919, %v3920
    %v3922 = vsel %vm3900, %v3635, 0.0
    %v3923 = vadd.f32 %v3921, %v3922
    %v3924 = vsel %vm3900, %v3640, 0.0
    %v3925 = vadd.f32 %v3923, %v3924
    %v3926 = vsel %vm3900, %v3645, 0.0
    %v3927 = vadd.f32 %v3925, %v3926
    %v3928 = vsel %vm3900, %v3650, 0.0
    %v3929 = vadd.f32 %v3927, %v3928
    %v3930 = vsel %vm3900, %v3655, 0.0
    %v3931 = vadd.f32 %v3929, %v3930
    %v3932 = vsel %vm3900, %v3660, 0.0
    %v3933 = vadd.f32 %v3931, %v3932
    %v3934 = vsel %vm3900, %v3665, 0.0
    %v3935 = vadd.f32 %v3933, %v3934
    %v3936 = vsel %vm3900, %v3670, 0.0
    %v3937 = vadd.f32 %v3935, %v3936
    %v3938 = vsel %vm3900, %v3675, 0.0
    %v3939 = vadd.f32 %v3937, %v3938
    %v3940 = vsel %vm3900, %v3680, 0.0
    %v3941 = vadd.f32 %v3939, %v3940
    %v3942 = vsel %vm3900, %v3685, 0.0
    %v3943 = vadd.f32 %v3941, %v3942
    %v3944 = vsel %vm3900, %v3690, 0.0
    %v3945 = vadd.f32 %v3943, %v3944
    %v3946 = vsel %vm3900, %v3695, 0.0
    %v3947 = vadd.f32 %v3945, %v3946
    %v3948 = vsel %vm3900, %v3700, 0.0
    %v3949 = vadd.f32 %v3947, %v3948
    %v3950 = vsel %vm3900, %v3705, 0.0
    %v3951 = vadd.f32 %v3949, %v3950
    %v3952 = vsel %vm3900, %v3710, 0.0
    %v3953 = vadd.f32 %v3951, %v3952
    %v3954 = vsel %vm3900, %v3715, 0.0
    %v3955 = vadd.f32 %v3953, %v3954
    %v3956 = vsel %vm3900, %v3720, 0.0
    %v3957 = vadd.f32 %v3955, %v3956
    %v3958 = vsel %vm3900, %v3725, 0.0
    %v3959 = vadd.f32 %v3957, %v3958
    %v3960 = vsel %vm3900, %v3730, 0.0
    %v3961 = vadd.f32 %v3959, %v3960
    %v3962 = vsel %vm3900, %v3735, 0.0
    %v3963 = vadd.f32 %v3961, %v3962
    %v3964 = vsel %vm3900, %v3740, 0.0
    %v3965 = vadd.f32 %v3963, %v3964
    %v3966 = vsel %vm3900, %v3745, 0.0
    %v3967 = vadd.f32 %v3965, %v3966
    %v3968 = vsel %vm3900, %v3750, 0.0
    %v3969 = vadd.f32 %v3967, %v3968
    %v3970 = vsel %vm3900, %v3755, 0.0
    %v3971 = vadd.f32 %v3969, %v3970
    %v3972 = vsel %vm3900, %v3760, 0.0
    %v3973 = vadd.f32 %v3971, %v3972
    %v3974 = vsel %vm3900, %v3765, 0.0
    %v3975 = vadd.f32 %v3973, %v3974
    %v3976 = vsel %vm3900, %v3770, 0.0
    %v3977 = vadd.f32 %v3975, %v3976
    %v3978 = vsel %vm3900, %v3775, 0.0
    %v3979 = vadd.f32 %v3977, %v3978
    %v3980 = vsel %vm3900, %v3780, 0.0
    %v3981 = vadd.f32 %v3979, %v3980
    %v3982 = vsel %vm3900, %v3785, 0.0
    %v3983 = vadd.f32 %v3981, %v3982
    %v3984 = vsel %vm3900, %v3790, 0.0
    %v3985 = vadd.f32 %v3983, %v3984
    %v3986 = vsel %vm3900, %v3795, 0.0
    %v3987 = vadd.f32 %v3985, %v3986
    %v3988 = vsel %vm3900, %v3800, 0.0
    %v3989 = vadd.f32 %v3987, %v3988
    %v3990 = vsel %vm3900, %v3805, 0.0
    %v3991 = vadd.f32 %v3989, %v3990
    %v3992 = vsel %vm3900, %v3810, 0.0
    %v3993 = vadd.f32 %v3991, %v3992
    %v3994 = vsel %vm3900, %v3815, 0.0
    %v3995 = vadd.f32 %v3993, %v3994
    %v3996 = vsel %vm3900, %v3820, 0.0
    %v3997 = vadd.f32 %v3995, %v3996
    %v3998 = vsel %vm3900, %v3825, 0.0
    %v3999 = vadd.f32 %v3997, %v3998
    %v4000 = vsel %vm3900, %v3830, 0.0
    %v4001 = vadd.f32 %v3999, %v4000
    %v4002 = vsel %vm3900, %v3835, 0.0
    %v4003 = vadd.f32 %v4001, %v4002
    %v4004 = vsel %vm3900, %v3840, 0.0
    %v4005 = vadd.f32 %v4003, %v4004
    %v4006 = vsel %vm3900, %v3845, 0.0
    %v4007 = vadd.f32 %v4005, %v4006
    %v4008 = vsel %vm3900, %v3850, 0.0
    %v4009 = vadd.f32 %v4007, %v4008
    %v4010 = vsel %vm3900, %v3855, 0.0
    %v4011 = vadd.f32 %v4009, %v4010
    %v4012 = vsel %vm3900, %v3860, 0.0
    %v4013 = vadd.f32 %v4011, %v4012
    %v4014 = vsel %vm3900, %v3865, 0.0
    %v4015 = vadd.f32 %v4013, %v4014
    %v4016 = vsel %vm3900, %v3870, 0.0
    %v4017 = vadd.f32 %v4015, %v4016
    %v4018 = vsel %vm3900, %v3875, 0.0
    %v4019 = vadd.f32 %v4017, %v4018
    %v4020 = vsel %vm3900, %v3880, 0.0
    %v4021 = vadd.f32 %v4019, %v4020
    %v4022 = vsel %vm3900, %v3885, 0.0
    %v4023 = vadd.f32 %v4021, %v4022
    %v4024 = vsel %vm3900, %v3890, 0.0
    %v4025 = vadd.f32 %v4023, %v4024
    %v4026 = vsel %vm3900, %v3895, 0.0
    %v4027 = vadd.f32 %v4025, %v4026
    %v4028 = vrot.slane %v4027, 4
    %v4029 = vadd.f32 %v4027, %v4028
    %v4030 = vrot.slane %v4029, 2
    %v4031 = vadd.f32 %v4029, %v4030
    %v4032 = vrot.slane %v4031, 1
    %v4033 = vadd.f32 %v4031, %v4032
    %v4034 = vmul.f32 %v3580, %v3580
    %v4035 = vmul.f32 %v3585, %v3585
    %v4036 = vmul.f32 %v3590, %v3590
    %v4037 = vmul.f32 %v3595, %v3595
    %v4038 = vmul.f32 %v3600, %v3600
    %v4039 = vmul.f32 %v3605, %v3605
    %v4040 = vmul.f32 %v3610, %v3610
    %v4041 = vmul.f32 %v3615, %v3615
    %v4042 = vmul.f32 %v3620, %v3620
    %v4043 = vmul.f32 %v3625, %v3625
    %v4044 = vmul.f32 %v3630, %v3630
    %v4045 = vmul.f32 %v3635, %v3635
    %v4046 = vmul.f32 %v3640, %v3640
    %v4047 = vmul.f32 %v3645, %v3645
    %v4048 = vmul.f32 %v3650, %v3650
    %v4049 = vmul.f32 %v3655, %v3655
    %v4050 = vmul.f32 %v3660, %v3660
    %v4051 = vmul.f32 %v3665, %v3665
    %v4052 = vmul.f32 %v3670, %v3670
    %v4053 = vmul.f32 %v3675, %v3675
    %v4054 = vmul.f32 %v3680, %v3680
    %v4055 = vmul.f32 %v3685, %v3685
    %v4056 = vmul.f32 %v3690, %v3690
    %v4057 = vmul.f32 %v3695, %v3695
    %v4058 = vmul.f32 %v3700, %v3700
    %v4059 = vmul.f32 %v3705, %v3705
    %v4060 = vmul.f32 %v3710, %v3710
    %v4061 = vmul.f32 %v3715, %v3715
    %v4062 = vmul.f32 %v3720, %v3720
    %v4063 = vmul.f32 %v3725, %v3725
    %v4064 = vmul.f32 %v3730, %v3730
    %v4065 = vmul.f32 %v3735, %v3735
    %v4066 = vmul.f32 %v3740, %v3740
    %v4067 = vmul.f32 %v3745, %v3745
    %v4068 = vmul.f32 %v3750, %v3750
    %v4069 = vmul.f32 %v3755, %v3755
    %v4070 = vmul.f32 %v3760, %v3760
    %v4071 = vmul.f32 %v3765, %v3765
    %v4072 = vmul.f32 %v3770, %v3770
    %v4073 = vmul.f32 %v3775, %v3775
    %v4074 = vmul.f32 %v3780, %v3780
    %v4075 = vmul.f32 %v3785, %v3785
    %v4076 = vmul.f32 %v3790, %v3790
    %v4077 = vmul.f32 %v3795, %v3795
    %v4078 = vmul.f32 %v3800, %v3800
    %v4079 = vmul.f32 %v3805, %v3805
    %v4080 = vmul.f32 %v3810, %v3810
    %v4081 = vmul.f32 %v3815, %v3815
    %v4082 = vmul.f32 %v3820, %v3820
    %v4083 = vmul.f32 %v3825, %v3825
    %v4084 = vmul.f32 %v3830, %v3830
    %v4085 = vmul.f32 %v3835, %v3835
    %v4086 = vmul.f32 %v3840, %v3840
    %v4087 = vmul.f32 %v3845, %v3845
    %v4088 = vmul.f32 %v3850, %v3850
    %v4089 = vmul.f32 %v3855, %v3855
    %v4090 = vmul.f32 %v3860, %v3860
    %v4091 = vmul.f32 %v3865, %v3865
    %v4092 = vmul.f32 %v3870, %v3870
    %v4093 = vmul.f32 %v3875, %v3875
    %v4094 = vmul.f32 %v3880, %v3880
    %v4095 = vmul.f32 %v3885, %v3885
    %v4096 = vmul.f32 %v3890, %v3890
    %v4097 = vmul.f32 %v3895, %v3895
    %v4098 = vsel %vm3900, %v4034, 0.0
    %v4099 = vsel %vm3900, %v4035, 0.0
    %v4100 = vadd.f32 %v4098, %v4099
    %v4101 = vsel %vm3900, %v4036, 0.0
    %v4102 = vadd.f32 %v4100, %v4101
    %v4103 = vsel %vm3900, %v4037, 0.0
    %v4104 = vadd.f32 %v4102, %v4103
    %v4105 = vsel %vm3900, %v4038, 0.0
    %v4106 = vadd.f32 %v4104, %v4105
    %v4107 = vsel %vm3900, %v4039, 0.0
    %v4108 = vadd.f32 %v4106, %v4107
    %v4109 = vsel %vm3900, %v4040, 0.0
    %v4110 = vadd.f32 %v4108, %v4109
    %v4111 = vsel %vm3900, %v4041, 0.0
    %v4112 = vadd.f32 %v4110, %v4111
    %v4113 = vsel %vm3900, %v4042, 0.0
    %v4114 = vadd.f32 %v4112, %v4113
    %v4115 = vsel %vm3900, %v4043, 0.0
    %v4116 = vadd.f32 %v4114, %v4115
    %v4117 = vsel %vm3900, %v4044, 0.0
    %v4118 = vadd.f32 %v4116, %v4117
    %v4119 = vsel %vm3900, %v4045, 0.0
    %v4120 = vadd.f32 %v4118, %v4119
    %v4121 = vsel %vm3900, %v4046, 0.0
    %v4122 = vadd.f32 %v4120, %v4121
    %v4123 = vsel %vm3900, %v4047, 0.0
    %v4124 = vadd.f32 %v4122, %v4123
    %v4125 = vsel %vm3900, %v4048, 0.0
    %v4126 = vadd.f32 %v4124, %v4125
    %v4127 = vsel %vm3900, %v4049, 0.0
    %v4128 = vadd.f32 %v4126, %v4127
    %v4129 = vsel %vm3900, %v4050, 0.0
    %v4130 = vadd.f32 %v4128, %v4129
    %v4131 = vsel %vm3900, %v4051, 0.0
    %v4132 = vadd.f32 %v4130, %v4131
    %v4133 = vsel %vm3900, %v4052, 0.0
    %v4134 = vadd.f32 %v4132, %v4133
    %v4135 = vsel %vm3900, %v4053, 0.0
    %v4136 = vadd.f32 %v4134, %v4135
    %v4137 = vsel %vm3900, %v4054, 0.0
    %v4138 = vadd.f32 %v4136, %v4137
    %v4139 = vsel %vm3900, %v4055, 0.0
    %v4140 = vadd.f32 %v4138, %v4139
    %v4141 = vsel %vm3900, %v4056, 0.0
    %v4142 = vadd.f32 %v4140, %v4141
    %v4143 = vsel %vm3900, %v4057, 0.0
    %v4144 = vadd.f32 %v4142, %v4143
    %v4145 = vsel %vm3900, %v4058, 0.0
    %v4146 = vadd.f32 %v4144, %v4145
    %v4147 = vsel %vm3900, %v4059, 0.0
    %v4148 = vadd.f32 %v4146, %v4147
    %v4149 = vsel %vm3900, %v4060, 0.0
    %v4150 = vadd.f32 %v4148, %v4149
    %v4151 = vsel %vm3900, %v4061, 0.0
    %v4152 = vadd.f32 %v4150, %v4151
    %v4153 = vsel %vm3900, %v4062, 0.0
    %v4154 = vadd.f32 %v4152, %v4153
    %v4155 = vsel %vm3900, %v4063, 0.0
    %v4156 = vadd.f32 %v4154, %v4155
    %v4157 = vsel %vm3900, %v4064, 0.0
    %v4158 = vadd.f32 %v4156, %v4157
    %v4159 = vsel %vm3900, %v4065, 0.0
    %v4160 = vadd.f32 %v4158, %v4159
    %v4161 = vsel %vm3900, %v4066, 0.0
    %v4162 = vadd.f32 %v4160, %v4161
    %v4163 = vsel %vm3900, %v4067, 0.0
    %v4164 = vadd.f32 %v4162, %v4163
    %v4165 = vsel %vm3900, %v4068, 0.0
    %v4166 = vadd.f32 %v4164, %v4165
    %v4167 = vsel %vm3900, %v4069, 0.0
    %v4168 = vadd.f32 %v4166, %v4167
    %v4169 = vsel %vm3900, %v4070, 0.0
    %v4170 = vadd.f32 %v4168, %v4169
    %v4171 = vsel %vm3900, %v4071, 0.0
    %v4172 = vadd.f32 %v4170, %v4171
    %v4173 = vsel %vm3900, %v4072, 0.0
    %v4174 = vadd.f32 %v4172, %v4173
    %v4175 = vsel %vm3900, %v4073, 0.0
    %v4176 = vadd.f32 %v4174, %v4175
    %v4177 = vsel %vm3900, %v4074, 0.0
    %v4178 = vadd.f32 %v4176, %v4177
    %v4179 = vsel %vm3900, %v4075, 0.0
    %v4180 = vadd.f32 %v4178, %v4179
    %v4181 = vsel %vm3900, %v4076, 0.0
    %v4182 = vadd.f32 %v4180, %v4181
    %v4183 = vsel %vm3900, %v4077, 0.0
    %v4184 = vadd.f32 %v4182, %v4183
    %v4185 = vsel %vm3900, %v4078, 0.0
    %v4186 = vadd.f32 %v4184, %v4185
    %v4187 = vsel %vm3900, %v4079, 0.0
    %v4188 = vadd.f32 %v4186, %v4187
    %v4189 = vsel %vm3900, %v4080, 0.0
    %v4190 = vadd.f32 %v4188, %v4189
    %v4191 = vsel %vm3900, %v4081, 0.0
    %v4192 = vadd.f32 %v4190, %v4191
    %v4193 = vsel %vm3900, %v4082, 0.0
    %v4194 = vadd.f32 %v4192, %v4193
    %v4195 = vsel %vm3900, %v4083, 0.0
    %v4196 = vadd.f32 %v4194, %v4195
    %v4197 = vsel %vm3900, %v4084, 0.0
    %v4198 = vadd.f32 %v4196, %v4197
    %v4199 = vsel %vm3900, %v4085, 0.0
    %v4200 = vadd.f32 %v4198, %v4199
    %v4201 = vsel %vm3900, %v4086, 0.0
    %v4202 = vadd.f32 %v4200, %v4201
    %v4203 = vsel %vm3900, %v4087, 0.0
    %v4204 = vadd.f32 %v4202, %v4203
    %v4205 = vsel %vm3900, %v4088, 0.0
    %v4206 = vadd.f32 %v4204, %v4205
    %v4207 = vsel %vm3900, %v4089, 0.0
    %v4208 = vadd.f32 %v4206, %v4207
    %v4209 = vsel %vm3900, %v4090, 0.0
    %v4210 = vadd.f32 %v4208, %v4209
    %v4211 = vsel %vm3900, %v4091, 0.0
    %v4212 = vadd.f32 %v4210, %v4211
    %v4213 = vsel %vm3900, %v4092, 0.0
    %v4214 = vadd.f32 %v4212, %v4213
    %v4215 = vsel %vm3900, %v4093, 0.0
    %v4216 = vadd.f32 %v4214, %v4215
    %v4217 = vsel %vm3900, %v4094, 0.0
    %v4218 = vadd.f32 %v4216, %v4217
    %v4219 = vsel %vm3900, %v4095, 0.0
    %v4220 = vadd.f32 %v4218, %v4219
    %v4221 = vsel %vm3900, %v4096, 0.0
    %v4222 = vadd.f32 %v4220, %v4221
    %v4223 = vsel %vm3900, %v4097, 0.0
    %v4224 = vadd.f32 %v4222, %v4223
    %v4225 = vrot.slane %v4224, 4
    %v4226 = vadd.f32 %v4224, %v4225
    %v4227 = vrot.slane %v4226, 2
    %v4228 = vadd.f32 %v4226, %v4227
    %v4229 = vrot.slane %v4228, 1
    %v4230 = vadd.f32 %v4228, %v4229
    %v4231 = vmul.f32 %v4033, 0.001953125
    %v4232 = vmul.f32 %v4230, 0.001953125
    %v4233 = vmul.f32 %v4231, %v4231
    %v4234 = vsub.f32 %v4232, %v4233
    %v4235 = vadd.f32 %v4234, 1e-05
    %v4236 = vrsqrt.pop %v4235
    %v4237 = vmul.f32 %v3898, %v4236
    %v4238 = vmul.f32 %v4231, %v4237
    %v4239 = vsub.f32 %v3899, %v4238
    %v4241 = vlaneseq
    %v4242 = vshrl.u32 %v4241, 7
    %v4243 = vsub.s32 0, %v4242
    %v4244 = vrot.slane %v4237, %v4243
    %v4246 = vmul.f32 %v3580, %v4244
    %v4247 = vmul.f32 %v3585, %v4244
    %v4248 = vmul.f32 %v3590, %v4244
    %v4249 = vmul.f32 %v3595, %v4244
    %v4250 = vmul.f32 %v3600, %v4244
    %v4251 = vmul.f32 %v3605, %v4244
    %v4252 = vmul.f32 %v3610, %v4244
    %v4253 = vmul.f32 %v3615, %v4244
    %v4254 = vmul.f32 %v3620, %v4244
    %v4255 = vmul.f32 %v3625, %v4244
    %v4256 = vmul.f32 %v3630, %v4244
    %v4257 = vmul.f32 %v3635, %v4244
    %v4258 = vmul.f32 %v3640, %v4244
    %v4259 = vmul.f32 %v3645, %v4244
    %v4260 = vmul.f32 %v3650, %v4244
    %v4261 = vmul.f32 %v3655, %v4244
    %v4262 = vmul.f32 %v3660, %v4244
    %v4263 = vmul.f32 %v3665, %v4244
    %v4264 = vmul.f32 %v3670, %v4244
    %v4265 = vmul.f32 %v3675, %v4244
    %v4266 = vmul.f32 %v3680, %v4244
    %v4267 = vmul.f32 %v3685, %v4244
    %v4268 = vmul.f32 %v3690, %v4244
    %v4269 = vmul.f32 %v3695, %v4244
    %v4270 = vmul.f32 %v3700, %v4244
    %v4271 = vmul.f32 %v3705, %v4244
    %v4272 = vmul.f32 %v3710, %v4244
    %v4273 = vmul.f32 %v3715, %v4244
    %v4274 = vmul.f32 %v3720, %v4244
    %v4275 = vmul.f32 %v3725, %v4244
    %v4276 = vmul.f32 %v3730, %v4244
    %v4277 = vmul.f32 %v3735, %v4244
    %v4278 = vmul.f32 %v3740, %v4244
    %v4279 = vmul.f32 %v3745, %v4244
    %v4280 = vmul.f32 %v3750, %v4244
    %v4281 = vmul.f32 %v3755, %v4244
    %v4282 = vmul.f32 %v3760, %v4244
    %v4283 = vmul.f32 %v3765, %v4244
    %v4284 = vmul.f32 %v3770, %v4244
    %v4285 = vmul.f32 %v3775, %v4244
    %v4286 = vmul.f32 %v3780, %v4244
    %v4287 = vmul.f32 %v3785, %v4244
    %v4288 = vmul.f32 %v3790, %v4244
    %v4289 = vmul.f32 %v3795, %v4244
    %v4290 = vmul.f32 %v3800, %v4244
    %v4291 = vmul.f32 %v3805, %v4244
    %v4292 = vmul.f32 %v3810, %v4244
    %v4293 = vmul.f32 %v3815, %v4244
    %v4294 = vmul.f32 %v3820, %v4244
    %v4295 = vmul.f32 %v3825, %v4244
    %v4296 = vmul.f32 %v3830, %v4244
    %v4297 = vmul.f32 %v3835, %v4244
    %v4298 = vmul.f32 %v3840, %v4244
    %v4299 = vmul.f32 %v3845, %v4244
    %v4300 = vmul.f32 %v3850, %v4244
    %v4301 = vmul.f32 %v3855, %v4244
    %v4302 = vmul.f32 %v3860, %v4244
    %v4303 = vmul.f32 %v3865, %v4244
    %v4304 = vmul.f32 %v3870, %v4244
    %v4305 = vmul.f32 %v3875, %v4244
    %v4306 = vmul.f32 %v3880, %v4244
    %v4307 = vmul.f32 %v3885, %v4244
    %v4308 = vmul.f32 %v3890, %v4244
    %v4309 = vmul.f32 %v3895, %v4244
    %v4311 = vlaneseq
    %v4312 = vshrl.u32 %v4311, 7
    %v4313 = vsub.s32 0, %v4312
    %v4314 = vrot.slane %v4239, %v4313
    %v4316 = vadd.f32 %v4246, %v4314
    %v4317 = vadd.f32 %v4247, %v4314
    %v4318 = vadd.f32 %v4248, %v4314
    %v4319 = vadd.f32 %v4249, %v4314
    %v4320 = vadd.f32 %v4250, %v4314
    %v4321 = vadd.f32 %v4251, %v4314
    %v4322 = vadd.f32 %v4252, %v4314
    %v4323 = vadd.f32 %v4253, %v4314
    %v4324 = vadd.f32 %v4254, %v4314
    %v4325 = vadd.f32 %v4255, %v4314
    %v4326 = vadd.f32 %v4256, %v4314
    %v4327 = vadd.f32 %v4257, %v4314
    %v4328 = vadd.f32 %v4258, %v4314
    %v4329 = vadd.f32 %v4259, %v4314
    %v4330 = vadd.f32 %v4260, %v4314
    %v4331 = vadd.f32 %v4261, %v4314
    %v4332 = vadd.f32 %v4262, %v4314
    %v4333 = vadd.f32 %v4263, %v4314
    %v4334 = vadd.f32 %v4264, %v4314
    %v4335 = vadd.f32 %v4265, %v4314
    %v4336 = vadd.f32 %v4266, %v4314
    %v4337 = vadd.f32 %v4267, %v4314
    %v4338 = vadd.f32 %v4268, %v4314
    %v4339 = vadd.f32 %v4269, %v4314
    %v4340 = vadd.f32 %v4270, %v4314
    %v4341 = vadd.f32 %v4271, %v4314
    %v4342 = vadd.f32 %v4272, %v4314
    %v4343 = vadd.f32 %v4273, %v4314
    %v4344 = vadd.f32 %v4274, %v4314
    %v4345 = vadd.f32 %v4275, %v4314
    %v4346 = vadd.f32 %v4276, %v4314
    %v4347 = vadd.f32 %v4277, %v4314
    %v4348 = vadd.f32 %v4278, %v4314
    %v4349 = vadd.f32 %v4279, %v4314
    %v4350 = vadd.f32 %v4280, %v4314
    %v4351 = vadd.f32 %v4281, %v4314
    %v4352 = vadd.f32 %v4282, %v4314
    %v4353 = vadd.f32 %v4283, %v4314
    %v4354 = vadd.f32 %v4284, %v4314
    %v4355 = vadd.f32 %v4285, %v4314
    %v4356 = vadd.f32 %v4286, %v4314
    %v4357 = vadd.f32 %v4287, %v4314
    %v4358 = vadd.f32 %v4288, %v4314
    %v4359 = vadd.f32 %v4289, %v4314
    %v4360 = vadd.f32 %v4290, %v4314
    %v4361 = vadd.f32 %v4291, %v4314
    %v4362 = vadd.f32 %v4292, %v4314
    %v4363 = vadd.f32 %v4293, %v4314
    %v4364 = vadd.f32 %v4294, %v4314
    %v4365 = vadd.f32 %v4295, %v4314
    %v4366 = vadd.f32 %v4296, %v4314
    %v4367 = vadd.f32 %v4297, %v4314
    %v4368 = vadd.f32 %v4298, %v4314
    %v4369 = vadd.f32 %v4299, %v4314
    %v4370 = vadd.f32 %v4300, %v4314
    %v4371 = vadd.f32 %v4301, %v4314
    %v4372 = vadd.f32 %v4302, %v4314
    %v4373 = vadd.f32 %v4303, %v4314
    %v4374 = vadd.f32 %v4304, %v4314
    %v4375 = vadd.f32 %v4305, %v4314
    %v4376 = vadd.f32 %v4306, %v4314
    %v4377 = vadd.f32 %v4307, %v4314
    %v4378 = vadd.f32 %v4308, %v4314
    %v4379 = vadd.f32 %v4309, %v4314
    %v4380 = vmax.f32 %v4316, 0.0
    %v4381 = vmax.f32 %v4317, 0.0
    %v4382 = vmax.f32 %v4318, 0.0
    %v4383 = vmax.f32 %v4319, 0.0
    %v4384 = vmax.f32 %v4320, 0.0
    %v4385 = vmax.f32 %v4321, 0.0
    %v4386 = vmax.f32 %v4322, 0.0
    %v4387 = vmax.f32 %v4323, 0.0
    %v4388 = vmax.f32 %v4324, 0.0
    %v4389 = vmax.f32 %v4325, 0.0
    %v4390 = vmax.f32 %v4326, 0.0
    %v4391 = vmax.f32 %v4327, 0.0
    %v4392 = vmax.f32 %v4328, 0.0
    %v4393 = vmax.f32 %v4329, 0.0
    %v4394 = vmax.f32 %v4330, 0.0
    %v4395 = vmax.f32 %v4331, 0.0
    %v4396 = vmax.f32 %v4332, 0.0
    %v4397 = vmax.f32 %v4333, 0.0
    %v4398 = vmax.f32 %v4334, 0.0
    %v4399 = vmax.f32 %v4335, 0.0
    %v4400 = vmax.f32 %v4336, 0.0
    %v4401 = vmax.f32 %v4337, 0.0
    %v4402 = vmax.f32 %v4338, 0.0
    %v4403 = vmax.f32 %v4339, 0.0
    %v4404 = vmax.f32 %v4340, 0.0
    %v4405 = vmax.f32 %v4341, 0.0
    %v4406 = vmax.f32 %v4342, 0.0
    %v4407 = vmax.f32 %v4343, 0.0
    %v4408 = vmax.f32 %v4344, 0.0
    %v4409 = vmax.f32 %v4345, 0.0
    %v4410 = vmax.f32 %v4346, 0.0
    %v4411 = vmax.f32 %v4347, 0.0
    %v4412 = vmax.f32 %v4348, 0.0
    %v4413 = vmax.f32 %v4349, 0.0
    %v4414 = vmax.f32 %v4350, 0.0
    %v4415 = vmax.f32 %v4351, 0.0
    %v4416 = vmax.f32 %v4352, 0.0
    %v4417 = vmax.f32 %v4353, 0.0
    %v4418 = vmax.f32 %v4354, 0.0
    %v4419 = vmax.f32 %v4355, 0.0
    %v4420 = vmax.f32 %v4356, 0.0
    %v4421 = vmax.f32 %v4357, 0.0
    %v4422 = vmax.f32 %v4358, 0.0
    %v4423 = vmax.f32 %v4359, 0.0
    %v4424 = vmax.f32 %v4360, 0.0
    %v4425 = vmax.f32 %v4361, 0.0
    %v4426 = vmax.f32 %v4362, 0.0
    %v4427 = vmax.f32 %v4363, 0.0
    %v4428 = vmax.f32 %v4364, 0.0
    %v4429 = vmax.f32 %v4365, 0.0
    %v4430 = vmax.f32 %v4366, 0.0
    %v4431 = vmax.f32 %v4367, 0.0
    %v4432 = vmax.f32 %v4368, 0.0
    %v4433 = vmax.f32 %v4369, 0.0
    %v4434 = vmax.f32 %v4370, 0.0
    %v4435 = vmax.f32 %v4371, 0.0
    %v4436 = vmax.f32 %v4372, 0.0
    %v4437 = vmax.f32 %v4373, 0.0
    %v4438 = vmax.f32 %v4374, 0.0
    %v4439 = vmax.f32 %v4375, 0.0
    %v4440 = vmax.f32 %v4376, 0.0
    %v4441 = vmax.f32 %v4377, 0.0
    %v4442 = vmax.f32 %v4378, 0.0
    %v4443 = vmax.f32 %v4379, 0.0
    %v4444 = vld [vmem:[%s3] sm:$0xf]
    %v4445 = vsel %vm100, %v1321, 0
    %v4447 = vsel %vm100, %v1322, 0
    %v4449 = vsel %vm100, %v1323, 0
    %v4451 = vsel %vm100, %v1324, 0
    %v4453 = vsel %vm100, %v1325, 0
    %v4455 = vsel %vm100, %v1326, 0
    %v4457 = vsel %vm100, %v1327, 0
    %v4459 = vsel %vm100, %v1328, 0
    %v4461 = vsel %vm100, %v1329, 0
    %v4463 = vsel %vm100, %v1330, 0
    %v4465 = vsel %vm100, %v1331, 0
    %v4467 = vsel %vm100, %v1332, 0
    %v4469 = vsel %vm100, %v1333, 0
    %v4471 = vsel %vm100, %v1334, 0
    %v4473 = vsel %vm100, %v1335, 0
    %v4475 = vsel %vm100, %v1336, 0
    %v4477 = vsel %vm100, %v1337, 0
    %v4479 = vsel %vm100, %v1338, 0
    %v4481 = vsel %vm100, %v1339, 0
    %v4483 = vsel %vm100, %v1340, 0
    %v4485 = vsel %vm100, %v1341, 0
    %v4487 = vsel %vm100, %v1342, 0
    %v4489 = vsel %vm100, %v1343, 0
    %v4491 = vsel %vm100, %v1344, 0
    %v4493 = vsel %vm100, %v1345, 0
    %v4495 = vsel %vm100, %v1346, 0
    %v4497 = vsel %vm100, %v1347, 0
    %v4499 = vsel %vm100, %v1348, 0
    %v4501 = vsel %vm100, %v1349, 0
    %v4503 = vsel %vm100, %v1350, 0
    %v4505 = vsel %vm100, %v1351, 0
    %v4507 = vsel %vm100, %v1352, 0
    %v4509 = vsel %vm100, %v1353, 0
    %v4511 = vsel %vm100, %v1354, 0
    %v4513 = vsel %vm100, %v1355, 0
    %v4515 = vsel %vm100, %v1356, 0
    %v4517 = vsel %vm100, %v1357, 0
    %v4519 = vsel %vm100, %v1358, 0
    %v4521 = vsel %vm100, %v1359, 0
    %v4523 = vsel %vm100, %v1360, 0
    %v4525 = vsel %vm100, %v1361, 0
    %v4527 = vsel %vm100, %v1362, 0
    %v4529 = vsel %vm100, %v1363, 0
    %v4531 = vsel %vm100, %v1364, 0
    %v4533 = vsel %vm100, %v1365, 0
    %v4535 = vsel %vm100, %v1366, 0
    %v4537 = vsel %vm100, %v1367, 0
    %v4539 = vsel %vm100, %v1368, 0
    %v4541 = vsel %vm100, %v1369, 0
    %v4543 = vsel %vm100, %v1370, 0
    %v4545 = vsel %vm100, %v1371, 0
    %v4547 = vsel %vm100, %v1372, 0
    %v4549 = vsel %vm100, %v1373, 0
    %v4551 = vsel %vm100, %v1374, 0
    %v4553 = vsel %vm100, %v1375, 0
    %v4555 = vsel %vm100, %v1376, 0
    %v4557 = vsel %vm100, %v1377, 0
    %v4559 = vsel %vm100, %v1378, 0
    %v4561 = vsel %vm100, %v1379, 0
    %v4563 = vsel %vm100, %v1380, 0
    %v4565 = vsel %vm100, %v1381, 0
    %v4567 = vsel %vm100, %v1382, 0
    %v4569 = vsel %vm100, %v1383, 0
    %v4571 = vsel %vm100, %v1384, 0
    %v4574 = vsel %vm3509, %v4444, 0
    %4576 = vmatprep.subr.mxu0 0.0
    %4577 = vmatpush1.msra.mxu0 %v4574
    %4578 = vmatprep.subr.mxu0 0.0
    %4579 = vmatpush1.msra.mxu0 0.0
    %4580 = vmatprep.subr.mxu0 0.0
    %4581 = vmatpush1.msra.mxu0 0.0
    %4582 = vmatprep.subr.mxu0 0.0
    %4583 = vmatpush1.msra.mxu0 0.0
    %4584 = vmatprep.subr.mxu0 0.0
    %4585 = vmatpush1.msra.mxu0 0.0
    %4586 = vmatprep.subr.mxu0 0.0
    %4587 = vmatpush1.msra.mxu0 0.0
    %4588 = vmatprep.subr.mxu0 0.0
    %4589 = vmatpush1.msra.mxu0 0.0
    %4590 = vmatprep.subr.mxu0 0.0
    %4591 = vmatpush1.msra.mxu0 0.0
    %4592 = vmatprep.subr.mxu0 0.0
    %4593 = vmatpush1.msra.mxu0 0.0
    %4594 = vmatprep.subr.mxu0 0.0
    %4595 = vmatpush1.msra.mxu0 0.0
    %4596 = vmatprep.subr.mxu0 0.0
    %4597 = vmatpush1.msra.mxu0 0.0
    %4598 = vmatprep.subr.mxu0 0.0
    %4599 = vmatpush1.msra.mxu0 0.0
    %4600 = vmatprep.subr.mxu0 0.0
    %4601 = vmatpush1.msra.mxu0 0.0
    %4602 = vmatprep.subr.mxu0 0.0
    %4603 = vmatpush1.msra.mxu0 0.0
    %4604 = vmatprep.subr.mxu0 0.0
    %4605 = vmatpush1.msra.mxu0 0.0
    %4606 = vmatprep.subr.mxu0 0.0
    %4607 = vmatpush1.msra.mxu0 0.0
    %4608 = vmatprep.subr.mxu0 0.0
    %4609 = vmatpush1.msra.mxu0 0.0
    %4610 = vmatprep.subr.mxu0 0.0
    %4611 = vmatpush1.msra.mxu0 0.0
    %4612 = vmatprep.subr.mxu0 0.0
    %4613 = vmatpush1.msra.mxu0 0.0
    %4614 = vmatprep.subr.mxu0 0.0
    %4615 = vmatpush1.msra.mxu0 0.0
    %4616 = vmatprep.subr.mxu0 0.0
    %4617 = vmatpush1.msra.mxu0 0.0
    %4618 = vmatprep.subr.mxu0 0.0
    %4619 = vmatpush1.msra.mxu0 0.0
    %4620 = vmatprep.subr.mxu0 0.0
    %4621 = vmatpush1.msra.mxu0 0.0
    %4622 = vmatprep.subr.mxu0 0.0
    %4623 = vmatpush1.msra.mxu0 0.0
    %4624 = vmatprep.subr.mxu0 0.0
    %4625 = vmatpush1.msra.mxu0 0.0
    %4626 = vmatprep.subr.mxu0 0.0
    %4627 = vmatpush1.msra.mxu0 0.0
    %4628 = vmatprep.subr.mxu0 0.0
    %4629 = vmatpush1.msra.mxu0 0.0
    %4630 = vmatprep.subr.mxu0 0.0
    %4631 = vmatpush1.msra.mxu0 0.0
    %4632 = vmatprep.subr.mxu0 0.0
    %4633 = vmatpush1.msra.mxu0 0.0
    %4634 = vmatprep.subr.mxu0 0.0
    %4635 = vmatpush1.msra.mxu0 0.0
    %4636 = vmatprep.subr.mxu0 0.0
    %4637 = vmatpush1.msra.mxu0 0.0
    %4638 = vmatprep.subr.mxu0 0.0
    %4639 = vmatpush1.msra.mxu0 0.0
    %4640 = vmatprep.mubr.f32.mxu0 0.0
    %4641 = vmatmul.mubr.f32.gmra.mrb[0].mxu0 %v4445
    %v4642 = vpop.f32.mrb[0].mxu0
    %v4643 = vadd.f32 0.0, %v4642
    %v4644 = vpop.f32.mrb[0].mxu0
    %4645 = vmatprep.mubr.f32.mxu0 0.0
    %4646 = vmatmul.mubr.f32.gmra.mrb[0].mxu0 %v4447
    %v4647 = vpop.f32.mrb[0].mxu0
    %v4648 = vadd.f32 0.0, %v4647
    %v4649 = vpop.f32.mrb[0].mxu0
    %4650 = vmatprep.mubr.f32.mxu0 0.0
    %4651 = vmatmul.mubr.f32.gmra.mrb[0].mxu0 %v4449
    %v4652 = vpop.f32.mrb[0].mxu0
    %v4653 = vadd.f32 0.0, %v4652
    %v4654 = vpop.f32.mrb[0].mxu0
    %4655 = vmatprep.mubr.f32.mxu0 0.0
    %4656 = vmatmul.mubr.f32.gmra.mrb[0].mxu0 %v4451
    %v4657 = vpop.f32.mrb[0].mxu0
    %v4658 = vadd.f32 0.0, %v4657
    %v4659 = vpop.f32.mrb[0].mxu0
    %4660 = vmatprep.mubr.f32.mxu0 0.0
    %4661 = vmatmul.mubr.f32.gmra.mrb[0].mxu0 %v4453
    %v4662 = vpop.f32.mrb[0].mxu0
    %v4663 = vadd.f32 0.0, %v4662
    %v4664 = vpop.f32.mrb[0].mxu0
    %4665 = vmatprep.mubr.f32.mxu0 0.0
    %4666 = vmatmul.mubr.f32.gmra.mrb[0].mxu0 %v4455
    %v4667 = vpop.f32.mrb[0].mxu0
    %v4668 = vadd.f32 0.0, %v4667
    %v4669 = vpop.f32.mrb[0].mxu0
    %4670 = vmatprep.mubr.f32.mxu0 0.0
    %4671 = vmatmul.mubr.f32.gmra.mrb[0].mxu0 %v4457
    %v4672 = vpop.f32.mrb[0].mxu0
    %v4673 = vadd.f32 0.0, %v4672
    %v4674 = vpop.f32.mrb[0].mxu0
    %4675 = vmatprep.mubr.f32.mxu0 0.0
    %4676 = vmatmul.mubr.f32.gmra.mrb[0].mxu0 %v4459
    %v4677 = vpop.f32.mrb[0].mxu0
    %v4678 = vadd.f32 0.0, %v4677
    %v4679 = vpop.f32.mrb[0].mxu0
    %4680 = vmatprep.mubr.f32.mxu0 0.0
    %4681 = vmatmul.mubr.f32.gmra.mrb[0].mxu0 %v4461
    %v4682 = vpop.f32.mrb[0].mxu0
    %v4683 = vadd.f32 0.0, %v4682
    %v4684 = vpop.f32.mrb[0].mxu0
    %4685 = vmatprep.mubr.f32.mxu0 0.0
    %4686 = vmatmul.mubr.f32.gmra.mrb[0].mxu0 %v4463
    %v4687 = vpop.f32.mrb[0].mxu0
    %v4688 = vadd.f32 0.0, %v4687
    %v4689 = vpop.f32.mrb[0].mxu0
    %4690 = vmatprep.mubr.f32.mxu0 0.0
    %4691 = vmatmul.mubr.f32.gmra.mrb[0].mxu0 %v4465
    %v4692 = vpop.f32.mrb[0].mxu0
    %v4693 = vadd.f32 0.0, %v4692
    %v4694 = vpop.f32.mrb[0].mxu0
    %4695 = vmatprep.mubr.f32.mxu0 0.0
    %4696 = vmatmul.mubr.f32.gmra.mrb[0].mxu0 %v4467
    %v4697 = vpop.f32.mrb[0].mxu0
    %v4698 = vadd.f32 0.0, %v4697
    %v4699 = vpop.f32.mrb[0].mxu0
    %4700 = vmatprep.mubr.f32.mxu0 0.0
    %4701 = vmatmul.mubr.f32.gmra.mrb[0].mxu0 %v4469
    %v4702 = vpop.f32.mrb[0].mxu0
    %v4703 = vadd.f32 0.0, %v4702
    %v4704 = vpop.f32.mrb[0].mxu0
    %4705 = vmatprep.mubr.f32.mxu0 0.0
    %4706 = vmatmul.mubr.f32.gmra.mrb[0].mxu0 %v4471
    %v4707 = vpop.f32.mrb[0].mxu0
    %v4708 = vadd.f32 0.0, %v4707
    %v4709 = vpop.f32.mrb[0].mxu0
    %4710 = vmatprep.mubr.f32.mxu0 0.0
    %4711 = vmatmul.mubr.f32.gmra.mrb[0].mxu0 %v4473
    %v4712 = vpop.f32.mrb[0].mxu0
    %v4713 = vadd.f32 0.0, %v4712
    %v4714 = vpop.f32.mrb[0].mxu0
    %4715 = vmatprep.mubr.f32.mxu0 0.0
    %4716 = vmatmul.mubr.f32.gmra.mrb[0].mxu0 %v4475
    %v4717 = vpop.f32.mrb[0].mxu0
    %v4718 = vadd.f32 0.0, %v4717
    %v4719 = vpop.f32.mrb[0].mxu0
    %4720 = vmatprep.mubr.f32.mxu0 0.0
    %4721 = vmatmul.mubr.f32.gmra.mrb[0].mxu0 %v4477
    %v4722 = vpop.f32.mrb[0].mxu0
    %v4723 = vadd.f32 0.0, %v4722
    %v4724 = vpop.f32.mrb[0].mxu0
    %4725 = vmatprep.mubr.f32.mxu0 0.0
    %4726 = vmatmul.mubr.f32.gmra.mrb[0].mxu0 %v4479
    %v4727 = vpop.f32.mrb[0].mxu0
    %v4728 = vadd.f32 0.0, %v4727
    %v4729 = vpop.f32.mrb[0].mxu0
    %4730 = vmatprep.mubr.f32.mxu0 0.0
    %4731 = vmatmul.mubr.f32.gmra.mrb[0].mxu0 %v4481
    %v4732 = vpop.f32.mrb[0].mxu0
    %v4733 = vadd.f32 0.0, %v4732
    %v4734 = vpop.f32.mrb[0].mxu0
    %4735 = vmatprep.mubr.f32.mxu0 0.0
    %4736 = vmatmul.mubr.f32.gmra.mrb[0].mxu0 %v4483
    %v4737 = vpop.f32.mrb[0].mxu0
    %v4738 = vadd.f32 0.0, %v4737
    %v4739 = vpop.f32.mrb[0].mxu0
    %4740 = vmatprep.mubr.f32.mxu0 0.0
    %4741 = vmatmul.mubr.f32.gmra.mrb[0].mxu0 %v4485
    %v4742 = vpop.f32.mrb[0].mxu0
    %v4743 = vadd.f32 0.0, %v4742
    %v4744 = vpop.f32.mrb[0].mxu0
    %4745 = vmatprep.mubr.f32.mxu0 0.0
    %4746 = vmatmul.mubr.f32.gmra.mrb[0].mxu0 %v4487
    %v4747 = vpop.f32.mrb[0].mxu0
    %v4748 = vadd.f32 0.0, %v4747
    %v4749 = vpop.f32.mrb[0].mxu0
    %4750 = vmatprep.mubr.f32.mxu0 0.0
    %4751 = vmatmul.mubr.f32.gmra.mrb[0].mxu0 %v4489
    %v4752 = vpop.f32.mrb[0].mxu0
    %v4753 = vadd.f32 0.0, %v4752
    %v4754 = vpop.f32.mrb[0].mxu0
    %4755 = vmatprep.mubr.f32.mxu0 0.0
    %4756 = vmatmul.mubr.f32.gmra.mrb[0].mxu0 %v4491
    %v4757 = vpop.f32.mrb[0].mxu0
    %v4758 = vadd.f32 0.0, %v4757
    %v4759 = vpop.f32.mrb[0].mxu0
    %4760 = vmatprep.mubr.f32.mxu0 0.0
    %4761 = vmatmul.mubr.f32.gmra.mrb[0].mxu0 %v4493
    %v4762 = vpop.f32.mrb[0].mxu0
    %v4763 = vadd.f32 0.0, %v4762
    %v4764 = vpop.f32.mrb[0].mxu0
    %4765 = vmatprep.mubr.f32.mxu0 0.0
    %4766 = vmatmul.mubr.f32.gmra.mrb[0].mxu0 %v4495
    %v4767 = vpop.f32.mrb[0].mxu0
    %v4768 = vadd.f32 0.0, %v4767
    %v4769 = vpop.f32.mrb[0].mxu0
    %4770 = vmatprep.mubr.f32.mxu0 0.0
    %4771 = vmatmul.mubr.f32.gmra.mrb[0].mxu0 %v4497
    %v4772 = vpop.f32.mrb[0].mxu0
    %v4773 = vadd.f32 0.0, %v4772
    %v4774 = vpop.f32.mrb[0].mxu0
    %4775 = vmatprep.mubr.f32.mxu0 0.0
    %4776 = vmatmul.mubr.f32.gmra.mrb[0].mxu0 %v4499
    %v4777 = vpop.f32.mrb[0].mxu0
    %v4778 = vadd.f32 0.0, %v4777
    %v4779 = vpop.f32.mrb[0].mxu0
    %4780 = vmatprep.mubr.f32.mxu0 0.0
    %4781 = vmatmul.mubr.f32.gmra.mrb[0].mxu0 %v4501
    %v4782 = vpop.f32.mrb[0].mxu0
    %v4783 = vadd.f32 0.0, %v4782
    %v4784 = vpop.f32.mrb[0].mxu0
    %4785 = vmatprep.mubr.f32.mxu0 0.0
    %4786 = vmatmul.mubr.f32.gmra.mrb[0].mxu0 %v4503
    %v4787 = vpop.f32.mrb[0].mxu0
    %v4788 = vadd.f32 0.0, %v4787
    %v4789 = vpop.f32.mrb[0].mxu0
    %4790 = vmatprep.mubr.f32.mxu0 0.0
    %4791 = vmatmul.mubr.f32.gmra.mrb[0].mxu0 %v4505
    %v4792 = vpop.f32.mrb[0].mxu0
    %v4793 = vadd.f32 0.0, %v4792
    %v4794 = vpop.f32.mrb[0].mxu0
    %4795 = vmatprep.mubr.f32.mxu0 0.0
    %4796 = vmatmul.mubr.f32.gmra.mrb[0].mxu0 %v4507
    %v4797 = vpop.f32.mrb[0].mxu0
    %v4798 = vadd.f32 0.0, %v4797
    %v4799 = vpop.f32.mrb[0].mxu0
    %4800 = vmatprep.mubr.f32.mxu0 0.0
    %4801 = vmatmul.mubr.f32.gmra.mrb[0].mxu0 %v4509
    %v4802 = vpop.f32.mrb[0].mxu0
    %v4803 = vadd.f32 0.0, %v4802
    %v4804 = vpop.f32.mrb[0].mxu0
    %4805 = vmatprep.mubr.f32.mxu0 0.0
    %4806 = vmatmul.mubr.f32.gmra.mrb[0].mxu0 %v4511
    %v4807 = vpop.f32.mrb[0].mxu0
    %v4808 = vadd.f32 0.0, %v4807
    %v4809 = vpop.f32.mrb[0].mxu0
    %4810 = vmatprep.mubr.f32.mxu0 0.0
    %4811 = vmatmul.mubr.f32.gmra.mrb[0].mxu0 %v4513
    %v4812 = vpop.f32.mrb[0].mxu0
    %v4813 = vadd.f32 0.0, %v4812
    %v4814 = vpop.f32.mrb[0].mxu0
    %4815 = vmatprep.mubr.f32.mxu0 0.0
    %4816 = vmatmul.mubr.f32.gmra.mrb[0].mxu0 %v4515
    %v4817 = vpop.f32.mrb[0].mxu0
    %v4818 = vadd.f32 0.0, %v4817
    %v4819 = vpop.f32.mrb[0].mxu0
    %4820 = vmatprep.mubr.f32.mxu0 0.0
    %4821 = vmatmul.mubr.f32.gmra.mrb[0].mxu0 %v4517
    %v4822 = vpop.f32.mrb[0].mxu0
    %v4823 = vadd.f32 0.0, %v4822
    %v4824 = vpop.f32.mrb[0].mxu0
    %4825 = vmatprep.mubr.f32.mxu0 0.0
    %4826 = vmatmul.mubr.f32.gmra.mrb[0].mxu0 %v4519
    %v4827 = vpop.f32.mrb[0].mxu0
    %v4828 = vadd.f32 0.0, %v4827
    %v4829 = vpop.f32.mrb[0].mxu0
    %4830 = vmatprep.mubr.f32.mxu0 0.0
    %4831 = vmatmul.mubr.f32.gmra.mrb[0].mxu0 %v4521
    %v4832 = vpop.f32.mrb[0].mxu0
    %v4833 = vadd.f32 0.0, %v4832
    %v4834 = vpop.f32.mrb[0].mxu0
    %4835 = vmatprep.mubr.f32.mxu0 0.0
    %4836 = vmatmul.mubr.f32.gmra.mrb[0].mxu0 %v4523
    %v4837 = vpop.f32.mrb[0].mxu0
    %v4838 = vadd.f32 0.0, %v4837
    %v4839 = vpop.f32.mrb[0].mxu0
    %4840 = vmatprep.mubr.f32.mxu0 0.0
    %4841 = vmatmul.mubr.f32.gmra.mrb[0].mxu0 %v4525
    %v4842 = vpop.f32.mrb[0].mxu0
    %v4843 = vadd.f32 0.0, %v4842
    %v4844 = vpop.f32.mrb[0].mxu0
    %4845 = vmatprep.mubr.f32.mxu0 0.0
    %4846 = vmatmul.mubr.f32.gmra.mrb[0].mxu0 %v4527
    %v4847 = vpop.f32.mrb[0].mxu0
    %v4848 = vadd.f32 0.0, %v4847
    %v4849 = vpop.f32.mrb[0].mxu0
    %4850 = vmatprep.mubr.f32.mxu0 0.0
    %4851 = vmatmul.mubr.f32.gmra.mrb[0].mxu0 %v4529
    %v4852 = vpop.f32.mrb[0].mxu0
    %v4853 = vadd.f32 0.0, %v4852
    %v4854 = vpop.f32.mrb[0].mxu0
    %4855 = vmatprep.mubr.f32.mxu0 0.0
    %4856 = vmatmul.mubr.f32.gmra.mrb[0].mxu0 %v4531
    %v4857 = vpop.f32.mrb[0].mxu0
    %v4858 = vadd.f32 0.0, %v4857
    %v4859 = vpop.f32.mrb[0].mxu0
    %4860 = vmatprep.mubr.f32.mxu0 0.0
    %4861 = vmatmul.mubr.f32.gmra.mrb[0].mxu0 %v4533
    %v4862 = vpop.f32.mrb[0].mxu0
    %v4863 = vadd.f32 0.0, %v4862
    %v4864 = vpop.f32.mrb[0].mxu0
    %4865 = vmatprep.mubr.f32.mxu0 0.0
    %4866 = vmatmul.mubr.f32.gmra.mrb[0].mxu0 %v4535
    %v4867 = vpop.f32.mrb[0].mxu0
    %v4868 = vadd.f32 0.0, %v4867
    %v4869 = vpop.f32.mrb[0].mxu0
    %4870 = vmatprep.mubr.f32.mxu0 0.0
    %4871 = vmatmul.mubr.f32.gmra.mrb[0].mxu0 %v4537
    %v4872 = vpop.f32.mrb[0].mxu0
    %v4873 = vadd.f32 0.0, %v4872
    %v4874 = vpop.f32.mrb[0].mxu0
    %4875 = vmatprep.mubr.f32.mxu0 0.0
    %4876 = vmatmul.mubr.f32.gmra.mrb[0].mxu0 %v4539
    %v4877 = vpop.f32.mrb[0].mxu0
    %v4878 = vadd.f32 0.0, %v4877
    %v4879 = vpop.f32.mrb[0].mxu0
    %4880 = vmatprep.mubr.f32.mxu0 0.0
    %4881 = vmatmul.mubr.f32.gmra.mrb[0].mxu0 %v4541
    %v4882 = vpop.f32.mrb[0].mxu0
    %v4883 = vadd.f32 0.0, %v4882
    %v4884 = vpop.f32.mrb[0].mxu0
    %4885 = vmatprep.mubr.f32.mxu0 0.0
    %4886 = vmatmul.mubr.f32.gmra.mrb[0].mxu0 %v4543
    %v4887 = vpop.f32.mrb[0].mxu0
    %v4888 = vadd.f32 0.0, %v4887
    %v4889 = vpop.f32.mrb[0].mxu0
    %4890 = vmatprep.mubr.f32.mxu0 0.0
    %4891 = vmatmul.mubr.f32.gmra.mrb[0].mxu0 %v4545
    %v4892 = vpop.f32.mrb[0].mxu0
    %v4893 = vadd.f32 0.0, %v4892
    %v4894 = vpop.f32.mrb[0].mxu0
    %4895 = vmatprep.mubr.f32.mxu0 0.0
    %4896 = vmatmul.mubr.f32.gmra.mrb[0].mxu0 %v4547
    %v4897 = vpop.f32.mrb[0].mxu0
    %v4898 = vadd.f32 0.0, %v4897
    %v4899 = vpop.f32.mrb[0].mxu0
    %4900 = vmatprep.mubr.f32.mxu0 0.0
    %4901 = vmatmul.mubr.f32.gmra.mrb[0].mxu0 %v4549
    %v4902 = vpop.f32.mrb[0].mxu0
    %v4903 = vadd.f32 0.0, %v4902
    %v4904 = vpop.f32.mrb[0].mxu0
    %4905 = vmatprep.mubr.f32.mxu0 0.0
    %4906 = vmatmul.mubr.f32.gmra.mrb[0].mxu0 %v4551
    %v4907 = vpop.f32.mrb[0].mxu0
    %v4908 = vadd.f32 0.0, %v4907
    %v4909 = vpop.f32.mrb[0].mxu0
    %4910 = vmatprep.mubr.f32.mxu0 0.0
    %4911 = vmatmul.mubr.f32.gmra.mrb[0].mxu0 %v4553
    %v4912 = vpop.f32.mrb[0].mxu0
    %v4913 = vadd.f32 0.0, %v4912
    %v4914 = vpop.f32.mrb[0].mxu0
    %4915 = vmatprep.mubr.f32.mxu0 0.0
    %4916 = vmatmul.mubr.f32.gmra.mrb[0].mxu0 %v4555
    %v4917 = vpop.f32.mrb[0].mxu0
    %v4918 = vadd.f32 0.0, %v4917
    %v4919 = vpop.f32.mrb[0].mxu0
    %4920 = vmatprep.mubr.f32.mxu0 0.0
    %4921 = vmatmul.mubr.f32.gmra.mrb[0].mxu0 %v4557
    %v4922 = vpop.f32.mrb[0].mxu0
    %v4923 = vadd.f32 0.0, %v4922
    %v4924 = vpop.f32.mrb[0].mxu0
    %4925 = vmatprep.mubr.f32.mxu0 0.0
    %4926 = vmatmul.mubr.f32.gmra.mrb[0].mxu0 %v4559
    %v4927 = vpop.f32.mrb[0].mxu0
    %v4928 = vadd.f32 0.0, %v4927
    %v4929 = vpop.f32.mrb[0].mxu0
    %4930 = vmatprep.mubr.f32.mxu0 0.0
    %4931 = vmatmul.mubr.f32.gmra.mrb[0].mxu0 %v4561
    %v4932 = vpop.f32.mrb[0].mxu0
    %v4933 = vadd.f32 0.0, %v4932
    %v4934 = vpop.f32.mrb[0].mxu0
    %4935 = vmatprep.mubr.f32.mxu0 0.0
    %4936 = vmatmul.mubr.f32.gmra.mrb[0].mxu0 %v4563
    %v4937 = vpop.f32.mrb[0].mxu0
    %v4938 = vadd.f32 0.0, %v4937
    %v4939 = vpop.f32.mrb[0].mxu0
    %4940 = vmatprep.mubr.f32.mxu0 0.0
    %4941 = vmatmul.mubr.f32.gmra.mrb[0].mxu0 %v4565
    %v4942 = vpop.f32.mrb[0].mxu0
    %v4943 = vadd.f32 0.0, %v4942
    %v4944 = vpop.f32.mrb[0].mxu0
    %4945 = vmatprep.mubr.f32.mxu0 0.0
    %4946 = vmatmul.mubr.f32.gmra.mrb[0].mxu0 %v4567
    %v4947 = vpop.f32.mrb[0].mxu0
    %v4948 = vadd.f32 0.0, %v4947
    %v4949 = vpop.f32.mrb[0].mxu0
    %4950 = vmatprep.mubr.f32.mxu0 0.0
    %4951 = vmatmul.mubr.f32.gmra.mrb[0].mxu0 %v4569
    %v4952 = vpop.f32.mrb[0].mxu0
    %v4953 = vadd.f32 0.0, %v4952
    %v4954 = vpop.f32.mrb[0].mxu0
    %4955 = vmatprep.mubr.f32.mxu0 0.0
    %4956 = vmatmul.mubr.f32.gmra.mrb[0].mxu0 %v4571
    %v4957 = vpop.f32.mrb[0].mxu0
    %v4958 = vadd.f32 0.0, %v4957
    %v4959 = vpop.f32.mrb[0].mxu0
    %4960 = vdwg.mxu0
    %v4961 = vld [vmem:[%s8] sm:$0x1]
    %v4962 = vld [vmem:[%s9] sm:$0x1]
    %v4963 = vadd.f32 %v4643, %v4648
    %v4964 = vadd.f32 %v4963, %v4653
    %v4965 = vadd.f32 %v4964, %v4658
    %v4966 = vadd.f32 %v4965, %v4663
    %v4967 = vadd.f32 %v4966, %v4668
    %v4968 = vadd.f32 %v4967, %v4673
    %v4969 = vadd.f32 %v4968, %v4678
    %v4970 = vadd.f32 %v4969, %v4683
    %v4971 = vadd.f32 %v4970, %v4688
    %v4972 = vadd.f32 %v4971, %v4693
    %v4973 = vadd.f32 %v4972, %v4698
    %v4974 = vadd.f32 %v4973, %v4703
    %v4975 = vadd.f32 %v4974, %v4708
    %v4976 = vadd.f32 %v4975, %v4713
    %v4977 = vadd.f32 %v4976, %v4718
    %v4978 = vadd.f32 %v4977, %v4723
    %v4979 = vadd.f32 %v4978, %v4728
    %v4980 = vadd.f32 %v4979, %v4733
    %v4981 = vadd.f32 %v4980, %v4738
    %v4982 = vadd.f32 %v4981, %v4743
    %v4983 = vadd.f32 %v4982, %v4748
    %v4984 = vadd.f32 %v4983, %v4753
    %v4985 = vadd.f32 %v4984, %v4758
    %v4986 = vadd.f32 %v4985, %v4763
    %v4987 = vadd.f32 %v4986, %v4768
    %v4988 = vadd.f32 %v4987, %v4773
    %v4989 = vadd.f32 %v4988, %v4778
    %v4990 = vadd.f32 %v4989, %v4783
    %v4991 = vadd.f32 %v4990, %v4788
    %v4992 = vadd.f32 %v4991, %v4793
    %v4993 = vadd.f32 %v4992, %v4798
    %v4994 = vadd.f32 %v4993, %v4803
    %v4995 = vadd.f32 %v4994, %v4808
    %v4996 = vadd.f32 %v4995, %v4813
    %v4997 = vadd.f32 %v4996, %v4818
    %v4998 = vadd.f32 %v4997, %v4823
    %v4999 = vadd.f32 %v4998, %v4828
    %v5000 = vadd.f32 %v4999, %v4833
    %v5001 = vadd.f32 %v5000, %v4838
    %v5002 = vadd.f32 %v5001, %v4843
    %v5003 = vadd.f32 %v5002, %v4848
    %v5004 = vadd.f32 %v5003, %v4853
    %v5005 = vadd.f32 %v5004, %v4858
    %v5006 = vadd.f32 %v5005, %v4863
    %v5007 = vadd.f32 %v5006, %v4868
    %v5008 = vadd.f32 %v5007, %v4873
    %v5009 = vadd.f32 %v5008, %v4878
    %v5010 = vadd.f32 %v5009, %v4883
    %v5011 = vadd.f32 %v5010, %v4888
    %v5012 = vadd.f32 %v5011, %v4893
    %v5013 = vadd.f32 %v5012, %v4898
    %v5014 = vadd.f32 %v5013, %v4903
    %v5015 = vadd.f32 %v5014, %v4908
    %v5016 = vadd.f32 %v5015, %v4913
    %v5017 = vadd.f32 %v5016, %v4918
    %v5018 = vadd.f32 %v5017, %v4923
    %v5019 = vadd.f32 %v5018, %v4928
    %v5020 = vadd.f32 %v5019, %v4933
    %v5021 = vadd.f32 %v5020, %v4938
    %v5022 = vadd.f32 %v5021, %v4943
    %v5023 = vadd.f32 %v5022, %v4948
    %v5024 = vadd.f32 %v5023, %v4953
    %v5025 = vadd.f32 %v5024, %v4958
    %v5026 = vrot.slane %v5025, 4
    %v5027 = vadd.f32 %v5025, %v5026
    %v5028 = vrot.slane %v5027, 2
    %v5029 = vadd.f32 %v5027, %v5028
    %v5030 = vrot.slane %v5029, 1
    %v5031 = vadd.f32 %v5029, %v5030
    %v5032 = vmul.f32 %v4643, %v4643
    %v5033 = vmul.f32 %v4648, %v4648
    %v5034 = vmul.f32 %v4653, %v4653
    %v5035 = vmul.f32 %v4658, %v4658
    %v5036 = vmul.f32 %v4663, %v4663
    %v5037 = vmul.f32 %v4668, %v4668
    %v5038 = vmul.f32 %v4673, %v4673
    %v5039 = vmul.f32 %v4678, %v4678
    %v5040 = vmul.f32 %v4683, %v4683
    %v5041 = vmul.f32 %v4688, %v4688
    %v5042 = vmul.f32 %v4693, %v4693
    %v5043 = vmul.f32 %v4698, %v4698
    %v5044 = vmul.f32 %v4703, %v4703
    %v5045 = vmul.f32 %v4708, %v4708
    %v5046 = vmul.f32 %v4713, %v4713
    %v5047 = vmul.f32 %v4718, %v4718
    %v5048 = vmul.f32 %v4723, %v4723
    %v5049 = vmul.f32 %v4728, %v4728
    %v5050 = vmul.f32 %v4733, %v4733
    %v5051 = vmul.f32 %v4738, %v4738
    %v5052 = vmul.f32 %v4743, %v4743
    %v5053 = vmul.f32 %v4748, %v4748
    %v5054 = vmul.f32 %v4753, %v4753
    %v5055 = vmul.f32 %v4758, %v4758
    %v5056 = vmul.f32 %v4763, %v4763
    %v5057 = vmul.f32 %v4768, %v4768
    %v5058 = vmul.f32 %v4773, %v4773
    %v5059 = vmul.f32 %v4778, %v4778
    %v5060 = vmul.f32 %v4783, %v4783
    %v5061 = vmul.f32 %v4788, %v4788
    %v5062 = vmul.f32 %v4793, %v4793
    %v5063 = vmul.f32 %v4798, %v4798
    %v5064 = vmul.f32 %v4803, %v4803
    %v5065 = vmul.f32 %v4808, %v4808
    %v5066 = vmul.f32 %v4813, %v4813
    %v5067 = vmul.f32 %v4818, %v4818
    %v5068 = vmul.f32 %v4823, %v4823
    %v5069 = vmul.f32 %v4828, %v4828
    %v5070 = vmul.f32 %v4833, %v4833
    %v5071 = vmul.f32 %v4838, %v4838
    %v5072 = vmul.f32 %v4843, %v4843
    %v5073 = vmul.f32 %v4848, %v4848
    %v5074 = vmul.f32 %v4853, %v4853
    %v5075 = vmul.f32 %v4858, %v4858
    %v5076 = vmul.f32 %v4863, %v4863
    %v5077 = vmul.f32 %v4868, %v4868
    %v5078 = vmul.f32 %v4873, %v4873
    %v5079 = vmul.f32 %v4878, %v4878
    %v5080 = vmul.f32 %v4883, %v4883
    %v5081 = vmul.f32 %v4888, %v4888
    %v5082 = vmul.f32 %v4893, %v4893
    %v5083 = vmul.f32 %v4898, %v4898
    %v5084 = vmul.f32 %v4903, %v4903
    %v5085 = vmul.f32 %v4908, %v4908
    %v5086 = vmul.f32 %v4913, %v4913
    %v5087 = vmul.f32 %v4918, %v4918
    %v5088 = vmul.f32 %v4923, %v4923
    %v5089 = vmul.f32 %v4928, %v4928
    %v5090 = vmul.f32 %v4933, %v4933
    %v5091 = vmul.f32 %v4938, %v4938
    %v5092 = vmul.f32 %v4943, %v4943
    %v5093 = vmul.f32 %v4948, %v4948
    %v5094 = vmul.f32 %v4953, %v4953
    %v5095 = vmul.f32 %v4958, %v4958
    %v5096 = vadd.f32 %v5032, %v5033
    %v5097 = vadd.f32 %v5096, %v5034
    %v5098 = vadd.f32 %v5097, %v5035
    %v5099 = vadd.f32 %v5098, %v5036
    %v5100 = vadd.f32 %v5099, %v5037
    %v5101 = vadd.f32 %v5100, %v5038
    %v5102 = vadd.f32 %v5101, %v5039
    %v5103 = vadd.f32 %v5102, %v5040
    %v5104 = vadd.f32 %v5103, %v5041
    %v5105 = vadd.f32 %v5104, %v5042
    %v5106 = vadd.f32 %v5105, %v5043
    %v5107 = vadd.f32 %v5106, %v5044
    %v5108 = vadd.f32 %v5107, %v5045
    %v5109 = vadd.f32 %v5108, %v5046
    %v5110 = vadd.f32 %v5109, %v5047
    %v5111 = vadd.f32 %v5110, %v5048
    %v5112 = vadd.f32 %v5111, %v5049
    %v5113 = vadd.f32 %v5112, %v5050
    %v5114 = vadd.f32 %v5113, %v5051
    %v5115 = vadd.f32 %v5114, %v5052
    %v5116 = vadd.f32 %v5115, %v5053
    %v5117 = vadd.f32 %v5116, %v5054
    %v5118 = vadd.f32 %v5117, %v5055
    %v5119 = vadd.f32 %v5118, %v5056
    %v5120 = vadd.f32 %v5119, %v5057
    %v5121 = vadd.f32 %v5120, %v5058
    %v5122 = vadd.f32 %v5121, %v5059
    %v5123 = vadd.f32 %v5122, %v5060
    %v5124 = vadd.f32 %v5123, %v5061
    %v5125 = vadd.f32 %v5124, %v5062
    %v5126 = vadd.f32 %v5125, %v5063
    %v5127 = vadd.f32 %v5126, %v5064
    %v5128 = vadd.f32 %v5127, %v5065
    %v5129 = vadd.f32 %v5128, %v5066
    %v5130 = vadd.f32 %v5129, %v5067
    %v5131 = vadd.f32 %v5130, %v5068
    %v5132 = vadd.f32 %v5131, %v5069
    %v5133 = vadd.f32 %v5132, %v5070
    %v5134 = vadd.f32 %v5133, %v5071
    %v5135 = vadd.f32 %v5134, %v5072
    %v5136 = vadd.f32 %v5135, %v5073
    %v5137 = vadd.f32 %v5136, %v5074
    %v5138 = vadd.f32 %v5137, %v5075
    %v5139 = vadd.f32 %v5138, %v5076
    %v5140 = vadd.f32 %v5139, %v5077
    %v5141 = vadd.f32 %v5140, %v5078
    %v5142 = vadd.f32 %v5141, %v5079
    %v5143 = vadd.f32 %v5142, %v5080
    %v5144 = vadd.f32 %v5143, %v5081
    %v5145 = vadd.f32 %v5144, %v5082
    %v5146 = vadd.f32 %v5145, %v5083
    %v5147 = vadd.f32 %v5146, %v5084
    %v5148 = vadd.f32 %v5147, %v5085
    %v5149 = vadd.f32 %v5148, %v5086
    %v5150 = vadd.f32 %v5149, %v5087
    %v5151 = vadd.f32 %v5150, %v5088
    %v5152 = vadd.f32 %v5151, %v5089
    %v5153 = vadd.f32 %v5152, %v5090
    %v5154 = vadd.f32 %v5153, %v5091
    %v5155 = vadd.f32 %v5154, %v5092
    %v5156 = vadd.f32 %v5155, %v5093
    %v5157 = vadd.f32 %v5156, %v5094
    %v5158 = vadd.f32 %v5157, %v5095
    %v5159 = vrot.slane %v5158, 4
    %v5160 = vadd.f32 %v5158, %v5159
    %v5161 = vrot.slane %v5160, 2
    %v5162 = vadd.f32 %v5160, %v5161
    %v5163 = vrot.slane %v5162, 1
    %v5164 = vadd.f32 %v5162, %v5163
    %v5165 = vmul.f32 %v5031, 0.001953125
    %v5166 = vmul.f32 %v5164, 0.001953125
    %v5167 = vmul.f32 %v5165, %v5165
    %v5168 = vsub.f32 %v5166, %v5167
    %v5169 = vadd.f32 %v5168, 1e-05
    %v5170 = vrsqrt.pop %v5169
    %v5171 = vmul.f32 %v4961, %v5170
    %v5172 = vmul.f32 %v5165, %v5171
    %v5173 = vsub.f32 %v4962, %v5172
    %v5175 = vlaneseq
    %v5176 = vshrl.u32 %v5175, 7
    %v5177 = vsub.s32 0, %v5176
    %v5178 = vrot.slane %v5171, %v5177
    %v5180 = vmul.f32 %v4643, %v5178
    %v5181 = vmul.f32 %v4648, %v5178
    %v5182 = vmul.f32 %v4653, %v5178
    %v5183 = vmul.f32 %v4658, %v5178
    %v5184 = vmul.f32 %v4663, %v5178
    %v5185 = vmul.f32 %v4668, %v5178
    %v5186 = vmul.f32 %v4673, %v5178
    %v5187 = vmul.f32 %v4678, %v5178
    %v5188 = vmul.f32 %v4683, %v5178
    %v5189 = vmul.f32 %v4688, %v5178
    %v5190 = vmul.f32 %v4693, %v5178
    %v5191 = vmul.f32 %v4698, %v5178
    %v5192 = vmul.f32 %v4703, %v5178
    %v5193 = vmul.f32 %v4708, %v5178
    %v5194 = vmul.f32 %v4713, %v5178
    %v5195 = vmul.f32 %v4718, %v5178
    %v5196 = vmul.f32 %v4723, %v5178
    %v5197 = vmul.f32 %v4728, %v5178
    %v5198 = vmul.f32 %v4733, %v5178
    %v5199 = vmul.f32 %v4738, %v5178
    %v5200 = vmul.f32 %v4743, %v5178
    %v5201 = vmul.f32 %v4748, %v5178
    %v5202 = vmul.f32 %v4753, %v5178
    %v5203 = vmul.f32 %v4758, %v5178
    %v5204 = vmul.f32 %v4763, %v5178
    %v5205 = vmul.f32 %v4768, %v5178
    %v5206 = vmul.f32 %v4773, %v5178
    %v5207 = vmul.f32 %v4778, %v5178
    %v5208 = vmul.f32 %v4783, %v5178
    %v5209 = vmul.f32 %v4788, %v5178
    %v5210 = vmul.f32 %v4793, %v5178
    %v5211 = vmul.f32 %v4798, %v5178
    %v5212 = vmul.f32 %v4803, %v5178
    %v5213 = vmul.f32 %v4808, %v5178
    %v5214 = vmul.f32 %v4813, %v5178
    %v5215 = vmul.f32 %v4818, %v5178
    %v5216 = vmul.f32 %v4823, %v5178
    %v5217 = vmul.f32 %v4828, %v5178
    %v5218 = vmul.f32 %v4833, %v5178
    %v5219 = vmul.f32 %v4838, %v5178
    %v5220 = vmul.f32 %v4843, %v5178
    %v5221 = vmul.f32 %v4848, %v5178
    %v5222 = vmul.f32 %v4853, %v5178
    %v5223 = vmul.f32 %v4858, %v5178
    %v5224 = vmul.f32 %v4863, %v5178
    %v5225 = vmul.f32 %v4868, %v5178
    %v5226 = vmul.f32 %v4873, %v5178
    %v5227 = vmul.f32 %v4878, %v5178
    %v5228 = vmul.f32 %v4883, %v5178
    %v5229 = vmul.f32 %v4888, %v5178
    %v5230 = vmul.f32 %v4893, %v5178
    %v5231 = vmul.f32 %v4898, %v5178
    %v5232 = vmul.f32 %v4903, %v5178
    %v5233 = vmul.f32 %v4908, %v5178
    %v5234 = vmul.f32 %v4913, %v5178
    %v5235 = vmul.f32 %v4918, %v5178
    %v5236 = vmul.f32 %v4923, %v5178
    %v5237 = vmul.f32 %v4928, %v5178
    %v5238 = vmul.f32 %v4933, %v5178
    %v5239 = vmul.f32 %v4938, %v5178
    %v5240 = vmul.f32 %v4943, %v5178
    %v5241 = vmul.f32 %v4948, %v5178
    %v5242 = vmul.f32 %v4953, %v5178
    %v5243 = vmul.f32 %v4958, %v5178
    %v5245 = vlaneseq
    %v5246 = vshrl.u32 %v5245, 7
    %v5247 = vsub.s32 0, %v5246
    %v5248 = vrot.slane %v5173, %v5247
    %v5250 = vadd.f32 %v5180, %v5248
    %v5251 = vadd.f32 %v5181, %v5248
    %v5252 = vadd.f32 %v5182, %v5248
    %v5253 = vadd.f32 %v5183, %v5248
    %v5254 = vadd.f32 %v5184, %v5248
    %v5255 = vadd.f32 %v5185, %v5248
    %v5256 = vadd.f32 %v5186, %v5248
    %v5257 = vadd.f32 %v5187, %v5248
    %v5258 = vadd.f32 %v5188, %v5248
    %v5259 = vadd.f32 %v5189, %v5248
    %v5260 = vadd.f32 %v5190, %v5248
    %v5261 = vadd.f32 %v5191, %v5248
    %v5262 = vadd.f32 %v5192, %v5248
    %v5263 = vadd.f32 %v5193, %v5248
    %v5264 = vadd.f32 %v5194, %v5248
    %v5265 = vadd.f32 %v5195, %v5248
    %v5266 = vadd.f32 %v5196, %v5248
    %v5267 = vadd.f32 %v5197, %v5248
    %v5268 = vadd.f32 %v5198, %v5248
    %v5269 = vadd.f32 %v5199, %v5248
    %v5270 = vadd.f32 %v5200, %v5248
    %v5271 = vadd.f32 %v5201, %v5248
    %v5272 = vadd.f32 %v5202, %v5248
    %v5273 = vadd.f32 %v5203, %v5248
    %v5274 = vadd.f32 %v5204, %v5248
    %v5275 = vadd.f32 %v5205, %v5248
    %v5276 = vadd.f32 %v5206, %v5248
    %v5277 = vadd.f32 %v5207, %v5248
    %v5278 = vadd.f32 %v5208, %v5248
    %v5279 = vadd.f32 %v5209, %v5248
    %v5280 = vadd.f32 %v5210, %v5248
    %v5281 = vadd.f32 %v5211, %v5248
    %v5282 = vadd.f32 %v5212, %v5248
    %v5283 = vadd.f32 %v5213, %v5248
    %v5284 = vadd.f32 %v5214, %v5248
    %v5285 = vadd.f32 %v5215, %v5248
    %v5286 = vadd.f32 %v5216, %v5248
    %v5287 = vadd.f32 %v5217, %v5248
    %v5288 = vadd.f32 %v5218, %v5248
    %v5289 = vadd.f32 %v5219, %v5248
    %v5290 = vadd.f32 %v5220, %v5248
    %v5291 = vadd.f32 %v5221, %v5248
    %v5292 = vadd.f32 %v5222, %v5248
    %v5293 = vadd.f32 %v5223, %v5248
    %v5294 = vadd.f32 %v5224, %v5248
    %v5295 = vadd.f32 %v5225, %v5248
    %v5296 = vadd.f32 %v5226, %v5248
    %v5297 = vadd.f32 %v5227, %v5248
    %v5298 = vadd.f32 %v5228, %v5248
    %v5299 = vadd.f32 %v5229, %v5248
    %v5300 = vadd.f32 %v5230, %v5248
    %v5301 = vadd.f32 %v5231, %v5248
    %v5302 = vadd.f32 %v5232, %v5248
    %v5303 = vadd.f32 %v5233, %v5248
    %v5304 = vadd.f32 %v5234, %v5248
    %v5305 = vadd.f32 %v5235, %v5248
    %v5306 = vadd.f32 %v5236, %v5248
    %v5307 = vadd.f32 %v5237, %v5248
    %v5308 = vadd.f32 %v5238, %v5248
    %v5309 = vadd.f32 %v5239, %v5248
    %v5310 = vadd.f32 %v5240, %v5248
    %v5311 = vadd.f32 %v5241, %v5248
    %v5312 = vadd.f32 %v5242, %v5248
    %v5313 = vadd.f32 %v5243, %v5248
    %5314 = vst.msk [vmem:[#allocation2] sm:$0xff] %vm3900, 0.0
    %5315 = vst.msk [vmem:[#allocation2 + $0x8] sm:$0xff] %vm3900, 0.0
    %vm5316 = vcmask 58368
    %5317 = vst.msk [vmem:[#allocation2 + $0x10] sm:$0x3] %vm5316, 0.0
    %5318 = vst.msk [vmem:[#allocation2 + $0x1b0] sm:$0xff] %vm3900, 0.0
    %5319 = vst.msk [vmem:[#allocation2 + $0x1b8] sm:$0xff] %vm3900, 0.0
    %5320 = vst.msk [vmem:[#allocation2 + $0x1c0] sm:$0x3] %vm5316, 0.0
    %s5321 = scalar_lea.vmem [#allocation2], 408
    %5322 = vst.msk [vmem:[%s5321] sm:$0xff] %vm3900, 0.0
    %5323 = vst.msk [vmem:[%s5321 + $0x8] sm:$0xff] %vm3900, 0.0
    %5324 = vst.msk [vmem:[%s5321 + $0x10] sm:$0x3] %vm5316, 0.0
    %5325 = vst.msk [vmem:[%s5321 + $0x1b0] sm:$0xff] %vm3900, 0.0
    %5326 = vst.msk [vmem:[%s5321 + $0x1b8] sm:$0xff] %vm3900, 0.0
    %5327 = vst.msk [vmem:[%s5321 + $0x1c0] sm:$0x3] %vm5316, 0.0
    %vm5328 = vcmask 57344
    %5329 = vst.msk [vmem:[#allocation2] sm:$0x1] %vm5328, 0.0
    %5330 = vst.msk [vmem:[#allocation2 + $0x18] sm:$0x1] %vm5328, 0.0
    %5331 = vst.msk [vmem:[#allocation2 + $0x30] sm:$0x1] %vm5328, 0.0
    %5332 = vst.msk [vmem:[#allocation2 + $0x48] sm:$0x1] %vm5328, 0.0
    %5333 = vst.msk [vmem:[#allocation2 + $0x60] sm:$0x1] %vm5328, 0.0
    %5334 = vst.msk [vmem:[#allocation2 + $0x78] sm:$0x1] %vm5328, 0.0
    %5335 = vst.msk [vmem:[#allocation2 + $0x90] sm:$0x1] %vm5328, 0.0
    %5336 = vst.msk [vmem:[#allocation2 + $0xa8] sm:$0x1] %vm5328, 0.0
    %5337 = vst.msk [vmem:[#allocation2 + $0xc0] sm:$0x1] %vm5328, 0.0
    %5338 = vst.msk [vmem:[#allocation2 + $0xd8] sm:$0x1] %vm5328, 0.0
    %5339 = vst.msk [vmem:[#allocation2 + $0xf0] sm:$0x1] %vm5328, 0.0
    %5340 = vst.msk [vmem:[#allocation2 + $0x108] sm:$0x1] %vm5328, 0.0
    %5341 = vst.msk [vmem:[#allocation2 + $0x120] sm:$0x1] %vm5328, 0.0
    %5342 = vst.msk [vmem:[#allocation2 + $0x138] sm:$0x1] %vm5328, 0.0
    %5343 = vst.msk [vmem:[#allocation2 + $0x150] sm:$0x1] %vm5328, 0.0
    %5344 = vst.msk [vmem:[#allocation2 + $0x168] sm:$0x1] %vm5328, 0.0
    %5345 = vst.msk [vmem:[#allocation2 + $0x180] sm:$0x1] %vm5328, 0.0
    %5346 = vst.msk [vmem:[#allocation2 + $0x198] sm:$0x1] %vm5328, 0.0
    %5347 = vst.msk [vmem:[#allocation2 + $0x1b0] sm:$0x1] %vm5328, 0.0
    %5348 = vst.msk [vmem:[#allocation2 + $0x1c8] sm:$0x1] %vm5328, 0.0
    %5349 = vst.msk [vmem:[#allocation2 + $0x1e0] sm:$0x1] %vm5328, 0.0
    %5350 = vst.msk [vmem:[#allocation2 + $0x1f8] sm:$0x1] %vm5328, 0.0
    %5351 = vst.msk [vmem:[#allocation2 + $0x210] sm:$0x1] %vm5328, 0.0
    %5352 = vst.msk [vmem:[#allocation2 + $0x228] sm:$0x1] %vm5328, 0.0
    %5353 = vst.msk [vmem:[#allocation2 + $0x240] sm:$0x1] %vm5328, 0.0
    %5354 = vst.msk [vmem:[#allocation2 + $0x258] sm:$0x1] %vm5328, 0.0
    %5355 = vst.msk [vmem:[#allocation2 + $0x270] sm:$0x1] %vm5328, 0.0
    %5356 = vst.msk [vmem:[#allocation2 + $0x288] sm:$0x1] %vm5328, 0.0
    %5357 = vst.msk [vmem:[#allocation2 + $0x2a0] sm:$0x1] %vm5328, 0.0
    %5358 = vst.msk [vmem:[#allocation2 + $0x2b8] sm:$0x1] %vm5328, 0.0
    %5359 = vst.msk [vmem:[#allocation2 + $0x2d0] sm:$0x1] %vm5328, 0.0
    %5360 = vst.msk [vmem:[#allocation2 + $0x2e8] sm:$0x1] %vm5328, 0.0
    %5361 = vst.msk [vmem:[#allocation2 + $0x300] sm:$0x1] %vm5328, 0.0
    %5362 = vst.msk [vmem:[#allocation2 + $0x318] sm:$0x1] %vm5328, 0.0
    %5363 = vst.msk [vmem:[#allocation2 + $0x330] sm:$0x1] %vm5328, 0.0
    %5364 = vst.msk [vmem:[#allocation2 + $0x348] sm:$0x1] %vm5328, 0.0
    %5365 = vst.msk [vmem:[#allocation2 + $0x11] sm:$0x1] %vm5328, 0.0
    %5366 = vst.msk [vmem:[#allocation2 + $0x29] sm:$0x1] %vm5328, 0.0
    %5367 = vst.msk [vmem:[#allocation2 + $0x41] sm:$0x1] %vm5328, 0.0
    %5368 = vst.msk [vmem:[#allocation2 + $0x59] sm:$0x1] %vm5328, 0.0
    %5369 = vst.msk [vmem:[#allocation2 + $0x71] sm:$0x1] %vm5328, 0.0
    %5370 = vst.msk [vmem:[#allocation2 + $0x89] sm:$0x1] %vm5328, 0.0
    %5371 = vst.msk [vmem:[#allocation2 + $0xa1] sm:$0x1] %vm5328, 0.0
    %5372 = vst.msk [vmem:[#allocation2 + $0xb9] sm:$0x1] %vm5328, 0.0
    %5373 = vst.msk [vmem:[#allocation2 + $0xd1] sm:$0x1] %vm5328, 0.0
    %5374 = vst.msk [vmem:[#allocation2 + $0xe9] sm:$0x1] %vm5328, 0.0
    %5375 = vst.msk [vmem:[#allocation2 + $0x101] sm:$0x1] %vm5328, 0.0
    %5376 = vst.msk [vmem:[#allocation2 + $0x119] sm:$0x1] %vm5328, 0.0
    %5377 = vst.msk [vmem:[#allocation2 + $0x131] sm:$0x1] %vm5328, 0.0
    %5378 = vst.msk [vmem:[#allocation2 + $0x149] sm:$0x1] %vm5328, 0.0
    %5379 = vst.msk [vmem:[#allocation2 + $0x161] sm:$0x1] %vm5328, 0.0
    %5380 = vst.msk [vmem:[#allocation2 + $0x179] sm:$0x1] %vm5328, 0.0
    %5381 = vst.msk [vmem:[#allocation2 + $0x191] sm:$0x1] %vm5328, 0.0
    %5382 = vst.msk [vmem:[#allocation2 + $0x1a9] sm:$0x1] %vm5328, 0.0
    %5383 = vst.msk [vmem:[#allocation2 + $0x1c1] sm:$0x1] %vm5328, 0.0
    %5384 = vst.msk [vmem:[#allocation2 + $0x1d9] sm:$0x1] %vm5328, 0.0
    %5385 = vst.msk [vmem:[#allocation2 + $0x1f1] sm:$0x1] %vm5328, 0.0
    %5386 = vst.msk [vmem:[#allocation2 + $0x209] sm:$0x1] %vm5328, 0.0
    %5387 = vst.msk [vmem:[#allocation2 + $0x221] sm:$0x1] %vm5328, 0.0
    %5388 = vst.msk [vmem:[#allocation2 + $0x239] sm:$0x1] %vm5328, 0.0
    %5389 = vst.msk [vmem:[#allocation2 + $0x251] sm:$0x1] %vm5328, 0.0
    %5390 = vst.msk [vmem:[#allocation2 + $0x269] sm:$0x1] %vm5328, 0.0
    %5391 = vst.msk [vmem:[#allocation2 + $0x281] sm:$0x1] %vm5328, 0.0
    %5392 = vst.msk [vmem:[#allocation2 + $0x299] sm:$0x1] %vm5328, 0.0
    %5393 = vst.msk [vmem:[#allocation2 + $0x2b1] sm:$0x1] %vm5328, 0.0
    %5394 = vst.msk [vmem:[#allocation2 + $0x2c9] sm:$0x1] %vm5328, 0.0
    %5395 = vst.msk [vmem:[#allocation2 + $0x2e1] sm:$0x1] %vm5328, 0.0
    %5396 = vst.msk [vmem:[#allocation2 + $0x2f9] sm:$0x1] %vm5328, 0.0
    %5397 = vst.msk [vmem:[#allocation2 + $0x311] sm:$0x1] %vm5328, 0.0
    %5398 = vst.msk [vmem:[#allocation2 + $0x329] sm:$0x1] %vm5328, 0.0
    %5399 = vst.msk [vmem:[#allocation2 + $0x341] sm:$0x1] %vm5328, 0.0
    %5400 = vst.msk [vmem:[#allocation2 + $0x359] sm:$0x1] %vm5328, 0.0
    %s5401 = scalar_lea.vmem [#allocation2], 24
    %5402 = vst.msk [vmem:[%s5401 + $0x1] sm:$0xff] %vm3900, %v4380
    %5403 = vst.msk [vmem:[%s5401 + $0x9] sm:$0xff] %vm3900, %v4381
    %5404 = vst.msk [vmem:[%s5401 + $0x19] sm:$0xff] %vm3900, %v4382
    %5405 = vst.msk [vmem:[%s5401 + $0x21] sm:$0xff] %vm3900, %v4383
    %5406 = vst.msk [vmem:[%s5401 + $0x31] sm:$0xff] %vm3900, %v4384
    %5407 = vst.msk [vmem:[%s5401 + $0x39] sm:$0xff] %vm3900, %v4385
    %5408 = vst.msk [vmem:[%s5401 + $0x49] sm:$0xff] %vm3900, %v4386
    %5409 = vst.msk [vmem:[%s5401 + $0x51] sm:$0xff] %vm3900, %v4387
    %5410 = vst.msk [vmem:[%s5401 + $0x61] sm:$0xff] %vm3900, %v4388
    %5411 = vst.msk [vmem:[%s5401 + $0x69] sm:$0xff] %vm3900, %v4389
    %5412 = vst.msk [vmem:[%s5401 + $0x79] sm:$0xff] %vm3900, %v4390
    %5413 = vst.msk [vmem:[%s5401 + $0x81] sm:$0xff] %vm3900, %v4391
    %5414 = vst.msk [vmem:[%s5401 + $0x91] sm:$0xff] %vm3900, %v4392
    %5415 = vst.msk [vmem:[%s5401 + $0x99] sm:$0xff] %vm3900, %v4393
    %5416 = vst.msk [vmem:[%s5401 + $0xa9] sm:$0xff] %vm3900, %v4394
    %5417 = vst.msk [vmem:[%s5401 + $0xb1] sm:$0xff] %vm3900, %v4395
    %5418 = vst.msk [vmem:[%s5401 + $0xc1] sm:$0xff] %vm3900, %v4396
    %5419 = vst.msk [vmem:[%s5401 + $0xc9] sm:$0xff] %vm3900, %v4397
    %5420 = vst.msk [vmem:[%s5401 + $0xd9] sm:$0xff] %vm3900, %v4398
    %5421 = vst.msk [vmem:[%s5401 + $0xe1] sm:$0xff] %vm3900, %v4399
    %5422 = vst.msk [vmem:[%s5401 + $0xf1] sm:$0xff] %vm3900, %v4400
    %5423 = vst.msk [vmem:[%s5401 + $0xf9] sm:$0xff] %vm3900, %v4401
    %5424 = vst.msk [vmem:[%s5401 + $0x109] sm:$0xff] %vm3900, %v4402
    %5425 = vst.msk [vmem:[%s5401 + $0x111] sm:$0xff] %vm3900, %v4403
    %5426 = vst.msk [vmem:[%s5401 + $0x121] sm:$0xff] %vm3900, %v4404
    %5427 = vst.msk [vmem:[%s5401 + $0x129] sm:$0xff] %vm3900, %v4405
    %5428 = vst.msk [vmem:[%s5401 + $0x139] sm:$0xff] %vm3900, %v4406
    %5429 = vst.msk [vmem:[%s5401 + $0x141] sm:$0xff] %vm3900, %v4407
    %5430 = vst.msk [vmem:[%s5401 + $0x151] sm:$0xff] %vm3900, %v4408
    %5431 = vst.msk [vmem:[%s5401 + $0x159] sm:$0xff] %vm3900, %v4409
    %5432 = vst.msk [vmem:[%s5401 + $0x169] sm:$0xff] %vm3900, %v4410
    %5433 = vst.msk [vmem:[%s5401 + $0x171] sm:$0xff] %vm3900, %v4411
    %5434 = vst.msk [vmem:[%s5401 + $0x1b1] sm:$0xff] %vm3900, %v4412
    %5435 = vst.msk [vmem:[%s5401 + $0x1b9] sm:$0xff] %vm3900, %v4413
    %5436 = vst.msk [vmem:[%s5401 + $0x1c9] sm:$0xff] %vm3900, %v4414
    %5437 = vst.msk [vmem:[%s5401 + $0x1d1] sm:$0xff] %vm3900, %v4415
    %5438 = vst.msk [vmem:[%s5401 + $0x1e1] sm:$0xff] %vm3900, %v4416
    %5439 = vst.msk [vmem:[%s5401 + $0x1e9] sm:$0xff] %vm3900, %v4417
    %5440 = vst.msk [vmem:[%s5401 + $0x1f9] sm:$0xff] %vm3900, %v4418
    %5441 = vst.msk [vmem:[%s5401 + $0x201] sm:$0xff] %vm3900, %v4419
    %5442 = vst.msk [vmem:[%s5401 + $0x211] sm:$0xff] %vm3900, %v4420
    %5443 = vst.msk [vmem:[%s5401 + $0x219] sm:$0xff] %vm3900, %v4421
    %5444 = vst.msk [vmem:[%s5401 + $0x229] sm:$0xff] %vm3900, %v4422
    %5445 = vst.msk [vmem:[%s5401 + $0x231] sm:$0xff] %vm3900, %v4423
    %5446 = vst.msk [vmem:[%s5401 + $0x241] sm:$0xff] %vm3900, %v4424
    %5447 = vst.msk [vmem:[%s5401 + $0x249] sm:$0xff] %vm3900, %v4425
    %5448 = vst.msk [vmem:[%s5401 + $0x259] sm:$0xff] %vm3900, %v4426
    %5449 = vst.msk [vmem:[%s5401 + $0x261] sm:$0xff] %vm3900, %v4427
    %5450 = vst.msk [vmem:[%s5401 + $0x271] sm:$0xff] %vm3900, %v4428
    %5451 = vst.msk [vmem:[%s5401 + $0x279] sm:$0xff] %vm3900, %v4429
    %5452 = vst.msk [vmem:[%s5401 + $0x289] sm:$0xff] %vm3900, %v4430
    %5453 = vst.msk [vmem:[%s5401 + $0x291] sm:$0xff] %vm3900, %v4431
    %5454 = vst.msk [vmem:[%s5401 + $0x2a1] sm:$0xff] %vm3900, %v4432
    %5455 = vst.msk [vmem:[%s5401 + $0x2a9] sm:$0xff] %vm3900, %v4433
    %5456 = vst.msk [vmem:[%s5401 + $0x2b9] sm:$0xff] %vm3900, %v4434
    %5457 = vst.msk [vmem:[%s5401 + $0x2c1] sm:$0xff] %vm3900, %v4435
    %5458 = vst.msk [vmem:[%s5401 + $0x2d1] sm:$0xff] %vm3900, %v4436
    %5459 = vst.msk [vmem:[%s5401 + $0x2d9] sm:$0xff] %vm3900, %v4437
    %5460 = vst.msk [vmem:[%s5401 + $0x2e9] sm:$0xff] %vm3900, %v4438
    %5461 = vst.msk [vmem:[%s5401 + $0x2f1] sm:$0xff] %vm3900, %v4439
    %5462 = vst.msk [vmem:[%s5401 + $0x301] sm:$0xff] %vm3900, %v4440
    %5463 = vst.msk [vmem:[%s5401 + $0x309] sm:$0xff] %vm3900, %v4441
    %5464 = vst.msk [vmem:[%s5401 + $0x319] sm:$0xff] %vm3900, %v4442
    %5465 = vst.msk [vmem:[%s5401 + $0x321] sm:$0xff] %vm3900, %v4443
    %v5466 = vld [vmem:[#allocation2] sm:$0xff]
    %v5467 = vld [vmem:[#allocation2 + $0x8] sm:$0xff]
    %v5468 = vld [vmem:[#allocation2 + $0x18] sm:$0xff]
    %v5469 = vld [vmem:[#allocation2 + $0x20] sm:$0xff]
    %v5470 = vld [vmem:[#allocation2 + $0x30] sm:$0xff]
    %v5471 = vld [vmem:[#allocation2 + $0x38] sm:$0xff]
    %v5472 = vld [vmem:[#allocation2 + $0x48] sm:$0xff]
    %v5473 = vld [vmem:[#allocation2 + $0x50] sm:$0xff]
    %v5474 = vld [vmem:[#allocation2 + $0x60] sm:$0xff]
    %v5475 = vld [vmem:[#allocation2 + $0x68] sm:$0xff]
    %v5476 = vld [vmem:[#allocation2 + $0x78] sm:$0xff]
    %v5477 = vld [vmem:[#allocation2 + $0x80] sm:$0xff]
    %v5478 = vld [vmem:[#allocation2 + $0x90] sm:$0xff]
    %v5479 = vld [vmem:[#allocation2 + $0x98] sm:$0xff]
    %v5480 = vld [vmem:[#allocation2 + $0xa8] sm:$0xff]
    %v5481 = vld [vmem:[#allocation2 + $0xb0] sm:$0xff]
    %v5482 = vld [vmem:[#allocation2 + $0xc0] sm:$0xff]
    %v5483 = vld [vmem:[#allocation2 + $0xc8] sm:$0xff]
    %v5484 = vld [vmem:[#allocation2 + $0xd8] sm:$0xff]
    %v5485 = vld [vmem:[#allocation2 + $0xe0] sm:$0xff]
    %v5486 = vld [vmem:[#allocation2 + $0xf0] sm:$0xff]
    %v5487 = vld [vmem:[#allocation2 + $0xf8] sm:$0xff]
    %v5488 = vld [vmem:[#allocation2 + $0x108] sm:$0xff]
    %v5489 = vld [vmem:[#allocation2 + $0x110] sm:$0xff]
    %v5490 = vld [vmem:[#allocation2 + $0x120] sm:$0xff]
    %v5491 = vld [vmem:[#allocation2 + $0x128] sm:$0xff]
    %v5492 = vld [vmem:[#allocation2 + $0x138] sm:$0xff]
    %v5493 = vld [vmem:[#allocation2 + $0x140] sm:$0xff]
    %v5494 = vld [vmem:[#allocation2 + $0x150] sm:$0xff]
    %v5495 = vld [vmem:[#allocation2 + $0x158] sm:$0xff]
    %v5496 = vld [vmem:[#allocation2 + $0x168] sm:$0xff]
    %v5497 = vld [vmem:[#allocation2 + $0x170] sm:$0xff]
    %v5498 = vld [vmem:[#allocation2 + $0x1b0] sm:$0xff]
    %v5499 = vld [vmem:[#allocation2 + $0x1b8] sm:$0xff]
    %v5500 = vld [vmem:[#allocation2 + $0x1c8] sm:$0xff]
    %v5501 = vld [vmem:[#allocation2 + $0x1d0] sm:$0xff]
    %v5502 = vld [vmem:[#allocation2 + $0x1e0] sm:$0xff]
    %v5503 = vld [vmem:[#allocation2 + $0x1e8] sm:$0xff]
    %v5504 = vld [vmem:[#allocation2 + $0x1f8] sm:$0xff]
    %v5505 = vld [vmem:[#allocation2 + $0x200] sm:$0xff]
    %v5506 = vld [vmem:[#allocation2 + $0x210] sm:$0xff]
    %v5507 = vld [vmem:[#allocation2 + $0x218] sm:$0xff]
    %v5508 = vld [vmem:[#allocation2 + $0x228] sm:$0xff]
    %v5509 = vld [vmem:[#allocation2 + $0x230] sm:$0xff]
    %v5510 = vld [vmem:[#allocation2 + $0x240] sm:$0xff]
    %v5511 = vld [vmem:[#allocation2 + $0x248] sm:$0xff]
    %v5512 = vld [vmem:[#allocation2 + $0x258] sm:$0xff]
    %v5513 = vld [vmem:[#allocation2 + $0x260] sm:$0xff]
    %v5514 = vld [vmem:[#allocation2 + $0x270] sm:$0xff]
    %v5515 = vld [vmem:[#allocation2 + $0x278] sm:$0xff]
    %v5516 = vld [vmem:[#allocation2 + $0x288] sm:$0xff]
    %v5517 = vld [vmem:[#allocation2 + $0x290] sm:$0xff]
    %v5518 = vld [vmem:[#allocation2 + $0x2a0] sm:$0xff]
    %v5519 = vld [vmem:[#allocation2 + $0x2a8] sm:$0xff]
    %v5520 = vld [vmem:[#allocation2 + $0x2b8] sm:$0xff]
    %v5521 = vld [vmem:[#allocation2 + $0x2c0] sm:$0xff]
    %v5522 = vld [vmem:[#allocation2 + $0x2d0] sm:$0xff]
    %v5523 = vld [vmem:[#allocation2 + $0x2d8] sm:$0xff]
    %v5524 = vld [vmem:[#allocation2 + $0x2e8] sm:$0xff]
    %v5525 = vld [vmem:[#allocation2 + $0x2f0] sm:$0xff]
    %v5526 = vld [vmem:[#allocation2 + $0x300] sm:$0xff]
    %v5527 = vld [vmem:[#allocation2 + $0x308] sm:$0xff]
    %v5528 = vld [vmem:[#allocation2 + $0x318] sm:$0xff]
    %v5529 = vld [vmem:[#allocation2 + $0x320] sm:$0xff]
    %5530 = vst.msk [vmem:[#allocation4] sm:$0xff] %vm3900, %v5466
    %5531 = vst.msk [vmem:[#allocation4 + $0x8] sm:$0xff] %vm3900, %v5467
    %5532 = vst.msk [vmem:[#allocation4 + $0x10] sm:$0xff] %vm3900, %v5468
    %5533 = vst.msk [vmem:[#allocation4 + $0x18] sm:$0xff] %vm3900, %v5469
    %5534 = vst.msk [vmem:[#allocation4 + $0x20] sm:$0xff] %vm3900, %v5470
    %5535 = vst.msk [vmem:[#allocation4 + $0x28] sm:$0xff] %vm3900, %v5471
    %5536 = vst.msk [vmem:[#allocation4 + $0x30] sm:$0xff] %vm3900, %v5472
    %5537 = vst.msk [vmem:[#allocation4 + $0x38] sm:$0xff] %vm3900, %v5473
    %5538 = vst.msk [vmem:[#allocation4 + $0x40] sm:$0xff] %vm3900, %v5474
    %5539 = vst.msk [vmem:[#allocation4 + $0x48] sm:$0xff] %vm3900, %v5475
    %5540 = vst.msk [vmem:[#allocation4 + $0x50] sm:$0xff] %vm3900, %v5476
    %5541 = vst.msk [vmem:[#allocation4 + $0x58] sm:$0xff] %vm3900, %v5477
    %5542 = vst.msk [vmem:[#allocation4 + $0x60] sm:$0xff] %vm3900, %v5478
    %5543 = vst.msk [vmem:[#allocation4 + $0x68] sm:$0xff] %vm3900, %v5479
    %5544 = vst.msk [vmem:[#allocation4 + $0x70] sm:$0xff] %vm3900, %v5480
    %5545 = vst.msk [vmem:[#allocation4 + $0x78] sm:$0xff] %vm3900, %v5481
    %5546 = vst.msk [vmem:[#allocation4 + $0x80] sm:$0xff] %vm3900, %v5482
    %5547 = vst.msk [vmem:[#allocation4 + $0x88] sm:$0xff] %vm3900, %v5483
    %5548 = vst.msk [vmem:[#allocation4 + $0x90] sm:$0xff] %vm3900, %v5484
    %5549 = vst.msk [vmem:[#allocation4 + $0x98] sm:$0xff] %vm3900, %v5485
    %5550 = vst.msk [vmem:[#allocation4 + $0xa0] sm:$0xff] %vm3900, %v5486
    %5551 = vst.msk [vmem:[#allocation4 + $0xa8] sm:$0xff] %vm3900, %v5487
    %5552 = vst.msk [vmem:[#allocation4 + $0xb0] sm:$0xff] %vm3900, %v5488
    %5553 = vst.msk [vmem:[#allocation4 + $0xb8] sm:$0xff] %vm3900, %v5489
    %5554 = vst.msk [vmem:[#allocation4 + $0xc0] sm:$0xff] %vm3900, %v5490
    %5555 = vst.msk [vmem:[#allocation4 + $0xc8] sm:$0xff] %vm3900, %v5491
    %5556 = vst.msk [vmem:[#allocation4 + $0xd0] sm:$0xff] %vm3900, %v5492
    %5557 = vst.msk [vmem:[#allocation4 + $0xd8] sm:$0xff] %vm3900, %v5493
    %5558 = vst.msk [vmem:[#allocation4 + $0xe0] sm:$0xff] %vm3900, %v5494
    %5559 = vst.msk [vmem:[#allocation4 + $0xe8] sm:$0xff] %vm3900, %v5495
    %5560 = vst.msk [vmem:[#allocation4 + $0xf0] sm:$0xff] %vm3900, %v5496
    %5561 = vst.msk [vmem:[#allocation4 + $0xf8] sm:$0xff] %vm3900, %v5497
    %5562 = vst.msk [vmem:[#allocation4 + $0x100] sm:$0xff] %vm3900, %v5498
    %5563 = vst.msk [vmem:[#allocation4 + $0x108] sm:$0xff] %vm3900, %v5499
    %5564 = vst.msk [vmem:[#allocation4 + $0x110] sm:$0xff] %vm3900, %v5500
    %5565 = vst.msk [vmem:[#allocation4 + $0x118] sm:$0xff] %vm3900, %v5501
    %5566 = vst.msk [vmem:[#allocation4 + $0x120] sm:$0xff] %vm3900, %v5502
    %5567 = vst.msk [vmem:[#allocation4 + $0x128] sm:$0xff] %vm3900, %v5503
    %5568 = vst.msk [vmem:[#allocation4 + $0x130] sm:$0xff] %vm3900, %v5504
    %5569 = vst.msk [vmem:[#allocation4 + $0x138] sm:$0xff] %vm3900, %v5505
    %5570 = vst.msk [vmem:[#allocation4 + $0x140] sm:$0xff] %vm3900, %v5506
    %5571 = vst.msk [vmem:[#allocation4 + $0x148] sm:$0xff] %vm3900, %v5507
    %5572 = vst.msk [vmem:[#allocation4 + $0x150] sm:$0xff] %vm3900, %v5508
    %5573 = vst.msk [vmem:[#allocation4 + $0x158] sm:$0xff] %vm3900, %v5509
    %5574 = vst.msk [vmem:[#allocation4 + $0x160] sm:$0xff] %vm3900, %v5510
    %5575 = vst.msk [vmem:[#allocation4 + $0x168] sm:$0xff] %vm3900, %v5511
    %5576 = vst.msk [vmem:[#allocation4 + $0x170] sm:$0xff] %vm3900, %v5512
    %5577 = vst.msk [vmem:[#allocation4 + $0x178] sm:$0xff] %vm3900, %v5513
    %5578 = vst.msk [vmem:[#allocation4 + $0x180] sm:$0xff] %vm3900, %v5514
    %5579 = vst.msk [vmem:[#allocation4 + $0x188] sm:$0xff] %vm3900, %v5515
    %5580 = vst.msk [vmem:[#allocation4 + $0x190] sm:$0xff] %vm3900, %v5516
    %5581 = vst.msk [vmem:[#allocation4 + $0x198] sm:$0xff] %vm3900, %v5517
    %5582 = vst.msk [vmem:[#allocation4 + $0x1a0] sm:$0xff] %vm3900, %v5518
    %5583 = vst.msk [vmem:[#allocation4 + $0x1a8] sm:$0xff] %vm3900, %v5519
    %5584 = vst.msk [vmem:[#allocation4 + $0x1b0] sm:$0xff] %vm3900, %v5520
    %5585 = vst.msk [vmem:[#allocation4 + $0x1b8] sm:$0xff] %vm3900, %v5521
    %5586 = vst.msk [vmem:[#allocation4 + $0x1c0] sm:$0xff] %vm3900, %v5522
    %5587 = vst.msk [vmem:[#allocation4 + $0x1c8] sm:$0xff] %vm3900, %v5523
    %5588 = vst.msk [vmem:[#allocation4 + $0x1d0] sm:$0xff] %vm3900, %v5524
    %5589 = vst.msk [vmem:[#allocation4 + $0x1d8] sm:$0xff] %vm3900, %v5525
    %5590 = vst.msk [vmem:[#allocation4 + $0x1e0] sm:$0xff] %vm3900, %v5526
    %5591 = vst.msk [vmem:[#allocation4 + $0x1e8] sm:$0xff] %vm3900, %v5527
    %5592 = vst.msk [vmem:[#allocation4 + $0x1f0] sm:$0xff] %vm3900, %v5528
    %5593 = vst.msk [vmem:[#allocation4 + $0x1f8] sm:$0xff] %vm3900, %v5529
    %v5594 = vld [vmem:[#allocation2 + $0x1] sm:$0xff]
    %v5595 = vld [vmem:[#allocation2 + $0x9] sm:$0xff]
    %v5596 = vld [vmem:[#allocation2 + $0x19] sm:$0xff]
    %v5597 = vld [vmem:[#allocation2 + $0x21] sm:$0xff]
    %v5598 = vld [vmem:[#allocation2 + $0x31] sm:$0xff]
    %v5599 = vld [vmem:[#allocation2 + $0x39] sm:$0xff]
    %v5600 = vld [vmem:[#allocation2 + $0x49] sm:$0xff]
    %v5601 = vld [vmem:[#allocation2 + $0x51] sm:$0xff]
    %v5602 = vld [vmem:[#allocation2 + $0x61] sm:$0xff]
    %v5603 = vld [vmem:[#allocation2 + $0x69] sm:$0xff]
    %v5604 = vld [vmem:[#allocation2 + $0x79] sm:$0xff]
    %v5605 = vld [vmem:[#allocation2 + $0x81] sm:$0xff]
    %v5606 = vld [vmem:[#allocation2 + $0x91] sm:$0xff]
    %v5607 = vld [vmem:[#allocation2 + $0x99] sm:$0xff]
    %v5608 = vld [vmem:[#allocation2 + $0xa9] sm:$0xff]
    %v5609 = vld [vmem:[#allocation2 + $0xb1] sm:$0xff]
    %v5610 = vld [vmem:[#allocation2 + $0xc1] sm:$0xff]
    %v5611 = vld [vmem:[#allocation2 + $0xc9] sm:$0xff]
    %v5612 = vld [vmem:[#allocation2 + $0xd9] sm:$0xff]
    %v5613 = vld [vmem:[#allocation2 + $0xe1] sm:$0xff]
    %v5614 = vld [vmem:[#allocation2 + $0xf1] sm:$0xff]
    %v5615 = vld [vmem:[#allocation2 + $0xf9] sm:$0xff]
    %v5616 = vld [vmem:[#allocation2 + $0x109] sm:$0xff]
    %v5617 = vld [vmem:[#allocation2 + $0x111] sm:$0xff]
    %v5618 = vld [vmem:[#allocation2 + $0x121] sm:$0xff]
    %v5619 = vld [vmem:[#allocation2 + $0x129] sm:$0xff]
    %v5620 = vld [vmem:[#allocation2 + $0x139] sm:$0xff]
    %v5621 = vld [vmem:[#allocation2 + $0x141] sm:$0xff]
    %v5622 = vld [vmem:[#allocation2 + $0x151] sm:$0xff]
    %v5623 = vld [vmem:[#allocation2 + $0x159] sm:$0xff]
    %v5624 = vld [vmem:[#allocation2 + $0x169] sm:$0xff]
    %v5625 = vld [vmem:[#allocation2 + $0x171] sm:$0xff]
    %v5626 = vld [vmem:[#allocation2 + $0x1b1] sm:$0xff]
    %v5627 = vld [vmem:[#allocation2 + $0x1b9] sm:$0xff]
    %v5628 = vld [vmem:[#allocation2 + $0x1c9] sm:$0xff]
    %v5629 = vld [vmem:[#allocation2 + $0x1d1] sm:$0xff]
    %v5630 = vld [vmem:[#allocation2 + $0x1e1] sm:$0xff]
    %v5631 = vld [vmem:[#allocation2 + $0x1e9] sm:$0xff]
    %v5632 = vld [vmem:[#allocation2 + $0x1f9] sm:$0xff]
    %v5633 = vld [vmem:[#allocation2 + $0x201] sm:$0xff]
    %v5634 = vld [vmem:[#allocation2 + $0x211] sm:$0xff]
    %v5635 = vld [vmem:[#allocation2 + $0x219] sm:$0xff]
    %v5636 = vld [vmem:[#allocation2 + $0x229] sm:$0xff]
    %v5637 = vld [vmem:[#allocation2 + $0x231] sm:$0xff]
    %v5638 = vld [vmem:[#allocation2 + $0x241] sm:$0xff]
    %v5639 = vld [vmem:[#allocation2 + $0x249] sm:$0xff]
    %v5640 = vld [vmem:[#allocation2 + $0x259] sm:$0xff]
    %v5641 = vld [vmem:[#allocation2 + $0x261] sm:$0xff]
    %v5642 = vld [vmem:[#allocation2 + $0x271] sm:$0xff]
    %v5643 = vld [vmem:[#allocation2 + $0x279] sm:$0xff]
    %v5644 = vld [vmem:[#allocation2 + $0x289] sm:$0xff]
    %v5645 = vld [vmem:[#allocation2 + $0x291] sm:$0xff]
    %v5646 = vld [vmem:[#allocation2 + $0x2a1] sm:$0xff]
    %v5647 = vld [vmem:[#allocation2 + $0x2a9] sm:$0xff]
    %v5648 = vld [vmem:[#allocation2 + $0x2b9] sm:$0xff]
    %v5649 = vld [vmem:[#allocation2 + $0x2c1] sm:$0xff]
    %v5650 = vld [vmem:[#allocation2 + $0x2d1] sm:$0xff]
    %v5651 = vld [vmem:[#allocation2 + $0x2d9] sm:$0xff]
    %v5652 = vld [vmem:[#allocation2 + $0x2e9] sm:$0xff]
    %v5653 = vld [vmem:[#allocation2 + $0x2f1] sm:$0xff]
    %v5654 = vld [vmem:[#allocation2 + $0x301] sm:$0xff]
    %v5655 = vld [vmem:[#allocation2 + $0x309] sm:$0xff]
    %v5656 = vld [vmem:[#allocation2 + $0x319] sm:$0xff]
    %v5657 = vld [vmem:[#allocation2 + $0x321] sm:$0xff]
    %5722 = vrot.lane.b32.xlu0 %v5594, 8
    %v5723 = vpop.permute.xlu0 %5722
    %5724 = vrot.lane.b32.xlu0 %v5595, 8
    %v5725 = vpop.permute.xlu0 %5724
    %5726 = vrot.lane.b32.xlu0 %v5596, 8
    %v5727 = vpop.permute.xlu0 %5726
    %5728 = vrot.lane.b32.xlu0 %v5597, 8
    %v5729 = vpop.permute.xlu0 %5728
    %5730 = vrot.lane.b32.xlu0 %v5598, 8
    %v5731 = vpop.permute.xlu0 %5730
    %5732 = vrot.lane.b32.xlu0 %v5599, 8
    %v5733 = vpop.permute.xlu0 %5732
    %5734 = vrot.lane.b32.xlu0 %v5600, 8
    %v5735 = vpop.permute.xlu0 %5734
    %5736 = vrot.lane.b32.xlu0 %v5601, 8
    %v5737 = vpop.permute.xlu0 %5736
    %5738 = vrot.lane.b32.xlu0 %v5602, 8
    %v5739 = vpop.permute.xlu0 %5738
    %5740 = vrot.lane.b32.xlu0 %v5603, 8
    %v5741 = vpop.permute.xlu0 %5740
    %5742 = vrot.lane.b32.xlu0 %v5604, 8
    %v5743 = vpop.permute.xlu0 %5742
    %5744 = vrot.lane.b32.xlu0 %v5605, 8
    %v5745 = vpop.permute.xlu0 %5744
    %5746 = vrot.lane.b32.xlu0 %v5606, 8
    %v5747 = vpop.permute.xlu0 %5746
    %5748 = vrot.lane.b32.xlu0 %v5607, 8
    %v5749 = vpop.permute.xlu0 %5748
    %5750 = vrot.lane.b32.xlu0 %v5608, 8
    %v5751 = vpop.permute.xlu0 %5750
    %5752 = vrot.lane.b32.xlu0 %v5609, 8
    %v5753 = vpop.permute.xlu0 %5752
    %5754 = vrot.lane.b32.xlu0 %v5610, 8
    %v5755 = vpop.permute.xlu0 %5754
    %5756 = vrot.lane.b32.xlu0 %v5611, 8
    %v5757 = vpop.permute.xlu0 %5756
    %5758 = vrot.lane.b32.xlu0 %v5612, 8
    %v5759 = vpop.permute.xlu0 %5758
    %5760 = vrot.lane.b32.xlu0 %v5613, 8
    %v5761 = vpop.permute.xlu0 %5760
    %5762 = vrot.lane.b32.xlu0 %v5614, 8
    %v5763 = vpop.permute.xlu0 %5762
    %5764 = vrot.lane.b32.xlu0 %v5615, 8
    %v5765 = vpop.permute.xlu0 %5764
    %5766 = vrot.lane.b32.xlu0 %v5616, 8
    %v5767 = vpop.permute.xlu0 %5766
    %5768 = vrot.lane.b32.xlu0 %v5617, 8
    %v5769 = vpop.permute.xlu0 %5768
    %5770 = vrot.lane.b32.xlu0 %v5618, 8
    %v5771 = vpop.permute.xlu0 %5770
    %5772 = vrot.lane.b32.xlu0 %v5619, 8
    %v5773 = vpop.permute.xlu0 %5772
    %5774 = vrot.lane.b32.xlu0 %v5620, 8
    %v5775 = vpop.permute.xlu0 %5774
    %5776 = vrot.lane.b32.xlu0 %v5621, 8
    %v5777 = vpop.permute.xlu0 %5776
    %5778 = vrot.lane.b32.xlu0 %v5622, 8
    %v5779 = vpop.permute.xlu0 %5778
    %5780 = vrot.lane.b32.xlu0 %v5623, 8
    %v5781 = vpop.permute.xlu0 %5780
    %5782 = vrot.lane.b32.xlu0 %v5624, 8
    %v5783 = vpop.permute.xlu0 %5782
    %5784 = vrot.lane.b32.xlu0 %v5625, 8
    %v5785 = vpop.permute.xlu0 %5784
    %5786 = vrot.lane.b32.xlu0 %v5626, 8
    %v5787 = vpop.permute.xlu0 %5786
    %5788 = vrot.lane.b32.xlu0 %v5627, 8
    %v5789 = vpop.permute.xlu0 %5788
    %5790 = vrot.lane.b32.xlu0 %v5628, 8
    %v5791 = vpop.permute.xlu0 %5790
    %5792 = vrot.lane.b32.xlu0 %v5629, 8
    %v5793 = vpop.permute.xlu0 %5792
    %5794 = vrot.lane.b32.xlu0 %v5630, 8
    %v5795 = vpop.permute.xlu0 %5794
    %5796 = vrot.lane.b32.xlu0 %v5631, 8
    %v5797 = vpop.permute.xlu0 %5796
    %5798 = vrot.lane.b32.xlu0 %v5632, 8
    %v5799 = vpop.permute.xlu0 %5798
    %5800 = vrot.lane.b32.xlu0 %v5633, 8
    %v5801 = vpop.permute.xlu0 %5800
    %5802 = vrot.lane.b32.xlu0 %v5634, 8
    %v5803 = vpop.permute.xlu0 %5802
    %5804 = vrot.lane.b32.xlu0 %v5635, 8
    %v5805 = vpop.permute.xlu0 %5804
    %5806 = vrot.lane.b32.xlu0 %v5636, 8
    %v5807 = vpop.permute.xlu0 %5806
    %5808 = vrot.lane.b32.xlu0 %v5637, 8
    %v5809 = vpop.permute.xlu0 %5808
    %5810 = vrot.lane.b32.xlu0 %v5638, 8
    %v5811 = vpop.permute.xlu0 %5810
    %5812 = vrot.lane.b32.xlu0 %v5639, 8
    %v5813 = vpop.permute.xlu0 %5812
    %5814 = vrot.lane.b32.xlu0 %v5640, 8
    %v5815 = vpop.permute.xlu0 %5814
    %5816 = vrot.lane.b32.xlu0 %v5641, 8
    %v5817 = vpop.permute.xlu0 %5816
    %5818 = vrot.lane.b32.xlu0 %v5642, 8
    %v5819 = vpop.permute.xlu0 %5818
    %5820 = vrot.lane.b32.xlu0 %v5643, 8
    %v5821 = vpop.permute.xlu0 %5820
    %5822 = vrot.lane.b32.xlu0 %v5644, 8
    %v5823 = vpop.permute.xlu0 %5822
    %5824 = vrot.lane.b32.xlu0 %v5645, 8
    %v5825 = vpop.permute.xlu0 %5824
    %5826 = vrot.lane.b32.xlu0 %v5646, 8
    %v5827 = vpop.permute.xlu0 %5826
    %5828 = vrot.lane.b32.xlu0 %v5647, 8
    %v5829 = vpop.permute.xlu0 %5828
    %5830 = vrot.lane.b32.xlu0 %v5648, 8
    %v5831 = vpop.permute.xlu0 %5830
    %5832 = vrot.lane.b32.xlu0 %v5649, 8
    %v5833 = vpop.permute.xlu0 %5832
    %5834 = vrot.lane.b32.xlu0 %v5650, 8
    %v5835 = vpop.permute.xlu0 %5834
    %5836 = vrot.lane.b32.xlu0 %v5651, 8
    %v5837 = vpop.permute.xlu0 %5836
    %5838 = vrot.lane.b32.xlu0 %v5652, 8
    %v5839 = vpop.permute.xlu0 %5838
    %5840 = vrot.lane.b32.xlu0 %v5653, 8
    %v5841 = vpop.permute.xlu0 %5840
    %5842 = vrot.lane.b32.xlu0 %v5654, 8
    %v5843 = vpop.permute.xlu0 %5842
    %5844 = vrot.lane.b32.xlu0 %v5655, 8
    %v5845 = vpop.permute.xlu0 %5844
    %5846 = vrot.lane.b32.xlu0 %v5656, 8
    %v5847 = vpop.permute.xlu0 %5846
    %5848 = vrot.lane.b32.xlu0 %v5657, 8
    %v5849 = vpop.permute.xlu0 %5848
    %vm5914 = vcmask 130112
    %5915 = vst.msk [vmem:[#allocation4] sm:$0xff] %vm5914, %v5723
    %5916 = vst.msk [vmem:[#allocation4 + $0x8] sm:$0xff] %vm5914, %v5725
    %5917 = vst.msk [vmem:[#allocation4 + $0x10] sm:$0xff] %vm5914, %v5727
    %5918 = vst.msk [vmem:[#allocation4 + $0x18] sm:$0xff] %vm5914, %v5729
    %5919 = vst.msk [vmem:[#allocation4 + $0x20] sm:$0xff] %vm5914, %v5731
    %5920 = vst.msk [vmem:[#allocation4 + $0x28] sm:$0xff] %vm5914, %v5733
    %5921 = vst.msk [vmem:[#allocation4 + $0x30] sm:$0xff] %vm5914, %v5735
    %5922 = vst.msk [vmem:[#allocation4 + $0x38] sm:$0xff] %vm5914, %v5737
    %5923 = vst.msk [vmem:[#allocation4 + $0x40] sm:$0xff] %vm5914, %v5739
    %5924 = vst.msk [vmem:[#allocation4 + $0x48] sm:$0xff] %vm5914, %v5741
    %5925 = vst.msk [vmem:[#allocation4 + $0x50] sm:$0xff] %vm5914, %v5743
    %5926 = vst.msk [vmem:[#allocation4 + $0x58] sm:$0xff] %vm5914, %v5745
    %5927 = vst.msk [vmem:[#allocation4 + $0x60] sm:$0xff] %vm5914, %v5747
    %5928 = vst.msk [vmem:[#allocation4 + $0x68] sm:$0xff] %vm5914, %v5749
    %5929 = vst.msk [vmem:[#allocation4 + $0x70] sm:$0xff] %vm5914, %v5751
    %5930 = vst.msk [vmem:[#allocation4 + $0x78] sm:$0xff] %vm5914, %v5753
    %5931 = vst.msk [vmem:[#allocation4 + $0x80] sm:$0xff] %vm5914, %v5755
    %5932 = vst.msk [vmem:[#allocation4 + $0x88] sm:$0xff] %vm5914, %v5757
    %5933 = vst.msk [vmem:[#allocation4 + $0x90] sm:$0xff] %vm5914, %v5759
    %5934 = vst.msk [vmem:[#allocation4 + $0x98] sm:$0xff] %vm5914, %v5761
    %5935 = vst.msk [vmem:[#allocation4 + $0xa0] sm:$0xff] %vm5914, %v5763
    %5936 = vst.msk [vmem:[#allocation4 + $0xa8] sm:$0xff] %vm5914, %v5765
    %5937 = vst.msk [vmem:[#allocation4 + $0xb0] sm:$0xff] %vm5914, %v5767
    %5938 = vst.msk [vmem:[#allocation4 + $0xb8] sm:$0xff] %vm5914, %v5769
    %5939 = vst.msk [vmem:[#allocation4 + $0xc0] sm:$0xff] %vm5914, %v5771
    %5940 = vst.msk [vmem:[#allocation4 + $0xc8] sm:$0xff] %vm5914, %v5773
    %5941 = vst.msk [vmem:[#allocation4 + $0xd0] sm:$0xff] %vm5914, %v5775
    %5942 = vst.msk [vmem:[#allocation4 + $0xd8] sm:$0xff] %vm5914, %v5777
    %5943 = vst.msk [vmem:[#allocation4 + $0xe0] sm:$0xff] %vm5914, %v5779
    %5944 = vst.msk [vmem:[#allocation4 + $0xe8] sm:$0xff] %vm5914, %v5781
    %5945 = vst.msk [vmem:[#allocation4 + $0xf0] sm:$0xff] %vm5914, %v5783
    %5946 = vst.msk [vmem:[#allocation4 + $0xf8] sm:$0xff] %vm5914, %v5785
    %5947 = vst.msk [vmem:[#allocation4 + $0x100] sm:$0xff] %vm5914, %v5787
    %5948 = vst.msk [vmem:[#allocation4 + $0x108] sm:$0xff] %vm5914, %v5789
    %5949 = vst.msk [vmem:[#allocation4 + $0x110] sm:$0xff] %vm5914, %v5791
    %5950 = vst.msk [vmem:[#allocation4 + $0x118] sm:$0xff] %vm5914, %v5793
    %5951 = vst.msk [vmem:[#allocation4 + $0x120] sm:$0xff] %vm5914, %v5795
    %5952 = vst.msk [vmem:[#allocation4 + $0x128] sm:$0xff] %vm5914, %v5797
    %5953 = vst.msk [vmem:[#allocation4 + $0x130] sm:$0xff] %vm5914, %v5799
    %5954 = vst.msk [vmem:[#allocation4 + $0x138] sm:$0xff] %vm5914, %v5801
    %5955 = vst.msk [vmem:[#allocation4 + $0x140] sm:$0xff] %vm5914, %v5803
    %5956 = vst.msk [vmem:[#allocation4 + $0x148] sm:$0xff] %vm5914, %v5805
    %5957 = vst.msk [vmem:[#allocation4 + $0x150] sm:$0xff] %vm5914, %v5807
    %5958 = vst.msk [vmem:[#allocation4 + $0x158] sm:$0xff] %vm5914, %v5809
    %5959 = vst.msk [vmem:[#allocation4 + $0x160] sm:$0xff] %vm5914, %v5811
    %5960 = vst.msk [vmem:[#allocation4 + $0x168] sm:$0xff] %vm5914, %v5813
    %5961 = vst.msk [vmem:[#allocation4 + $0x170] sm:$0xff] %vm5914, %v5815
    %5962 = vst.msk [vmem:[#allocation4 + $0x178] sm:$0xff] %vm5914, %v5817
    %5963 = vst.msk [vmem:[#allocation4 + $0x180] sm:$0xff] %vm5914, %v5819
    %5964 = vst.msk [vmem:[#allocation4 + $0x188] sm:$0xff] %vm5914, %v5821
    %5965 = vst.msk [vmem:[#allocation4 + $0x190] sm:$0xff] %vm5914, %v5823
    %5966 = vst.msk [vmem:[#allocation4 + $0x198] sm:$0xff] %vm5914, %v5825
    %5967 = vst.msk [vmem:[#allocation4 + $0x1a0] sm:$0xff] %vm5914, %v5827
    %5968 = vst.msk [vmem:[#allocation4 + $0x1a8] sm:$0xff] %vm5914, %v5829
    %5969 = vst.msk [vmem:[#allocation4 + $0x1b0] sm:$0xff] %vm5914, %v5831
    %5970 = vst.msk [vmem:[#allocation4 + $0x1b8] sm:$0xff] %vm5914, %v5833
    %5971 = vst.msk [vmem:[#allocation4 + $0x1c0] sm:$0xff] %vm5914, %v5835
    %5972 = vst.msk [vmem:[#allocation4 + $0x1c8] sm:$0xff] %vm5914, %v5837
    %5973 = vst.msk [vmem:[#allocation4 + $0x1d0] sm:$0xff] %vm5914, %v5839
    %5974 = vst.msk [vmem:[#allocation4 + $0x1d8] sm:$0xff] %vm5914, %v5841
    %5975 = vst.msk [vmem:[#allocation4 + $0x1e0] sm:$0xff] %vm5914, %v5843
    %5976 = vst.msk [vmem:[#allocation4 + $0x1e8] sm:$0xff] %vm5914, %v5845
    %5977 = vst.msk [vmem:[#allocation4 + $0x1f0] sm:$0xff] %vm5914, %v5847
    %5978 = vst.msk [vmem:[#allocation4 + $0x1f8] sm:$0xff] %vm5914, %v5849
    %v5979 = vld [vmem:[#allocation2 + $0x2] sm:$0xff]
    %v5980 = vld [vmem:[#allocation2 + $0xa] sm:$0xff]
    %v5981 = vld [vmem:[#allocation2 + $0x1a] sm:$0xff]
    %v5982 = vld [vmem:[#allocation2 + $0x22] sm:$0xff]
    %v5983 = vld [vmem:[#allocation2 + $0x32] sm:$0xff]
    %v5984 = vld [vmem:[#allocation2 + $0x3a] sm:$0xff]
    %v5985 = vld [vmem:[#allocation2 + $0x4a] sm:$0xff]
    %v5986 = vld [vmem:[#allocation2 + $0x52] sm:$0xff]
    %v5987 = vld [vmem:[#allocation2 + $0x62] sm:$0xff]
    %v5988 = vld [vmem:[#allocation2 + $0x6a] sm:$0xff]
    %v5989 = vld [vmem:[#allocation2 + $0x7a] sm:$0xff]
    %v5990 = vld [vmem:[#allocation2 + $0x82] sm:$0xff]
    %v5991 = vld [vmem:[#allocation2 + $0x92] sm:$0xff]
    %v5992 = vld [vmem:[#allocation2 + $0x9a] sm:$0xff]
    %v5993 = vld [vmem:[#allocation2 + $0xaa] sm:$0xff]
    %v5994 = vld [vmem:[#allocation2 + $0xb2] sm:$0xff]
    %v5995 = vld [vmem:[#allocation2 + $0xc2] sm:$0xff]
    %v5996 = vld [vmem:[#allocation2 + $0xca] sm:$0xff]
    %v5997 = vld [vmem:[#allocation2 + $0xda] sm:$0xff]
    %v5998 = vld [vmem:[#allocation2 + $0xe2] sm:$0xff]
    %v5999 = vld [vmem:[#allocation2 + $0xf2] sm:$0xff]
    %v6000 = vld [vmem:[#allocation2 + $0xfa] sm:$0xff]
    %v6001 = vld [vmem:[#allocation2 + $0x10a] sm:$0xff]
    %v6002 = vld [vmem:[#allocation2 + $0x112] sm:$0xff]
    %v6003 = vld [vmem:[#allocation2 + $0x122] sm:$0xff]
    %v6004 = vld [vmem:[#allocation2 + $0x12a] sm:$0xff]
    %v6005 = vld [vmem:[#allocation2 + $0x13a] sm:$0xff]
    %v6006 = vld [vmem:[#allocation2 + $0x142] sm:$0xff]
    %v6007 = vld [vmem:[#allocation2 + $0x152] sm:$0xff]
    %v6008 = vld [vmem:[#allocation2 + $0x15a] sm:$0xff]
    %v6009 = vld [vmem:[#allocation2 + $0x16a] sm:$0xff]
    %v6010 = vld [vmem:[#allocation2 + $0x172] sm:$0xff]
    %v6011 = vld [vmem:[#allocation2 + $0x1b2] sm:$0xff]
    %v6012 = vld [vmem:[#allocation2 + $0x1ba] sm:$0xff]
    %v6013 = vld [vmem:[#allocation2 + $0x1ca] sm:$0xff]
    %v6014 = vld [vmem:[#allocation2 + $0x1d2] sm:$0xff]
    %v6015 = vld [vmem:[#allocation2 + $0x1e2] sm:$0xff]
    %v6016 = vld [vmem:[#allocation2 + $0x1ea] sm:$0xff]
    %v6017 = vld [vmem:[#allocation2 + $0x1fa] sm:$0xff]
    %v6018 = vld [vmem:[#allocation2 + $0x202] sm:$0xff]
    %v6019 = vld [vmem:[#allocation2 + $0x212] sm:$0xff]
    %v6020 = vld [vmem:[#allocation2 + $0x21a] sm:$0xff]
    %v6021 = vld [vmem:[#allocation2 + $0x22a] sm:$0xff]
    %v6022 = vld [vmem:[#allocation2 + $0x232] sm:$0xff]
    %v6023 = vld [vmem:[#allocation2 + $0x242] sm:$0xff]
    %v6024 = vld [vmem:[#allocation2 + $0x24a] sm:$0xff]
    %v6025 = vld [vmem:[#allocation2 + $0x25a] sm:$0xff]
    %v6026 = vld [vmem:[#allocation2 + $0x262] sm:$0xff]
    %v6027 = vld [vmem:[#allocation2 + $0x272] sm:$0xff]
    %v6028 = vld [vmem:[#allocation2 + $0x27a] sm:$0xff]
    %v6029 = vld [vmem:[#allocation2 + $0x28a] sm:$0xff]
    %v6030 = vld [vmem:[#allocation2 + $0x292] sm:$0xff]
    %v6031 = vld [vmem:[#allocation2 + $0x2a2] sm:$0xff]
    %v6032 = vld [vmem:[#allocation2 + $0x2aa] sm:$0xff]
    %v6033 = vld [vmem:[#allocation2 + $0x2ba] sm:$0xff]
    %v6034 = vld [vmem:[#allocation2 + $0x2c2] sm:$0xff]
    %v6035 = vld [vmem:[#allocation2 + $0x2d2] sm:$0xff]
    %v6036 = vld [vmem:[#allocation2 + $0x2da] sm:$0xff]
    %v6037 = vld [vmem:[#allocation2 + $0x2ea] sm:$0xff]
    %v6038 = vld [vmem:[#allocation2 + $0x2f2] sm:$0xff]
    %v6039 = vld [vmem:[#allocation2 + $0x302] sm:$0xff]
    %v6040 = vld [vmem:[#allocation2 + $0x30a] sm:$0xff]
    %v6041 = vld [vmem:[#allocation2 + $0x31a] sm:$0xff]
    %v6042 = vld [vmem:[#allocation2 + $0x322] sm:$0xff]
    %6107 = vrot.lane.b32.xlu0 %v5979, 16
    %v6108 = vpop.permute.xlu0 %6107
    %6109 = vrot.lane.b32.xlu0 %v5980, 16
    %v6110 = vpop.permute.xlu0 %6109
    %6111 = vrot.lane.b32.xlu0 %v5981, 16
    %v6112 = vpop.permute.xlu0 %6111
    %6113 = vrot.lane.b32.xlu0 %v5982, 16
    %v6114 = vpop.permute.xlu0 %6113
    %6115 = vrot.lane.b32.xlu0 %v5983, 16
    %v6116 = vpop.permute.xlu0 %6115
    %6117 = vrot.lane.b32.xlu0 %v5984, 16
    %v6118 = vpop.permute.xlu0 %6117
    %6119 = vrot.lane.b32.xlu0 %v5985, 16
    %v6120 = vpop.permute.xlu0 %6119
    %6121 = vrot.lane.b32.xlu0 %v5986, 16
    %v6122 = vpop.permute.xlu0 %6121
    %6123 = vrot.lane.b32.xlu0 %v5987, 16
    %v6124 = vpop.permute.xlu0 %6123
    %6125 = vrot.lane.b32.xlu0 %v5988, 16
    %v6126 = vpop.permute.xlu0 %6125
    %6127 = vrot.lane.b32.xlu0 %v5989, 16
    %v6128 = vpop.permute.xlu0 %6127
    %6129 = vrot.lane.b32.xlu0 %v5990, 16
    %v6130 = vpop.permute.xlu0 %6129
    %6131 = vrot.lane.b32.xlu0 %v5991, 16
    %v6132 = vpop.permute.xlu0 %6131
    %6133 = vrot.lane.b32.xlu0 %v5992, 16
    %v6134 = vpop.permute.xlu0 %6133
    %6135 = vrot.lane.b32.xlu0 %v5993, 16
    %v6136 = vpop.permute.xlu0 %6135
    %6137 = vrot.lane.b32.xlu0 %v5994, 16
    %v6138 = vpop.permute.xlu0 %6137
    %6139 = vrot.lane.b32.xlu0 %v5995, 16
    %v6140 = vpop.permute.xlu0 %6139
    %6141 = vrot.lane.b32.xlu0 %v5996, 16
    %v6142 = vpop.permute.xlu0 %6141
    %6143 = vrot.lane.b32.xlu0 %v5997, 16
    %v6144 = vpop.permute.xlu0 %6143
    %6145 = vrot.lane.b32.xlu0 %v5998, 16
    %v6146 = vpop.permute.xlu0 %6145
    %6147 = vrot.lane.b32.xlu0 %v5999, 16
    %v6148 = vpop.permute.xlu0 %6147
    %6149 = vrot.lane.b32.xlu0 %v6000, 16
    %v6150 = vpop.permute.xlu0 %6149
    %6151 = vrot.lane.b32.xlu0 %v6001, 16
    %v6152 = vpop.permute.xlu0 %6151
    %6153 = vrot.lane.b32.xlu0 %v6002, 16
    %v6154 = vpop.permute.xlu0 %6153
    %6155 = vrot.lane.b32.xlu0 %v6003, 16
    %v6156 = vpop.permute.xlu0 %6155
    %6157 = vrot.lane.b32.xlu0 %v6004, 16
    %v6158 = vpop.permute.xlu0 %6157
    %6159 = vrot.lane.b32.xlu0 %v6005, 16
    %v6160 = vpop.permute.xlu0 %6159
    %6161 = vrot.lane.b32.xlu0 %v6006, 16
    %v6162 = vpop.permute.xlu0 %6161
    %6163 = vrot.lane.b32.xlu0 %v6007, 16
    %v6164 = vpop.permute.xlu0 %6163
    %6165 = vrot.lane.b32.xlu0 %v6008, 16
    %v6166 = vpop.permute.xlu0 %6165
    %6167 = vrot.lane.b32.xlu0 %v6009, 16
    %v6168 = vpop.permute.xlu0 %6167
    %6169 = vrot.lane.b32.xlu0 %v6010, 16
    %v6170 = vpop.permute.xlu0 %6169
    %6171 = vrot.lane.b32.xlu0 %v6011, 16
    %v6172 = vpop.permute.xlu0 %6171
    %6173 = vrot.lane.b32.xlu0 %v6012, 16
    %v6174 = vpop.permute.xlu0 %6173
    %6175 = vrot.lane.b32.xlu0 %v6013, 16
    %v6176 = vpop.permute.xlu0 %6175
    %6177 = vrot.lane.b32.xlu0 %v6014, 16
    %v6178 = vpop.permute.xlu0 %6177
    %6179 = vrot.lane.b32.xlu0 %v6015, 16
    %v6180 = vpop.permute.xlu0 %6179
    %6181 = vrot.lane.b32.xlu0 %v6016, 16
    %v6182 = vpop.permute.xlu0 %6181
    %6183 = vrot.lane.b32.xlu0 %v6017, 16
    %v6184 = vpop.permute.xlu0 %6183
    %6185 = vrot.lane.b32.xlu0 %v6018, 16
    %v6186 = vpop.permute.xlu0 %6185
    %6187 = vrot.lane.b32.xlu0 %v6019, 16
    %v6188 = vpop.permute.xlu0 %6187
    %6189 = vrot.lane.b32.xlu0 %v6020, 16
    %v6190 = vpop.permute.xlu0 %6189
    %6191 = vrot.lane.b32.xlu0 %v6021, 16
    %v6192 = vpop.permute.xlu0 %6191
    %6193 = vrot.lane.b32.xlu0 %v6022, 16
    %v6194 = vpop.permute.xlu0 %6193
    %6195 = vrot.lane.b32.xlu0 %v6023, 16
    %v6196 = vpop.permute.xlu0 %6195
    %6197 = vrot.lane.b32.xlu0 %v6024, 16
    %v6198 = vpop.permute.xlu0 %6197
    %6199 = vrot.lane.b32.xlu0 %v6025, 16
    %v6200 = vpop.permute.xlu0 %6199
    %6201 = vrot.lane.b32.xlu0 %v6026, 16
    %v6202 = vpop.permute.xlu0 %6201
    %6203 = vrot.lane.b32.xlu0 %v6027, 16
    %v6204 = vpop.permute.xlu0 %6203
    %6205 = vrot.lane.b32.xlu0 %v6028, 16
    %v6206 = vpop.permute.xlu0 %6205
    %6207 = vrot.lane.b32.xlu0 %v6029, 16
    %v6208 = vpop.permute.xlu0 %6207
    %6209 = vrot.lane.b32.xlu0 %v6030, 16
    %v6210 = vpop.permute.xlu0 %6209
    %6211 = vrot.lane.b32.xlu0 %v6031, 16
    %v6212 = vpop.permute.xlu0 %6211
    %6213 = vrot.lane.b32.xlu0 %v6032, 16
    %v6214 = vpop.permute.xlu0 %6213
    %6215 = vrot.lane.b32.xlu0 %v6033, 16
    %v6216 = vpop.permute.xlu0 %6215
    %6217 = vrot.lane.b32.xlu0 %v6034, 16
    %v6218 = vpop.permute.xlu0 %6217
    %6219 = vrot.lane.b32.xlu0 %v6035, 16
    %v6220 = vpop.permute.xlu0 %6219
    %6221 = vrot.lane.b32.xlu0 %v6036, 16
    %v6222 = vpop.permute.xlu0 %6221
    %6223 = vrot.lane.b32.xlu0 %v6037, 16
    %v6224 = vpop.permute.xlu0 %6223
    %6225 = vrot.lane.b32.xlu0 %v6038, 16
    %v6226 = vpop.permute.xlu0 %6225
    %6227 = vrot.lane.b32.xlu0 %v6039, 16
    %v6228 = vpop.permute.xlu0 %6227
    %6229 = vrot.lane.b32.xlu0 %v6040, 16
    %v6230 = vpop.permute.xlu0 %6229
    %6231 = vrot.lane.b32.xlu0 %v6041, 16
    %v6232 = vpop.permute.xlu0 %6231
    %6233 = vrot.lane.b32.xlu0 %v6042, 16
    %v6234 = vpop.permute.xlu0 %6233
    %vm6299 = vcmask 195712
    %6300 = vst.msk [vmem:[#allocation4] sm:$0xff] %vm6299, %v6108
    %6301 = vst.msk [vmem:[#allocation4 + $0x8] sm:$0xff] %vm6299, %v6110
    %6302 = vst.msk [vmem:[#allocation4 + $0x10] sm:$0xff] %vm6299, %v6112
    %6303 = vst.msk [vmem:[#allocation4 + $0x18] sm:$0xff] %vm6299, %v6114
    %6304 = vst.msk [vmem:[#allocation4 + $0x20] sm:$0xff] %vm6299, %v6116
    %6305 = vst.msk [vmem:[#allocation4 + $0x28] sm:$0xff] %vm6299, %v6118
    %6306 = vst.msk [vmem:[#allocation4 + $0x30] sm:$0xff] %vm6299, %v6120
    %6307 = vst.msk [vmem:[#allocation4 + $0x38] sm:$0xff] %vm6299, %v6122
    %6308 = vst.msk [vmem:[#allocation4 + $0x40] sm:$0xff] %vm6299, %v6124
    %6309 = vst.msk [vmem:[#allocation4 + $0x48] sm:$0xff] %vm6299, %v6126
    %6310 = vst.msk [vmem:[#allocation4 + $0x50] sm:$0xff] %vm6299, %v6128
    %6311 = vst.msk [vmem:[#allocation4 + $0x58] sm:$0xff] %vm6299, %v6130
    %6312 = vst.msk [vmem:[#allocation4 + $0x60] sm:$0xff] %vm6299, %v6132
    %6313 = vst.msk [vmem:[#allocation4 + $0x68] sm:$0xff] %vm6299, %v6134
    %6314 = vst.msk [vmem:[#allocation4 + $0x70] sm:$0xff] %vm6299, %v6136
    %6315 = vst.msk [vmem:[#allocation4 + $0x78] sm:$0xff] %vm6299, %v6138
    %6316 = vst.msk [vmem:[#allocation4 + $0x80] sm:$0xff] %vm6299, %v6140
    %6317 = vst.msk [vmem:[#allocation4 + $0x88] sm:$0xff] %vm6299, %v6142
    %6318 = vst.msk [vmem:[#allocation4 + $0x90] sm:$0xff] %vm6299, %v6144
    %6319 = vst.msk [vmem:[#allocation4 + $0x98] sm:$0xff] %vm6299, %v6146
    %6320 = vst.msk [vmem:[#allocation4 + $0xa0] sm:$0xff] %vm6299, %v6148
    %6321 = vst.msk [vmem:[#allocation4 + $0xa8] sm:$0xff] %vm6299, %v6150
    %6322 = vst.msk [vmem:[#allocation4 + $0xb0] sm:$0xff] %vm6299, %v6152
    %6323 = vst.msk [vmem:[#allocation4 + $0xb8] sm:$0xff] %vm6299, %v6154
    %6324 = vst.msk [vmem:[#allocation4 + $0xc0] sm:$0xff] %vm6299, %v6156
    %6325 = vst.msk [vmem:[#allocation4 + $0xc8] sm:$0xff] %vm6299, %v6158
    %6326 = vst.msk [vmem:[#allocation4 + $0xd0] sm:$0xff] %vm6299, %v6160
    %6327 = vst.msk [vmem:[#allocation4 + $0xd8] sm:$0xff] %vm6299, %v6162
    %6328 = vst.msk [vmem:[#allocation4 + $0xe0] sm:$0xff] %vm6299, %v6164
    %6329 = vst.msk [vmem:[#allocation4 + $0xe8] sm:$0xff] %vm6299, %v6166
    %6330 = vst.msk [vmem:[#allocation4 + $0xf0] sm:$0xff] %vm6299, %v6168
    %6331 = vst.msk [vmem:[#allocation4 + $0xf8] sm:$0xff] %vm6299, %v6170
    %6332 = vst.msk [vmem:[#allocation4 + $0x100] sm:$0xff] %vm6299, %v6172
    %6333 = vst.msk [vmem:[#allocation4 + $0x108] sm:$0xff] %vm6299, %v6174
    %6334 = vst.msk [vmem:[#allocation4 + $0x110] sm:$0xff] %vm6299, %v6176
    %6335 = vst.msk [vmem:[#allocation4 + $0x118] sm:$0xff] %vm6299, %v6178
    %6336 = vst.msk [vmem:[#allocation4 + $0x120] sm:$0xff] %vm6299, %v6180
    %6337 = vst.msk [vmem:[#allocation4 + $0x128] sm:$0xff] %vm6299, %v6182
    %6338 = vst.msk [vmem:[#allocation4 + $0x130] sm:$0xff] %vm6299, %v6184
    %6339 = vst.msk [vmem:[#allocation4 + $0x138] sm:$0xff] %vm6299, %v6186
    %6340 = vst.msk [vmem:[#allocation4 + $0x140] sm:$0xff] %vm6299, %v6188
    %6341 = vst.msk [vmem:[#allocation4 + $0x148] sm:$0xff] %vm6299, %v6190
    %6342 = vst.msk [vmem:[#allocation4 + $0x150] sm:$0xff] %vm6299, %v6192
    %6343 = vst.msk [vmem:[#allocation4 + $0x158] sm:$0xff] %vm6299, %v6194
    %6344 = vst.msk [vmem:[#allocation4 + $0x160] sm:$0xff] %vm6299, %v6196
    %6345 = vst.msk [vmem:[#allocation4 + $0x168] sm:$0xff] %vm6299, %v6198
    %6346 = vst.msk [vmem:[#allocation4 + $0x170] sm:$0xff] %vm6299, %v6200
    %6347 = vst.msk [vmem:[#allocation4 + $0x178] sm:$0xff] %vm6299, %v6202
    %6348 = vst.msk [vmem:[#allocation4 + $0x180] sm:$0xff] %vm6299, %v6204
    %6349 = vst.msk [vmem:[#allocation4 + $0x188] sm:$0xff] %vm6299, %v6206
    %6350 = vst.msk [vmem:[#allocation4 + $0x190] sm:$0xff] %vm6299, %v6208
    %6351 = vst.msk [vmem:[#allocation4 + $0x198] sm:$0xff] %vm6299, %v6210
    %6352 = vst.msk [vmem:[#allocation4 + $0x1a0] sm:$0xff] %vm6299, %v6212
    %6353 = vst.msk [vmem:[#allocation4 + $0x1a8] sm:$0xff] %vm6299, %v6214
    %6354 = vst.msk [vmem:[#allocation4 + $0x1b0] sm:$0xff] %vm6299, %v6216
    %6355 = vst.msk [vmem:[#allocation4 + $0x1b8] sm:$0xff] %vm6299, %v6218
    %6356 = vst.msk [vmem:[#allocation4 + $0x1c0] sm:$0xff] %vm6299, %v6220
    %6357 = vst.msk [vmem:[#allocation4 + $0x1c8] sm:$0xff] %vm6299, %v6222
    %6358 = vst.msk [vmem:[#allocation4 + $0x1d0] sm:$0xff] %vm6299, %v6224
    %6359 = vst.msk [vmem:[#allocation4 + $0x1d8] sm:$0xff] %vm6299, %v6226
    %6360 = vst.msk [vmem:[#allocation4 + $0x1e0] sm:$0xff] %vm6299, %v6228
    %6361 = vst.msk [vmem:[#allocation4 + $0x1e8] sm:$0xff] %vm6299, %v6230
    %6362 = vst.msk [vmem:[#allocation4 + $0x1f0] sm:$0xff] %vm6299, %v6232
    %6363 = vst.msk [vmem:[#allocation4 + $0x1f8] sm:$0xff] %vm6299, %v6234
    %v6364 = vld [vmem:[%s5401] sm:$0xff]
    %v6365 = vld [vmem:[%s5401 + $0x8] sm:$0xff]
    %v6366 = vld [vmem:[%s5401 + $0x18] sm:$0xff]
    %v6367 = vld [vmem:[%s5401 + $0x20] sm:$0xff]
    %v6368 = vld [vmem:[%s5401 + $0x30] sm:$0xff]
    %v6369 = vld [vmem:[%s5401 + $0x38] sm:$0xff]
    %v6370 = vld [vmem:[%s5401 + $0x48] sm:$0xff]
    %v6371 = vld [vmem:[%s5401 + $0x50] sm:$0xff]
    %v6372 = vld [vmem:[%s5401 + $0x60] sm:$0xff]
    %v6373 = vld [vmem:[%s5401 + $0x68] sm:$0xff]
    %v6374 = vld [vmem:[%s5401 + $0x78] sm:$0xff]
    %v6375 = vld [vmem:[%s5401 + $0x80] sm:$0xff]
    %v6376 = vld [vmem:[%s5401 + $0x90] sm:$0xff]
    %v6377 = vld [vmem:[%s5401 + $0x98] sm:$0xff]
    %v6378 = vld [vmem:[%s5401 + $0xa8] sm:$0xff]
    %v6379 = vld [vmem:[%s5401 + $0xb0] sm:$0xff]
    %v6380 = vld [vmem:[%s5401 + $0xc0] sm:$0xff]
    %v6381 = vld [vmem:[%s5401 + $0xc8] sm:$0xff]
    %v6382 = vld [vmem:[%s5401 + $0xd8] sm:$0xff]
    %v6383 = vld [vmem:[%s5401 + $0xe0] sm:$0xff]
    %v6384 = vld [vmem:[%s5401 + $0xf0] sm:$0xff]
    %v6385 = vld [vmem:[%s5401 + $0xf8] sm:$0xff]
    %v6386 = vld [vmem:[%s5401 + $0x108] sm:$0xff]
    %v6387 = vld [vmem:[%s5401 + $0x110] sm:$0xff]
    %v6388 = vld [vmem:[%s5401 + $0x120] sm:$0xff]
    %v6389 = vld [vmem:[%s5401 + $0x128] sm:$0xff]
    %v6390 = vld [vmem:[%s5401 + $0x138] sm:$0xff]
    %v6391 = vld [vmem:[%s5401 + $0x140] sm:$0xff]
    %v6392 = vld [vmem:[%s5401 + $0x150] sm:$0xff]
    %v6393 = vld [vmem:[%s5401 + $0x158] sm:$0xff]
    %v6394 = vld [vmem:[%s5401 + $0x168] sm:$0xff]
    %v6395 = vld [vmem:[%s5401 + $0x170] sm:$0xff]
    %v6396 = vld [vmem:[%s5401 + $0x1b0] sm:$0xff]
    %v6397 = vld [vmem:[%s5401 + $0x1b8] sm:$0xff]
    %v6398 = vld [vmem:[%s5401 + $0x1c8] sm:$0xff]
    %v6399 = vld [vmem:[%s5401 + $0x1d0] sm:$0xff]
    %v6400 = vld [vmem:[%s5401 + $0x1e0] sm:$0xff]
    %v6401 = vld [vmem:[%s5401 + $0x1e8] sm:$0xff]
    %v6402 = vld [vmem:[%s5401 + $0x1f8] sm:$0xff]
    %v6403 = vld [vmem:[%s5401 + $0x200] sm:$0xff]
    %v6404 = vld [vmem:[%s5401 + $0x210] sm:$0xff]
    %v6405 = vld [vmem:[%s5401 + $0x218] sm:$0xff]
    %v6406 = vld [vmem:[%s5401 + $0x228] sm:$0xff]
    %v6407 = vld [vmem:[%s5401 + $0x230] sm:$0xff]
    %v6408 = vld [vmem:[%s5401 + $0x240] sm:$0xff]
    %v6409 = vld [vmem:[%s5401 + $0x248] sm:$0xff]
    %v6410 = vld [vmem:[%s5401 + $0x258] sm:$0xff]
    %v6411 = vld [vmem:[%s5401 + $0x260] sm:$0xff]
    %v6412 = vld [vmem:[%s5401 + $0x270] sm:$0xff]
    %v6413 = vld [vmem:[%s5401 + $0x278] sm:$0xff]
    %v6414 = vld [vmem:[%s5401 + $0x288] sm:$0xff]
    %v6415 = vld [vmem:[%s5401 + $0x290] sm:$0xff]
    %v6416 = vld [vmem:[%s5401 + $0x2a0] sm:$0xff]
    %v6417 = vld [vmem:[%s5401 + $0x2a8] sm:$0xff]
    %v6418 = vld [vmem:[%s5401 + $0x2b8] sm:$0xff]
    %v6419 = vld [vmem:[%s5401 + $0x2c0] sm:$0xff]
    %v6420 = vld [vmem:[%s5401 + $0x2d0] sm:$0xff]
    %v6421 = vld [vmem:[%s5401 + $0x2d8] sm:$0xff]
    %v6422 = vld [vmem:[%s5401 + $0x2e8] sm:$0xff]
    %v6423 = vld [vmem:[%s5401 + $0x2f0] sm:$0xff]
    %v6424 = vld [vmem:[%s5401 + $0x300] sm:$0xff]
    %v6425 = vld [vmem:[%s5401 + $0x308] sm:$0xff]
    %v6426 = vld [vmem:[%s5401 + $0x318] sm:$0xff]
    %v6427 = vld [vmem:[%s5401 + $0x320] sm:$0xff]
    %6492 = vrot.lane.b32.xlu0 %v6364, 24
    %v6493 = vpop.permute.xlu0 %6492
    %6494 = vrot.lane.b32.xlu0 %v6365, 24
    %v6495 = vpop.permute.xlu0 %6494
    %6496 = vrot.lane.b32.xlu0 %v6366, 24
    %v6497 = vpop.permute.xlu0 %6496
    %6498 = vrot.lane.b32.xlu0 %v6367, 24
    %v6499 = vpop.permute.xlu0 %6498
    %6500 = vrot.lane.b32.xlu0 %v6368, 24
    %v6501 = vpop.permute.xlu0 %6500
    %6502 = vrot.lane.b32.xlu0 %v6369, 24
    %v6503 = vpop.permute.xlu0 %6502
    %6504 = vrot.lane.b32.xlu0 %v6370, 24
    %v6505 = vpop.permute.xlu0 %6504
    %6506 = vrot.lane.b32.xlu0 %v6371, 24
    %v6507 = vpop.permute.xlu0 %6506
    %6508 = vrot.lane.b32.xlu0 %v6372, 24
    %v6509 = vpop.permute.xlu0 %6508
    %6510 = vrot.lane.b32.xlu0 %v6373, 24
    %v6511 = vpop.permute.xlu0 %6510
    %6512 = vrot.lane.b32.xlu0 %v6374, 24
    %v6513 = vpop.permute.xlu0 %6512
    %6514 = vrot.lane.b32.xlu0 %v6375, 24
    %v6515 = vpop.permute.xlu0 %6514
    %6516 = vrot.lane.b32.xlu0 %v6376, 24
    %v6517 = vpop.permute.xlu0 %6516
    %6518 = vrot.lane.b32.xlu0 %v6377, 24
    %v6519 = vpop.permute.xlu0 %6518
    %6520 = vrot.lane.b32.xlu0 %v6378, 24
    %v6521 = vpop.permute.xlu0 %6520
    %6522 = vrot.lane.b32.xlu0 %v6379, 24
    %v6523 = vpop.permute.xlu0 %6522
    %6524 = vrot.lane.b32.xlu0 %v6380, 24
    %v6525 = vpop.permute.xlu0 %6524
    %6526 = vrot.lane.b32.xlu0 %v6381, 24
    %v6527 = vpop.permute.xlu0 %6526
    %6528 = vrot.lane.b32.xlu0 %v6382, 24
    %v6529 = vpop.permute.xlu0 %6528
    %6530 = vrot.lane.b32.xlu0 %v6383, 24
    %v6531 = vpop.permute.xlu0 %6530
    %6532 = vrot.lane.b32.xlu0 %v6384, 24
    %v6533 = vpop.permute.xlu0 %6532
    %6534 = vrot.lane.b32.xlu0 %v6385, 24
    %v6535 = vpop.permute.xlu0 %6534
    %6536 = vrot.lane.b32.xlu0 %v6386, 24
    %v6537 = vpop.permute.xlu0 %6536
    %6538 = vrot.lane.b32.xlu0 %v6387, 24
    %v6539 = vpop.permute.xlu0 %6538
    %6540 = vrot.lane.b32.xlu0 %v6388, 24
    %v6541 = vpop.permute.xlu0 %6540
    %6542 = vrot.lane.b32.xlu0 %v6389, 24
    %v6543 = vpop.permute.xlu0 %6542
    %6544 = vrot.lane.b32.xlu0 %v6390, 24
    %v6545 = vpop.permute.xlu0 %6544
    %6546 = vrot.lane.b32.xlu0 %v6391, 24
    %v6547 = vpop.permute.xlu0 %6546
    %6548 = vrot.lane.b32.xlu0 %v6392, 24
    %v6549 = vpop.permute.xlu0 %6548
    %6550 = vrot.lane.b32.xlu0 %v6393, 24
    %v6551 = vpop.permute.xlu0 %6550
    %6552 = vrot.lane.b32.xlu0 %v6394, 24
    %v6553 = vpop.permute.xlu0 %6552
    %6554 = vrot.lane.b32.xlu0 %v6395, 24
    %v6555 = vpop.permute.xlu0 %6554
    %6556 = vrot.lane.b32.xlu0 %v6396, 24
    %v6557 = vpop.permute.xlu0 %6556
    %6558 = vrot.lane.b32.xlu0 %v6397, 24
    %v6559 = vpop.permute.xlu0 %6558
    %6560 = vrot.lane.b32.xlu0 %v6398, 24
    %v6561 = vpop.permute.xlu0 %6560
    %6562 = vrot.lane.b32.xlu0 %v6399, 24
    %v6563 = vpop.permute.xlu0 %6562
    %6564 = vrot.lane.b32.xlu0 %v6400, 24
    %v6565 = vpop.permute.xlu0 %6564
    %6566 = vrot.lane.b32.xlu0 %v6401, 24
    %v6567 = vpop.permute.xlu0 %6566
    %6568 = vrot.lane.b32.xlu0 %v6402, 24
    %v6569 = vpop.permute.xlu0 %6568
    %6570 = vrot.lane.b32.xlu0 %v6403, 24
    %v6571 = vpop.permute.xlu0 %6570
    %6572 = vrot.lane.b32.xlu0 %v6404, 24
    %v6573 = vpop.permute.xlu0 %6572
    %6574 = vrot.lane.b32.xlu0 %v6405, 24
    %v6575 = vpop.permute.xlu0 %6574
    %6576 = vrot.lane.b32.xlu0 %v6406, 24
    %v6577 = vpop.permute.xlu0 %6576
    %6578 = vrot.lane.b32.xlu0 %v6407, 24
    %v6579 = vpop.permute.xlu0 %6578
    %6580 = vrot.lane.b32.xlu0 %v6408, 24
    %v6581 = vpop.permute.xlu0 %6580
    %6582 = vrot.lane.b32.xlu0 %v6409, 24
    %v6583 = vpop.permute.xlu0 %6582
    %6584 = vrot.lane.b32.xlu0 %v6410, 24
    %v6585 = vpop.permute.xlu0 %6584
    %6586 = vrot.lane.b32.xlu0 %v6411, 24
    %v6587 = vpop.permute.xlu0 %6586
    %6588 = vrot.lane.b32.xlu0 %v6412, 24
    %v6589 = vpop.permute.xlu0 %6588
    %6590 = vrot.lane.b32.xlu0 %v6413, 24
    %v6591 = vpop.permute.xlu0 %6590
    %6592 = vrot.lane.b32.xlu0 %v6414, 24
    %v6593 = vpop.permute.xlu0 %6592
    %6594 = vrot.lane.b32.xlu0 %v6415, 24
    %v6595 = vpop.permute.xlu0 %6594
    %6596 = vrot.lane.b32.xlu0 %v6416, 24
    %v6597 = vpop.permute.xlu0 %6596
    %6598 = vrot.lane.b32.xlu0 %v6417, 24
    %v6599 = vpop.permute.xlu0 %6598
    %6600 = vrot.lane.b32.xlu0 %v6418, 24
    %v6601 = vpop.permute.xlu0 %6600
    %6602 = vrot.lane.b32.xlu0 %v6419, 24
    %v6603 = vpop.permute.xlu0 %6602
    %6604 = vrot.lane.b32.xlu0 %v6420, 24
    %v6605 = vpop.permute.xlu0 %6604
    %6606 = vrot.lane.b32.xlu0 %v6421, 24
    %v6607 = vpop.permute.xlu0 %6606
    %6608 = vrot.lane.b32.xlu0 %v6422, 24
    %v6609 = vpop.permute.xlu0 %6608
    %6610 = vrot.lane.b32.xlu0 %v6423, 24
    %v6611 = vpop.permute.xlu0 %6610
    %6612 = vrot.lane.b32.xlu0 %v6424, 24
    %v6613 = vpop.permute.xlu0 %6612
    %6614 = vrot.lane.b32.xlu0 %v6425, 24
    %v6615 = vpop.permute.xlu0 %6614
    %6616 = vrot.lane.b32.xlu0 %v6426, 24
    %v6617 = vpop.permute.xlu0 %6616
    %6618 = vrot.lane.b32.xlu0 %v6427, 24
    %v6619 = vpop.permute.xlu0 %6618
    %vm6684 = vcmask 261312
    %6685 = vst.msk [vmem:[#allocation4] sm:$0xff] %vm6684, %v6493
    %6686 = vst.msk [vmem:[#allocation4 + $0x8] sm:$0xff] %vm6684, %v6495
    %6687 = vst.msk [vmem:[#allocation4 + $0x10] sm:$0xff] %vm6684, %v6497
    %6688 = vst.msk [vmem:[#allocation4 + $0x18] sm:$0xff] %vm6684, %v6499
    %6689 = vst.msk [vmem:[#allocation4 + $0x20] sm:$0xff] %vm6684, %v6501
    %6690 = vst.msk [vmem:[#allocation4 + $0x28] sm:$0xff] %vm6684, %v6503
    %6691 = vst.msk [vmem:[#allocation4 + $0x30] sm:$0xff] %vm6684, %v6505
    %6692 = vst.msk [vmem:[#allocation4 + $0x38] sm:$0xff] %vm6684, %v6507
    %6693 = vst.msk [vmem:[#allocation4 + $0x40] sm:$0xff] %vm6684, %v6509
    %6694 = vst.msk [vmem:[#allocation4 + $0x48] sm:$0xff] %vm6684, %v6511
    %6695 = vst.msk [vmem:[#allocation4 + $0x50] sm:$0xff] %vm6684, %v6513
    %6696 = vst.msk [vmem:[#allocation4 + $0x58] sm:$0xff] %vm6684, %v6515
    %6697 = vst.msk [vmem:[#allocation4 + $0x60] sm:$0xff] %vm6684, %v6517
    %6698 = vst.msk [vmem:[#allocation4 + $0x68] sm:$0xff] %vm6684, %v6519
    %6699 = vst.msk [vmem:[#allocation4 + $0x70] sm:$0xff] %vm6684, %v6521
    %6700 = vst.msk [vmem:[#allocation4 + $0x78] sm:$0xff] %vm6684, %v6523
    %6701 = vst.msk [vmem:[#allocation4 + $0x80] sm:$0xff] %vm6684, %v6525
    %6702 = vst.msk [vmem:[#allocation4 + $0x88] sm:$0xff] %vm6684, %v6527
    %6703 = vst.msk [vmem:[#allocation4 + $0x90] sm:$0xff] %vm6684, %v6529
    %6704 = vst.msk [vmem:[#allocation4 + $0x98] sm:$0xff] %vm6684, %v6531
    %6705 = vst.msk [vmem:[#allocation4 + $0xa0] sm:$0xff] %vm6684, %v6533
    %6706 = vst.msk [vmem:[#allocation4 + $0xa8] sm:$0xff] %vm6684, %v6535
    %6707 = vst.msk [vmem:[#allocation4 + $0xb0] sm:$0xff] %vm6684, %v6537
    %6708 = vst.msk [vmem:[#allocation4 + $0xb8] sm:$0xff] %vm6684, %v6539
    %6709 = vst.msk [vmem:[#allocation4 + $0xc0] sm:$0xff] %vm6684, %v6541
    %6710 = vst.msk [vmem:[#allocation4 + $0xc8] sm:$0xff] %vm6684, %v6543
    %6711 = vst.msk [vmem:[#allocation4 + $0xd0] sm:$0xff] %vm6684, %v6545
    %6712 = vst.msk [vmem:[#allocation4 + $0xd8] sm:$0xff] %vm6684, %v6547
    %6713 = vst.msk [vmem:[#allocation4 + $0xe0] sm:$0xff] %vm6684, %v6549
    %6714 = vst.msk [vmem:[#allocation4 + $0xe8] sm:$0xff] %vm6684, %v6551
    %6715 = vst.msk [vmem:[#allocation4 + $0xf0] sm:$0xff] %vm6684, %v6553
    %6716 = vst.msk [vmem:[#allocation4 + $0xf8] sm:$0xff] %vm6684, %v6555
    %6717 = vst.msk [vmem:[#allocation4 + $0x100] sm:$0xff] %vm6684, %v6557
    %6718 = vst.msk [vmem:[#allocation4 + $0x108] sm:$0xff] %vm6684, %v6559
    %6719 = vst.msk [vmem:[#allocation4 + $0x110] sm:$0xff] %vm6684, %v6561
    %6720 = vst.msk [vmem:[#allocation4 + $0x118] sm:$0xff] %vm6684, %v6563
    %6721 = vst.msk [vmem:[#allocation4 + $0x120] sm:$0xff] %vm6684, %v6565
    %6722 = vst.msk [vmem:[#allocation4 + $0x128] sm:$0xff] %vm6684, %v6567
    %6723 = vst.msk [vmem:[#allocation4 + $0x130] sm:$0xff] %vm6684, %v6569
    %6724 = vst.msk [vmem:[#allocation4 + $0x138] sm:$0xff] %vm6684, %v6571
    %6725 = vst.msk [vmem:[#allocation4 + $0x140] sm:$0xff] %vm6684, %v6573
    %6726 = vst.msk [vmem:[#allocation4 + $0x148] sm:$0xff] %vm6684, %v6575
    %6727 = vst.msk [vmem:[#allocation4 + $0x150] sm:$0xff] %vm6684, %v6577
    %6728 = vst.msk [vmem:[#allocation4 + $0x158] sm:$0xff] %vm6684, %v6579
    %6729 = vst.msk [vmem:[#allocation4 + $0x160] sm:$0xff] %vm6684, %v6581
    %6730 = vst.msk [vmem:[#allocation4 + $0x168] sm:$0xff] %vm6684, %v6583
    %6731 = vst.msk [vmem:[#allocation4 + $0x170] sm:$0xff] %vm6684, %v6585
    %6732 = vst.msk [vmem:[#allocation4 + $0x178] sm:$0xff] %vm6684, %v6587
    %6733 = vst.msk [vmem:[#allocation4 + $0x180] sm:$0xff] %vm6684, %v6589
    %6734 = vst.msk [vmem:[#allocation4 + $0x188] sm:$0xff] %vm6684, %v6591
    %6735 = vst.msk [vmem:[#allocation4 + $0x190] sm:$0xff] %vm6684, %v6593
    %6736 = vst.msk [vmem:[#allocation4 + $0x198] sm:$0xff] %vm6684, %v6595
    %6737 = vst.msk [vmem:[#allocation4 + $0x1a0] sm:$0xff] %vm6684, %v6597
    %6738 = vst.msk [vmem:[#allocation4 + $0x1a8] sm:$0xff] %vm6684, %v6599
    %6739 = vst.msk [vmem:[#allocation4 + $0x1b0] sm:$0xff] %vm6684, %v6601
    %6740 = vst.msk [vmem:[#allocation4 + $0x1b8] sm:$0xff] %vm6684, %v6603
    %6741 = vst.msk [vmem:[#allocation4 + $0x1c0] sm:$0xff] %vm6684, %v6605
    %6742 = vst.msk [vmem:[#allocation4 + $0x1c8] sm:$0xff] %vm6684, %v6607
    %6743 = vst.msk [vmem:[#allocation4 + $0x1d0] sm:$0xff] %vm6684, %v6609
    %6744 = vst.msk [vmem:[#allocation4 + $0x1d8] sm:$0xff] %vm6684, %v6611
    %6745 = vst.msk [vmem:[#allocation4 + $0x1e0] sm:$0xff] %vm6684, %v6613
    %6746 = vst.msk [vmem:[#allocation4 + $0x1e8] sm:$0xff] %vm6684, %v6615
    %6747 = vst.msk [vmem:[#allocation4 + $0x1f0] sm:$0xff] %vm6684, %v6617
    %6748 = vst.msk [vmem:[#allocation4 + $0x1f8] sm:$0xff] %vm6684, %v6619
    %v6749 = vld [vmem:[%s5401 + $0x1] sm:$0xff]
    %v6750 = vld [vmem:[%s5401 + $0x9] sm:$0xff]
    %v6751 = vld [vmem:[%s5401 + $0x19] sm:$0xff]
    %v6752 = vld [vmem:[%s5401 + $0x21] sm:$0xff]
    %v6753 = vld [vmem:[%s5401 + $0x31] sm:$0xff]
    %v6754 = vld [vmem:[%s5401 + $0x39] sm:$0xff]
    %v6755 = vld [vmem:[%s5401 + $0x49] sm:$0xff]
    %v6756 = vld [vmem:[%s5401 + $0x51] sm:$0xff]
    %v6757 = vld [vmem:[%s5401 + $0x61] sm:$0xff]
    %v6758 = vld [vmem:[%s5401 + $0x69] sm:$0xff]
    %v6759 = vld [vmem:[%s5401 + $0x79] sm:$0xff]
    %v6760 = vld [vmem:[%s5401 + $0x81] sm:$0xff]
    %v6761 = vld [vmem:[%s5401 + $0x91] sm:$0xff]
    %v6762 = vld [vmem:[%s5401 + $0x99] sm:$0xff]
    %v6763 = vld [vmem:[%s5401 + $0xa9] sm:$0xff]
    %v6764 = vld [vmem:[%s5401 + $0xb1] sm:$0xff]
    %v6765 = vld [vmem:[%s5401 + $0xc1] sm:$0xff]
    %v6766 = vld [vmem:[%s5401 + $0xc9] sm:$0xff]
    %v6767 = vld [vmem:[%s5401 + $0xd9] sm:$0xff]
    %v6768 = vld [vmem:[%s5401 + $0xe1] sm:$0xff]
    %v6769 = vld [vmem:[%s5401 + $0xf1] sm:$0xff]
    %v6770 = vld [vmem:[%s5401 + $0xf9] sm:$0xff]
    %v6771 = vld [vmem:[%s5401 + $0x109] sm:$0xff]
    %v6772 = vld [vmem:[%s5401 + $0x111] sm:$0xff]
    %v6773 = vld [vmem:[%s5401 + $0x121] sm:$0xff]
    %v6774 = vld [vmem:[%s5401 + $0x129] sm:$0xff]
    %v6775 = vld [vmem:[%s5401 + $0x139] sm:$0xff]
    %v6776 = vld [vmem:[%s5401 + $0x141] sm:$0xff]
    %v6777 = vld [vmem:[%s5401 + $0x151] sm:$0xff]
    %v6778 = vld [vmem:[%s5401 + $0x159] sm:$0xff]
    %v6779 = vld [vmem:[%s5401 + $0x169] sm:$0xff]
    %v6780 = vld [vmem:[%s5401 + $0x171] sm:$0xff]
    %v6781 = vld [vmem:[%s5401 + $0x1b1] sm:$0xff]
    %v6782 = vld [vmem:[%s5401 + $0x1b9] sm:$0xff]
    %v6783 = vld [vmem:[%s5401 + $0x1c9] sm:$0xff]
    %v6784 = vld [vmem:[%s5401 + $0x1d1] sm:$0xff]
    %v6785 = vld [vmem:[%s5401 + $0x1e1] sm:$0xff]
    %v6786 = vld [vmem:[%s5401 + $0x1e9] sm:$0xff]
    %v6787 = vld [vmem:[%s5401 + $0x1f9] sm:$0xff]
    %v6788 = vld [vmem:[%s5401 + $0x201] sm:$0xff]
    %v6789 = vld [vmem:[%s5401 + $0x211] sm:$0xff]
    %v6790 = vld [vmem:[%s5401 + $0x219] sm:$0xff]
    %v6791 = vld [vmem:[%s5401 + $0x229] sm:$0xff]
    %v6792 = vld [vmem:[%s5401 + $0x231] sm:$0xff]
    %v6793 = vld [vmem:[%s5401 + $0x241] sm:$0xff]
    %v6794 = vld [vmem:[%s5401 + $0x249] sm:$0xff]
    %v6795 = vld [vmem:[%s5401 + $0x259] sm:$0xff]
    %v6796 = vld [vmem:[%s5401 + $0x261] sm:$0xff]
    %v6797 = vld [vmem:[%s5401 + $0x271] sm:$0xff]
    %v6798 = vld [vmem:[%s5401 + $0x279] sm:$0xff]
    %v6799 = vld [vmem:[%s5401 + $0x289] sm:$0xff]
    %v6800 = vld [vmem:[%s5401 + $0x291] sm:$0xff]
    %v6801 = vld [vmem:[%s5401 + $0x2a1] sm:$0xff]
    %v6802 = vld [vmem:[%s5401 + $0x2a9] sm:$0xff]
    %v6803 = vld [vmem:[%s5401 + $0x2b9] sm:$0xff]
    %v6804 = vld [vmem:[%s5401 + $0x2c1] sm:$0xff]
    %v6805 = vld [vmem:[%s5401 + $0x2d1] sm:$0xff]
    %v6806 = vld [vmem:[%s5401 + $0x2d9] sm:$0xff]
    %v6807 = vld [vmem:[%s5401 + $0x2e9] sm:$0xff]
    %v6808 = vld [vmem:[%s5401 + $0x2f1] sm:$0xff]
    %v6809 = vld [vmem:[%s5401 + $0x301] sm:$0xff]
    %v6810 = vld [vmem:[%s5401 + $0x309] sm:$0xff]
    %v6811 = vld [vmem:[%s5401 + $0x319] sm:$0xff]
    %v6812 = vld [vmem:[%s5401 + $0x321] sm:$0xff]
    %6877 = vrot.lane.b32.xlu0 %v6749, 32
    %v6878 = vpop.permute.xlu0 %6877
    %6879 = vrot.lane.b32.xlu0 %v6750, 32
    %v6880 = vpop.permute.xlu0 %6879
    %6881 = vrot.lane.b32.xlu0 %v6751, 32
    %v6882 = vpop.permute.xlu0 %6881
    %6883 = vrot.lane.b32.xlu0 %v6752, 32
    %v6884 = vpop.permute.xlu0 %6883
    %6885 = vrot.lane.b32.xlu0 %v6753, 32
    %v6886 = vpop.permute.xlu0 %6885
    %6887 = vrot.lane.b32.xlu0 %v6754, 32
    %v6888 = vpop.permute.xlu0 %6887
    %6889 = vrot.lane.b32.xlu0 %v6755, 32
    %v6890 = vpop.permute.xlu0 %6889
    %6891 = vrot.lane.b32.xlu0 %v6756, 32
    %v6892 = vpop.permute.xlu0 %6891
    %6893 = vrot.lane.b32.xlu0 %v6757, 32
    %v6894 = vpop.permute.xlu0 %6893
    %6895 = vrot.lane.b32.xlu0 %v6758, 32
    %v6896 = vpop.permute.xlu0 %6895
    %6897 = vrot.lane.b32.xlu0 %v6759, 32
    %v6898 = vpop.permute.xlu0 %6897
    %6899 = vrot.lane.b32.xlu0 %v6760, 32
    %v6900 = vpop.permute.xlu0 %6899
    %6901 = vrot.lane.b32.xlu0 %v6761, 32
    %v6902 = vpop.permute.xlu0 %6901
    %6903 = vrot.lane.b32.xlu0 %v6762, 32
    %v6904 = vpop.permute.xlu0 %6903
    %6905 = vrot.lane.b32.xlu0 %v6763, 32
    %v6906 = vpop.permute.xlu0 %6905
    %6907 = vrot.lane.b32.xlu0 %v6764, 32
    %v6908 = vpop.permute.xlu0 %6907
    %6909 = vrot.lane.b32.xlu0 %v6765, 32
    %v6910 = vpop.permute.xlu0 %6909
    %6911 = vrot.lane.b32.xlu0 %v6766, 32
    %v6912 = vpop.permute.xlu0 %6911
    %6913 = vrot.lane.b32.xlu0 %v6767, 32
    %v6914 = vpop.permute.xlu0 %6913
    %6915 = vrot.lane.b32.xlu0 %v6768, 32
    %v6916 = vpop.permute.xlu0 %6915
    %6917 = vrot.lane.b32.xlu0 %v6769, 32
    %v6918 = vpop.permute.xlu0 %6917
    %6919 = vrot.lane.b32.xlu0 %v6770, 32
    %v6920 = vpop.permute.xlu0 %6919
    %6921 = vrot.lane.b32.xlu0 %v6771, 32
    %v6922 = vpop.permute.xlu0 %6921
    %6923 = vrot.lane.b32.xlu0 %v6772, 32
    %v6924 = vpop.permute.xlu0 %6923
    %6925 = vrot.lane.b32.xlu0 %v6773, 32
    %v6926 = vpop.permute.xlu0 %6925
    %6927 = vrot.lane.b32.xlu0 %v6774, 32
    %v6928 = vpop.permute.xlu0 %6927
    %6929 = vrot.lane.b32.xlu0 %v6775, 32
    %v6930 = vpop.permute.xlu0 %6929
    %6931 = vrot.lane.b32.xlu0 %v6776, 32
    %v6932 = vpop.permute.xlu0 %6931
    %6933 = vrot.lane.b32.xlu0 %v6777, 32
    %v6934 = vpop.permute.xlu0 %6933
    %6935 = vrot.lane.b32.xlu0 %v6778, 32
    %v6936 = vpop.permute.xlu0 %6935
    %6937 = vrot.lane.b32.xlu0 %v6779, 32
    %v6938 = vpop.permute.xlu0 %6937
    %6939 = vrot.lane.b32.xlu0 %v6780, 32
    %v6940 = vpop.permute.xlu0 %6939
    %6941 = vrot.lane.b32.xlu0 %v6781, 32
    %v6942 = vpop.permute.xlu0 %6941
    %6943 = vrot.lane.b32.xlu0 %v6782, 32
    %v6944 = vpop.permute.xlu0 %6943
    %6945 = vrot.lane.b32.xlu0 %v6783, 32
    %v6946 = vpop.permute.xlu0 %6945
    %6947 = vrot.lane.b32.xlu0 %v6784, 32
    %v6948 = vpop.permute.xlu0 %6947
    %6949 = vrot.lane.b32.xlu0 %v6785, 32
    %v6950 = vpop.permute.xlu0 %6949
    %6951 = vrot.lane.b32.xlu0 %v6786, 32
    %v6952 = vpop.permute.xlu0 %6951
    %6953 = vrot.lane.b32.xlu0 %v6787, 32
    %v6954 = vpop.permute.xlu0 %6953
    %6955 = vrot.lane.b32.xlu0 %v6788, 32
    %v6956 = vpop.permute.xlu0 %6955
    %6957 = vrot.lane.b32.xlu0 %v6789, 32
    %v6958 = vpop.permute.xlu0 %6957
    %6959 = vrot.lane.b32.xlu0 %v6790, 32
    %v6960 = vpop.permute.xlu0 %6959
    %6961 = vrot.lane.b32.xlu0 %v6791, 32
    %v6962 = vpop.permute.xlu0 %6961
    %6963 = vrot.lane.b32.xlu0 %v6792, 32
    %v6964 = vpop.permute.xlu0 %6963
    %6965 = vrot.lane.b32.xlu0 %v6793, 32
    %v6966 = vpop.permute.xlu0 %6965
    %6967 = vrot.lane.b32.xlu0 %v6794, 32
    %v6968 = vpop.permute.xlu0 %6967
    %6969 = vrot.lane.b32.xlu0 %v6795, 32
    %v6970 = vpop.permute.xlu0 %6969
    %6971 = vrot.lane.b32.xlu0 %v6796, 32
    %v6972 = vpop.permute.xlu0 %6971
    %6973 = vrot.lane.b32.xlu0 %v6797, 32
    %v6974 = vpop.permute.xlu0 %6973
    %6975 = vrot.lane.b32.xlu0 %v6798, 32
    %v6976 = vpop.permute.xlu0 %6975
    %6977 = vrot.lane.b32.xlu0 %v6799, 32
    %v6978 = vpop.permute.xlu0 %6977
    %6979 = vrot.lane.b32.xlu0 %v6800, 32
    %v6980 = vpop.permute.xlu0 %6979
    %6981 = vrot.lane.b32.xlu0 %v6801, 32
    %v6982 = vpop.permute.xlu0 %6981
    %6983 = vrot.lane.b32.xlu0 %v6802, 32
    %v6984 = vpop.permute.xlu0 %6983
    %6985 = vrot.lane.b32.xlu0 %v6803, 32
    %v6986 = vpop.permute.xlu0 %6985
    %6987 = vrot.lane.b32.xlu0 %v6804, 32
    %v6988 = vpop.permute.xlu0 %6987
    %6989 = vrot.lane.b32.xlu0 %v6805, 32
    %v6990 = vpop.permute.xlu0 %6989
    %6991 = vrot.lane.b32.xlu0 %v6806, 32
    %v6992 = vpop.permute.xlu0 %6991
    %6993 = vrot.lane.b32.xlu0 %v6807, 32
    %v6994 = vpop.permute.xlu0 %6993
    %6995 = vrot.lane.b32.xlu0 %v6808, 32
    %v6996 = vpop.permute.xlu0 %6995
    %6997 = vrot.lane.b32.xlu0 %v6809, 32
    %v6998 = vpop.permute.xlu0 %6997
    %6999 = vrot.lane.b32.xlu0 %v6810, 32
    %v7000 = vpop.permute.xlu0 %6999
    %7001 = vrot.lane.b32.xlu0 %v6811, 32
    %v7002 = vpop.permute.xlu0 %7001
    %7003 = vrot.lane.b32.xlu0 %v6812, 32
    %v7004 = vpop.permute.xlu0 %7003
    %vm7069 = vcmask 326912
    %7070 = vst.msk [vmem:[#allocation4] sm:$0xff] %vm7069, %v6878
    %7071 = vst.msk [vmem:[#allocation4 + $0x8] sm:$0xff] %vm7069, %v6880
    %7072 = vst.msk [vmem:[#allocation4 + $0x10] sm:$0xff] %vm7069, %v6882
    %7073 = vst.msk [vmem:[#allocation4 + $0x18] sm:$0xff] %vm7069, %v6884
    %7074 = vst.msk [vmem:[#allocation4 + $0x20] sm:$0xff] %vm7069, %v6886
    %7075 = vst.msk [vmem:[#allocation4 + $0x28] sm:$0xff] %vm7069, %v6888
    %7076 = vst.msk [vmem:[#allocation4 + $0x30] sm:$0xff] %vm7069, %v6890
    %7077 = vst.msk [vmem:[#allocation4 + $0x38] sm:$0xff] %vm7069, %v6892
    %7078 = vst.msk [vmem:[#allocation4 + $0x40] sm:$0xff] %vm7069, %v6894
    %7079 = vst.msk [vmem:[#allocation4 + $0x48] sm:$0xff] %vm7069, %v6896
    %7080 = vst.msk [vmem:[#allocation4 + $0x50] sm:$0xff] %vm7069, %v6898
    %7081 = vst.msk [vmem:[#allocation4 + $0x58] sm:$0xff] %vm7069, %v6900
    %7082 = vst.msk [vmem:[#allocation4 + $0x60] sm:$0xff] %vm7069, %v6902
    %7083 = vst.msk [vmem:[#allocation4 + $0x68] sm:$0xff] %vm7069, %v6904
    %7084 = vst.msk [vmem:[#allocation4 + $0x70] sm:$0xff] %vm7069, %v6906
    %7085 = vst.msk [vmem:[#allocation4 + $0x78] sm:$0xff] %vm7069, %v6908
    %7086 = vst.msk [vmem:[#allocation4 + $0x80] sm:$0xff] %vm7069, %v6910
    %7087 = vst.msk [vmem:[#allocation4 + $0x88] sm:$0xff] %vm7069, %v6912
    %7088 = vst.msk [vmem:[#allocation4 + $0x90] sm:$0xff] %vm7069, %v6914
    %7089 = vst.msk [vmem:[#allocation4 + $0x98] sm:$0xff] %vm7069, %v6916
    %7090 = vst.msk [vmem:[#allocation4 + $0xa0] sm:$0xff] %vm7069, %v6918
    %7091 = vst.msk [vmem:[#allocation4 + $0xa8] sm:$0xff] %vm7069, %v6920
    %7092 = vst.msk [vmem:[#allocation4 + $0xb0] sm:$0xff] %vm7069, %v6922
    %7093 = vst.msk [vmem:[#allocation4 + $0xb8] sm:$0xff] %vm7069, %v6924
    %7094 = vst.msk [vmem:[#allocation4 + $0xc0] sm:$0xff] %vm7069, %v6926
    %7095 = vst.msk [vmem:[#allocation4 + $0xc8] sm:$0xff] %vm7069, %v6928
    %7096 = vst.msk [vmem:[#allocation4 + $0xd0] sm:$0xff] %vm7069, %v6930
    %7097 = vst.msk [vmem:[#allocation4 + $0xd8] sm:$0xff] %vm7069, %v6932
    %7098 = vst.msk [vmem:[#allocation4 + $0xe0] sm:$0xff] %vm7069, %v6934
    %7099 = vst.msk [vmem:[#allocation4 + $0xe8] sm:$0xff] %vm7069, %v6936
    %7100 = vst.msk [vmem:[#allocation4 + $0xf0] sm:$0xff] %vm7069, %v6938
    %7101 = vst.msk [vmem:[#allocation4 + $0xf8] sm:$0xff] %vm7069, %v6940
    %7102 = vst.msk [vmem:[#allocation4 + $0x100] sm:$0xff] %vm7069, %v6942
    %7103 = vst.msk [vmem:[#allocation4 + $0x108] sm:$0xff] %vm7069, %v6944
    %7104 = vst.msk [vmem:[#allocation4 + $0x110] sm:$0xff] %vm7069, %v6946
    %7105 = vst.msk [vmem:[#allocation4 + $0x118] sm:$0xff] %vm7069, %v6948
    %7106 = vst.msk [vmem:[#allocation4 + $0x120] sm:$0xff] %vm7069, %v6950
    %7107 = vst.msk [vmem:[#allocation4 + $0x128] sm:$0xff] %vm7069, %v6952
    %7108 = vst.msk [vmem:[#allocation4 + $0x130] sm:$0xff] %vm7069, %v6954
    %7109 = vst.msk [vmem:[#allocation4 + $0x138] sm:$0xff] %vm7069, %v6956
    %7110 = vst.msk [vmem:[#allocation4 + $0x140] sm:$0xff] %vm7069, %v6958
    %7111 = vst.msk [vmem:[#allocation4 + $0x148] sm:$0xff] %vm7069, %v6960
    %7112 = vst.msk [vmem:[#allocation4 + $0x150] sm:$0xff] %vm7069, %v6962
    %7113 = vst.msk [vmem:[#allocation4 + $0x158] sm:$0xff] %vm7069, %v6964
    %7114 = vst.msk [vmem:[#allocation4 + $0x160] sm:$0xff] %vm7069, %v6966
    %7115 = vst.msk [vmem:[#allocation4 + $0x168] sm:$0xff] %vm7069, %v6968
    %7116 = vst.msk [vmem:[#allocation4 + $0x170] sm:$0xff] %vm7069, %v6970
    %7117 = vst.msk [vmem:[#allocation4 + $0x178] sm:$0xff] %vm7069, %v6972
    %7118 = vst.msk [vmem:[#allocation4 + $0x180] sm:$0xff] %vm7069, %v6974
    %7119 = vst.msk [vmem:[#allocation4 + $0x188] sm:$0xff] %vm7069, %v6976
    %7120 = vst.msk [vmem:[#allocation4 + $0x190] sm:$0xff] %vm7069, %v6978
    %7121 = vst.msk [vmem:[#allocation4 + $0x198] sm:$0xff] %vm7069, %v6980
    %7122 = vst.msk [vmem:[#allocation4 + $0x1a0] sm:$0xff] %vm7069, %v6982
    %7123 = vst.msk [vmem:[#allocation4 + $0x1a8] sm:$0xff] %vm7069, %v6984
    %7124 = vst.msk [vmem:[#allocation4 + $0x1b0] sm:$0xff] %vm7069, %v6986
    %7125 = vst.msk [vmem:[#allocation4 + $0x1b8] sm:$0xff] %vm7069, %v6988
    %7126 = vst.msk [vmem:[#allocation4 + $0x1c0] sm:$0xff] %vm7069, %v6990
    %7127 = vst.msk [vmem:[#allocation4 + $0x1c8] sm:$0xff] %vm7069, %v6992
    %7128 = vst.msk [vmem:[#allocation4 + $0x1d0] sm:$0xff] %vm7069, %v6994
    %7129 = vst.msk [vmem:[#allocation4 + $0x1d8] sm:$0xff] %vm7069, %v6996
    %7130 = vst.msk [vmem:[#allocation4 + $0x1e0] sm:$0xff] %vm7069, %v6998
    %7131 = vst.msk [vmem:[#allocation4 + $0x1e8] sm:$0xff] %vm7069, %v7000
    %7132 = vst.msk [vmem:[#allocation4 + $0x1f0] sm:$0xff] %vm7069, %v7002
    %7133 = vst.msk [vmem:[#allocation4 + $0x1f8] sm:$0xff] %vm7069, %v7004
    %v7134 = vld [vmem:[%s5401 + $0x2] sm:$0xff]
    %v7135 = vld [vmem:[%s5401 + $0xa] sm:$0xff]
    %v7136 = vld [vmem:[%s5401 + $0x1a] sm:$0xff]
    %v7137 = vld [vmem:[%s5401 + $0x22] sm:$0xff]
    %v7138 = vld [vmem:[%s5401 + $0x32] sm:$0xff]
    %v7139 = vld [vmem:[%s5401 + $0x3a] sm:$0xff]
    %v7140 = vld [vmem:[%s5401 + $0x4a] sm:$0xff]
    %v7141 = vld [vmem:[%s5401 + $0x52] sm:$0xff]
    %v7142 = vld [vmem:[%s5401 + $0x62] sm:$0xff]
    %v7143 = vld [vmem:[%s5401 + $0x6a] sm:$0xff]
    %v7144 = vld [vmem:[%s5401 + $0x7a] sm:$0xff]
    %v7145 = vld [vmem:[%s5401 + $0x82] sm:$0xff]
    %v7146 = vld [vmem:[%s5401 + $0x92] sm:$0xff]
    %v7147 = vld [vmem:[%s5401 + $0x9a] sm:$0xff]
    %v7148 = vld [vmem:[%s5401 + $0xaa] sm:$0xff]
    %v7149 = vld [vmem:[%s5401 + $0xb2] sm:$0xff]
    %v7150 = vld [vmem:[%s5401 + $0xc2] sm:$0xff]
    %v7151 = vld [vmem:[%s5401 + $0xca] sm:$0xff]
    %v7152 = vld [vmem:[%s5401 + $0xda] sm:$0xff]
    %v7153 = vld [vmem:[%s5401 + $0xe2] sm:$0xff]
    %v7154 = vld [vmem:[%s5401 + $0xf2] sm:$0xff]
    %v7155 = vld [vmem:[%s5401 + $0xfa] sm:$0xff]
    %v7156 = vld [vmem:[%s5401 + $0x10a] sm:$0xff]
    %v7157 = vld [vmem:[%s5401 + $0x112] sm:$0xff]
    %v7158 = vld [vmem:[%s5401 + $0x122] sm:$0xff]
    %v7159 = vld [vmem:[%s5401 + $0x12a] sm:$0xff]
    %v7160 = vld [vmem:[%s5401 + $0x13a] sm:$0xff]
    %v7161 = vld [vmem:[%s5401 + $0x142] sm:$0xff]
    %v7162 = vld [vmem:[%s5401 + $0x152] sm:$0xff]
    %v7163 = vld [vmem:[%s5401 + $0x15a] sm:$0xff]
    %v7164 = vld [vmem:[%s5401 + $0x16a] sm:$0xff]
    %v7165 = vld [vmem:[%s5401 + $0x172] sm:$0xff]
    %v7166 = vld [vmem:[%s5401 + $0x1b2] sm:$0xff]
    %v7167 = vld [vmem:[%s5401 + $0x1ba] sm:$0xff]
    %v7168 = vld [vmem:[%s5401 + $0x1ca] sm:$0xff]
    %v7169 = vld [vmem:[%s5401 + $0x1d2] sm:$0xff]
    %v7170 = vld [vmem:[%s5401 + $0x1e2] sm:$0xff]
    %v7171 = vld [vmem:[%s5401 + $0x1ea] sm:$0xff]
    %v7172 = vld [vmem:[%s5401 + $0x1fa] sm:$0xff]
    %v7173 = vld [vmem:[%s5401 + $0x202] sm:$0xff]
    %v7174 = vld [vmem:[%s5401 + $0x212] sm:$0xff]
    %v7175 = vld [vmem:[%s5401 + $0x21a] sm:$0xff]
    %v7176 = vld [vmem:[%s5401 + $0x22a] sm:$0xff]
    %v7177 = vld [vmem:[%s5401 + $0x232] sm:$0xff]
    %v7178 = vld [vmem:[%s5401 + $0x242] sm:$0xff]
    %v7179 = vld [vmem:[%s5401 + $0x24a] sm:$0xff]
    %v7180 = vld [vmem:[%s5401 + $0x25a] sm:$0xff]
    %v7181 = vld [vmem:[%s5401 + $0x262] sm:$0xff]
    %v7182 = vld [vmem:[%s5401 + $0x272] sm:$0xff]
    %v7183 = vld [vmem:[%s5401 + $0x27a] sm:$0xff]
    %v7184 = vld [vmem:[%s5401 + $0x28a] sm:$0xff]
    %v7185 = vld [vmem:[%s5401 + $0x292] sm:$0xff]
    %v7186 = vld [vmem:[%s5401 + $0x2a2] sm:$0xff]
    %v7187 = vld [vmem:[%s5401 + $0x2aa] sm:$0xff]
    %v7188 = vld [vmem:[%s5401 + $0x2ba] sm:$0xff]
    %v7189 = vld [vmem:[%s5401 + $0x2c2] sm:$0xff]
    %v7190 = vld [vmem:[%s5401 + $0x2d2] sm:$0xff]
    %v7191 = vld [vmem:[%s5401 + $0x2da] sm:$0xff]
    %v7192 = vld [vmem:[%s5401 + $0x2ea] sm:$0xff]
    %v7193 = vld [vmem:[%s5401 + $0x2f2] sm:$0xff]
    %v7194 = vld [vmem:[%s5401 + $0x302] sm:$0xff]
    %v7195 = vld [vmem:[%s5401 + $0x30a] sm:$0xff]
    %v7196 = vld [vmem:[%s5401 + $0x31a] sm:$0xff]
    %v7197 = vld [vmem:[%s5401 + $0x322] sm:$0xff]
    %7262 = vrot.lane.b32.xlu0 %v7134, 40
    %v7263 = vpop.permute.xlu0 %7262
    %7264 = vrot.lane.b32.xlu0 %v7135, 40
    %v7265 = vpop.permute.xlu0 %7264
    %7266 = vrot.lane.b32.xlu0 %v7136, 40
    %v7267 = vpop.permute.xlu0 %7266
    %7268 = vrot.lane.b32.xlu0 %v7137, 40
    %v7269 = vpop.permute.xlu0 %7268
    %7270 = vrot.lane.b32.xlu0 %v7138, 40
    %v7271 = vpop.permute.xlu0 %7270
    %7272 = vrot.lane.b32.xlu0 %v7139, 40
    %v7273 = vpop.permute.xlu0 %7272
    %7274 = vrot.lane.b32.xlu0 %v7140, 40
    %v7275 = vpop.permute.xlu0 %7274
    %7276 = vrot.lane.b32.xlu0 %v7141, 40
    %v7277 = vpop.permute.xlu0 %7276
    %7278 = vrot.lane.b32.xlu0 %v7142, 40
    %v7279 = vpop.permute.xlu0 %7278
    %7280 = vrot.lane.b32.xlu0 %v7143, 40
    %v7281 = vpop.permute.xlu0 %7280
    %7282 = vrot.lane.b32.xlu0 %v7144, 40
    %v7283 = vpop.permute.xlu0 %7282
    %7284 = vrot.lane.b32.xlu0 %v7145, 40
    %v7285 = vpop.permute.xlu0 %7284
    %7286 = vrot.lane.b32.xlu0 %v7146, 40
    %v7287 = vpop.permute.xlu0 %7286
    %7288 = vrot.lane.b32.xlu0 %v7147, 40
    %v7289 = vpop.permute.xlu0 %7288
    %7290 = vrot.lane.b32.xlu0 %v7148, 40
    %v7291 = vpop.permute.xlu0 %7290
    %7292 = vrot.lane.b32.xlu0 %v7149, 40
    %v7293 = vpop.permute.xlu0 %7292
    %7294 = vrot.lane.b32.xlu0 %v7150, 40
    %v7295 = vpop.permute.xlu0 %7294
    %7296 = vrot.lane.b32.xlu0 %v7151, 40
    %v7297 = vpop.permute.xlu0 %7296
    %7298 = vrot.lane.b32.xlu0 %v7152, 40
    %v7299 = vpop.permute.xlu0 %7298
    %7300 = vrot.lane.b32.xlu0 %v7153, 40
    %v7301 = vpop.permute.xlu0 %7300
    %7302 = vrot.lane.b32.xlu0 %v7154, 40
    %v7303 = vpop.permute.xlu0 %7302
    %7304 = vrot.lane.b32.xlu0 %v7155, 40
    %v7305 = vpop.permute.xlu0 %7304
    %7306 = vrot.lane.b32.xlu0 %v7156, 40
    %v7307 = vpop.permute.xlu0 %7306
    %7308 = vrot.lane.b32.xlu0 %v7157, 40
    %v7309 = vpop.permute.xlu0 %7308
    %7310 = vrot.lane.b32.xlu0 %v7158, 40
    %v7311 = vpop.permute.xlu0 %7310
    %7312 = vrot.lane.b32.xlu0 %v7159, 40
    %v7313 = vpop.permute.xlu0 %7312
    %7314 = vrot.lane.b32.xlu0 %v7160, 40
    %v7315 = vpop.permute.xlu0 %7314
    %7316 = vrot.lane.b32.xlu0 %v7161, 40
    %v7317 = vpop.permute.xlu0 %7316
    %7318 = vrot.lane.b32.xlu0 %v7162, 40
    %v7319 = vpop.permute.xlu0 %7318
    %7320 = vrot.lane.b32.xlu0 %v7163, 40
    %v7321 = vpop.permute.xlu0 %7320
    %7322 = vrot.lane.b32.xlu0 %v7164, 40
    %v7323 = vpop.permute.xlu0 %7322
    %7324 = vrot.lane.b32.xlu0 %v7165, 40
    %v7325 = vpop.permute.xlu0 %7324
    %7326 = vrot.lane.b32.xlu0 %v7166, 40
    %v7327 = vpop.permute.xlu0 %7326
    %7328 = vrot.lane.b32.xlu0 %v7167, 40
    %v7329 = vpop.permute.xlu0 %7328
    %7330 = vrot.lane.b32.xlu0 %v7168, 40
    %v7331 = vpop.permute.xlu0 %7330
    %7332 = vrot.lane.b32.xlu0 %v7169, 40
    %v7333 = vpop.permute.xlu0 %7332
    %7334 = vrot.lane.b32.xlu0 %v7170, 40
    %v7335 = vpop.permute.xlu0 %7334
    %7336 = vrot.lane.b32.xlu0 %v7171, 40
    %v7337 = vpop.permute.xlu0 %7336
    %7338 = vrot.lane.b32.xlu0 %v7172, 40
    %v7339 = vpop.permute.xlu0 %7338
    %7340 = vrot.lane.b32.xlu0 %v7173, 40
    %v7341 = vpop.permute.xlu0 %7340
    %7342 = vrot.lane.b32.xlu0 %v7174, 40
    %v7343 = vpop.permute.xlu0 %7342
    %7344 = vrot.lane.b32.xlu0 %v7175, 40
    %v7345 = vpop.permute.xlu0 %7344
    %7346 = vrot.lane.b32.xlu0 %v7176, 40
    %v7347 = vpop.permute.xlu0 %7346
    %7348 = vrot.lane.b32.xlu0 %v7177, 40
    %v7349 = vpop.permute.xlu0 %7348
    %7350 = vrot.lane.b32.xlu0 %v7178, 40
    %v7351 = vpop.permute.xlu0 %7350
    %7352 = vrot.lane.b32.xlu0 %v7179, 40
    %v7353 = vpop.permute.xlu0 %7352
    %7354 = vrot.lane.b32.xlu0 %v7180, 40
    %v7355 = vpop.permute.xlu0 %7354
    %7356 = vrot.lane.b32.xlu0 %v7181, 40
    %v7357 = vpop.permute.xlu0 %7356
    %7358 = vrot.lane.b32.xlu0 %v7182, 40
    %v7359 = vpop.permute.xlu0 %7358
    %7360 = vrot.lane.b32.xlu0 %v7183, 40
    %v7361 = vpop.permute.xlu0 %7360
    %7362 = vrot.lane.b32.xlu0 %v7184, 40
    %v7363 = vpop.permute.xlu0 %7362
    %7364 = vrot.lane.b32.xlu0 %v7185, 40
    %v7365 = vpop.permute.xlu0 %7364
    %7366 = vrot.lane.b32.xlu0 %v7186, 40
    %v7367 = vpop.permute.xlu0 %7366
    %7368 = vrot.lane.b32.xlu0 %v7187, 40
    %v7369 = vpop.permute.xlu0 %7368
    %7370 = vrot.lane.b32.xlu0 %v7188, 40
    %v7371 = vpop.permute.xlu0 %7370
    %7372 = vrot.lane.b32.xlu0 %v7189, 40
    %v7373 = vpop.permute.xlu0 %7372
    %7374 = vrot.lane.b32.xlu0 %v7190, 40
    %v7375 = vpop.permute.xlu0 %7374
    %7376 = vrot.lane.b32.xlu0 %v7191, 40
    %v7377 = vpop.permute.xlu0 %7376
    %7378 = vrot.lane.b32.xlu0 %v7192, 40
    %v7379 = vpop.permute.xlu0 %7378
    %7380 = vrot.lane.b32.xlu0 %v7193, 40
    %v7381 = vpop.permute.xlu0 %7380
    %7382 = vrot.lane.b32.xlu0 %v7194, 40
    %v7383 = vpop.permute.xlu0 %7382
    %7384 = vrot.lane.b32.xlu0 %v7195, 40
    %v7385 = vpop.permute.xlu0 %7384
    %7386 = vrot.lane.b32.xlu0 %v7196, 40
    %v7387 = vpop.permute.xlu0 %7386
    %7388 = vrot.lane.b32.xlu0 %v7197, 40
    %v7389 = vpop.permute.xlu0 %7388
    %vm7454 = vcmask 392512
    %7455 = vst.msk [vmem:[#allocation4] sm:$0xff] %vm7454, %v7263
    %7456 = vst.msk [vmem:[#allocation4 + $0x8] sm:$0xff] %vm7454, %v7265
    %7457 = vst.msk [vmem:[#allocation4 + $0x10] sm:$0xff] %vm7454, %v7267
    %7458 = vst.msk [vmem:[#allocation4 + $0x18] sm:$0xff] %vm7454, %v7269
    %7459 = vst.msk [vmem:[#allocation4 + $0x20] sm:$0xff] %vm7454, %v7271
    %7460 = vst.msk [vmem:[#allocation4 + $0x28] sm:$0xff] %vm7454, %v7273
    %7461 = vst.msk [vmem:[#allocation4 + $0x30] sm:$0xff] %vm7454, %v7275
    %7462 = vst.msk [vmem:[#allocation4 + $0x38] sm:$0xff] %vm7454, %v7277
    %7463 = vst.msk [vmem:[#allocation4 + $0x40] sm:$0xff] %vm7454, %v7279
    %7464 = vst.msk [vmem:[#allocation4 + $0x48] sm:$0xff] %vm7454, %v7281
    %7465 = vst.msk [vmem:[#allocation4 + $0x50] sm:$0xff] %vm7454, %v7283
    %7466 = vst.msk [vmem:[#allocation4 + $0x58] sm:$0xff] %vm7454, %v7285
    %7467 = vst.msk [vmem:[#allocation4 + $0x60] sm:$0xff] %vm7454, %v7287
    %7468 = vst.msk [vmem:[#allocation4 + $0x68] sm:$0xff] %vm7454, %v7289
    %7469 = vst.msk [vmem:[#allocation4 + $0x70] sm:$0xff] %vm7454, %v7291
    %7470 = vst.msk [vmem:[#allocation4 + $0x78] sm:$0xff] %vm7454, %v7293
    %7471 = vst.msk [vmem:[#allocation4 + $0x80] sm:$0xff] %vm7454, %v7295
    %7472 = vst.msk [vmem:[#allocation4 + $0x88] sm:$0xff] %vm7454, %v7297
    %7473 = vst.msk [vmem:[#allocation4 + $0x90] sm:$0xff] %vm7454, %v7299
    %7474 = vst.msk [vmem:[#allocation4 + $0x98] sm:$0xff] %vm7454, %v7301
    %7475 = vst.msk [vmem:[#allocation4 + $0xa0] sm:$0xff] %vm7454, %v7303
    %7476 = vst.msk [vmem:[#allocation4 + $0xa8] sm:$0xff] %vm7454, %v7305
    %7477 = vst.msk [vmem:[#allocation4 + $0xb0] sm:$0xff] %vm7454, %v7307
    %7478 = vst.msk [vmem:[#allocation4 + $0xb8] sm:$0xff] %vm7454, %v7309
    %7479 = vst.msk [vmem:[#allocation4 + $0xc0] sm:$0xff] %vm7454, %v7311
    %7480 = vst.msk [vmem:[#allocation4 + $0xc8] sm:$0xff] %vm7454, %v7313
    %7481 = vst.msk [vmem:[#allocation4 + $0xd0] sm:$0xff] %vm7454, %v7315
    %7482 = vst.msk [vmem:[#allocation4 + $0xd8] sm:$0xff] %vm7454, %v7317
    %7483 = vst.msk [vmem:[#allocation4 + $0xe0] sm:$0xff] %vm7454, %v7319
    %7484 = vst.msk [vmem:[#allocation4 + $0xe8] sm:$0xff] %vm7454, %v7321
    %7485 = vst.msk [vmem:[#allocation4 + $0xf0] sm:$0xff] %vm7454, %v7323
    %7486 = vst.msk [vmem:[#allocation4 + $0xf8] sm:$0xff] %vm7454, %v7325
    %7487 = vst.msk [vmem:[#allocation4 + $0x100] sm:$0xff] %vm7454, %v7327
    %7488 = vst.msk [vmem:[#allocation4 + $0x108] sm:$0xff] %vm7454, %v7329
    %7489 = vst.msk [vmem:[#allocation4 + $0x110] sm:$0xff] %vm7454, %v7331
    %7490 = vst.msk [vmem:[#allocation4 + $0x118] sm:$0xff] %vm7454, %v7333
    %7491 = vst.msk [vmem:[#allocation4 + $0x120] sm:$0xff] %vm7454, %v7335
    %7492 = vst.msk [vmem:[#allocation4 + $0x128] sm:$0xff] %vm7454, %v7337
    %7493 = vst.msk [vmem:[#allocation4 + $0x130] sm:$0xff] %vm7454, %v7339
    %7494 = vst.msk [vmem:[#allocation4 + $0x138] sm:$0xff] %vm7454, %v7341
    %7495 = vst.msk [vmem:[#allocation4 + $0x140] sm:$0xff] %vm7454, %v7343
    %7496 = vst.msk [vmem:[#allocation4 + $0x148] sm:$0xff] %vm7454, %v7345
    %7497 = vst.msk [vmem:[#allocation4 + $0x150] sm:$0xff] %vm7454, %v7347
    %7498 = vst.msk [vmem:[#allocation4 + $0x158] sm:$0xff] %vm7454, %v7349
    %7499 = vst.msk [vmem:[#allocation4 + $0x160] sm:$0xff] %vm7454, %v7351
    %7500 = vst.msk [vmem:[#allocation4 + $0x168] sm:$0xff] %vm7454, %v7353
    %7501 = vst.msk [vmem:[#allocation4 + $0x170] sm:$0xff] %vm7454, %v7355
    %7502 = vst.msk [vmem:[#allocation4 + $0x178] sm:$0xff] %vm7454, %v7357
    %7503 = vst.msk [vmem:[#allocation4 + $0x180] sm:$0xff] %vm7454, %v7359
    %7504 = vst.msk [vmem:[#allocation4 + $0x188] sm:$0xff] %vm7454, %v7361
    %7505 = vst.msk [vmem:[#allocation4 + $0x190] sm:$0xff] %vm7454, %v7363
    %7506 = vst.msk [vmem:[#allocation4 + $0x198] sm:$0xff] %vm7454, %v7365
    %7507 = vst.msk [vmem:[#allocation4 + $0x1a0] sm:$0xff] %vm7454, %v7367
    %7508 = vst.msk [vmem:[#allocation4 + $0x1a8] sm:$0xff] %vm7454, %v7369
    %7509 = vst.msk [vmem:[#allocation4 + $0x1b0] sm:$0xff] %vm7454, %v7371
    %7510 = vst.msk [vmem:[#allocation4 + $0x1b8] sm:$0xff] %vm7454, %v7373
    %7511 = vst.msk [vmem:[#allocation4 + $0x1c0] sm:$0xff] %vm7454, %v7375
    %7512 = vst.msk [vmem:[#allocation4 + $0x1c8] sm:$0xff] %vm7454, %v7377
    %7513 = vst.msk [vmem:[#allocation4 + $0x1d0] sm:$0xff] %vm7454, %v7379
    %7514 = vst.msk [vmem:[#allocation4 + $0x1d8] sm:$0xff] %vm7454, %v7381
    %7515 = vst.msk [vmem:[#allocation4 + $0x1e0] sm:$0xff] %vm7454, %v7383
    %7516 = vst.msk [vmem:[#allocation4 + $0x1e8] sm:$0xff] %vm7454, %v7385
    %7517 = vst.msk [vmem:[#allocation4 + $0x1f0] sm:$0xff] %vm7454, %v7387
    %7518 = vst.msk [vmem:[#allocation4 + $0x1f8] sm:$0xff] %vm7454, %v7389
    %s7519 = scalar_lea.vmem [#allocation2], 48
    %v7520 = vld [vmem:[%s7519] sm:$0xff]
    %v7521 = vld [vmem:[%s7519 + $0x8] sm:$0xff]
    %v7522 = vld [vmem:[%s7519 + $0x18] sm:$0xff]
    %v7523 = vld [vmem:[%s7519 + $0x20] sm:$0xff]
    %v7524 = vld [vmem:[%s7519 + $0x30] sm:$0xff]
    %v7525 = vld [vmem:[%s7519 + $0x38] sm:$0xff]
    %v7526 = vld [vmem:[%s7519 + $0x48] sm:$0xff]
    %v7527 = vld [vmem:[%s7519 + $0x50] sm:$0xff]
    %v7528 = vld [vmem:[%s7519 + $0x60] sm:$0xff]
    %v7529 = vld [vmem:[%s7519 + $0x68] sm:$0xff]
    %v7530 = vld [vmem:[%s7519 + $0x78] sm:$0xff]
    %v7531 = vld [vmem:[%s7519 + $0x80] sm:$0xff]
    %v7532 = vld [vmem:[%s7519 + $0x90] sm:$0xff]
    %v7533 = vld [vmem:[%s7519 + $0x98] sm:$0xff]
    %v7534 = vld [vmem:[%s7519 + $0xa8] sm:$0xff]
    %v7535 = vld [vmem:[%s7519 + $0xb0] sm:$0xff]
    %v7536 = vld [vmem:[%s7519 + $0xc0] sm:$0xff]
    %v7537 = vld [vmem:[%s7519 + $0xc8] sm:$0xff]
    %v7538 = vld [vmem:[%s7519 + $0xd8] sm:$0xff]
    %v7539 = vld [vmem:[%s7519 + $0xe0] sm:$0xff]
    %v7540 = vld [vmem:[%s7519 + $0xf0] sm:$0xff]
    %v7541 = vld [vmem:[%s7519 + $0xf8] sm:$0xff]
    %v7542 = vld [vmem:[%s7519 + $0x108] sm:$0xff]
    %v7543 = vld [vmem:[%s7519 + $0x110] sm:$0xff]
    %v7544 = vld [vmem:[%s7519 + $0x120] sm:$0xff]
    %v7545 = vld [vmem:[%s7519 + $0x128] sm:$0xff]
    %v7546 = vld [vmem:[%s7519 + $0x138] sm:$0xff]
    %v7547 = vld [vmem:[%s7519 + $0x140] sm:$0xff]
    %v7548 = vld [vmem:[%s7519 + $0x150] sm:$0xff]
    %v7549 = vld [vmem:[%s7519 + $0x158] sm:$0xff]
    %v7550 = vld [vmem:[%s7519 + $0x168] sm:$0xff]
    %v7551 = vld [vmem:[%s7519 + $0x170] sm:$0xff]
    %v7552 = vld [vmem:[%s7519 + $0x1b0] sm:$0xff]
    %v7553 = vld [vmem:[%s7519 + $0x1b8] sm:$0xff]
    %v7554 = vld [vmem:[%s7519 + $0x1c8] sm:$0xff]
    %v7555 = vld [vmem:[%s7519 + $0x1d0] sm:$0xff]
    %v7556 = vld [vmem:[%s7519 + $0x1e0] sm:$0xff]
    %v7557 = vld [vmem:[%s7519 + $0x1e8] sm:$0xff]
    %v7558 = vld [vmem:[%s7519 + $0x1f8] sm:$0xff]
    %v7559 = vld [vmem:[%s7519 + $0x200] sm:$0xff]
    %v7560 = vld [vmem:[%s7519 + $0x210] sm:$0xff]
    %v7561 = vld [vmem:[%s7519 + $0x218] sm:$0xff]
    %v7562 = vld [vmem:[%s7519 + $0x228] sm:$0xff]
    %v7563 = vld [vmem:[%s7519 + $0x230] sm:$0xff]
    %v7564 = vld [vmem:[%s7519 + $0x240] sm:$0xff]
    %v7565 = vld [vmem:[%s7519 + $0x248] sm:$0xff]
    %v7566 = vld [vmem:[%s7519 + $0x258] sm:$0xff]
    %v7567 = vld [vmem:[%s7519 + $0x260] sm:$0xff]
    %v7568 = vld [vmem:[%s7519 + $0x270] sm:$0xff]
    %v7569 = vld [vmem:[%s7519 + $0x278] sm:$0xff]
    %v7570 = vld [vmem:[%s7519 + $0x288] sm:$0xff]
    %v7571 = vld [vmem:[%s7519 + $0x290] sm:$0xff]
    %v7572 = vld [vmem:[%s7519 + $0x2a0] sm:$0xff]
    %v7573 = vld [vmem:[%s7519 + $0x2a8] sm:$0xff]
    %v7574 = vld [vmem:[%s7519 + $0x2b8] sm:$0xff]
    %v7575 = vld [vmem:[%s7519 + $0x2c0] sm:$0xff]
    %v7576 = vld [vmem:[%s7519 + $0x2d0] sm:$0xff]
    %v7577 = vld [vmem:[%s7519 + $0x2d8] sm:$0xff]
    %v7578 = vld [vmem:[%s7519 + $0x2e8] sm:$0xff]
    %v7579 = vld [vmem:[%s7519 + $0x2f0] sm:$0xff]
    %v7580 = vld [vmem:[%s7519 + $0x300] sm:$0xff]
    %v7581 = vld [vmem:[%s7519 + $0x308] sm:$0xff]
    %v7582 = vld [vmem:[%s7519 + $0x318] sm:$0xff]
    %v7583 = vld [vmem:[%s7519 + $0x320] sm:$0xff]
    %7648 = vrot.lane.b32.xlu0 %v7520, 48
    %v7649 = vpop.permute.xlu0 %7648
    %7650 = vrot.lane.b32.xlu0 %v7521, 48
    %v7651 = vpop.permute.xlu0 %7650
    %7652 = vrot.lane.b32.xlu0 %v7522, 48
    %v7653 = vpop.permute.xlu0 %7652
    %7654 = vrot.lane.b32.xlu0 %v7523, 48
    %v7655 = vpop.permute.xlu0 %7654
    %7656 = vrot.lane.b32.xlu0 %v7524, 48
    %v7657 = vpop.permute.xlu0 %7656
    %7658 = vrot.lane.b32.xlu0 %v7525, 48
    %v7659 = vpop.permute.xlu0 %7658
    %7660 = vrot.lane.b32.xlu0 %v7526, 48
    %v7661 = vpop.permute.xlu0 %7660
    %7662 = vrot.lane.b32.xlu0 %v7527, 48
    %v7663 = vpop.permute.xlu0 %7662
    %7664 = vrot.lane.b32.xlu0 %v7528, 48
    %v7665 = vpop.permute.xlu0 %7664
    %7666 = vrot.lane.b32.xlu0 %v7529, 48
    %v7667 = vpop.permute.xlu0 %7666
    %7668 = vrot.lane.b32.xlu0 %v7530, 48
    %v7669 = vpop.permute.xlu0 %7668
    %7670 = vrot.lane.b32.xlu0 %v7531, 48
    %v7671 = vpop.permute.xlu0 %7670
    %7672 = vrot.lane.b32.xlu0 %v7532, 48
    %v7673 = vpop.permute.xlu0 %7672
    %7674 = vrot.lane.b32.xlu0 %v7533, 48
    %v7675 = vpop.permute.xlu0 %7674
    %7676 = vrot.lane.b32.xlu0 %v7534, 48
    %v7677 = vpop.permute.xlu0 %7676
    %7678 = vrot.lane.b32.xlu0 %v7535, 48
    %v7679 = vpop.permute.xlu0 %7678
    %7680 = vrot.lane.b32.xlu0 %v7536, 48
    %v7681 = vpop.permute.xlu0 %7680
    %7682 = vrot.lane.b32.xlu0 %v7537, 48
    %v7683 = vpop.permute.xlu0 %7682
    %7684 = vrot.lane.b32.xlu0 %v7538, 48
    %v7685 = vpop.permute.xlu0 %7684
    %7686 = vrot.lane.b32.xlu0 %v7539, 48
    %v7687 = vpop.permute.xlu0 %7686
    %7688 = vrot.lane.b32.xlu0 %v7540, 48
    %v7689 = vpop.permute.xlu0 %7688
    %7690 = vrot.lane.b32.xlu0 %v7541, 48
    %v7691 = vpop.permute.xlu0 %7690
    %7692 = vrot.lane.b32.xlu0 %v7542, 48
    %v7693 = vpop.permute.xlu0 %7692
    %7694 = vrot.lane.b32.xlu0 %v7543, 48
    %v7695 = vpop.permute.xlu0 %7694
    %7696 = vrot.lane.b32.xlu0 %v7544, 48
    %v7697 = vpop.permute.xlu0 %7696
    %7698 = vrot.lane.b32.xlu0 %v7545, 48
    %v7699 = vpop.permute.xlu0 %7698
    %7700 = vrot.lane.b32.xlu0 %v7546, 48
    %v7701 = vpop.permute.xlu0 %7700
    %7702 = vrot.lane.b32.xlu0 %v7547, 48
    %v7703 = vpop.permute.xlu0 %7702
    %7704 = vrot.lane.b32.xlu0 %v7548, 48
    %v7705 = vpop.permute.xlu0 %7704
    %7706 = vrot.lane.b32.xlu0 %v7549, 48
    %v7707 = vpop.permute.xlu0 %7706
    %7708 = vrot.lane.b32.xlu0 %v7550, 48
    %v7709 = vpop.permute.xlu0 %7708
    %7710 = vrot.lane.b32.xlu0 %v7551, 48
    %v7711 = vpop.permute.xlu0 %7710
    %7712 = vrot.lane.b32.xlu0 %v7552, 48
    %v7713 = vpop.permute.xlu0 %7712
    %7714 = vrot.lane.b32.xlu0 %v7553, 48
    %v7715 = vpop.permute.xlu0 %7714
    %7716 = vrot.lane.b32.xlu0 %v7554, 48
    %v7717 = vpop.permute.xlu0 %7716
    %7718 = vrot.lane.b32.xlu0 %v7555, 48
    %v7719 = vpop.permute.xlu0 %7718
    %7720 = vrot.lane.b32.xlu0 %v7556, 48
    %v7721 = vpop.permute.xlu0 %7720
    %7722 = vrot.lane.b32.xlu0 %v7557, 48
    %v7723 = vpop.permute.xlu0 %7722
    %7724 = vrot.lane.b32.xlu0 %v7558, 48
    %v7725 = vpop.permute.xlu0 %7724
    %7726 = vrot.lane.b32.xlu0 %v7559, 48
    %v7727 = vpop.permute.xlu0 %7726
    %7728 = vrot.lane.b32.xlu0 %v7560, 48
    %v7729 = vpop.permute.xlu0 %7728
    %7730 = vrot.lane.b32.xlu0 %v7561, 48
    %v7731 = vpop.permute.xlu0 %7730
    %7732 = vrot.lane.b32.xlu0 %v7562, 48
    %v7733 = vpop.permute.xlu0 %7732
    %7734 = vrot.lane.b32.xlu0 %v7563, 48
    %v7735 = vpop.permute.xlu0 %7734
    %7736 = vrot.lane.b32.xlu0 %v7564, 48
    %v7737 = vpop.permute.xlu0 %7736
    %7738 = vrot.lane.b32.xlu0 %v7565, 48
    %v7739 = vpop.permute.xlu0 %7738
    %7740 = vrot.lane.b32.xlu0 %v7566, 48
    %v7741 = vpop.permute.xlu0 %7740
    %7742 = vrot.lane.b32.xlu0 %v7567, 48
    %v7743 = vpop.permute.xlu0 %7742
    %7744 = vrot.lane.b32.xlu0 %v7568, 48
    %v7745 = vpop.permute.xlu0 %7744
    %7746 = vrot.lane.b32.xlu0 %v7569, 48
    %v7747 = vpop.permute.xlu0 %7746
    %7748 = vrot.lane.b32.xlu0 %v7570, 48
    %v7749 = vpop.permute.xlu0 %7748
    %7750 = vrot.lane.b32.xlu0 %v7571, 48
    %v7751 = vpop.permute.xlu0 %7750
    %7752 = vrot.lane.b32.xlu0 %v7572, 48
    %v7753 = vpop.permute.xlu0 %7752
    %7754 = vrot.lane.b32.xlu0 %v7573, 48
    %v7755 = vpop.permute.xlu0 %7754
    %7756 = vrot.lane.b32.xlu0 %v7574, 48
    %v7757 = vpop.permute.xlu0 %7756
    %7758 = vrot.lane.b32.xlu0 %v7575, 48
    %v7759 = vpop.permute.xlu0 %7758
    %7760 = vrot.lane.b32.xlu0 %v7576, 48
    %v7761 = vpop.permute.xlu0 %7760
    %7762 = vrot.lane.b32.xlu0 %v7577, 48
    %v7763 = vpop.permute.xlu0 %7762
    %7764 = vrot.lane.b32.xlu0 %v7578, 48
    %v7765 = vpop.permute.xlu0 %7764
    %7766 = vrot.lane.b32.xlu0 %v7579, 48
    %v7767 = vpop.permute.xlu0 %7766
    %7768 = vrot.lane.b32.xlu0 %v7580, 48
    %v7769 = vpop.permute.xlu0 %7768
    %7770 = vrot.lane.b32.xlu0 %v7581, 48
    %v7771 = vpop.permute.xlu0 %7770
    %7772 = vrot.lane.b32.xlu0 %v7582, 48
    %v7773 = vpop.permute.xlu0 %7772
    %7774 = vrot.lane.b32.xlu0 %v7583, 48
    %v7775 = vpop.permute.xlu0 %7774
    %vm7840 = vcmask 458112
    %7841 = vst.msk [vmem:[#allocation4] sm:$0xff] %vm7840, %v7649
    %7842 = vst.msk [vmem:[#allocation4 + $0x8] sm:$0xff] %vm7840, %v7651
    %7843 = vst.msk [vmem:[#allocation4 + $0x10] sm:$0xff] %vm7840, %v7653
    %7844 = vst.msk [vmem:[#allocation4 + $0x18] sm:$0xff] %vm7840, %v7655
    %7845 = vst.msk [vmem:[#allocation4 + $0x20] sm:$0xff] %vm7840, %v7657
    %7846 = vst.msk [vmem:[#allocation4 + $0x28] sm:$0xff] %vm7840, %v7659
    %7847 = vst.msk [vmem:[#allocation4 + $0x30] sm:$0xff] %vm7840, %v7661
    %7848 = vst.msk [vmem:[#allocation4 + $0x38] sm:$0xff] %vm7840, %v7663
    %7849 = vst.msk [vmem:[#allocation4 + $0x40] sm:$0xff] %vm7840, %v7665
    %7850 = vst.msk [vmem:[#allocation4 + $0x48] sm:$0xff] %vm7840, %v7667
    %7851 = vst.msk [vmem:[#allocation4 + $0x50] sm:$0xff] %vm7840, %v7669
    %7852 = vst.msk [vmem:[#allocation4 + $0x58] sm:$0xff] %vm7840, %v7671
    %7853 = vst.msk [vmem:[#allocation4 + $0x60] sm:$0xff] %vm7840, %v7673
    %7854 = vst.msk [vmem:[#allocation4 + $0x68] sm:$0xff] %vm7840, %v7675
    %7855 = vst.msk [vmem:[#allocation4 + $0x70] sm:$0xff] %vm7840, %v7677
    %7856 = vst.msk [vmem:[#allocation4 + $0x78] sm:$0xff] %vm7840, %v7679
    %7857 = vst.msk [vmem:[#allocation4 + $0x80] sm:$0xff] %vm7840, %v7681
    %7858 = vst.msk [vmem:[#allocation4 + $0x88] sm:$0xff] %vm7840, %v7683
    %7859 = vst.msk [vmem:[#allocation4 + $0x90] sm:$0xff] %vm7840, %v7685
    %7860 = vst.msk [vmem:[#allocation4 + $0x98] sm:$0xff] %vm7840, %v7687
    %7861 = vst.msk [vmem:[#allocation4 + $0xa0] sm:$0xff] %vm7840, %v7689
    %7862 = vst.msk [vmem:[#allocation4 + $0xa8] sm:$0xff] %vm7840, %v7691
    %7863 = vst.msk [vmem:[#allocation4 + $0xb0] sm:$0xff] %vm7840, %v7693
    %7864 = vst.msk [vmem:[#allocation4 + $0xb8] sm:$0xff] %vm7840, %v7695
    %7865 = vst.msk [vmem:[#allocation4 + $0xc0] sm:$0xff] %vm7840, %v7697
    %7866 = vst.msk [vmem:[#allocation4 + $0xc8] sm:$0xff] %vm7840, %v7699
    %7867 = vst.msk [vmem:[#allocation4 + $0xd0] sm:$0xff] %vm7840, %v7701
    %7868 = vst.msk [vmem:[#allocation4 + $0xd8] sm:$0xff] %vm7840, %v7703
    %7869 = vst.msk [vmem:[#allocation4 + $0xe0] sm:$0xff] %vm7840, %v7705
    %7870 = vst.msk [vmem:[#allocation4 + $0xe8] sm:$0xff] %vm7840, %v7707
    %7871 = vst.msk [vmem:[#allocation4 + $0xf0] sm:$0xff] %vm7840, %v7709
    %7872 = vst.msk [vmem:[#allocation4 + $0xf8] sm:$0xff] %vm7840, %v7711
    %7873 = vst.msk [vmem:[#allocation4 + $0x100] sm:$0xff] %vm7840, %v7713
    %7874 = vst.msk [vmem:[#allocation4 + $0x108] sm:$0xff] %vm7840, %v7715
    %7875 = vst.msk [vmem:[#allocation4 + $0x110] sm:$0xff] %vm7840, %v7717
    %7876 = vst.msk [vmem:[#allocation4 + $0x118] sm:$0xff] %vm7840, %v7719
    %7877 = vst.msk [vmem:[#allocation4 + $0x120] sm:$0xff] %vm7840, %v7721
    %7878 = vst.msk [vmem:[#allocation4 + $0x128] sm:$0xff] %vm7840, %v7723
    %7879 = vst.msk [vmem:[#allocation4 + $0x130] sm:$0xff] %vm7840, %v7725
    %7880 = vst.msk [vmem:[#allocation4 + $0x138] sm:$0xff] %vm7840, %v7727
    %7881 = vst.msk [vmem:[#allocation4 + $0x140] sm:$0xff] %vm7840, %v7729
    %7882 = vst.msk [vmem:[#allocation4 + $0x148] sm:$0xff] %vm7840, %v7731
    %7883 = vst.msk [vmem:[#allocation4 + $0x150] sm:$0xff] %vm7840, %v7733
    %7884 = vst.msk [vmem:[#allocation4 + $0x158] sm:$0xff] %vm7840, %v7735
    %7885 = vst.msk [vmem:[#allocation4 + $0x160] sm:$0xff] %vm7840, %v7737
    %7886 = vst.msk [vmem:[#allocation4 + $0x168] sm:$0xff] %vm7840, %v7739
    %7887 = vst.msk [vmem:[#allocation4 + $0x170] sm:$0xff] %vm7840, %v7741
    %7888 = vst.msk [vmem:[#allocation4 + $0x178] sm:$0xff] %vm7840, %v7743
    %7889 = vst.msk [vmem:[#allocation4 + $0x180] sm:$0xff] %vm7840, %v7745
    %7890 = vst.msk [vmem:[#allocation4 + $0x188] sm:$0xff] %vm7840, %v7747
    %7891 = vst.msk [vmem:[#allocation4 + $0x190] sm:$0xff] %vm7840, %v7749
    %7892 = vst.msk [vmem:[#allocation4 + $0x198] sm:$0xff] %vm7840, %v7751
    %7893 = vst.msk [vmem:[#allocation4 + $0x1a0] sm:$0xff] %vm7840, %v7753
    %7894 = vst.msk [vmem:[#allocation4 + $0x1a8] sm:$0xff] %vm7840, %v7755
    %7895 = vst.msk [vmem:[#allocation4 + $0x1b0] sm:$0xff] %vm7840, %v7757
    %7896 = vst.msk [vmem:[#allocation4 + $0x1b8] sm:$0xff] %vm7840, %v7759
    %7897 = vst.msk [vmem:[#allocation4 + $0x1c0] sm:$0xff] %vm7840, %v7761
    %7898 = vst.msk [vmem:[#allocation4 + $0x1c8] sm:$0xff] %vm7840, %v7763
    %7899 = vst.msk [vmem:[#allocation4 + $0x1d0] sm:$0xff] %vm7840, %v7765
    %7900 = vst.msk [vmem:[#allocation4 + $0x1d8] sm:$0xff] %vm7840, %v7767
    %7901 = vst.msk [vmem:[#allocation4 + $0x1e0] sm:$0xff] %vm7840, %v7769
    %7902 = vst.msk [vmem:[#allocation4 + $0x1e8] sm:$0xff] %vm7840, %v7771
    %7903 = vst.msk [vmem:[#allocation4 + $0x1f0] sm:$0xff] %vm7840, %v7773
    %7904 = vst.msk [vmem:[#allocation4 + $0x1f8] sm:$0xff] %vm7840, %v7775
    %v7905 = vld [vmem:[%s7519 + $0x1] sm:$0xff]
    %v7906 = vld [vmem:[%s7519 + $0x9] sm:$0xff]
    %v7907 = vld [vmem:[%s7519 + $0x19] sm:$0xff]
    %v7908 = vld [vmem:[%s7519 + $0x21] sm:$0xff]
    %v7909 = vld [vmem:[%s7519 + $0x31] sm:$0xff]
    %v7910 = vld [vmem:[%s7519 + $0x39] sm:$0xff]
    %v7911 = vld [vmem:[%s7519 + $0x49] sm:$0xff]
    %v7912 = vld [vmem:[%s7519 + $0x51] sm:$0xff]
    %v7913 = vld [vmem:[%s7519 + $0x61] sm:$0xff]
    %v7914 = vld [vmem:[%s7519 + $0x69] sm:$0xff]
    %v7915 = vld [vmem:[%s7519 + $0x79] sm:$0xff]
    %v7916 = vld [vmem:[%s7519 + $0x81] sm:$0xff]
    %v7917 = vld [vmem:[%s7519 + $0x91] sm:$0xff]
    %v7918 = vld [vmem:[%s7519 + $0x99] sm:$0xff]
    %v7919 = vld [vmem:[%s7519 + $0xa9] sm:$0xff]
    %v7920 = vld [vmem:[%s7519 + $0xb1] sm:$0xff]
    %v7921 = vld [vmem:[%s7519 + $0xc1] sm:$0xff]
    %v7922 = vld [vmem:[%s7519 + $0xc9] sm:$0xff]
    %v7923 = vld [vmem:[%s7519 + $0xd9] sm:$0xff]
    %v7924 = vld [vmem:[%s7519 + $0xe1] sm:$0xff]
    %v7925 = vld [vmem:[%s7519 + $0xf1] sm:$0xff]
    %v7926 = vld [vmem:[%s7519 + $0xf9] sm:$0xff]
    %v7927 = vld [vmem:[%s7519 + $0x109] sm:$0xff]
    %v7928 = vld [vmem:[%s7519 + $0x111] sm:$0xff]
    %v7929 = vld [vmem:[%s7519 + $0x121] sm:$0xff]
    %v7930 = vld [vmem:[%s7519 + $0x129] sm:$0xff]
    %v7931 = vld [vmem:[%s7519 + $0x139] sm:$0xff]
    %v7932 = vld [vmem:[%s7519 + $0x141] sm:$0xff]
    %v7933 = vld [vmem:[%s7519 + $0x151] sm:$0xff]
    %v7934 = vld [vmem:[%s7519 + $0x159] sm:$0xff]
    %v7935 = vld [vmem:[%s7519 + $0x169] sm:$0xff]
    %v7936 = vld [vmem:[%s7519 + $0x171] sm:$0xff]
    %v7937 = vld [vmem:[%s7519 + $0x1b1] sm:$0xff]
    %v7938 = vld [vmem:[%s7519 + $0x1b9] sm:$0xff]
    %v7939 = vld [vmem:[%s7519 + $0x1c9] sm:$0xff]
    %v7940 = vld [vmem:[%s7519 + $0x1d1] sm:$0xff]
    %v7941 = vld [vmem:[%s7519 + $0x1e1] sm:$0xff]
    %v7942 = vld [vmem:[%s7519 + $0x1e9] sm:$0xff]
    %v7943 = vld [vmem:[%s7519 + $0x1f9] sm:$0xff]
    %v7944 = vld [vmem:[%s7519 + $0x201] sm:$0xff]
    %v7945 = vld [vmem:[%s7519 + $0x211] sm:$0xff]
    %v7946 = vld [vmem:[%s7519 + $0x219] sm:$0xff]
    %v7947 = vld [vmem:[%s7519 + $0x229] sm:$0xff]
    %v7948 = vld [vmem:[%s7519 + $0x231] sm:$0xff]
    %v7949 = vld [vmem:[%s7519 + $0x241] sm:$0xff]
    %v7950 = vld [vmem:[%s7519 + $0x249] sm:$0xff]
    %v7951 = vld [vmem:[%s7519 + $0x259] sm:$0xff]
    %v7952 = vld [vmem:[%s7519 + $0x261] sm:$0xff]
    %v7953 = vld [vmem:[%s7519 + $0x271] sm:$0xff]
    %v7954 = vld [vmem:[%s7519 + $0x279] sm:$0xff]
    %v7955 = vld [vmem:[%s7519 + $0x289] sm:$0xff]
    %v7956 = vld [vmem:[%s7519 + $0x291] sm:$0xff]
    %v7957 = vld [vmem:[%s7519 + $0x2a1] sm:$0xff]
    %v7958 = vld [vmem:[%s7519 + $0x2a9] sm:$0xff]
    %v7959 = vld [vmem:[%s7519 + $0x2b9] sm:$0xff]
    %v7960 = vld [vmem:[%s7519 + $0x2c1] sm:$0xff]
    %v7961 = vld [vmem:[%s7519 + $0x2d1] sm:$0xff]
    %v7962 = vld [vmem:[%s7519 + $0x2d9] sm:$0xff]
    %v7963 = vld [vmem:[%s7519 + $0x2e9] sm:$0xff]
    %v7964 = vld [vmem:[%s7519 + $0x2f1] sm:$0xff]
    %v7965 = vld [vmem:[%s7519 + $0x301] sm:$0xff]
    %v7966 = vld [vmem:[%s7519 + $0x309] sm:$0xff]
    %v7967 = vld [vmem:[%s7519 + $0x319] sm:$0xff]
    %v7968 = vld [vmem:[%s7519 + $0x321] sm:$0xff]
    %8033 = vrot.lane.b32.xlu0 %v7905, 56
    %v8034 = vpop.permute.xlu0 %8033
    %8035 = vrot.lane.b32.xlu0 %v7906, 56
    %v8036 = vpop.permute.xlu0 %8035
    %8037 = vrot.lane.b32.xlu0 %v7907, 56
    %v8038 = vpop.permute.xlu0 %8037
    %8039 = vrot.lane.b32.xlu0 %v7908, 56
    %v8040 = vpop.permute.xlu0 %8039
    %8041 = vrot.lane.b32.xlu0 %v7909, 56
    %v8042 = vpop.permute.xlu0 %8041
    %8043 = vrot.lane.b32.xlu0 %v7910, 56
    %v8044 = vpop.permute.xlu0 %8043
    %8045 = vrot.lane.b32.xlu0 %v7911, 56
    %v8046 = vpop.permute.xlu0 %8045
    %8047 = vrot.lane.b32.xlu0 %v7912, 56
    %v8048 = vpop.permute.xlu0 %8047
    %8049 = vrot.lane.b32.xlu0 %v7913, 56
    %v8050 = vpop.permute.xlu0 %8049
    %8051 = vrot.lane.b32.xlu0 %v7914, 56
    %v8052 = vpop.permute.xlu0 %8051
    %8053 = vrot.lane.b32.xlu0 %v7915, 56
    %v8054 = vpop.permute.xlu0 %8053
    %8055 = vrot.lane.b32.xlu0 %v7916, 56
    %v8056 = vpop.permute.xlu0 %8055
    %8057 = vrot.lane.b32.xlu0 %v7917, 56
    %v8058 = vpop.permute.xlu0 %8057
    %8059 = vrot.lane.b32.xlu0 %v7918, 56
    %v8060 = vpop.permute.xlu0 %8059
    %8061 = vrot.lane.b32.xlu0 %v7919, 56
    %v8062 = vpop.permute.xlu0 %8061
    %8063 = vrot.lane.b32.xlu0 %v7920, 56
    %v8064 = vpop.permute.xlu0 %8063
    %8065 = vrot.lane.b32.xlu0 %v7921, 56
    %v8066 = vpop.permute.xlu0 %8065
    %8067 = vrot.lane.b32.xlu0 %v7922, 56
    %v8068 = vpop.permute.xlu0 %8067
    %8069 = vrot.lane.b32.xlu0 %v7923, 56
    %v8070 = vpop.permute.xlu0 %8069
    %8071 = vrot.lane.b32.xlu0 %v7924, 56
    %v8072 = vpop.permute.xlu0 %8071
    %8073 = vrot.lane.b32.xlu0 %v7925, 56
    %v8074 = vpop.permute.xlu0 %8073
    %8075 = vrot.lane.b32.xlu0 %v7926, 56
    %v8076 = vpop.permute.xlu0 %8075
    %8077 = vrot.lane.b32.xlu0 %v7927, 56
    %v8078 = vpop.permute.xlu0 %8077
    %8079 = vrot.lane.b32.xlu0 %v7928, 56
    %v8080 = vpop.permute.xlu0 %8079
    %8081 = vrot.lane.b32.xlu0 %v7929, 56
    %v8082 = vpop.permute.xlu0 %8081
    %8083 = vrot.lane.b32.xlu0 %v7930, 56
    %v8084 = vpop.permute.xlu0 %8083
    %8085 = vrot.lane.b32.xlu0 %v7931, 56
    %v8086 = vpop.permute.xlu0 %8085
    %8087 = vrot.lane.b32.xlu0 %v7932, 56
    %v8088 = vpop.permute.xlu0 %8087
    %8089 = vrot.lane.b32.xlu0 %v7933, 56
    %v8090 = vpop.permute.xlu0 %8089
    %8091 = vrot.lane.b32.xlu0 %v7934, 56
    %v8092 = vpop.permute.xlu0 %8091
    %8093 = vrot.lane.b32.xlu0 %v7935, 56
    %v8094 = vpop.permute.xlu0 %8093
    %8095 = vrot.lane.b32.xlu0 %v7936, 56
    %v8096 = vpop.permute.xlu0 %8095
    %8097 = vrot.lane.b32.xlu0 %v7937, 56
    %v8098 = vpop.permute.xlu0 %8097
    %8099 = vrot.lane.b32.xlu0 %v7938, 56
    %v8100 = vpop.permute.xlu0 %8099
    %8101 = vrot.lane.b32.xlu0 %v7939, 56
    %v8102 = vpop.permute.xlu0 %8101
    %8103 = vrot.lane.b32.xlu0 %v7940, 56
    %v8104 = vpop.permute.xlu0 %8103
    %8105 = vrot.lane.b32.xlu0 %v7941, 56
    %v8106 = vpop.permute.xlu0 %8105
    %8107 = vrot.lane.b32.xlu0 %v7942, 56
    %v8108 = vpop.permute.xlu0 %8107
    %8109 = vrot.lane.b32.xlu0 %v7943, 56
    %v8110 = vpop.permute.xlu0 %8109
    %8111 = vrot.lane.b32.xlu0 %v7944, 56
    %v8112 = vpop.permute.xlu0 %8111
    %8113 = vrot.lane.b32.xlu0 %v7945, 56
    %v8114 = vpop.permute.xlu0 %8113
    %8115 = vrot.lane.b32.xlu0 %v7946, 56
    %v8116 = vpop.permute.xlu0 %8115
    %8117 = vrot.lane.b32.xlu0 %v7947, 56
    %v8118 = vpop.permute.xlu0 %8117
    %8119 = vrot.lane.b32.xlu0 %v7948, 56
    %v8120 = vpop.permute.xlu0 %8119
    %8121 = vrot.lane.b32.xlu0 %v7949, 56
    %v8122 = vpop.permute.xlu0 %8121
    %8123 = vrot.lane.b32.xlu0 %v7950, 56
    %v8124 = vpop.permute.xlu0 %8123
    %8125 = vrot.lane.b32.xlu0 %v7951, 56
    %v8126 = vpop.permute.xlu0 %8125
    %8127 = vrot.lane.b32.xlu0 %v7952, 56
    %v8128 = vpop.permute.xlu0 %8127
    %8129 = vrot.lane.b32.xlu0 %v7953, 56
    %v8130 = vpop.permute.xlu0 %8129
    %8131 = vrot.lane.b32.xlu0 %v7954, 56
    %v8132 = vpop.permute.xlu0 %8131
    %8133 = vrot.lane.b32.xlu0 %v7955, 56
    %v8134 = vpop.permute.xlu0 %8133
    %8135 = vrot.lane.b32.xlu0 %v7956, 56
    %v8136 = vpop.permute.xlu0 %8135
    %8137 = vrot.lane.b32.xlu0 %v7957, 56
    %v8138 = vpop.permute.xlu0 %8137
    %8139 = vrot.lane.b32.xlu0 %v7958, 56
    %v8140 = vpop.permute.xlu0 %8139
    %8141 = vrot.lane.b32.xlu0 %v7959, 56
    %v8142 = vpop.permute.xlu0 %8141
    %8143 = vrot.lane.b32.xlu0 %v7960, 56
    %v8144 = vpop.permute.xlu0 %8143
    %8145 = vrot.lane.b32.xlu0 %v7961, 56
    %v8146 = vpop.permute.xlu0 %8145
    %8147 = vrot.lane.b32.xlu0 %v7962, 56
    %v8148 = vpop.permute.xlu0 %8147
    %8149 = vrot.lane.b32.xlu0 %v7963, 56
    %v8150 = vpop.permute.xlu0 %8149
    %8151 = vrot.lane.b32.xlu0 %v7964, 56
    %v8152 = vpop.permute.xlu0 %8151
    %8153 = vrot.lane.b32.xlu0 %v7965, 56
    %v8154 = vpop.permute.xlu0 %8153
    %8155 = vrot.lane.b32.xlu0 %v7966, 56
    %v8156 = vpop.permute.xlu0 %8155
    %8157 = vrot.lane.b32.xlu0 %v7967, 56
    %v8158 = vpop.permute.xlu0 %8157
    %8159 = vrot.lane.b32.xlu0 %v7968, 56
    %v8160 = vpop.permute.xlu0 %8159
    %vm8225 = vcmask 523712
    %8226 = vst.msk [vmem:[#allocation4] sm:$0xff] %vm8225, %v8034
    %8227 = vst.msk [vmem:[#allocation4 + $0x8] sm:$0xff] %vm8225, %v8036
    %8228 = vst.msk [vmem:[#allocation4 + $0x10] sm:$0xff] %vm8225, %v8038
    %8229 = vst.msk [vmem:[#allocation4 + $0x18] sm:$0xff] %vm8225, %v8040
    %8230 = vst.msk [vmem:[#allocation4 + $0x20] sm:$0xff] %vm8225, %v8042
    %8231 = vst.msk [vmem:[#allocation4 + $0x28] sm:$0xff] %vm8225, %v8044
    %8232 = vst.msk [vmem:[#allocation4 + $0x30] sm:$0xff] %vm8225, %v8046
    %8233 = vst.msk [vmem:[#allocation4 + $0x38] sm:$0xff] %vm8225, %v8048
    %8234 = vst.msk [vmem:[#allocation4 + $0x40] sm:$0xff] %vm8225, %v8050
    %8235 = vst.msk [vmem:[#allocation4 + $0x48] sm:$0xff] %vm8225, %v8052
    %8236 = vst.msk [vmem:[#allocation4 + $0x50] sm:$0xff] %vm8225, %v8054
    %8237 = vst.msk [vmem:[#allocation4 + $0x58] sm:$0xff] %vm8225, %v8056
    %8238 = vst.msk [vmem:[#allocation4 + $0x60] sm:$0xff] %vm8225, %v8058
    %8239 = vst.msk [vmem:[#allocation4 + $0x68] sm:$0xff] %vm8225, %v8060
    %8240 = vst.msk [vmem:[#allocation4 + $0x70] sm:$0xff] %vm8225, %v8062
    %8241 = vst.msk [vmem:[#allocation4 + $0x78] sm:$0xff] %vm8225, %v8064
    %8242 = vst.msk [vmem:[#allocation4 + $0x80] sm:$0xff] %vm8225, %v8066
    %8243 = vst.msk [vmem:[#allocation4 + $0x88] sm:$0xff] %vm8225, %v8068
    %8244 = vst.msk [vmem:[#allocation4 + $0x90] sm:$0xff] %vm8225, %v8070
    %8245 = vst.msk [vmem:[#allocation4 + $0x98] sm:$0xff] %vm8225, %v8072
    %8246 = vst.msk [vmem:[#allocation4 + $0xa0] sm:$0xff] %vm8225, %v8074
    %8247 = vst.msk [vmem:[#allocation4 + $0xa8] sm:$0xff] %vm8225, %v8076
    %8248 = vst.msk [vmem:[#allocation4 + $0xb0] sm:$0xff] %vm8225, %v8078
    %8249 = vst.msk [vmem:[#allocation4 + $0xb8] sm:$0xff] %vm8225, %v8080
    %8250 = vst.msk [vmem:[#allocation4 + $0xc0] sm:$0xff] %vm8225, %v8082
    %8251 = vst.msk [vmem:[#allocation4 + $0xc8] sm:$0xff] %vm8225, %v8084
    %8252 = vst.msk [vmem:[#allocation4 + $0xd0] sm:$0xff] %vm8225, %v8086
    %8253 = vst.msk [vmem:[#allocation4 + $0xd8] sm:$0xff] %vm8225, %v8088
    %8254 = vst.msk [vmem:[#allocation4 + $0xe0] sm:$0xff] %vm8225, %v8090
    %8255 = vst.msk [vmem:[#allocation4 + $0xe8] sm:$0xff] %vm8225, %v8092
    %8256 = vst.msk [vmem:[#allocation4 + $0xf0] sm:$0xff] %vm8225, %v8094
    %8257 = vst.msk [vmem:[#allocation4 + $0xf8] sm:$0xff] %vm8225, %v8096
    %8258 = vst.msk [vmem:[#allocation4 + $0x100] sm:$0xff] %vm8225, %v8098
    %8259 = vst.msk [vmem:[#allocation4 + $0x108] sm:$0xff] %vm8225, %v8100
    %8260 = vst.msk [vmem:[#allocation4 + $0x110] sm:$0xff] %vm8225, %v8102
    %8261 = vst.msk [vmem:[#allocation4 + $0x118] sm:$0xff] %vm8225, %v8104
    %8262 = vst.msk [vmem:[#allocation4 + $0x120] sm:$0xff] %vm8225, %v8106
    %8263 = vst.msk [vmem:[#allocation4 + $0x128] sm:$0xff] %vm8225, %v8108
    %8264 = vst.msk [vmem:[#allocation4 + $0x130] sm:$0xff] %vm8225, %v8110
    %8265 = vst.msk [vmem:[#allocation4 + $0x138] sm:$0xff] %vm8225, %v8112
    %8266 = vst.msk [vmem:[#allocation4 + $0x140] sm:$0xff] %vm8225, %v8114
    %8267 = vst.msk [vmem:[#allocation4 + $0x148] sm:$0xff] %vm8225, %v8116
    %8268 = vst.msk [vmem:[#allocation4 + $0x150] sm:$0xff] %vm8225, %v8118
    %8269 = vst.msk [vmem:[#allocation4 + $0x158] sm:$0xff] %vm8225, %v8120
    %8270 = vst.msk [vmem:[#allocation4 + $0x160] sm:$0xff] %vm8225, %v8122
    %8271 = vst.msk [vmem:[#allocation4 + $0x168] sm:$0xff] %vm8225, %v8124
    %8272 = vst.msk [vmem:[#allocation4 + $0x170] sm:$0xff] %vm8225, %v8126
    %8273 = vst.msk [vmem:[#allocation4 + $0x178] sm:$0xff] %vm8225, %v8128
    %8274 = vst.msk [vmem:[#allocation4 + $0x180] sm:$0xff] %vm8225, %v8130
    %8275 = vst.msk [vmem:[#allocation4 + $0x188] sm:$0xff] %vm8225, %v8132
    %8276 = vst.msk [vmem:[#allocation4 + $0x190] sm:$0xff] %vm8225, %v8134
    %8277 = vst.msk [vmem:[#allocation4 + $0x198] sm:$0xff] %vm8225, %v8136
    %8278 = vst.msk [vmem:[#allocation4 + $0x1a0] sm:$0xff] %vm8225, %v8138
    %8279 = vst.msk [vmem:[#allocation4 + $0x1a8] sm:$0xff] %vm8225, %v8140
    %8280 = vst.msk [vmem:[#allocation4 + $0x1b0] sm:$0xff] %vm8225, %v8142
    %8281 = vst.msk [vmem:[#allocation4 + $0x1b8] sm:$0xff] %vm8225, %v8144
    %8282 = vst.msk [vmem:[#allocation4 + $0x1c0] sm:$0xff] %vm8225, %v8146
    %8283 = vst.msk [vmem:[#allocation4 + $0x1c8] sm:$0xff] %vm8225, %v8148
    %8284 = vst.msk [vmem:[#allocation4 + $0x1d0] sm:$0xff] %vm8225, %v8150
    %8285 = vst.msk [vmem:[#allocation4 + $0x1d8] sm:$0xff] %vm8225, %v8152
    %8286 = vst.msk [vmem:[#allocation4 + $0x1e0] sm:$0xff] %vm8225, %v8154
    %8287 = vst.msk [vmem:[#allocation4 + $0x1e8] sm:$0xff] %vm8225, %v8156
    %8288 = vst.msk [vmem:[#allocation4 + $0x1f0] sm:$0xff] %vm8225, %v8158
    %8289 = vst.msk [vmem:[#allocation4 + $0x1f8] sm:$0xff] %vm8225, %v8160
    %v8290 = vld [vmem:[%s7519 + $0x2] sm:$0xff]
    %v8291 = vld [vmem:[%s7519 + $0xa] sm:$0xff]
    %v8292 = vld [vmem:[%s7519 + $0x1a] sm:$0xff]
    %v8293 = vld [vmem:[%s7519 + $0x22] sm:$0xff]
    %v8294 = vld [vmem:[%s7519 + $0x32] sm:$0xff]
    %v8295 = vld [vmem:[%s7519 + $0x3a] sm:$0xff]
    %v8296 = vld [vmem:[%s7519 + $0x4a] sm:$0xff]
    %v8297 = vld [vmem:[%s7519 + $0x52] sm:$0xff]
    %v8298 = vld [vmem:[%s7519 + $0x62] sm:$0xff]
    %v8299 = vld [vmem:[%s7519 + $0x6a] sm:$0xff]
    %v8300 = vld [vmem:[%s7519 + $0x7a] sm:$0xff]
    %v8301 = vld [vmem:[%s7519 + $0x82] sm:$0xff]
    %v8302 = vld [vmem:[%s7519 + $0x92] sm:$0xff]
    %v8303 = vld [vmem:[%s7519 + $0x9a] sm:$0xff]
    %v8304 = vld [vmem:[%s7519 + $0xaa] sm:$0xff]
    %v8305 = vld [vmem:[%s7519 + $0xb2] sm:$0xff]
    %v8306 = vld [vmem:[%s7519 + $0xc2] sm:$0xff]
    %v8307 = vld [vmem:[%s7519 + $0xca] sm:$0xff]
    %v8308 = vld [vmem:[%s7519 + $0xda] sm:$0xff]
    %v8309 = vld [vmem:[%s7519 + $0xe2] sm:$0xff]
    %v8310 = vld [vmem:[%s7519 + $0xf2] sm:$0xff]
    %v8311 = vld [vmem:[%s7519 + $0xfa] sm:$0xff]
    %v8312 = vld [vmem:[%s7519 + $0x10a] sm:$0xff]
    %v8313 = vld [vmem:[%s7519 + $0x112] sm:$0xff]
    %v8314 = vld [vmem:[%s7519 + $0x122] sm:$0xff]
    %v8315 = vld [vmem:[%s7519 + $0x12a] sm:$0xff]
    %v8316 = vld [vmem:[%s7519 + $0x13a] sm:$0xff]
    %v8317 = vld [vmem:[%s7519 + $0x142] sm:$0xff]
    %v8318 = vld [vmem:[%s7519 + $0x152] sm:$0xff]
    %v8319 = vld [vmem:[%s7519 + $0x15a] sm:$0xff]
    %v8320 = vld [vmem:[%s7519 + $0x16a] sm:$0xff]
    %v8321 = vld [vmem:[%s7519 + $0x172] sm:$0xff]
    %v8322 = vld [vmem:[%s7519 + $0x1b2] sm:$0xff]
    %v8323 = vld [vmem:[%s7519 + $0x1ba] sm:$0xff]
    %v8324 = vld [vmem:[%s7519 + $0x1ca] sm:$0xff]
    %v8325 = vld [vmem:[%s7519 + $0x1d2] sm:$0xff]
    %v8326 = vld [vmem:[%s7519 + $0x1e2] sm:$0xff]
    %v8327 = vld [vmem:[%s7519 + $0x1ea] sm:$0xff]
    %v8328 = vld [vmem:[%s7519 + $0x1fa] sm:$0xff]
    %v8329 = vld [vmem:[%s7519 + $0x202] sm:$0xff]
    %v8330 = vld [vmem:[%s7519 + $0x212] sm:$0xff]
    %v8331 = vld [vmem:[%s7519 + $0x21a] sm:$0xff]
    %v8332 = vld [vmem:[%s7519 + $0x22a] sm:$0xff]
    %v8333 = vld [vmem:[%s7519 + $0x232] sm:$0xff]
    %v8334 = vld [vmem:[%s7519 + $0x242] sm:$0xff]
    %v8335 = vld [vmem:[%s7519 + $0x24a] sm:$0xff]
    %v8336 = vld [vmem:[%s7519 + $0x25a] sm:$0xff]
    %v8337 = vld [vmem:[%s7519 + $0x262] sm:$0xff]
    %v8338 = vld [vmem:[%s7519 + $0x272] sm:$0xff]
    %v8339 = vld [vmem:[%s7519 + $0x27a] sm:$0xff]
    %v8340 = vld [vmem:[%s7519 + $0x28a] sm:$0xff]
    %v8341 = vld [vmem:[%s7519 + $0x292] sm:$0xff]
    %v8342 = vld [vmem:[%s7519 + $0x2a2] sm:$0xff]
    %v8343 = vld [vmem:[%s7519 + $0x2aa] sm:$0xff]
    %v8344 = vld [vmem:[%s7519 + $0x2ba] sm:$0xff]
    %v8345 = vld [vmem:[%s7519 + $0x2c2] sm:$0xff]
    %v8346 = vld [vmem:[%s7519 + $0x2d2] sm:$0xff]
    %v8347 = vld [vmem:[%s7519 + $0x2da] sm:$0xff]
    %v8348 = vld [vmem:[%s7519 + $0x2ea] sm:$0xff]
    %v8349 = vld [vmem:[%s7519 + $0x2f2] sm:$0xff]
    %v8350 = vld [vmem:[%s7519 + $0x302] sm:$0xff]
    %v8351 = vld [vmem:[%s7519 + $0x30a] sm:$0xff]
    %v8352 = vld [vmem:[%s7519 + $0x31a] sm:$0xff]
    %v8353 = vld [vmem:[%s7519 + $0x322] sm:$0xff]
    %8418 = vrot.lane.b32.xlu0 %v8290, 64
    %v8419 = vpop.permute.xlu0 %8418
    %8420 = vrot.lane.b32.xlu0 %v8291, 64
    %v8421 = vpop.permute.xlu0 %8420
    %8422 = vrot.lane.b32.xlu0 %v8292, 64
    %v8423 = vpop.permute.xlu0 %8422
    %8424 = vrot.lane.b32.xlu0 %v8293, 64
    %v8425 = vpop.permute.xlu0 %8424
    %8426 = vrot.lane.b32.xlu0 %v8294, 64
    %v8427 = vpop.permute.xlu0 %8426
    %8428 = vrot.lane.b32.xlu0 %v8295, 64
    %v8429 = vpop.permute.xlu0 %8428
    %8430 = vrot.lane.b32.xlu0 %v8296, 64
    %v8431 = vpop.permute.xlu0 %8430
    %8432 = vrot.lane.b32.xlu0 %v8297, 64
    %v8433 = vpop.permute.xlu0 %8432
    %8434 = vrot.lane.b32.xlu0 %v8298, 64
    %v8435 = vpop.permute.xlu0 %8434
    %8436 = vrot.lane.b32.xlu0 %v8299, 64
    %v8437 = vpop.permute.xlu0 %8436
    %8438 = vrot.lane.b32.xlu0 %v8300, 64
    %v8439 = vpop.permute.xlu0 %8438
    %8440 = vrot.lane.b32.xlu0 %v8301, 64
    %v8441 = vpop.permute.xlu0 %8440
    %8442 = vrot.lane.b32.xlu0 %v8302, 64
    %v8443 = vpop.permute.xlu0 %8442
    %8444 = vrot.lane.b32.xlu0 %v8303, 64
    %v8445 = vpop.permute.xlu0 %8444
    %8446 = vrot.lane.b32.xlu0 %v8304, 64
    %v8447 = vpop.permute.xlu0 %8446
    %8448 = vrot.lane.b32.xlu0 %v8305, 64
    %v8449 = vpop.permute.xlu0 %8448
    %8450 = vrot.lane.b32.xlu0 %v8306, 64
    %v8451 = vpop.permute.xlu0 %8450
    %8452 = vrot.lane.b32.xlu0 %v8307, 64
    %v8453 = vpop.permute.xlu0 %8452
    %8454 = vrot.lane.b32.xlu0 %v8308, 64
    %v8455 = vpop.permute.xlu0 %8454
    %8456 = vrot.lane.b32.xlu0 %v8309, 64
    %v8457 = vpop.permute.xlu0 %8456
    %8458 = vrot.lane.b32.xlu0 %v8310, 64
    %v8459 = vpop.permute.xlu0 %8458
    %8460 = vrot.lane.b32.xlu0 %v8311, 64
    %v8461 = vpop.permute.xlu0 %8460
    %8462 = vrot.lane.b32.xlu0 %v8312, 64
    %v8463 = vpop.permute.xlu0 %8462
    %8464 = vrot.lane.b32.xlu0 %v8313, 64
    %v8465 = vpop.permute.xlu0 %8464
    %8466 = vrot.lane.b32.xlu0 %v8314, 64
    %v8467 = vpop.permute.xlu0 %8466
    %8468 = vrot.lane.b32.xlu0 %v8315, 64
    %v8469 = vpop.permute.xlu0 %8468
    %8470 = vrot.lane.b32.xlu0 %v8316, 64
    %v8471 = vpop.permute.xlu0 %8470
    %8472 = vrot.lane.b32.xlu0 %v8317, 64
    %v8473 = vpop.permute.xlu0 %8472
    %8474 = vrot.lane.b32.xlu0 %v8318, 64
    %v8475 = vpop.permute.xlu0 %8474
    %8476 = vrot.lane.b32.xlu0 %v8319, 64
    %v8477 = vpop.permute.xlu0 %8476
    %8478 = vrot.lane.b32.xlu0 %v8320, 64
    %v8479 = vpop.permute.xlu0 %8478
    %8480 = vrot.lane.b32.xlu0 %v8321, 64
    %v8481 = vpop.permute.xlu0 %8480
    %8482 = vrot.lane.b32.xlu0 %v8322, 64
    %v8483 = vpop.permute.xlu0 %8482
    %8484 = vrot.lane.b32.xlu0 %v8323, 64
    %v8485 = vpop.permute.xlu0 %8484
    %8486 = vrot.lane.b32.xlu0 %v8324, 64
    %v8487 = vpop.permute.xlu0 %8486
    %8488 = vrot.lane.b32.xlu0 %v8325, 64
    %v8489 = vpop.permute.xlu0 %8488
    %8490 = vrot.lane.b32.xlu0 %v8326, 64
    %v8491 = vpop.permute.xlu0 %8490
    %8492 = vrot.lane.b32.xlu0 %v8327, 64
    %v8493 = vpop.permute.xlu0 %8492
    %8494 = vrot.lane.b32.xlu0 %v8328, 64
    %v8495 = vpop.permute.xlu0 %8494
    %8496 = vrot.lane.b32.xlu0 %v8329, 64
    %v8497 = vpop.permute.xlu0 %8496
    %8498 = vrot.lane.b32.xlu0 %v8330, 64
    %v8499 = vpop.permute.xlu0 %8498
    %8500 = vrot.lane.b32.xlu0 %v8331, 64
    %v8501 = vpop.permute.xlu0 %8500
    %8502 = vrot.lane.b32.xlu0 %v8332, 64
    %v8503 = vpop.permute.xlu0 %8502
    %8504 = vrot.lane.b32.xlu0 %v8333, 64
    %v8505 = vpop.permute.xlu0 %8504
    %8506 = vrot.lane.b32.xlu0 %v8334, 64
    %v8507 = vpop.permute.xlu0 %8506
    %8508 = vrot.lane.b32.xlu0 %v8335, 64
    %v8509 = vpop.permute.xlu0 %8508
    %8510 = vrot.lane.b32.xlu0 %v8336, 64
    %v8511 = vpop.permute.xlu0 %8510
    %8512 = vrot.lane.b32.xlu0 %v8337, 64
    %v8513 = vpop.permute.xlu0 %8512
    %8514 = vrot.lane.b32.xlu0 %v8338, 64
    %v8515 = vpop.permute.xlu0 %8514
    %8516 = vrot.lane.b32.xlu0 %v8339, 64
    %v8517 = vpop.permute.xlu0 %8516
    %8518 = vrot.lane.b32.xlu0 %v8340, 64
    %v8519 = vpop.permute.xlu0 %8518
    %8520 = vrot.lane.b32.xlu0 %v8341, 64
    %v8521 = vpop.permute.xlu0 %8520
    %8522 = vrot.lane.b32.xlu0 %v8342, 64
    %v8523 = vpop.permute.xlu0 %8522
    %8524 = vrot.lane.b32.xlu0 %v8343, 64
    %v8525 = vpop.permute.xlu0 %8524
    %8526 = vrot.lane.b32.xlu0 %v8344, 64
    %v8527 = vpop.permute.xlu0 %8526
    %8528 = vrot.lane.b32.xlu0 %v8345, 64
    %v8529 = vpop.permute.xlu0 %8528
    %8530 = vrot.lane.b32.xlu0 %v8346, 64
    %v8531 = vpop.permute.xlu0 %8530
    %8532 = vrot.lane.b32.xlu0 %v8347, 64
    %v8533 = vpop.permute.xlu0 %8532
    %8534 = vrot.lane.b32.xlu0 %v8348, 64
    %v8535 = vpop.permute.xlu0 %8534
    %8536 = vrot.lane.b32.xlu0 %v8349, 64
    %v8537 = vpop.permute.xlu0 %8536
    %8538 = vrot.lane.b32.xlu0 %v8350, 64
    %v8539 = vpop.permute.xlu0 %8538
    %8540 = vrot.lane.b32.xlu0 %v8351, 64
    %v8541 = vpop.permute.xlu0 %8540
    %8542 = vrot.lane.b32.xlu0 %v8352, 64
    %v8543 = vpop.permute.xlu0 %8542
    %8544 = vrot.lane.b32.xlu0 %v8353, 64
    %v8545 = vpop.permute.xlu0 %8544
    %vm8610 = vcmask 589312
    %8611 = vst.msk [vmem:[#allocation4] sm:$0xff] %vm8610, %v8419
    %8612 = vst.msk [vmem:[#allocation4 + $0x8] sm:$0xff] %vm8610, %v8421
    %8613 = vst.msk [vmem:[#allocation4 + $0x10] sm:$0xff] %vm8610, %v8423
    %8614 = vst.msk [vmem:[#allocation4 + $0x18] sm:$0xff] %vm8610, %v8425
    %8615 = vst.msk [vmem:[#allocation4 + $0x20] sm:$0xff] %vm8610, %v8427
    %8616 = vst.msk [vmem:[#allocation4 + $0x28] sm:$0xff] %vm8610, %v8429
    %8617 = vst.msk [vmem:[#allocation4 + $0x30] sm:$0xff] %vm8610, %v8431
    %8618 = vst.msk [vmem:[#allocation4 + $0x38] sm:$0xff] %vm8610, %v8433
    %8619 = vst.msk [vmem:[#allocation4 + $0x40] sm:$0xff] %vm8610, %v8435
    %8620 = vst.msk [vmem:[#allocation4 + $0x48] sm:$0xff] %vm8610, %v8437
    %8621 = vst.msk [vmem:[#allocation4 + $0x50] sm:$0xff] %vm8610, %v8439
    %8622 = vst.msk [vmem:[#allocation4 + $0x58] sm:$0xff] %vm8610, %v8441
    %8623 = vst.msk [vmem:[#allocation4 + $0x60] sm:$0xff] %vm8610, %v8443
    %8624 = vst.msk [vmem:[#allocation4 + $0x68] sm:$0xff] %vm8610, %v8445
    %8625 = vst.msk [vmem:[#allocation4 + $0x70] sm:$0xff] %vm8610, %v8447
    %8626 = vst.msk [vmem:[#allocation4 + $0x78] sm:$0xff] %vm8610, %v8449
    %8627 = vst.msk [vmem:[#allocation4 + $0x80] sm:$0xff] %vm8610, %v8451
    %8628 = vst.msk [vmem:[#allocation4 + $0x88] sm:$0xff] %vm8610, %v8453
    %8629 = vst.msk [vmem:[#allocation4 + $0x90] sm:$0xff] %vm8610, %v8455
    %8630 = vst.msk [vmem:[#allocation4 + $0x98] sm:$0xff] %vm8610, %v8457
    %8631 = vst.msk [vmem:[#allocation4 + $0xa0] sm:$0xff] %vm8610, %v8459
    %8632 = vst.msk [vmem:[#allocation4 + $0xa8] sm:$0xff] %vm8610, %v8461
    %8633 = vst.msk [vmem:[#allocation4 + $0xb0] sm:$0xff] %vm8610, %v8463
    %8634 = vst.msk [vmem:[#allocation4 + $0xb8] sm:$0xff] %vm8610, %v8465
    %8635 = vst.msk [vmem:[#allocation4 + $0xc0] sm:$0xff] %vm8610, %v8467
    %8636 = vst.msk [vmem:[#allocation4 + $0xc8] sm:$0xff] %vm8610, %v8469
    %8637 = vst.msk [vmem:[#allocation4 + $0xd0] sm:$0xff] %vm8610, %v8471
    %8638 = vst.msk [vmem:[#allocation4 + $0xd8] sm:$0xff] %vm8610, %v8473
    %8639 = vst.msk [vmem:[#allocation4 + $0xe0] sm:$0xff] %vm8610, %v8475
    %8640 = vst.msk [vmem:[#allocation4 + $0xe8] sm:$0xff] %vm8610, %v8477
    %8641 = vst.msk [vmem:[#allocation4 + $0xf0] sm:$0xff] %vm8610, %v8479
    %8642 = vst.msk [vmem:[#allocation4 + $0xf8] sm:$0xff] %vm8610, %v8481
    %8643 = vst.msk [vmem:[#allocation4 + $0x100] sm:$0xff] %vm8610, %v8483
    %8644 = vst.msk [vmem:[#allocation4 + $0x108] sm:$0xff] %vm8610, %v8485
    %8645 = vst.msk [vmem:[#allocation4 + $0x110] sm:$0xff] %vm8610, %v8487
    %8646 = vst.msk [vmem:[#allocation4 + $0x118] sm:$0xff] %vm8610, %v8489
    %8647 = vst.msk [vmem:[#allocation4 + $0x120] sm:$0xff] %vm8610, %v8491
    %8648 = vst.msk [vmem:[#allocation4 + $0x128] sm:$0xff] %vm8610, %v8493
    %8649 = vst.msk [vmem:[#allocation4 + $0x130] sm:$0xff] %vm8610, %v8495
    %8650 = vst.msk [vmem:[#allocation4 + $0x138] sm:$0xff] %vm8610, %v8497
    %8651 = vst.msk [vmem:[#allocation4 + $0x140] sm:$0xff] %vm8610, %v8499
    %8652 = vst.msk [vmem:[#allocation4 + $0x148] sm:$0xff] %vm8610, %v8501
    %8653 = vst.msk [vmem:[#allocation4 + $0x150] sm:$0xff] %vm8610, %v8503
    %8654 = vst.msk [vmem:[#allocation4 + $0x158] sm:$0xff] %vm8610, %v8505
    %8655 = vst.msk [vmem:[#allocation4 + $0x160] sm:$0xff] %vm8610, %v8507
    %8656 = vst.msk [vmem:[#allocation4 + $0x168] sm:$0xff] %vm8610, %v8509
    %8657 = vst.msk [vmem:[#allocation4 + $0x170] sm:$0xff] %vm8610, %v8511
    %8658 = vst.msk [vmem:[#allocation4 + $0x178] sm:$0xff] %vm8610, %v8513
    %8659 = vst.msk [vmem:[#allocation4 + $0x180] sm:$0xff] %vm8610, %v8515
    %8660 = vst.msk [vmem:[#allocation4 + $0x188] sm:$0xff] %vm8610, %v8517
    %8661 = vst.msk [vmem:[#allocation4 + $0x190] sm:$0xff] %vm8610, %v8519
    %8662 = vst.msk [vmem:[#allocation4 + $0x198] sm:$0xff] %vm8610, %v8521
    %8663 = vst.msk [vmem:[#allocation4 + $0x1a0] sm:$0xff] %vm8610, %v8523
    %8664 = vst.msk [vmem:[#allocation4 + $0x1a8] sm:$0xff] %vm8610, %v8525
    %8665 = vst.msk [vmem:[#allocation4 + $0x1b0] sm:$0xff] %vm8610, %v8527
    %8666 = vst.msk [vmem:[#allocation4 + $0x1b8] sm:$0xff] %vm8610, %v8529
    %8667 = vst.msk [vmem:[#allocation4 + $0x1c0] sm:$0xff] %vm8610, %v8531
    %8668 = vst.msk [vmem:[#allocation4 + $0x1c8] sm:$0xff] %vm8610, %v8533
    %8669 = vst.msk [vmem:[#allocation4 + $0x1d0] sm:$0xff] %vm8610, %v8535
    %8670 = vst.msk [vmem:[#allocation4 + $0x1d8] sm:$0xff] %vm8610, %v8537
    %8671 = vst.msk [vmem:[#allocation4 + $0x1e0] sm:$0xff] %vm8610, %v8539
    %8672 = vst.msk [vmem:[#allocation4 + $0x1e8] sm:$0xff] %vm8610, %v8541
    %8673 = vst.msk [vmem:[#allocation4 + $0x1f0] sm:$0xff] %vm8610, %v8543
    %8674 = vst.msk [vmem:[#allocation4 + $0x1f8] sm:$0xff] %vm8610, %v8545
    %v8675 = vld [vmem:[#allocation4] sm:$0xff]
    %v8676 = vld [vmem:[#allocation4 + $0x8] sm:$0xff]
    %v8677 = vld [vmem:[#allocation4 + $0x10] sm:$0xff]
    %v8678 = vld [vmem:[#allocation4 + $0x18] sm:$0xff]
    %v8679 = vld [vmem:[#allocation4 + $0x20] sm:$0xff]
    %v8680 = vld [vmem:[#allocation4 + $0x28] sm:$0xff]
    %v8681 = vld [vmem:[#allocation4 + $0x30] sm:$0xff]
    %v8682 = vld [vmem:[#allocation4 + $0x38] sm:$0xff]
    %v8683 = vld [vmem:[#allocation4 + $0x40] sm:$0xff]
    %v8684 = vld [vmem:[#allocation4 + $0x48] sm:$0xff]
    %v8685 = vld [vmem:[#allocation4 + $0x50] sm:$0xff]
    %v8686 = vld [vmem:[#allocation4 + $0x58] sm:$0xff]
    %v8687 = vld [vmem:[#allocation4 + $0x60] sm:$0xff]
    %v8688 = vld [vmem:[#allocation4 + $0x68] sm:$0xff]
    %v8689 = vld [vmem:[#allocation4 + $0x70] sm:$0xff]
    %v8690 = vld [vmem:[#allocation4 + $0x78] sm:$0xff]
    %v8691 = vld [vmem:[#allocation4 + $0x80] sm:$0xff]
    %v8692 = vld [vmem:[#allocation4 + $0x88] sm:$0xff]
    %v8693 = vld [vmem:[#allocation4 + $0x90] sm:$0xff]
    %v8694 = vld [vmem:[#allocation4 + $0x98] sm:$0xff]
    %v8695 = vld [vmem:[#allocation4 + $0xa0] sm:$0xff]
    %v8696 = vld [vmem:[#allocation4 + $0xa8] sm:$0xff]
    %v8697 = vld [vmem:[#allocation4 + $0xb0] sm:$0xff]
    %v8698 = vld [vmem:[#allocation4 + $0xb8] sm:$0xff]
    %v8699 = vld [vmem:[#allocation4 + $0xc0] sm:$0xff]
    %v8700 = vld [vmem:[#allocation4 + $0xc8] sm:$0xff]
    %v8701 = vld [vmem:[#allocation4 + $0xd0] sm:$0xff]
    %v8702 = vld [vmem:[#allocation4 + $0xd8] sm:$0xff]
    %v8703 = vld [vmem:[#allocation4 + $0xe0] sm:$0xff]
    %v8704 = vld [vmem:[#allocation4 + $0xe8] sm:$0xff]
    %v8705 = vld [vmem:[#allocation4 + $0xf0] sm:$0xff]
    %v8706 = vld [vmem:[#allocation4 + $0xf8] sm:$0xff]
    %v8707 = vld [vmem:[#allocation4 + $0x100] sm:$0xff]
    %v8708 = vld [vmem:[#allocation4 + $0x108] sm:$0xff]
    %v8709 = vld [vmem:[#allocation4 + $0x110] sm:$0xff]
    %v8710 = vld [vmem:[#allocation4 + $0x118] sm:$0xff]
    %v8711 = vld [vmem:[#allocation4 + $0x120] sm:$0xff]
    %v8712 = vld [vmem:[#allocation4 + $0x128] sm:$0xff]
    %v8713 = vld [vmem:[#allocation4 + $0x130] sm:$0xff]
    %v8714 = vld [vmem:[#allocation4 + $0x138] sm:$0xff]
    %v8715 = vld [vmem:[#allocation4 + $0x140] sm:$0xff]
    %v8716 = vld [vmem:[#allocation4 + $0x148] sm:$0xff]
    %v8717 = vld [vmem:[#allocation4 + $0x150] sm:$0xff]
    %v8718 = vld [vmem:[#allocation4 + $0x158] sm:$0xff]
    %v8719 = vld [vmem:[#allocation4 + $0x160] sm:$0xff]
    %v8720 = vld [vmem:[#allocation4 + $0x168] sm:$0xff]
    %v8721 = vld [vmem:[#allocation4 + $0x170] sm:$0xff]
    %v8722 = vld [vmem:[#allocation4 + $0x178] sm:$0xff]
    %v8723 = vld [vmem:[#allocation4 + $0x180] sm:$0xff]
    %v8724 = vld [vmem:[#allocation4 + $0x188] sm:$0xff]
    %v8725 = vld [vmem:[#allocation4 + $0x190] sm:$0xff]
    %v8726 = vld [vmem:[#allocation4 + $0x198] sm:$0xff]
    %v8727 = vld [vmem:[#allocation4 + $0x1a0] sm:$0xff]
    %v8728 = vld [vmem:[#allocation4 + $0x1a8] sm:$0xff]
    %v8729 = vld [vmem:[#allocation4 + $0x1b0] sm:$0xff]
    %v8730 = vld [vmem:[#allocation4 + $0x1b8] sm:$0xff]
    %v8731 = vld [vmem:[#allocation4 + $0x1c0] sm:$0xff]
    %v8732 = vld [vmem:[#allocation4 + $0x1c8] sm:$0xff]
    %v8733 = vld [vmem:[#allocation4 + $0x1d0] sm:$0xff]
    %v8734 = vld [vmem:[#allocation4 + $0x1d8] sm:$0xff]
    %v8735 = vld [vmem:[#allocation4 + $0x1e0] sm:$0xff]
    %v8736 = vld [vmem:[#allocation4 + $0x1e8] sm:$0xff]
    %v8737 = vld [vmem:[#allocation4 + $0x1f0] sm:$0xff]
    %v8738 = vld [vmem:[#allocation4 + $0x1f8] sm:$0xff]
    %v8739 = vld [vmem:[%s2] sm:$0xff]
    %v8740 = vld [vmem:[%s2 + $0x8] sm:$0xff]
    %v8741 = vld [vmem:[%s2 + $0x10] sm:$0xff]
    %v8742 = vld [vmem:[%s2 + $0x18] sm:$0xff]
    %v8743 = vld [vmem:[%s2 + $0x20] sm:$0xff]
    %v8744 = vld [vmem:[%s2 + $0x28] sm:$0xff]
    %v8745 = vld [vmem:[%s2 + $0x30] sm:$0xff]
    %v8746 = vld [vmem:[%s2 + $0x38] sm:$0xff]
    %v8747 = vld [vmem:[%s2 + $0x40] sm:$0xff]
    %vm8748 = vcmask 588800
    %v8750 = vsel %vm8748, %v8675, 0
    %v8753 = vsel %vm8748, %v8676, 0
    %v8756 = vsel %vm8748, %v8677, 0
    %v8759 = vsel %vm8748, %v8678, 0
    %v8762 = vsel %vm8748, %v8679, 0
    %v8765 = vsel %vm8748, %v8680, 0
    %v8768 = vsel %vm8748, %v8681, 0
    %v8771 = vsel %vm8748, %v8682, 0
    %v8774 = vsel %vm8748, %v8683, 0
    %v8777 = vsel %vm8748, %v8684, 0
    %v8780 = vsel %vm8748, %v8685, 0
    %v8783 = vsel %vm8748, %v8686, 0
    %v8786 = vsel %vm8748, %v8687, 0
    %v8789 = vsel %vm8748, %v8688, 0
    %v8792 = vsel %vm8748, %v8689, 0
    %v8795 = vsel %vm8748, %v8690, 0
    %v8798 = vsel %vm8748, %v8691, 0
    %v8801 = vsel %vm8748, %v8692, 0
    %v8804 = vsel %vm8748, %v8693, 0
    %v8807 = vsel %vm8748, %v8694, 0
    %v8810 = vsel %vm8748, %v8695, 0
    %v8813 = vsel %vm8748, %v8696, 0
    %v8816 = vsel %vm8748, %v8697, 0
    %v8819 = vsel %vm8748, %v8698, 0
    %v8822 = vsel %vm8748, %v8699, 0
    %v8825 = vsel %vm8748, %v8700, 0
    %v8828 = vsel %vm8748, %v8701, 0
    %v8831 = vsel %vm8748, %v8702, 0
    %v8834 = vsel %vm8748, %v8703, 0
    %v8837 = vsel %vm8748, %v8704, 0
    %v8840 = vsel %vm8748, %v8705, 0
    %v8843 = vsel %vm8748, %v8706, 0
    %v8846 = vsel %vm8748, %v8707, 0
    %v8849 = vsel %vm8748, %v8708, 0
    %v8852 = vsel %vm8748, %v8709, 0
    %v8855 = vsel %vm8748, %v8710, 0
    %v8858 = vsel %vm8748, %v8711, 0
    %v8861 = vsel %vm8748, %v8712, 0
    %v8864 = vsel %vm8748, %v8713, 0
    %v8867 = vsel %vm8748, %v8714, 0
    %v8870 = vsel %vm8748, %v8715, 0
    %v8873 = vsel %vm8748, %v8716, 0
    %v8876 = vsel %vm8748, %v8717, 0
    %v8879 = vsel %vm8748, %v8718, 0
    %v8882 = vsel %vm8748, %v8719, 0
    %v8885 = vsel %vm8748, %v8720, 0
    %v8888 = vsel %vm8748, %v8721, 0
    %v8891 = vsel %vm8748, %v8722, 0
    %v8894 = vsel %vm8748, %v8723, 0
    %v8897 = vsel %vm8748, %v8724, 0
    %v8900 = vsel %vm8748, %v8725, 0
    %v8903 = vsel %vm8748, %v8726, 0
    %v8906 = vsel %vm8748, %v8727, 0
    %v8909 = vsel %vm8748, %v8728, 0
    %v8912 = vsel %vm8748, %v8729, 0
    %v8915 = vsel %vm8748, %v8730, 0
    %v8918 = vsel %vm8748, %v8731, 0
    %v8921 = vsel %vm8748, %v8732, 0
    %v8924 = vsel %vm8748, %v8733, 0
    %v8927 = vsel %vm8748, %v8734, 0
    %v8930 = vsel %vm8748, %v8735, 0
    %v8933 = vsel %vm8748, %v8736, 0
    %v8936 = vsel %vm8748, %v8737, 0
    %v8939 = vsel %vm8748, %v8738, 0
    %8941 = vmatprep.subr.mxu0 0.0
    %8942 = vmatpush1.msra.mxu0 %v8739
    %8943 = vmatprep.subr.mxu0 0.0
    %8944 = vmatpush1.msra.mxu0 %v8740
    %8945 = vmatprep.subr.mxu0 0.0
    %8946 = vmatpush1.msra.mxu0 %v8741
    %8947 = vmatprep.subr.mxu0 0.0
    %8948 = vmatpush1.msra.mxu0 %v8742
    %8949 = vmatprep.subr.mxu0 0.0
    %8950 = vmatpush1.msra.mxu0 %v8743
    %8951 = vmatprep.subr.mxu0 0.0
    %8952 = vmatpush1.msra.mxu0 %v8744
    %8953 = vmatprep.subr.mxu0 0.0
    %8954 = vmatpush1.msra.mxu0 %v8745
    %8955 = vmatprep.subr.mxu0 0.0
    %8956 = vmatpush1.msra.mxu0 %v8746
    %8957 = vmatprep.subr.mxu0 0.0
    %8958 = vmatpush1.msra.mxu0 %v8747
    %8959 = vmatprep.subr.mxu0 0.0
    %8960 = vmatpush1.msra.mxu0 0.0
    %8961 = vmatprep.subr.mxu0 0.0
    %8962 = vmatpush1.msra.mxu0 0.0
    %8963 = vmatprep.subr.mxu0 0.0
    %8964 = vmatpush1.msra.mxu0 0.0
    %8965 = vmatprep.subr.mxu0 0.0
    %8966 = vmatpush1.msra.mxu0 0.0
    %8967 = vmatprep.subr.mxu0 0.0
    %8968 = vmatpush1.msra.mxu0 0.0
    %8969 = vmatprep.subr.mxu0 0.0
    %8970 = vmatpush1.msra.mxu0 0.0
    %8971 = vmatprep.subr.mxu0 0.0
    %8972 = vmatpush1.msra.mxu0 0.0
    %8973 = vmatprep.subr.mxu0 0.0
    %8974 = vmatpush1.msra.mxu0 0.0
    %8975 = vmatprep.subr.mxu0 0.0
    %8976 = vmatpush1.msra.mxu0 0.0
    %8977 = vmatprep.subr.mxu0 0.0
    %8978 = vmatpush1.msra.mxu0 0.0
    %8979 = vmatprep.subr.mxu0 0.0
    %8980 = vmatpush1.msra.mxu0 0.0
    %8981 = vmatprep.subr.mxu0 0.0
    %8982 = vmatpush1.msra.mxu0 0.0
    %8983 = vmatprep.subr.mxu0 0.0
    %8984 = vmatpush1.msra.mxu0 0.0
    %8985 = vmatprep.subr.mxu0 0.0
    %8986 = vmatpush1.msra.mxu0 0.0
    %8987 = vmatprep.subr.mxu0 0.0
    %8988 = vmatpush1.msra.mxu0 0.0
    %8989 = vmatprep.subr.mxu0 0.0
    %8990 = vmatpush1.msra.mxu0 0.0
    %8991 = vmatprep.subr.mxu0 0.0
    %8992 = vmatpush1.msra.mxu0 0.0
    %8993 = vmatprep.subr.mxu0 0.0
    %8994 = vmatpush1.msra.mxu0 0.0
    %8995 = vmatprep.subr.mxu0 0.0
    %8996 = vmatpush1.msra.mxu0 0.0
    %8997 = vmatprep.subr.mxu0 0.0
    %8998 = vmatpush1.msra.mxu0 0.0
    %8999 = vmatprep.subr.mxu0 0.0
    %9000 = vmatpush1.msra.mxu0 0.0
    %9001 = vmatprep.subr.mxu0 0.0
    %9002 = vmatpush1.msra.mxu0 0.0
    %9003 = vmatprep.subr.mxu0 0.0
    %9004 = vmatpush1.msra.mxu0 0.0
    %9005 = vmatprep.mubr.f32.mxu0 0.0
    %9006 = vmatmul.mubr.f32.gmra.mrb[0].mxu0 %v8750
    %v9007 = vpop.f32.mrb[0].mxu0
    %v9008 = vadd.f32 0.0, %v9007
    %v9009 = vpop.f32.mrb[0].mxu0
    %9010 = vmatprep.mubr.f32.mxu0 0.0
    %9011 = vmatmul.mubr.f32.gmra.mrb[0].mxu0 %v8753
    %v9012 = vpop.f32.mrb[0].mxu0
    %v9013 = vadd.f32 0.0, %v9012
    %v9014 = vpop.f32.mrb[0].mxu0
    %9015 = vmatprep.mubr.f32.mxu0 0.0
    %9016 = vmatmul.mubr.f32.gmra.mrb[0].mxu0 %v8756
    %v9017 = vpop.f32.mrb[0].mxu0
    %v9018 = vadd.f32 0.0, %v9017
    %v9019 = vpop.f32.mrb[0].mxu0
    %9020 = vmatprep.mubr.f32.mxu0 0.0
    %9021 = vmatmul.mubr.f32.gmra.mrb[0].mxu0 %v8759
    %v9022 = vpop.f32.mrb[0].mxu0
    %v9023 = vadd.f32 0.0, %v9022
    %v9024 = vpop.f32.mrb[0].mxu0
    %9025 = vmatprep.mubr.f32.mxu0 0.0
    %9026 = vmatmul.mubr.f32.gmra.mrb[0].mxu0 %v8762
    %v9027 = vpop.f32.mrb[0].mxu0
    %v9028 = vadd.f32 0.0, %v9027
    %v9029 = vpop.f32.mrb[0].mxu0
    %9030 = vmatprep.mubr.f32.mxu0 0.0
    %9031 = vmatmul.mubr.f32.gmra.mrb[0].mxu0 %v8765
    %v9032 = vpop.f32.mrb[0].mxu0
    %v9033 = vadd.f32 0.0, %v9032
    %v9034 = vpop.f32.mrb[0].mxu0
    %9035 = vmatprep.mubr.f32.mxu0 0.0
    %9036 = vmatmul.mubr.f32.gmra.mrb[0].mxu0 %v8768
    %v9037 = vpop.f32.mrb[0].mxu0
    %v9038 = vadd.f32 0.0, %v9037
    %v9039 = vpop.f32.mrb[0].mxu0
    %9040 = vmatprep.mubr.f32.mxu0 0.0
    %9041 = vmatmul.mubr.f32.gmra.mrb[0].mxu0 %v8771
    %v9042 = vpop.f32.mrb[0].mxu0
    %v9043 = vadd.f32 0.0, %v9042
    %v9044 = vpop.f32.mrb[0].mxu0
    %9045 = vmatprep.mubr.f32.mxu0 0.0
    %9046 = vmatmul.mubr.f32.gmra.mrb[0].mxu0 %v8774
    %v9047 = vpop.f32.mrb[0].mxu0
    %v9048 = vadd.f32 0.0, %v9047
    %v9049 = vpop.f32.mrb[0].mxu0
    %9050 = vmatprep.mubr.f32.mxu0 0.0
    %9051 = vmatmul.mubr.f32.gmra.mrb[0].mxu0 %v8777
    %v9052 = vpop.f32.mrb[0].mxu0
    %v9053 = vadd.f32 0.0, %v9052
    %v9054 = vpop.f32.mrb[0].mxu0
    %9055 = vmatprep.mubr.f32.mxu0 0.0
    %9056 = vmatmul.mubr.f32.gmra.mrb[0].mxu0 %v8780
    %v9057 = vpop.f32.mrb[0].mxu0
    %v9058 = vadd.f32 0.0, %v9057
    %v9059 = vpop.f32.mrb[0].mxu0
    %9060 = vmatprep.mubr.f32.mxu0 0.0
    %9061 = vmatmul.mubr.f32.gmra.mrb[0].mxu0 %v8783
    %v9062 = vpop.f32.mrb[0].mxu0
    %v9063 = vadd.f32 0.0, %v9062
    %v9064 = vpop.f32.mrb[0].mxu0
    %9065 = vmatprep.mubr.f32.mxu0 0.0
    %9066 = vmatmul.mubr.f32.gmra.mrb[0].mxu0 %v8786
    %v9067 = vpop.f32.mrb[0].mxu0
    %v9068 = vadd.f32 0.0, %v9067
    %v9069 = vpop.f32.mrb[0].mxu0
    %9070 = vmatprep.mubr.f32.mxu0 0.0
    %9071 = vmatmul.mubr.f32.gmra.mrb[0].mxu0 %v8789
    %v9072 = vpop.f32.mrb[0].mxu0
    %v9073 = vadd.f32 0.0, %v9072
    %v9074 = vpop.f32.mrb[0].mxu0
    %9075 = vmatprep.mubr.f32.mxu0 0.0
    %9076 = vmatmul.mubr.f32.gmra.mrb[0].mxu0 %v8792
    %v9077 = vpop.f32.mrb[0].mxu0
    %v9078 = vadd.f32 0.0, %v9077
    %v9079 = vpop.f32.mrb[0].mxu0
    %9080 = vmatprep.mubr.f32.mxu0 0.0
    %9081 = vmatmul.mubr.f32.gmra.mrb[0].mxu0 %v8795
    %v9082 = vpop.f32.mrb[0].mxu0
    %v9083 = vadd.f32 0.0, %v9082
    %v9084 = vpop.f32.mrb[0].mxu0
    %9085 = vmatprep.mubr.f32.mxu0 0.0
    %9086 = vmatmul.mubr.f32.gmra.mrb[0].mxu0 %v8798
    %v9087 = vpop.f32.mrb[0].mxu0
    %v9088 = vadd.f32 0.0, %v9087
    %v9089 = vpop.f32.mrb[0].mxu0
    %9090 = vmatprep.mubr.f32.mxu0 0.0
    %9091 = vmatmul.mubr.f32.gmra.mrb[0].mxu0 %v8801
    %v9092 = vpop.f32.mrb[0].mxu0
    %v9093 = vadd.f32 0.0, %v9092
    %v9094 = vpop.f32.mrb[0].mxu0
    %9095 = vmatprep.mubr.f32.mxu0 0.0
    %9096 = vmatmul.mubr.f32.gmra.mrb[0].mxu0 %v8804
    %v9097 = vpop.f32.mrb[0].mxu0
    %v9098 = vadd.f32 0.0, %v9097
    %v9099 = vpop.f32.mrb[0].mxu0
    %9100 = vmatprep.mubr.f32.mxu0 0.0
    %9101 = vmatmul.mubr.f32.gmra.mrb[0].mxu0 %v8807
    %v9102 = vpop.f32.mrb[0].mxu0
    %v9103 = vadd.f32 0.0, %v9102
    %v9104 = vpop.f32.mrb[0].mxu0
    %9105 = vmatprep.mubr.f32.mxu0 0.0
    %9106 = vmatmul.mubr.f32.gmra.mrb[0].mxu0 %v8810
    %v9107 = vpop.f32.mrb[0].mxu0
    %v9108 = vadd.f32 0.0, %v9107
    %v9109 = vpop.f32.mrb[0].mxu0
    %9110 = vmatprep.mubr.f32.mxu0 0.0
    %9111 = vmatmul.mubr.f32.gmra.mrb[0].mxu0 %v8813
    %v9112 = vpop.f32.mrb[0].mxu0
    %v9113 = vadd.f32 0.0, %v9112
    %v9114 = vpop.f32.mrb[0].mxu0
    %9115 = vmatprep.mubr.f32.mxu0 0.0
    %9116 = vmatmul.mubr.f32.gmra.mrb[0].mxu0 %v8816
    %v9117 = vpop.f32.mrb[0].mxu0
    %v9118 = vadd.f32 0.0, %v9117
    %v9119 = vpop.f32.mrb[0].mxu0
    %9120 = vmatprep.mubr.f32.mxu0 0.0
    %9121 = vmatmul.mubr.f32.gmra.mrb[0].mxu0 %v8819
    %v9122 = vpop.f32.mrb[0].mxu0
    %v9123 = vadd.f32 0.0, %v9122
    %v9124 = vpop.f32.mrb[0].mxu0
    %9125 = vmatprep.mubr.f32.mxu0 0.0
    %9126 = vmatmul.mubr.f32.gmra.mrb[0].mxu0 %v8822
    %v9127 = vpop.f32.mrb[0].mxu0
    %v9128 = vadd.f32 0.0, %v9127
    %v9129 = vpop.f32.mrb[0].mxu0
    %9130 = vmatprep.mubr.f32.mxu0 0.0
    %9131 = vmatmul.mubr.f32.gmra.mrb[0].mxu0 %v8825
    %v9132 = vpop.f32.mrb[0].mxu0
    %v9133 = vadd.f32 0.0, %v9132
    %v9134 = vpop.f32.mrb[0].mxu0
    %9135 = vmatprep.mubr.f32.mxu0 0.0
    %9136 = vmatmul.mubr.f32.gmra.mrb[0].mxu0 %v8828
    %v9137 = vpop.f32.mrb[0].mxu0
    %v9138 = vadd.f32 0.0, %v9137
    %v9139 = vpop.f32.mrb[0].mxu0
    %9140 = vmatprep.mubr.f32.mxu0 0.0
    %9141 = vmatmul.mubr.f32.gmra.mrb[0].mxu0 %v8831
    %v9142 = vpop.f32.mrb[0].mxu0
    %v9143 = vadd.f32 0.0, %v9142
    %v9144 = vpop.f32.mrb[0].mxu0
    %9145 = vmatprep.mubr.f32.mxu0 0.0
    %9146 = vmatmul.mubr.f32.gmra.mrb[0].mxu0 %v8834
    %v9147 = vpop.f32.mrb[0].mxu0
    %v9148 = vadd.f32 0.0, %v9147
    %v9149 = vpop.f32.mrb[0].mxu0
    %9150 = vmatprep.mubr.f32.mxu0 0.0
    %9151 = vmatmul.mubr.f32.gmra.mrb[0].mxu0 %v8837
    %v9152 = vpop.f32.mrb[0].mxu0
    %v9153 = vadd.f32 0.0, %v9152
    %v9154 = vpop.f32.mrb[0].mxu0
    %9155 = vmatprep.mubr.f32.mxu0 0.0
    %9156 = vmatmul.mubr.f32.gmra.mrb[0].mxu0 %v8840
    %v9157 = vpop.f32.mrb[0].mxu0
    %v9158 = vadd.f32 0.0, %v9157
    %v9159 = vpop.f32.mrb[0].mxu0
    %9160 = vmatprep.mubr.f32.mxu0 0.0
    %9161 = vmatmul.mubr.f32.gmra.mrb[0].mxu0 %v8843
    %v9162 = vpop.f32.mrb[0].mxu0
    %v9163 = vadd.f32 0.0, %v9162
    %v9164 = vpop.f32.mrb[0].mxu0
    %9165 = vmatprep.mubr.f32.mxu0 0.0
    %9166 = vmatmul.mubr.f32.gmra.mrb[0].mxu0 %v8846
    %v9167 = vpop.f32.mrb[0].mxu0
    %v9168 = vadd.f32 0.0, %v9167
    %v9169 = vpop.f32.mrb[0].mxu0
    %9170 = vmatprep.mubr.f32.mxu0 0.0
    %9171 = vmatmul.mubr.f32.gmra.mrb[0].mxu0 %v8849
    %v9172 = vpop.f32.mrb[0].mxu0
    %v9173 = vadd.f32 0.0, %v9172
    %v9174 = vpop.f32.mrb[0].mxu0
    %9175 = vmatprep.mubr.f32.mxu0 0.0
    %9176 = vmatmul.mubr.f32.gmra.mrb[0].mxu0 %v8852
    %v9177 = vpop.f32.mrb[0].mxu0
    %v9178 = vadd.f32 0.0, %v9177
    %v9179 = vpop.f32.mrb[0].mxu0
    %9180 = vmatprep.mubr.f32.mxu0 0.0
    %9181 = vmatmul.mubr.f32.gmra.mrb[0].mxu0 %v8855
    %v9182 = vpop.f32.mrb[0].mxu0
    %v9183 = vadd.f32 0.0, %v9182
    %v9184 = vpop.f32.mrb[0].mxu0
    %9185 = vmatprep.mubr.f32.mxu0 0.0
    %9186 = vmatmul.mubr.f32.gmra.mrb[0].mxu0 %v8858
    %v9187 = vpop.f32.mrb[0].mxu0
    %v9188 = vadd.f32 0.0, %v9187
    %v9189 = vpop.f32.mrb[0].mxu0
    %9190 = vmatprep.mubr.f32.mxu0 0.0
    %9191 = vmatmul.mubr.f32.gmra.mrb[0].mxu0 %v8861
    %v9192 = vpop.f32.mrb[0].mxu0
    %v9193 = vadd.f32 0.0, %v9192
    %v9194 = vpop.f32.mrb[0].mxu0
    %9195 = vmatprep.mubr.f32.mxu0 0.0
    %9196 = vmatmul.mubr.f32.gmra.mrb[0].mxu0 %v8864
    %v9197 = vpop.f32.mrb[0].mxu0
    %v9198 = vadd.f32 0.0, %v9197
    %v9199 = vpop.f32.mrb[0].mxu0
    %9200 = vmatprep.mubr.f32.mxu0 0.0
    %9201 = vmatmul.mubr.f32.gmra.mrb[0].mxu0 %v8867
    %v9202 = vpop.f32.mrb[0].mxu0
    %v9203 = vadd.f32 0.0, %v9202
    %v9204 = vpop.f32.mrb[0].mxu0
    %9205 = vmatprep.mubr.f32.mxu0 0.0
    %9206 = vmatmul.mubr.f32.gmra.mrb[0].mxu0 %v8870
    %v9207 = vpop.f32.mrb[0].mxu0
    %v9208 = vadd.f32 0.0, %v9207
    %v9209 = vpop.f32.mrb[0].mxu0
    %9210 = vmatprep.mubr.f32.mxu0 0.0
    %9211 = vmatmul.mubr.f32.gmra.mrb[0].mxu0 %v8873
    %v9212 = vpop.f32.mrb[0].mxu0
    %v9213 = vadd.f32 0.0, %v9212
    %v9214 = vpop.f32.mrb[0].mxu0
    %9215 = vmatprep.mubr.f32.mxu0 0.0
    %9216 = vmatmul.mubr.f32.gmra.mrb[0].mxu0 %v8876
    %v9217 = vpop.f32.mrb[0].mxu0
    %v9218 = vadd.f32 0.0, %v9217
    %v9219 = vpop.f32.mrb[0].mxu0
    %9220 = vmatprep.mubr.f32.mxu0 0.0
    %9221 = vmatmul.mubr.f32.gmra.mrb[0].mxu0 %v8879
    %v9222 = vpop.f32.mrb[0].mxu0
    %v9223 = vadd.f32 0.0, %v9222
    %v9224 = vpop.f32.mrb[0].mxu0
    %9225 = vmatprep.mubr.f32.mxu0 0.0
    %9226 = vmatmul.mubr.f32.gmra.mrb[0].mxu0 %v8882
    %v9227 = vpop.f32.mrb[0].mxu0
    %v9228 = vadd.f32 0.0, %v9227
    %v9229 = vpop.f32.mrb[0].mxu0
    %9230 = vmatprep.mubr.f32.mxu0 0.0
    %9231 = vmatmul.mubr.f32.gmra.mrb[0].mxu0 %v8885
    %v9232 = vpop.f32.mrb[0].mxu0
    %v9233 = vadd.f32 0.0, %v9232
    %v9234 = vpop.f32.mrb[0].mxu0
    %9235 = vmatprep.mubr.f32.mxu0 0.0
    %9236 = vmatmul.mubr.f32.gmra.mrb[0].mxu0 %v8888
    %v9237 = vpop.f32.mrb[0].mxu0
    %v9238 = vadd.f32 0.0, %v9237
    %v9239 = vpop.f32.mrb[0].mxu0
    %9240 = vmatprep.mubr.f32.mxu0 0.0
    %9241 = vmatmul.mubr.f32.gmra.mrb[0].mxu0 %v8891
    %v9242 = vpop.f32.mrb[0].mxu0
    %v9243 = vadd.f32 0.0, %v9242
    %v9244 = vpop.f32.mrb[0].mxu0
    %9245 = vmatprep.mubr.f32.mxu0 0.0
    %9246 = vmatmul.mubr.f32.gmra.mrb[0].mxu0 %v8894
    %v9247 = vpop.f32.mrb[0].mxu0
    %v9248 = vadd.f32 0.0, %v9247
    %v9249 = vpop.f32.mrb[0].mxu0
    %9250 = vmatprep.mubr.f32.mxu0 0.0
    %9251 = vmatmul.mubr.f32.gmra.mrb[0].mxu0 %v8897
    %v9252 = vpop.f32.mrb[0].mxu0
    %v9253 = vadd.f32 0.0, %v9252
    %v9254 = vpop.f32.mrb[0].mxu0
    %9255 = vmatprep.mubr.f32.mxu0 0.0
    %9256 = vmatmul.mubr.f32.gmra.mrb[0].mxu0 %v8900
    %v9257 = vpop.f32.mrb[0].mxu0
    %v9258 = vadd.f32 0.0, %v9257
    %v9259 = vpop.f32.mrb[0].mxu0
    %9260 = vmatprep.mubr.f32.mxu0 0.0
    %9261 = vmatmul.mubr.f32.gmra.mrb[0].mxu0 %v8903
    %v9262 = vpop.f32.mrb[0].mxu0
    %v9263 = vadd.f32 0.0, %v9262
    %v9264 = vpop.f32.mrb[0].mxu0
    %9265 = vmatprep.mubr.f32.mxu0 0.0
    %9266 = vmatmul.mubr.f32.gmra.mrb[0].mxu0 %v8906
    %v9267 = vpop.f32.mrb[0].mxu0
    %v9268 = vadd.f32 0.0, %v9267
    %v9269 = vpop.f32.mrb[0].mxu0
    %9270 = vmatprep.mubr.f32.mxu0 0.0
    %9271 = vmatmul.mubr.f32.gmra.mrb[0].mxu0 %v8909
    %v9272 = vpop.f32.mrb[0].mxu0
    %v9273 = vadd.f32 0.0, %v9272
    %v9274 = vpop.f32.mrb[0].mxu0
    %9275 = vmatprep.mubr.f32.mxu0 0.0
    %9276 = vmatmul.mubr.f32.gmra.mrb[0].mxu0 %v8912
    %v9277 = vpop.f32.mrb[0].mxu0
    %v9278 = vadd.f32 0.0, %v9277
    %v9279 = vpop.f32.mrb[0].mxu0
    %9280 = vmatprep.mubr.f32.mxu0 0.0
    %9281 = vmatmul.mubr.f32.gmra.mrb[0].mxu0 %v8915
    %v9282 = vpop.f32.mrb[0].mxu0
    %v9283 = vadd.f32 0.0, %v9282
    %v9284 = vpop.f32.mrb[0].mxu0
    %9285 = vmatprep.mubr.f32.mxu0 0.0
    %9286 = vmatmul.mubr.f32.gmra.mrb[0].mxu0 %v8918
    %v9287 = vpop.f32.mrb[0].mxu0
    %v9288 = vadd.f32 0.0, %v9287
    %v9289 = vpop.f32.mrb[0].mxu0
    %9290 = vmatprep.mubr.f32.mxu0 0.0
    %9291 = vmatmul.mubr.f32.gmra.mrb[0].mxu0 %v8921
    %v9292 = vpop.f32.mrb[0].mxu0
    %v9293 = vadd.f32 0.0, %v9292
    %v9294 = vpop.f32.mrb[0].mxu0
    %9295 = vmatprep.mubr.f32.mxu0 0.0
    %9296 = vmatmul.mubr.f32.gmra.mrb[0].mxu0 %v8924
    %v9297 = vpop.f32.mrb[0].mxu0
    %v9298 = vadd.f32 0.0, %v9297
    %v9299 = vpop.f32.mrb[0].mxu0
    %9300 = vmatprep.mubr.f32.mxu0 0.0
    %9301 = vmatmul.mubr.f32.gmra.mrb[0].mxu0 %v8927
    %v9302 = vpop.f32.mrb[0].mxu0
    %v9303 = vadd.f32 0.0, %v9302
    %v9304 = vpop.f32.mrb[0].mxu0
    %9305 = vmatprep.mubr.f32.mxu0 0.0
    %9306 = vmatmul.mubr.f32.gmra.mrb[0].mxu0 %v8930
    %v9307 = vpop.f32.mrb[0].mxu0
    %v9308 = vadd.f32 0.0, %v9307
    %v9309 = vpop.f32.mrb[0].mxu0
    %9310 = vmatprep.mubr.f32.mxu0 0.0
    %9311 = vmatmul.mubr.f32.gmra.mrb[0].mxu0 %v8933
    %v9312 = vpop.f32.mrb[0].mxu0
    %v9313 = vadd.f32 0.0, %v9312
    %v9314 = vpop.f32.mrb[0].mxu0
    %9315 = vmatprep.mubr.f32.mxu0 0.0
    %9316 = vmatmul.mubr.f32.gmra.mrb[0].mxu0 %v8936
    %v9317 = vpop.f32.mrb[0].mxu0
    %v9318 = vadd.f32 0.0, %v9317
    %v9319 = vpop.f32.mrb[0].mxu0
    %9320 = vmatprep.mubr.f32.mxu0 0.0
    %9321 = vmatmul.mubr.f32.gmra.mrb[0].mxu0 %v8939
    %v9322 = vpop.f32.mrb[0].mxu0
    %v9323 = vadd.f32 0.0, %v9322
    %v9324 = vpop.f32.mrb[0].mxu0
    %9325 = vdwg.mxu0
    %v9326 = vld [vmem:[%s6] sm:$0x1]
    %v9327 = vld [vmem:[%s7] sm:$0x1]
    %v9328 = vadd.f32 %v9008, %v9013
    %v9329 = vadd.f32 %v9328, %v9018
    %v9330 = vadd.f32 %v9329, %v9023
    %v9331 = vadd.f32 %v9330, %v9028
    %v9332 = vadd.f32 %v9331, %v9033
    %v9333 = vadd.f32 %v9332, %v9038
    %v9334 = vadd.f32 %v9333, %v9043
    %v9335 = vadd.f32 %v9334, %v9048
    %v9336 = vadd.f32 %v9335, %v9053
    %v9337 = vadd.f32 %v9336, %v9058
    %v9338 = vadd.f32 %v9337, %v9063
    %v9339 = vadd.f32 %v9338, %v9068
    %v9340 = vadd.f32 %v9339, %v9073
    %v9341 = vadd.f32 %v9340, %v9078
    %v9342 = vadd.f32 %v9341, %v9083
    %v9343 = vadd.f32 %v9342, %v9088
    %v9344 = vadd.f32 %v9343, %v9093
    %v9345 = vadd.f32 %v9344, %v9098
    %v9346 = vadd.f32 %v9345, %v9103
    %v9347 = vadd.f32 %v9346, %v9108
    %v9348 = vadd.f32 %v9347, %v9113
    %v9349 = vadd.f32 %v9348, %v9118
    %v9350 = vadd.f32 %v9349, %v9123
    %v9351 = vadd.f32 %v9350, %v9128
    %v9352 = vadd.f32 %v9351, %v9133
    %v9353 = vadd.f32 %v9352, %v9138
    %v9354 = vadd.f32 %v9353, %v9143
    %v9355 = vadd.f32 %v9354, %v9148
    %v9356 = vadd.f32 %v9355, %v9153
    %v9357 = vadd.f32 %v9356, %v9158
    %v9358 = vadd.f32 %v9357, %v9163
    %v9359 = vadd.f32 %v9358, %v9168
    %v9360 = vadd.f32 %v9359, %v9173
    %v9361 = vadd.f32 %v9360, %v9178
    %v9362 = vadd.f32 %v9361, %v9183
    %v9363 = vadd.f32 %v9362, %v9188
    %v9364 = vadd.f32 %v9363, %v9193
    %v9365 = vadd.f32 %v9364, %v9198
    %v9366 = vadd.f32 %v9365, %v9203
    %v9367 = vadd.f32 %v9366, %v9208
    %v9368 = vadd.f32 %v9367, %v9213
    %v9369 = vadd.f32 %v9368, %v9218
    %v9370 = vadd.f32 %v9369, %v9223
    %v9371 = vadd.f32 %v9370, %v9228
    %v9372 = vadd.f32 %v9371, %v9233
    %v9373 = vadd.f32 %v9372, %v9238
    %v9374 = vadd.f32 %v9373, %v9243
    %v9375 = vadd.f32 %v9374, %v9248
    %v9376 = vadd.f32 %v9375, %v9253
    %v9377 = vadd.f32 %v9376, %v9258
    %v9378 = vadd.f32 %v9377, %v9263
    %v9379 = vadd.f32 %v9378, %v9268
    %v9380 = vadd.f32 %v9379, %v9273
    %v9381 = vadd.f32 %v9380, %v9278
    %v9382 = vadd.f32 %v9381, %v9283
    %v9383 = vadd.f32 %v9382, %v9288
    %v9384 = vadd.f32 %v9383, %v9293
    %v9385 = vadd.f32 %v9384, %v9298
    %v9386 = vadd.f32 %v9385, %v9303
    %v9387 = vadd.f32 %v9386, %v9308
    %v9388 = vadd.f32 %v9387, %v9313
    %v9389 = vadd.f32 %v9388, %v9318
    %v9390 = vadd.f32 %v9389, %v9323
    %v9391 = vrot.slane %v9390, 4
    %v9392 = vadd.f32 %v9390, %v9391
    %v9393 = vrot.slane %v9392, 2
    %v9394 = vadd.f32 %v9392, %v9393
    %v9395 = vrot.slane %v9394, 1
    %v9396 = vadd.f32 %v9394, %v9395
    %v9397 = vmul.f32 %v9008, %v9008
    %v9398 = vmul.f32 %v9013, %v9013
    %v9399 = vmul.f32 %v9018, %v9018
    %v9400 = vmul.f32 %v9023, %v9023
    %v9401 = vmul.f32 %v9028, %v9028
    %v9402 = vmul.f32 %v9033, %v9033
    %v9403 = vmul.f32 %v9038, %v9038
    %v9404 = vmul.f32 %v9043, %v9043
    %v9405 = vmul.f32 %v9048, %v9048
    %v9406 = vmul.f32 %v9053, %v9053
    %v9407 = vmul.f32 %v9058, %v9058
    %v9408 = vmul.f32 %v9063, %v9063
    %v9409 = vmul.f32 %v9068, %v9068
    %v9410 = vmul.f32 %v9073, %v9073
    %v9411 = vmul.f32 %v9078, %v9078
    %v9412 = vmul.f32 %v9083, %v9083
    %v9413 = vmul.f32 %v9088, %v9088
    %v9414 = vmul.f32 %v9093, %v9093
    %v9415 = vmul.f32 %v9098, %v9098
    %v9416 = vmul.f32 %v9103, %v9103
    %v9417 = vmul.f32 %v9108, %v9108
    %v9418 = vmul.f32 %v9113, %v9113
    %v9419 = vmul.f32 %v9118, %v9118
    %v9420 = vmul.f32 %v9123, %v9123
    %v9421 = vmul.f32 %v9128, %v9128
    %v9422 = vmul.f32 %v9133, %v9133
    %v9423 = vmul.f32 %v9138, %v9138
    %v9424 = vmul.f32 %v9143, %v9143
    %v9425 = vmul.f32 %v9148, %v9148
    %v9426 = vmul.f32 %v9153, %v9153
    %v9427 = vmul.f32 %v9158, %v9158
    %v9428 = vmul.f32 %v9163, %v9163
    %v9429 = vmul.f32 %v9168, %v9168
    %v9430 = vmul.f32 %v9173, %v9173
    %v9431 = vmul.f32 %v9178, %v9178
    %v9432 = vmul.f32 %v9183, %v9183
    %v9433 = vmul.f32 %v9188, %v9188
    %v9434 = vmul.f32 %v9193, %v9193
    %v9435 = vmul.f32 %v9198, %v9198
    %v9436 = vmul.f32 %v9203, %v9203
    %v9437 = vmul.f32 %v9208, %v9208
    %v9438 = vmul.f32 %v9213, %v9213
    %v9439 = vmul.f32 %v9218, %v9218
    %v9440 = vmul.f32 %v9223, %v9223
    %v9441 = vmul.f32 %v9228, %v9228
    %v9442 = vmul.f32 %v9233, %v9233
    %v9443 = vmul.f32 %v9238, %v9238
    %v9444 = vmul.f32 %v9243, %v9243
    %v9445 = vmul.f32 %v9248, %v9248
    %v9446 = vmul.f32 %v9253, %v9253
    %v9447 = vmul.f32 %v9258, %v9258
    %v9448 = vmul.f32 %v9263, %v9263
    %v9449 = vmul.f32 %v9268, %v9268
    %v9450 = vmul.f32 %v9273, %v9273
    %v9451 = vmul.f32 %v9278, %v9278
    %v9452 = vmul.f32 %v9283, %v9283
    %v9453 = vmul.f32 %v9288, %v9288
    %v9454 = vmul.f32 %v9293, %v9293
    %v9455 = vmul.f32 %v9298, %v9298
    %v9456 = vmul.f32 %v9303, %v9303
    %v9457 = vmul.f32 %v9308, %v9308
    %v9458 = vmul.f32 %v9313, %v9313
    %v9459 = vmul.f32 %v9318, %v9318
    %v9460 = vmul.f32 %v9323, %v9323
    %v9461 = vadd.f32 %v9397, %v9398
    %v9462 = vadd.f32 %v9461, %v9399
    %v9463 = vadd.f32 %v9462, %v9400
    %v9464 = vadd.f32 %v9463, %v9401
    %v9465 = vadd.f32 %v9464, %v9402
    %v9466 = vadd.f32 %v9465, %v9403
    %v9467 = vadd.f32 %v9466, %v9404
    %v9468 = vadd.f32 %v9467, %v9405
    %v9469 = vadd.f32 %v9468, %v9406
    %v9470 = vadd.f32 %v9469, %v9407
    %v9471 = vadd.f32 %v9470, %v9408
    %v9472 = vadd.f32 %v9471, %v9409
    %v9473 = vadd.f32 %v9472, %v9410
    %v9474 = vadd.f32 %v9473, %v9411
    %v9475 = vadd.f32 %v9474, %v9412
    %v9476 = vadd.f32 %v9475, %v9413
    %v9477 = vadd.f32 %v9476, %v9414
    %v9478 = vadd.f32 %v9477, %v9415
    %v9479 = vadd.f32 %v9478, %v9416
    %v9480 = vadd.f32 %v9479, %v9417
    %v9481 = vadd.f32 %v9480, %v9418
    %v9482 = vadd.f32 %v9481, %v9419
    %v9483 = vadd.f32 %v9482, %v9420
    %v9484 = vadd.f32 %v9483, %v9421
    %v9485 = vadd.f32 %v9484, %v9422
    %v9486 = vadd.f32 %v9485, %v9423
    %v9487 = vadd.f32 %v9486, %v9424
    %v9488 = vadd.f32 %v9487, %v9425
    %v9489 = vadd.f32 %v9488, %v9426
    %v9490 = vadd.f32 %v9489, %v9427
    %v9491 = vadd.f32 %v9490, %v9428
    %v9492 = vadd.f32 %v9491, %v9429
    %v9493 = vadd.f32 %v9492, %v9430
    %v9494 = vadd.f32 %v9493, %v9431
    %v9495 = vadd.f32 %v9494, %v9432
    %v9496 = vadd.f32 %v9495, %v9433
    %v9497 = vadd.f32 %v9496, %v9434
    %v9498 = vadd.f32 %v9497, %v9435
    %v9499 = vadd.f32 %v9498, %v9436
    %v9500 = vadd.f32 %v9499, %v9437
    %v9501 = vadd.f32 %v9500, %v9438
    %v9502 = vadd.f32 %v9501, %v9439
    %v9503 = vadd.f32 %v9502, %v9440
    %v9504 = vadd.f32 %v9503, %v9441
    %v9505 = vadd.f32 %v9504, %v9442
    %v9506 = vadd.f32 %v9505, %v9443
    %v9507 = vadd.f32 %v9506, %v9444
    %v9508 = vadd.f32 %v9507, %v9445
    %v9509 = vadd.f32 %v9508, %v9446
    %v9510 = vadd.f32 %v9509, %v9447
    %v9511 = vadd.f32 %v9510, %v9448
    %v9512 = vadd.f32 %v9511, %v9449
    %v9513 = vadd.f32 %v9512, %v9450
    %v9514 = vadd.f32 %v9513, %v9451
    %v9515 = vadd.f32 %v9514, %v9452
    %v9516 = vadd.f32 %v9515, %v9453
    %v9517 = vadd.f32 %v9516, %v9454
    %v9518 = vadd.f32 %v9517, %v9455
    %v9519 = vadd.f32 %v9518, %v9456
    %v9520 = vadd.f32 %v9519, %v9457
    %v9521 = vadd.f32 %v9520, %v9458
    %v9522 = vadd.f32 %v9521, %v9459
    %v9523 = vadd.f32 %v9522, %v9460
    %v9524 = vrot.slane %v9523, 4
    %v9525 = vadd.f32 %v9523, %v9524
    %v9526 = vrot.slane %v9525, 2
    %v9527 = vadd.f32 %v9525, %v9526
    %v9528 = vrot.slane %v9527, 1
    %v9529 = vadd.f32 %v9527, %v9528
    %v9530 = vmul.f32 %v9396, 0.001953125
    %v9531 = vmul.f32 %v9529, 0.001953125
    %v9532 = vmul.f32 %v9530, %v9530
    %v9533 = vsub.f32 %v9531, %v9532
    %v9534 = vadd.f32 %v9533, 1e-05
    %v9535 = vrsqrt.pop %v9534
    %v9536 = vmul.f32 %v9326, %v9535
    %v9537 = vmul.f32 %v9530, %v9536
    %v9538 = vsub.f32 %v9327, %v9537
    %v9540 = vlaneseq
    %v9541 = vshrl.u32 %v9540, 7
    %v9542 = vsub.s32 0, %v9541
    %v9543 = vrot.slane %v9536, %v9542
    %v9545 = vmul.f32 %v9008, %v9543
    %v9546 = vmul.f32 %v9013, %v9543
    %v9547 = vmul.f32 %v9018, %v9543
    %v9548 = vmul.f32 %v9023, %v9543
    %v9549 = vmul.f32 %v9028, %v9543
    %v9550 = vmul.f32 %v9033, %v9543
    %v9551 = vmul.f32 %v9038, %v9543
    %v9552 = vmul.f32 %v9043, %v9543
    %v9553 = vmul.f32 %v9048, %v9543
    %v9554 = vmul.f32 %v9053, %v9543
    %v9555 = vmul.f32 %v9058, %v9543
    %v9556 = vmul.f32 %v9063, %v9543
    %v9557 = vmul.f32 %v9068, %v9543
    %v9558 = vmul.f32 %v9073, %v9543
    %v9559 = vmul.f32 %v9078, %v9543
    %v9560 = vmul.f32 %v9083, %v9543
    %v9561 = vmul.f32 %v9088, %v9543
    %v9562 = vmul.f32 %v9093, %v9543
    %v9563 = vmul.f32 %v9098, %v9543
    %v9564 = vmul.f32 %v9103, %v9543
    %v9565 = vmul.f32 %v9108, %v9543
    %v9566 = vmul.f32 %v9113, %v9543
    %v9567 = vmul.f32 %v9118, %v9543
    %v9568 = vmul.f32 %v9123, %v9543
    %v9569 = vmul.f32 %v9128, %v9543
    %v9570 = vmul.f32 %v9133, %v9543
    %v9571 = vmul.f32 %v9138, %v9543
    %v9572 = vmul.f32 %v9143, %v9543
    %v9573 = vmul.f32 %v9148, %v9543
    %v9574 = vmul.f32 %v9153, %v9543
    %v9575 = vmul.f32 %v9158, %v9543
    %v9576 = vmul.f32 %v9163, %v9543
    %v9577 = vmul.f32 %v9168, %v9543
    %v9578 = vmul.f32 %v9173, %v9543
    %v9579 = vmul.f32 %v9178, %v9543
    %v9580 = vmul.f32 %v9183, %v9543
    %v9581 = vmul.f32 %v9188, %v9543
    %v9582 = vmul.f32 %v9193, %v9543
    %v9583 = vmul.f32 %v9198, %v9543
    %v9584 = vmul.f32 %v9203, %v9543
    %v9585 = vmul.f32 %v9208, %v9543
    %v9586 = vmul.f32 %v9213, %v9543
    %v9587 = vmul.f32 %v9218, %v9543
    %v9588 = vmul.f32 %v9223, %v9543
    %v9589 = vmul.f32 %v9228, %v9543
    %v9590 = vmul.f32 %v9233, %v9543
    %v9591 = vmul.f32 %v9238, %v9543
    %v9592 = vmul.f32 %v9243, %v9543
    %v9593 = vmul.f32 %v9248, %v9543
    %v9594 = vmul.f32 %v9253, %v9543
    %v9595 = vmul.f32 %v9258, %v9543
    %v9596 = vmul.f32 %v9263, %v9543
    %v9597 = vmul.f32 %v9268, %v9543
    %v9598 = vmul.f32 %v9273, %v9543
    %v9599 = vmul.f32 %v9278, %v9543
    %v9600 = vmul.f32 %v9283, %v9543
    %v9601 = vmul.f32 %v9288, %v9543
    %v9602 = vmul.f32 %v9293, %v9543
    %v9603 = vmul.f32 %v9298, %v9543
    %v9604 = vmul.f32 %v9303, %v9543
    %v9605 = vmul.f32 %v9308, %v9543
    %v9606 = vmul.f32 %v9313, %v9543
    %v9607 = vmul.f32 %v9318, %v9543
    %v9608 = vmul.f32 %v9323, %v9543
    %v9610 = vlaneseq
    %v9611 = vshrl.u32 %v9610, 7
    %v9612 = vsub.s32 0, %v9611
    %v9613 = vrot.slane %v9538, %v9612
    %v9615 = vadd.f32 %v9545, %v9613
    %v9616 = vadd.f32 %v9546, %v9613
    %v9617 = vadd.f32 %v9547, %v9613
    %v9618 = vadd.f32 %v9548, %v9613
    %v9619 = vadd.f32 %v9549, %v9613
    %v9620 = vadd.f32 %v9550, %v9613
    %v9621 = vadd.f32 %v9551, %v9613
    %v9622 = vadd.f32 %v9552, %v9613
    %v9623 = vadd.f32 %v9553, %v9613
    %v9624 = vadd.f32 %v9554, %v9613
    %v9625 = vadd.f32 %v9555, %v9613
    %v9626 = vadd.f32 %v9556, %v9613
    %v9627 = vadd.f32 %v9557, %v9613
    %v9628 = vadd.f32 %v9558, %v9613
    %v9629 = vadd.f32 %v9559, %v9613
    %v9630 = vadd.f32 %v9560, %v9613
    %v9631 = vadd.f32 %v9561, %v9613
    %v9632 = vadd.f32 %v9562, %v9613
    %v9633 = vadd.f32 %v9563, %v9613
    %v9634 = vadd.f32 %v9564, %v9613
    %v9635 = vadd.f32 %v9565, %v9613
    %v9636 = vadd.f32 %v9566, %v9613
    %v9637 = vadd.f32 %v9567, %v9613
    %v9638 = vadd.f32 %v9568, %v9613
    %v9639 = vadd.f32 %v9569, %v9613
    %v9640 = vadd.f32 %v9570, %v9613
    %v9641 = vadd.f32 %v9571, %v9613
    %v9642 = vadd.f32 %v9572, %v9613
    %v9643 = vadd.f32 %v9573, %v9613
    %v9644 = vadd.f32 %v9574, %v9613
    %v9645 = vadd.f32 %v9575, %v9613
    %v9646 = vadd.f32 %v9576, %v9613
    %v9647 = vadd.f32 %v9577, %v9613
    %v9648 = vadd.f32 %v9578, %v9613
    %v9649 = vadd.f32 %v9579, %v9613
    %v9650 = vadd.f32 %v9580, %v9613
    %v9651 = vadd.f32 %v9581, %v9613
    %v9652 = vadd.f32 %v9582, %v9613
    %v9653 = vadd.f32 %v9583, %v9613
    %v9654 = vadd.f32 %v9584, %v9613
    %v9655 = vadd.f32 %v9585, %v9613
    %v9656 = vadd.f32 %v9586, %v9613
    %v9657 = vadd.f32 %v9587, %v9613
    %v9658 = vadd.f32 %v9588, %v9613
    %v9659 = vadd.f32 %v9589, %v9613
    %v9660 = vadd.f32 %v9590, %v9613
    %v9661 = vadd.f32 %v9591, %v9613
    %v9662 = vadd.f32 %v9592, %v9613
    %v9663 = vadd.f32 %v9593, %v9613
    %v9664 = vadd.f32 %v9594, %v9613
    %v9665 = vadd.f32 %v9595, %v9613
    %v9666 = vadd.f32 %v9596, %v9613
    %v9667 = vadd.f32 %v9597, %v9613
    %v9668 = vadd.f32 %v9598, %v9613
    %v9669 = vadd.f32 %v9599, %v9613
    %v9670 = vadd.f32 %v9600, %v9613
    %v9671 = vadd.f32 %v9601, %v9613
    %v9672 = vadd.f32 %v9602, %v9613
    %v9673 = vadd.f32 %v9603, %v9613
    %v9674 = vadd.f32 %v9604, %v9613
    %v9675 = vadd.f32 %v9605, %v9613
    %v9676 = vadd.f32 %v9606, %v9613
    %v9677 = vadd.f32 %v9607, %v9613
    %v9678 = vadd.f32 %v9608, %v9613
    %v9679 = vadd.f32 %v9615, %v5250
    %v9680 = vadd.f32 %v9616, %v5251
    %v9681 = vadd.f32 %v9617, %v5252
    %v9682 = vadd.f32 %v9618, %v5253
    %v9683 = vadd.f32 %v9619, %v5254
    %v9684 = vadd.f32 %v9620, %v5255
    %v9685 = vadd.f32 %v9621, %v5256
    %v9686 = vadd.f32 %v9622, %v5257
    %v9687 = vadd.f32 %v9623, %v5258
    %v9688 = vadd.f32 %v9624, %v5259
    %v9689 = vadd.f32 %v9625, %v5260
    %v9690 = vadd.f32 %v9626, %v5261
    %v9691 = vadd.f32 %v9627, %v5262
    %v9692 = vadd.f32 %v9628, %v5263
    %v9693 = vadd.f32 %v9629, %v5264
    %v9694 = vadd.f32 %v9630, %v5265
    %v9695 = vadd.f32 %v9631, %v5266
    %v9696 = vadd.f32 %v9632, %v5267
    %v9697 = vadd.f32 %v9633, %v5268
    %v9698 = vadd.f32 %v9634, %v5269
    %v9699 = vadd.f32 %v9635, %v5270
    %v9700 = vadd.f32 %v9636, %v5271
    %v9701 = vadd.f32 %v9637, %v5272
    %v9702 = vadd.f32 %v9638, %v5273
    %v9703 = vadd.f32 %v9639, %v5274
    %v9704 = vadd.f32 %v9640, %v5275
    %v9705 = vadd.f32 %v9641, %v5276
    %v9706 = vadd.f32 %v9642, %v5277
    %v9707 = vadd.f32 %v9643, %v5278
    %v9708 = vadd.f32 %v9644, %v5279
    %v9709 = vadd.f32 %v9645, %v5280
    %v9710 = vadd.f32 %v9646, %v5281
    %v9711 = vadd.f32 %v9647, %v5282
    %v9712 = vadd.f32 %v9648, %v5283
    %v9713 = vadd.f32 %v9649, %v5284
    %v9714 = vadd.f32 %v9650, %v5285
    %v9715 = vadd.f32 %v9651, %v5286
    %v9716 = vadd.f32 %v9652, %v5287
    %v9717 = vadd.f32 %v9653, %v5288
    %v9718 = vadd.f32 %v9654, %v5289
    %v9719 = vadd.f32 %v9655, %v5290
    %v9720 = vadd.f32 %v9656, %v5291
    %v9721 = vadd.f32 %v9657, %v5292
    %v9722 = vadd.f32 %v9658, %v5293
    %v9723 = vadd.f32 %v9659, %v5294
    %v9724 = vadd.f32 %v9660, %v5295
    %v9725 = vadd.f32 %v9661, %v5296
    %v9726 = vadd.f32 %v9662, %v5297
    %v9727 = vadd.f32 %v9663, %v5298
    %v9728 = vadd.f32 %v9664, %v5299
    %v9729 = vadd.f32 %v9665, %v5300
    %v9730 = vadd.f32 %v9666, %v5301
    %v9731 = vadd.f32 %v9667, %v5302
    %v9732 = vadd.f32 %v9668, %v5303
    %v9733 = vadd.f32 %v9669, %v5304
    %v9734 = vadd.f32 %v9670, %v5305
    %v9735 = vadd.f32 %v9671, %v5306
    %v9736 = vadd.f32 %v9672, %v5307
    %v9737 = vadd.f32 %v9673, %v5308
    %v9738 = vadd.f32 %v9674, %v5309
    %v9739 = vadd.f32 %v9675, %v5310
    %v9740 = vadd.f32 %v9676, %v5311
    %v9741 = vadd.f32 %v9677, %v5312
    %v9742 = vadd.f32 %v9678, %v5313
    %v9743 = vmax.f32 %v9679, 0.0
    %v9744 = vmax.f32 %v9680, 0.0
    %v9745 = vmax.f32 %v9681, 0.0
    %v9746 = vmax.f32 %v9682, 0.0
    %v9747 = vmax.f32 %v9683, 0.0
    %v9748 = vmax.f32 %v9684, 0.0
    %v9749 = vmax.f32 %v9685, 0.0
    %v9750 = vmax.f32 %v9686, 0.0
    %v9751 = vmax.f32 %v9687, 0.0
    %v9752 = vmax.f32 %v9688, 0.0
    %v9753 = vmax.f32 %v9689, 0.0
    %v9754 = vmax.f32 %v9690, 0.0
    %v9755 = vmax.f32 %v9691, 0.0
    %v9756 = vmax.f32 %v9692, 0.0
    %v9757 = vmax.f32 %v9693, 0.0
    %v9758 = vmax.f32 %v9694, 0.0
    %v9759 = vmax.f32 %v9695, 0.0
    %v9760 = vmax.f32 %v9696, 0.0
    %v9761 = vmax.f32 %v9697, 0.0
    %v9762 = vmax.f32 %v9698, 0.0
    %v9763 = vmax.f32 %v9699, 0.0
    %v9764 = vmax.f32 %v9700, 0.0
    %v9765 = vmax.f32 %v9701, 0.0
    %v9766 = vmax.f32 %v9702, 0.0
    %v9767 = vmax.f32 %v9703, 0.0
    %v9768 = vmax.f32 %v9704, 0.0
    %v9769 = vmax.f32 %v9705, 0.0
    %v9770 = vmax.f32 %v9706, 0.0
    %v9771 = vmax.f32 %v9707, 0.0
    %v9772 = vmax.f32 %v9708, 0.0
    %v9773 = vmax.f32 %v9709, 0.0
    %v9774 = vmax.f32 %v9710, 0.0
    %v9775 = vmax.f32 %v9711, 0.0
    %v9776 = vmax.f32 %v9712, 0.0
    %v9777 = vmax.f32 %v9713, 0.0
    %v9778 = vmax.f32 %v9714, 0.0
    %v9779 = vmax.f32 %v9715, 0.0
    %v9780 = vmax.f32 %v9716, 0.0
    %v9781 = vmax.f32 %v9717, 0.0
    %v9782 = vmax.f32 %v9718, 0.0
    %v9783 = vmax.f32 %v9719, 0.0
    %v9784 = vmax.f32 %v9720, 0.0
    %v9785 = vmax.f32 %v9721, 0.0
    %v9786 = vmax.f32 %v9722, 0.0
    %v9787 = vmax.f32 %v9723, 0.0
    %v9788 = vmax.f32 %v9724, 0.0
    %v9789 = vmax.f32 %v9725, 0.0
    %v9790 = vmax.f32 %v9726, 0.0
    %v9791 = vmax.f32 %v9727, 0.0
    %v9792 = vmax.f32 %v9728, 0.0
    %v9793 = vmax.f32 %v9729, 0.0
    %v9794 = vmax.f32 %v9730, 0.0
    %v9795 = vmax.f32 %v9731, 0.0
    %v9796 = vmax.f32 %v9732, 0.0
    %v9797 = vmax.f32 %v9733, 0.0
    %v9798 = vmax.f32 %v9734, 0.0
    %v9799 = vmax.f32 %v9735, 0.0
    %v9800 = vmax.f32 %v9736, 0.0
    %v9801 = vmax.f32 %v9737, 0.0
    %v9802 = vmax.f32 %v9738, 0.0
    %v9803 = vmax.f32 %v9739, 0.0
    %v9804 = vmax.f32 %v9740, 0.0
    %v9805 = vmax.f32 %v9741, 0.0
    %v9806 = vmax.f32 %v9742, 0.0
    %9807 = vst [vmem:[#allocation5] sm:$0xff] %v9743
    %9808 = vst [vmem:[#allocation5 + $0x8] sm:$0xff] %v9744
    %9809 = vst [vmem:[#allocation5 + $0x10] sm:$0xff] %v9745
    %9810 = vst [vmem:[#allocation5 + $0x18] sm:$0xff] %v9746
    %9811 = vst [vmem:[#allocation5 + $0x20] sm:$0xff] %v9747
    %9812 = vst [vmem:[#allocation5 + $0x28] sm:$0xff] %v9748
    %9813 = vst [vmem:[#allocation5 + $0x30] sm:$0xff] %v9749
    %9814 = vst [vmem:[#allocation5 + $0x38] sm:$0xff] %v9750
    %9815 = vst [vmem:[#allocation5 + $0x40] sm:$0xff] %v9751
    %9816 = vst [vmem:[#allocation5 + $0x48] sm:$0xff] %v9752
    %9817 = vst [vmem:[#allocation5 + $0x50] sm:$0xff] %v9753
    %9818 = vst [vmem:[#allocation5 + $0x58] sm:$0xff] %v9754
    %9819 = vst [vmem:[#allocation5 + $0x60] sm:$0xff] %v9755
    %9820 = vst [vmem:[#allocation5 + $0x68] sm:$0xff] %v9756
    %9821 = vst [vmem:[#allocation5 + $0x70] sm:$0xff] %v9757
    %9822 = vst [vmem:[#allocation5 + $0x78] sm:$0xff] %v9758
    %9823 = vst [vmem:[#allocation5 + $0x80] sm:$0xff] %v9759
    %9824 = vst [vmem:[#allocation5 + $0x88] sm:$0xff] %v9760
    %9825 = vst [vmem:[#allocation5 + $0x90] sm:$0xff] %v9761
    %9826 = vst [vmem:[#allocation5 + $0x98] sm:$0xff] %v9762
    %9827 = vst [vmem:[#allocation5 + $0xa0] sm:$0xff] %v9763
    %9828 = vst [vmem:[#allocation5 + $0xa8] sm:$0xff] %v9764
    %9829 = vst [vmem:[#allocation5 + $0xb0] sm:$0xff] %v9765
    %9830 = vst [vmem:[#allocation5 + $0xb8] sm:$0xff] %v9766
    %9831 = vst [vmem:[#allocation5 + $0xc0] sm:$0xff] %v9767
    %9832 = vst [vmem:[#allocation5 + $0xc8] sm:$0xff] %v9768
    %9833 = vst [vmem:[#allocation5 + $0xd0] sm:$0xff] %v9769
    %9834 = vst [vmem:[#allocation5 + $0xd8] sm:$0xff] %v9770
    %9835 = vst [vmem:[#allocation5 + $0xe0] sm:$0xff] %v9771
    %9836 = vst [vmem:[#allocation5 + $0xe8] sm:$0xff] %v9772
    %9837 = vst [vmem:[#allocation5 + $0xf0] sm:$0xff] %v9773
    %9838 = vst [vmem:[#allocation5 + $0xf8] sm:$0xff] %v9774
    %9839 = vst [vmem:[#allocation5 + $0x100] sm:$0xff] %v9775
    %9840 = vst [vmem:[#allocation5 + $0x108] sm:$0xff] %v9776
    %9841 = vst [vmem:[#allocation5 + $0x110] sm:$0xff] %v9777
    %9842 = vst [vmem:[#allocation5 + $0x118] sm:$0xff] %v9778
    %9843 = vst [vmem:[#allocation5 + $0x120] sm:$0xff] %v9779
    %9844 = vst [vmem:[#allocation5 + $0x128] sm:$0xff] %v9780
    %9845 = vst [vmem:[#allocation5 + $0x130] sm:$0xff] %v9781
    %9846 = vst [vmem:[#allocation5 + $0x138] sm:$0xff] %v9782
    %9847 = vst [vmem:[#allocation5 + $0x140] sm:$0xff] %v9783
    %9848 = vst [vmem:[#allocation5 + $0x148] sm:$0xff] %v9784
    %9849 = vst [vmem:[#allocation5 + $0x150] sm:$0xff] %v9785
    %9850 = vst [vmem:[#allocation5 + $0x158] sm:$0xff] %v9786
    %9851 = vst [vmem:[#allocation5 + $0x160] sm:$0xff] %v9787
    %9852 = vst [vmem:[#allocation5 + $0x168] sm:$0xff] %v9788
    %9853 = vst [vmem:[#allocation5 + $0x170] sm:$0xff] %v9789
    %9854 = vst [vmem:[#allocation5 + $0x178] sm:$0xff] %v9790
    %9855 = vst [vmem:[#allocation5 + $0x180] sm:$0xff] %v9791
    %9856 = vst [vmem:[#allocation5 + $0x188] sm:$0xff] %v9792
    %9857 = vst [vmem:[#allocation5 + $0x190] sm:$0xff] %v9793
    %9858 = vst [vmem:[#allocation5 + $0x198] sm:$0xff] %v9794
    %9859 = vst [vmem:[#allocation5 + $0x1a0] sm:$0xff] %v9795
    %9860 = vst [vmem:[#allocation5 + $0x1a8] sm:$0xff] %v9796
    %9861 = vst [vmem:[#allocation5 + $0x1b0] sm:$0xff] %v9797
    %9862 = vst [vmem:[#allocation5 + $0x1b8] sm:$0xff] %v9798
    %9863 = vst [vmem:[#allocation5 + $0x1c0] sm:$0xff] %v9799
    %9864 = vst [vmem:[#allocation5 + $0x1c8] sm:$0xff] %v9800
    %9865 = vst [vmem:[#allocation5 + $0x1d0] sm:$0xff] %v9801
    %9866 = vst [vmem:[#allocation5 + $0x1d8] sm:$0xff] %v9802
    %9867 = vst [vmem:[#allocation5 + $0x1e0] sm:$0xff] %v9803
    %9868 = vst [vmem:[#allocation5 + $0x1e8] sm:$0xff] %v9804
    %9869 = vst [vmem:[#allocation5 + $0x1f0] sm:$0xff] %v9805
    %9870 = vst [vmem:[#allocation5 + $0x1f8] sm:$0xff] %v9806
    // Predicated region
    $region42: #{tpu_custom_call.1} parent=1 // pred_check
      _
    $region43: #{tpu_custom_call.1} parent=1 // pred_check_branch
      %9872 = sbr.rel (0) target = $region45
    $region44: #{tpu_custom_call.1} parent=1 // pred_region
      %s9874 = ssub.s32 8192, 8192
      %9875 = vsyncadd [#allocation6], %s9874
      %s9876 = sshll.u32 [#allocation5], 4
      %s9877 = int_to_ptr.vmem [resolvable:$true] %s9876
      %9882 = dma.vmem_to_hbm [thread:$0]  %s9877, 8192, %s10, [#allocation6], 128, 128, 8
    $region45: #{tpu_custom_call.1} parent=1 // pred_fallthru
      _
    // Predicated region
    $region46: #{tpu_custom_call.1} parent=1 // pred_check
      _
    $region47: #{tpu_custom_call.1} parent=1 // pred_check_branch
      %9884 = sbr.rel (0) target = $region49
    $region48: #{tpu_custom_call.1} parent=1 // pred_region
      %9885 = dma.done [#allocation6], 8192
    $region49: #{tpu_custom_call.1} parent=1 // pred_fallthru
      _
    %9886 = vsyncpa [#allocation6], 1

</llo_original>
